<compile_context>
chip_gen: v6e
topology: v6e:2x2x1
jax: 0.10.0
libtpu: 0.0.40
codegen_flags: <defaults>
</compile_context>

<pallas_src>
import jax
import jax.numpy as jnp
from jax import lax
from jax.experimental import pallas as pl
from jax.experimental.pallas import tpu as pltpu

# ----------------------------- problem sizes --------------------------------
B, S, C = 2, 16, 8        # batch, sample seq len, context seq len
D = 32                    # dim
H = 2                     # num_attention_heads
HD = 16                   # head_dim
ID = H * HD               # inner_dim (== D so residuals line up)
FF = 4 * D                # feed-forward inner dim (mult=4)
T = S + C                 # joint sequence length

BF16 = jnp.bfloat16
F32 = jnp.float32

# --------------------------- parameter inventory -----------------------------
# Original (unfused) parameter shapes, Linear weights stored (in, out): y = x @ W + b.
PARAM_SHAPES = {
    "ada_w": (D, 6 * D), "ada_b": (1, 6 * D),
    "ada_ctx_w": (D, 6 * D), "ada_ctx_b": (1, 6 * D),
    "wq": (D, ID), "bq": (1, ID),
    "wk": (D, ID), "bk": (1, ID),
    "wv": (D, ID), "bv": (1, ID),
    "w_add_q": (D, ID), "b_add_q": (1, ID),
    "w_add_k": (D, ID), "b_add_k": (1, ID),
    "w_add_v": (D, ID), "b_add_v": (1, ID),
    "g_q": (1, HD), "be_q": (1, HD),
    "g_k": (1, HD), "be_k": (1, HD),
    "g_aq": (1, HD), "be_aq": (1, HD),
    "g_ak": (1, HD), "be_ak": (1, HD),
    "w_out": (ID, D), "b_out": (1, D),
    "w_add_out": (ID, D), "b_add_out": (1, D),
    "ff_w1": (D, FF), "ff_b1": (1, FF),
    "ff_w2": (FF, D), "ff_b2": (1, D),
    "ffc_w1": (D, FF), "ffc_b1": (1, FF),
    "ffc_w2": (FF, D), "ffc_b2": (1, D),
}

# ----------------- packed-slab column offsets (all 128-aligned) ---------------
SLOT = 128          # every logical segment occupies its own 128-lane slot
N_ADA = 12          # 6 sample + 6 context modulation chunks

# D-row weight slab (bf16), shape (D, WD_COLS)
OFF_ADA = 0                       # 12 AdaLN chunks, one per slot           (D, D each)
OFF_QKV = OFF_ADA + N_ADA * SLOT  # q / k / v, one per slot                 (D, ID each)
OFF_AQKV = OFF_QKV + 3 * SLOT     # added q / k / v, one per slot           (D, ID each)
OFF_OUT = OFF_AQKV + 3 * SLOT     # attn.to_out                             (ID, D)
OFF_AOUT = OFF_OUT + SLOT         # attn.to_add_out                         (ID, D)
OFF_FF1 = OFF_AOUT + SLOT         # ff linear 1                             (D, FF)
OFF_FFC1 = OFF_FF1 + FF           # ff_context linear 1                     (D, FF)
OFF_EAVG = OFF_FFC1 + FF          # per-head averaging matrix               (ID, H)
OFF_BCAST = OFF_EAVG + SLOT       # per-head broadcast-back matrix          (H, ID)
WD_COLS = OFF_BCAST + SLOT        # 3072 = 24 * 128

# FF-row weight slab (bf16), shape (FF, WF_COLS)
OFF_FF2 = 0                       # ff linear 2                             (FF, D)
OFF_FFC2 = SLOT                   # ff_context linear 2                     (FF, D)
WF_COLS = 2 * SLOT                # 256

# bias / affine slab (f32), shape (1, B_COLS); layout mirrors padded matmul outputs
B_ADA = 0
B_QKV = B_ADA + N_ADA * SLOT
B_AQKV = B_QKV + 3 * SLOT
B_OUT = B_AQKV + 3 * SLOT
B_AOUT = B_OUT + SLOT
B_FF1 = B_AOUT + SLOT
B_FFC1 = B_FF1 + FF
B_FF2 = B_FFC1 + FF
B_FFC2 = B_FF2 + SLOT
B_QKN = B_FFC2 + SLOT             # 8 qk-norm affines, one per 128-lane slot
B_COLS = B_QKN + 8 * SLOT         # 4096 = 32 * 128


# ------------------------------- math helpers --------------------------------
def _ln(x, eps):
    # LayerNorm over the last axis, no affine (biased variance, like PyTorch).
    m = jnp.mean(x, axis=-1, keepdims=True)
    v = jnp.mean(jnp.square(x - m), axis=-1, keepdims=True)
    return (x - m) * lax.rsqrt(v + eps)


def _silu(x):
    return x * jax.nn.sigmoid(x)


def _gelu_tanh(x):
    # PyTorch F.gelu(..., approximate='tanh')
    c = 0.7978845608028654  # sqrt(2/pi)
    return 0.5 * x * (1.0 + jnp.tanh(c * (x + 0.044715 * x * x * x)))


def _headwise_ln(x, eavg, bcast, gamma, beta):
    """LayerNorm over each HD-wide head chunk of x (rows, ID).

    Two-pass (centered) statistics: per-chunk mean via skinny (ID,H)/(H,ID) matmuls
    on the MXU (cheap, no narrow XLU reductions), variance from centered squares
    (no E[x^2]-m^2 cancellation)."""
    m = jnp.dot(jnp.dot(x.astype(BF16), eavg, preferred_element_type=F32).astype(BF16),
                bcast, preferred_element_type=F32)                        # (rows, ID)
    xc = x - m
    var = jnp.dot(jnp.dot((xc * xc).astype(BF16), eavg,
                          preferred_element_type=F32).astype(BF16),
                  bcast, preferred_element_type=F32)
    return xc * lax.rsqrt(var + 1e-5) * gamma + beta


# --------------------------------- kernel ------------------------------------
def _joint_block_kernel(h_ref, c_ref, t_ref, wd_ref, wf_ref, b_ref,
                        h_out_ref, c_out_ref):
    h = h_ref[0]          # (S, D) f32
    c = c_ref[0]          # (C, D) f32
    t = t_ref[0]          # (1, D) f32

    # ---- fused AdaLayerNormZero modulation (norm1 + norm1_context), lane-padded ----
    st = _silu(t).astype(BF16)                                               # (1, D)
    emb = jnp.dot(st, wd_ref[:, OFF_ADA:OFF_ADA + N_ADA * SLOT],
                  preferred_element_type=F32)
    emb = emb + b_ref[:, B_ADA:B_ADA + N_ADA * SLOT]                         # (1, 12*128)

    def ch(i):  # i-th modulation chunk, 128-lane aligned -> (1, D)
        return emb[:, i * SLOT:i * SLOT + D]

    shift_msa, scale_msa, gate_msa = ch(0), ch(1), ch(2)
    shift_mlp, scale_mlp, gate_mlp = ch(3), ch(4), ch(5)
    c_shift_msa, c_scale_msa, c_gate_msa = ch(6), ch(7), ch(8)
    c_shift_mlp, c_scale_mlp, c_gate_mlp = ch(9), ch(10), ch(11)

    norm_h = (_ln(h, 1e-6) * (1.0 + scale_msa) + shift_msa).astype(BF16)     # (S, D)
    norm_c = (_ln(c, 1e-6) * (1.0 + c_scale_msa) + c_shift_msa).astype(BF16)  # (C, D)

    # ---- fused, lane-padded QKV projections (q / k / v each in its own 128 slot) ----
    qkv = jnp.dot(norm_h, wd_ref[:, OFF_QKV:OFF_QKV + 3 * SLOT],
                  preferred_element_type=F32) + b_ref[:, B_QKV:B_QKV + 3 * SLOT]
    aqkv = jnp.dot(norm_c, wd_ref[:, OFF_AQKV:OFF_AQKV + 3 * SLOT],
                   preferred_element_type=F32) + b_ref[:, B_AQKV:B_AQKV + 3 * SLOT]
    q = qkv[:, 0 * SLOT:0 * SLOT + ID]
    k = qkv[:, 1 * SLOT:1 * SLOT + ID]
    v = qkv[:, 2 * SLOT:2 * SLOT + ID]
    qc = aqkv[:, 0 * SLOT:0 * SLOT + ID]
    kc = aqkv[:, 1 * SLOT:1 * SLOT + ID]
    vc = aqkv[:, 2 * SLOT:2 * SLOT + ID]

    # ---- per-head qk LayerNorm, hoisted out of the head loop ----
    eavg = wd_ref[:, OFF_EAVG:OFF_EAVG + H]         # (D, H)   block-diag 1/HD
    bcast = wd_ref[:H, OFF_BCAST:OFF_BCAST + ID]    # (H, ID)  0/1 broadcast-back

    def qkn(j):  # j-th qk-norm affine, (1, ID), own 128-lane slot
        return b_ref[:, B_QKN + j * SLOT:B_QKN + j * SLOT + ID]

    qn = jnp.concatenate(
        [_headwise_ln(q, eavg, bcast, qkn(0), qkn(1)),
         _headwise_ln(qc, eavg, bcast, qkn(4), qkn(5))], axis=0).astype(BF16)  # (T, ID)
    kn = jnp.concatenate(
        [_headwise_ln(k, eavg, bcast, qkn(2), qkn(3)),
         _headwise_ln(kc, eavg, bcast, qkn(6), qkn(7))], axis=0).astype(BF16)  # (T, ID)
    vj = jnp.concatenate([v, vc], axis=0).astype(BF16)                          # (T, ID)

    # ---- joint attention (sample tokens first, then context tokens) ----
    scale = 1.0 / (float(HD) ** 0.5)
    attn_h = jnp.zeros((S, D), F32)
    attn_c = jnp.zeros((C, D), F32)
    for hh in range(H):   # static unroll; per-head output projection folded in
        lo = hh * HD
        s = lax.dot_general(qn[:, lo:lo + HD], kn[:, lo:lo + HD],
                            dimension_numbers=(((1,), (1,)), ((), ())),
                            preferred_element_type=F32) * scale                # (T, T)
        s = s - jnp.max(s, axis=-1, keepdims=True)
        e = jnp.exp(s)
        probs = (e * pl.reciprocal(jnp.sum(e, axis=-1, keepdims=True),
                                   approx=True)).astype(BF16)
        oh = jnp.dot(probs, vj[:, lo:lo + HD],
                     preferred_element_type=F32).astype(BF16)                  # (T, HD)
        attn_h = attn_h + jnp.dot(oh[:S], wd_ref[lo:lo + HD, OFF_OUT:OFF_OUT + D],
                                  preferred_element_type=F32)
        attn_c = attn_c + jnp.dot(oh[S:], wd_ref[lo:lo + HD, OFF_AOUT:OFF_AOUT + D],
                                  preferred_element_type=F32)
    attn_h = attn_h + b_ref[:, B_OUT:B_OUT + D]
    attn_c = attn_c + b_ref[:, B_AOUT:B_AOUT + D]

    # ---- sample branch: residual + gated MLP ----
    h = h + gate_msa * attn_h
    nh = (_ln(h, 1e-6) * (1.0 + scale_mlp) + shift_mlp).astype(BF16)
    ff1 = jnp.dot(nh, wd_ref[:, OFF_FF1:OFF_FF1 + FF], preferred_element_type=F32)
    ff1 = _gelu_tanh(ff1 + b_ref[:, B_FF1:B_FF1 + FF]).astype(BF16)
    ff = jnp.dot(ff1, wf_ref[:, OFF_FF2:OFF_FF2 + D], preferred_element_type=F32)
    ff = ff + b_ref[:, B_FF2:B_FF2 + D]
    h_out_ref[0] = h + gate_mlp * ff

    # ---- context branch: residual + gated MLP ----
    c = c + c_gate_msa * attn_c
    nc = (_ln(c, 1e-6) * (1.0 + c_scale_mlp) + c_shift_mlp).astype(BF16)
    fc1 = jnp.dot(nc, wd_ref[:, OFF_FFC1:OFF_FFC1 + FF], preferred_element_type=F32)
    fc1 = _gelu_tanh(fc1 + b_ref[:, B_FFC1:B_FFC1 + FF]).astype(BF16)
    fc = jnp.dot(fc1, wf_ref[:, OFF_FFC2:OFF_FFC2 + D], preferred_element_type=F32)
    fc = fc + b_ref[:, B_FFC2:B_FFC2 + D]
    c_out_ref[0] = c + c_gate_mlp * fc


# ------------------------------ param packing --------------------------------
def pack_params(params):
    """Pack weights into two bf16 slabs (split by row count) and all biases / LN
    affines into one f32 slab. Every logical segment gets its own 128-lane slot."""
    # D-row weight slab
    wd = jnp.zeros((D, WD_COLS), F32)
    ada_chunks = (list(jnp.split(params["ada_w"], 6, axis=1))
                  + list(jnp.split(params["ada_ctx_w"], 6, axis=1)))
    for i, chunk in enumerate(ada_chunks):
        wd = wd.at[:, OFF_ADA + i * SLOT:OFF_ADA + i * SLOT + D].set(chunk)
    for i, nm in enumerate(("wq", "wk", "wv")):
        wd = wd.at[:, OFF_QKV + i * SLOT:OFF_QKV + i * SLOT + ID].set(params[nm])
    for i, nm in enumerate(("w_add_q", "w_add_k", "w_add_v")):
        wd = wd.at[:, OFF_AQKV + i * SLOT:OFF_AQKV + i * SLOT + ID].set(params[nm])
    wd = wd.at[:ID, OFF_OUT:OFF_OUT + D].set(params["w_out"])
    wd = wd.at[:ID, OFF_AOUT:OFF_AOUT + D].set(params["w_add_out"])
    wd = wd.at[:, OFF_FF1:OFF_FF1 + FF].set(params["ff_w1"])
    wd = wd.at[:, OFF_FFC1:OFF_FFC1 + FF].set(params["ffc_w1"])
    eavg = jnp.kron(jnp.eye(H, dtype=F32), jnp.full((HD, 1), 1.0 / HD, F32))  # (ID, H)
    bcast = jnp.kron(jnp.eye(H, dtype=F32), jnp.ones((1, HD), F32))           # (H, ID)
    wd = wd.at[:ID, OFF_EAVG:OFF_EAVG + H].set(eavg)
    wd = wd.at[:H, OFF_BCAST:OFF_BCAST + ID].set(bcast)
    wd = wd.astype(BF16)

    # FF-row weight slab
    wf = jnp.zeros((FF, WF_COLS), F32)
    wf = wf.at[:, OFF_FF2:OFF_FF2 + D].set(params["ff_w2"])
    wf = wf.at[:, OFF_FFC2:OFF_FFC2 + D].set(params["ffc_w2"])
    wf = wf.astype(BF16)

    # bias / affine slab
    bs = jnp.zeros((1, B_COLS), F32)
    ada_b_chunks = (list(jnp.split(params["ada_b"], 6, axis=1))
                    + list(jnp.split(params["ada_ctx_b"], 6, axis=1)))
    for i, chunk in enumerate(ada_b_chunks):
        bs = bs.at[:, B_ADA + i * SLOT:B_ADA + i * SLOT + D].set(chunk)
    for i, nm in enumerate(("bq", "bk", "bv")):
        bs = bs.at[:, B_QKV + i * SLOT:B_QKV + i * SLOT + ID].set(params[nm])
    for i, nm in enumerate(("b_add_q", "b_add_k", "b_add_v")):
        bs = bs.at[:, B_AQKV + i * SLOT:B_AQKV + i * SLOT + ID].set(params[nm])
    bs = bs.at[:, B_OUT:B_OUT + D].set(params["b_out"])
    bs = bs.at[:, B_AOUT:B_AOUT + D].set(params["b_add_out"])
    bs = bs.at[:, B_FF1:B_FF1 + FF].set(params["ff_b1"])
    bs = bs.at[:, B_FFC1:B_FFC1 + FF].set(params["ffc_b1"])
    bs = bs.at[:, B_FF2:B_FF2 + D].set(params["ff_b2"])
    bs = bs.at[:, B_FFC2:B_FFC2 + D].set(params["ffc_b2"])
    qk_names = ("g_q", "be_q", "g_k", "be_k", "g_aq", "be_aq", "g_ak", "be_ak")
    for i, nm in enumerate(qk_names):
        # per-head_dim affine shared across heads -> tile to (1, ID), own 128 slot
        bs = bs.at[:, B_QKN + i * SLOT:B_QKN + i * SLOT + ID].set(
            jnp.tile(params[nm], (1, H)))
    return wd, wf, bs


# --------------------------------- wrapper ------------------------------------
def joint_transformer_block(hidden_states, encoder_hidden_states, temb, params):
    """Returns (encoder_hidden_states_out, hidden_states_out) like the torch module."""
    wd, wf, bs = pack_params(params)
    temb3 = temb.reshape(B, 1, D)  # (B, 1, D) so the per-row block equals full trailing dims

    cost = pl.CostEstimate(flops=2_500_000, transcendentals=10_000,
                           bytes_accessed=600_000)

    def run(single_buffer_slabs):
        res_kw = dict(pipeline_mode=pl.Buffered(1)) if single_buffer_slabs else {}
        grid_spec = pltpu.PrefetchScalarGridSpec(
            num_scalar_prefetch=0,
            grid=(B,),                                        # one batch row per step
            in_specs=[
                pl.BlockSpec((1, S, D), lambda i: (i, 0, 0)),   # hidden_states row
                pl.BlockSpec((1, C, D), lambda i: (i, 0, 0)),   # encoder_hidden row
                pl.BlockSpec((1, 1, D), lambda i: (i, 0, 0)),   # temb row
                pl.BlockSpec((D, WD_COLS), lambda i: (0, 0), **res_kw),   # D-row weights
                pl.BlockSpec((FF, WF_COLS), lambda i: (0, 0), **res_kw),  # FF-row weights
                pl.BlockSpec((1, B_COLS), lambda i: (0, 0), **res_kw),    # biases/affines
            ],
            out_specs=[
                pl.BlockSpec((1, S, D), lambda i: (i, 0, 0)),
                pl.BlockSpec((1, C, D), lambda i: (i, 0, 0)),
            ],
        )
        h_out, c_out = pl.pallas_call(
            _joint_block_kernel,
            out_shape=(jax.ShapeDtypeStruct((B, S, D), F32),
                       jax.ShapeDtypeStruct((B, C, D), F32)),
            grid_spec=grid_spec,
            compiler_params=pltpu.CompilerParams(
                dimension_semantics=("parallel",),
                vmem_limit_bytes=32 * 1024 * 1024,
            ),
            cost_estimate=cost,
        )(hidden_states, encoder_hidden_states, temb3, wd, wf, bs)
        jax.block_until_ready((h_out, c_out))
        return c_out, h_out  # (encoder_hidden_states, hidden_states)

    try:
        # Resident slabs have a constant index map -> request single buffering.
        return run(True)
    except Exception:
        # Fallback if pipeline_mode=pl.Buffered(1) is unsupported on this jax version.
        return run(False)


# ------------------------------ param init -----------------------------------
def init_params(key):
    params = {}
    keys = jax.random.split(key, len(PARAM_SHAPES))
    for (name, shp), k in zip(PARAM_SHAPES.items(), keys):
        if name.startswith("g_"):
            # perturbed from the PyTorch init (ones) so the packed qk-norm affine
            # path is actually exercised by the correctness check
            params[name] = 1.0 + 0.05 * jax.random.normal(k, shp, jnp.float32)
        elif name.startswith("be_"):
            params[name] = 0.05 * jax.random.normal(k, shp, jnp.float32)
        elif shp[0] == 1:
            params[name] = 0.02 * jax.random.normal(k, shp, jnp.float32)   # linear bias
        else:
            params[name] = 0.05 * jax.random.normal(k, shp, jnp.float32)   # linear weight
    return params


# --------------------------- pure-JAX f32 reference ---------------------------
def _reference_block(h, c, t, p):
    def proj(x, w, b):
        return x @ w + b

    st = _silu(t)
    emb = proj(st, p["ada_w"], p["ada_b"])
    (shift_msa, scale_msa, gate_msa,
     shift_mlp, scale_mlp, gate_mlp) = jnp.split(emb, 6, axis=-1)
    emb_c = proj(st, p["ada_ctx_w"], p["ada_ctx_b"])
    (c_shift_msa, c_scale_msa, c_gate_msa,
     c_shift_mlp, c_scale_mlp, c_gate_mlp) = jnp.split(emb_c, 6, axis=-1)

    nh = _ln(h, 1e-6) * (1.0 + scale_msa) + shift_msa
    nc = _ln(c, 1e-6) * (1.0 + c_scale_msa) + c_shift_msa

    q = proj(nh, p["wq"], p["bq"]); k = proj(nh, p["wk"], p["bk"]); v = proj(nh, p["wv"], p["bv"])
    qc = proj(nc, p["w_add_q"], p["b_add_q"])
    kc = proj(nc, p["w_add_k"], p["b_add_k"])
    vc = proj(nc, p["w_add_v"], p["b_add_v"])

    outs = []
    for hh in range(H):
        sl = slice(hh * HD, (hh + 1) * HD)
        qh = jnp.concatenate([_ln(q[:, sl], 1e-5) * p["g_q"] + p["be_q"],
                              _ln(qc[:, sl], 1e-5) * p["g_aq"] + p["be_aq"]], axis=0)
        kh = jnp.concatenate([_ln(k[:, sl], 1e-5) * p["g_k"] + p["be_k"],
                              _ln(kc[:, sl], 1e-5) * p["g_ak"] + p["be_ak"]], axis=0)
        vh = jnp.concatenate([v[:, sl], vc[:, sl]], axis=0)
        s = (qh @ kh.T) / jnp.sqrt(jnp.float32(HD))
        probs = jax.nn.softmax(s, axis=-1)
        outs.append(probs @ vh)
    o = jnp.concatenate(outs, axis=-1)

    attn_h = proj(o[:S], p["w_out"], p["b_out"])
    attn_c = proj(o[S:], p["w_add_out"], p["b_add_out"])

    h = h + gate_msa * attn_h
    nh2 = _ln(h, 1e-6) * (1.0 + scale_mlp) + shift_mlp
    h = h + gate_mlp * proj(_gelu_tanh(proj(nh2, p["ff_w1"], p["ff_b1"])),
                            p["ff_w2"], p["ff_b2"])

    c = c + c_gate_msa * attn_c
    nc2 = _ln(c, 1e-6) * (1.0 + c_scale_mlp) + c_shift_mlp
    c = c + c_gate_mlp * proj(_gelu_tanh(proj(nc2, p["ffc_w1"], p["ffc_b1"])),
                              p["ffc_w2"], p["ffc_b2"])
    return h, c


# ---------------------------------- main --------------------------------------
if __name__ == "__main__":
    key = jax.random.PRNGKey(0)
    k_h, k_c, k_t, k_p = jax.random.split(key, 4)
    hidden_states = jax.random.normal(k_h, (B, S, D), jnp.float32)
    encoder_hidden_states = jax.random.normal(k_c, (B, C, D), jnp.float32)
    temb = jax.random.normal(k_t, (B, D), jnp.float32)
    params = init_params(k_p)

    enc_out, hid_out = joint_transformer_block(
        hidden_states, encoder_hidden_states, temb, params)
    jax.block_until_ready((enc_out, hid_out))

    # float32 reference with the original (unfused, exact) math.
    ref_h, ref_c = [], []
    for b in range(B):
        hb, cb = _reference_block(hidden_states[b], encoder_hidden_states[b],
                                  temb[b:b + 1], params)
        ref_h.append(hb)
        ref_c.append(cb)
    ref_h = jnp.stack(ref_h)
    ref_c = jnp.stack(ref_c)

    assert bool(jnp.all(jnp.isfinite(hid_out))) and bool(jnp.all(jnp.isfinite(enc_out)))
    assert bool(jnp.allclose(hid_out, ref_h, rtol=2e-2, atol=2e-2))
    assert bool(jnp.allclose(enc_out, ref_c, rtol=2e-2, atol=2e-2))

    print("KERNEL_OK")
</pallas_src>

<mosaic_0001>
module attributes {stable_mosaic.version = 11 : i64} {
  func.func @_joint_block_kernel(%arg0: i32, %arg1: memref<1x16x32xf32, #tpu.memory_space<vmem>>, %arg2: memref<1x8x32xf32, #tpu.memory_space<vmem>>, %arg3: memref<1x1x32xf32, #tpu.memory_space<vmem>>, %arg4: memref<32x3072xbf16, #tpu.memory_space<vmem>>, %arg5: memref<128x256xbf16, #tpu.memory_space<vmem>>, %arg6: memref<1x4096xf32, #tpu.memory_space<vmem>>, %arg7: memref<1x16x32xf32, #tpu.memory_space<vmem>>, %arg8: memref<1x8x32xf32, #tpu.memory_space<vmem>>) attributes {dimension_semantics = [#tpu.dimension_semantics<parallel>], iteration_bounds = array<i64: 2>, scalar_prefetch = 0 : i64, scratch_operands = 0 : i64, tpu.core_type = #tpu.core_type<tc>, window_params = [{transform_indices = @transform_0, window_bounds = array<i64: 1, 16, 32>}, {transform_indices = @transform_1, window_bounds = array<i64: 1, 8, 32>}, {transform_indices = @transform_2, window_bounds = array<i64: 1, 1, 32>}, {pipeline_mode = #tpu.pipeline_mode<synchronous>, transform_indices = @transform_3, window_bounds = array<i64: 32, 3072>}, {pipeline_mode = #tpu.pipeline_mode<synchronous>, transform_indices = @transform_4, window_bounds = array<i64: 128, 256>}, {pipeline_mode = #tpu.pipeline_mode<synchronous>, transform_indices = @transform_5, window_bounds = array<i64: 1, 4096>}, {transform_indices = @transform_6, window_bounds = array<i64: 1, 16, 32>}, {transform_indices = @transform_7, window_bounds = array<i64: 1, 8, 32>}]} {
    %c0 = arith.constant 0 : index
    %c0_0 = arith.constant 0 : index
    %c0_1 = arith.constant 0 : index
    %0 = vector.load %arg1[%c0, %c0_0, %c0_1] : memref<1x16x32xf32, #tpu.memory_space<vmem>>, vector<1x16x32xf32>
    %1 = vector.shape_cast %0 : vector<1x16x32xf32> to vector<16x32xf32>
    %c0_2 = arith.constant 0 : index
    %c0_3 = arith.constant 0 : index
    %c0_4 = arith.constant 0 : index
    %2 = vector.load %arg2[%c0_2, %c0_3, %c0_4] : memref<1x8x32xf32, #tpu.memory_space<vmem>>, vector<1x8x32xf32>
    %3 = vector.shape_cast %2 : vector<1x8x32xf32> to vector<8x32xf32>
    %c0_5 = arith.constant 0 : index
    %c0_6 = arith.constant 0 : index
    %c0_7 = arith.constant 0 : index
    %4 = vector.load %arg3[%c0_5, %c0_6, %c0_7] : memref<1x1x32xf32, #tpu.memory_space<vmem>>, vector<1x1x32xf32>
    %5 = vector.shape_cast %4 : vector<1x1x32xf32> to vector<1x32xf32>
    %6 = arith.negf %5 : vector<1x32xf32>
    %7 = math.exp %6 : vector<1x32xf32>
    %cst = arith.constant 1.000000e+00 : f32
    %8 = vector.broadcast %cst : f32 to vector<1x32xf32>
    %9 = arith.addf %8, %7 : vector<1x32xf32>
    %10 = arith.divf %8, %9 : vector<1x32xf32>
    %11 = arith.mulf %5, %10 : vector<1x32xf32>
    %12 = arith.truncf %11 : vector<1x32xf32> to vector<1x32xbf16>
    %c0_8 = arith.constant 0 : index
    %c0_9 = arith.constant 0 : index
    %13 = vector.load %arg4[%c0_8, %c0_9] : memref<32x3072xbf16, #tpu.memory_space<vmem>>, vector<32x1536xbf16>
    %cst_10 = arith.constant dense<0.000000e+00> : vector<1x1536xf32>
    %14 = tpu.matmul %12, %13, %cst_10 {dimension_numbers = #tpu.dot_dimension_numbers<[1], [0], [0], [1], [0, 0, 1, 1], [], []>} : vector<1x32xbf16>, vector<32x1536xbf16>, vector<1x1536xf32> -> vector<1x1536xf32>
    %c0_11 = arith.constant 0 : index
    %c0_12 = arith.constant 0 : index
    %15 = vector.load %arg6[%c0_11, %c0_12] : memref<1x4096xf32, #tpu.memory_space<vmem>>, vector<1x1536xf32>
    %16 = arith.addf %14, %15 : vector<1x1536xf32>
    %17 = vector.extract_strided_slice %16 {offsets = [0, 0], sizes = [1, 32], strides = [1, 1]} : vector<1x1536xf32> to vector<1x32xf32>
    %18 = vector.extract_strided_slice %16 {offsets = [0, 128], sizes = [1, 32], strides = [1, 1]} : vector<1x1536xf32> to vector<1x32xf32>
    %19 = vector.extract_strided_slice %16 {offsets = [0, 256], sizes = [1, 32], strides = [1, 1]} : vector<1x1536xf32> to vector<1x32xf32>
    %20 = vector.extract_strided_slice %16 {offsets = [0, 384], sizes = [1, 32], strides = [1, 1]} : vector<1x1536xf32> to vector<1x32xf32>
    %21 = vector.extract_strided_slice %16 {offsets = [0, 512], sizes = [1, 32], strides = [1, 1]} : vector<1x1536xf32> to vector<1x32xf32>
    %22 = vector.extract_strided_slice %16 {offsets = [0, 640], sizes = [1, 32], strides = [1, 1]} : vector<1x1536xf32> to vector<1x32xf32>
    %23 = vector.extract_strided_slice %16 {offsets = [0, 768], sizes = [1, 32], strides = [1, 1]} : vector<1x1536xf32> to vector<1x32xf32>
    %24 = vector.extract_strided_slice %16 {offsets = [0, 896], sizes = [1, 32], strides = [1, 1]} : vector<1x1536xf32> to vector<1x32xf32>
    %25 = vector.extract_strided_slice %16 {offsets = [0, 1024], sizes = [1, 32], strides = [1, 1]} : vector<1x1536xf32> to vector<1x32xf32>
    %26 = vector.extract_strided_slice %16 {offsets = [0, 1152], sizes = [1, 32], strides = [1, 1]} : vector<1x1536xf32> to vector<1x32xf32>
    %27 = vector.extract_strided_slice %16 {offsets = [0, 1280], sizes = [1, 32], strides = [1, 1]} : vector<1x1536xf32> to vector<1x32xf32>
    %28 = vector.extract_strided_slice %16 {offsets = [0, 1408], sizes = [1, 32], strides = [1, 1]} : vector<1x1536xf32> to vector<1x32xf32>
    %cst_13 = arith.constant dense<0.000000e+00> : vector<16xf32>
    %29 = vector.multi_reduction <add>, %1, %cst_13 [1] : vector<16x32xf32> to vector<16xf32>
    %30 = vector.shape_cast %29 : vector<16xf32> to vector<16x1xf32>
    %cst_14 = arith.constant 3.200000e+01 : f32
    %31 = vector.broadcast %cst_14 : f32 to vector<16x1xf32>
    %32 = arith.divf %30, %31 : vector<16x1xf32>
    %33 = vector.broadcast %32 : vector<16x1xf32> to vector<16x32xf32>
    %34 = arith.subf %1, %33 : vector<16x32xf32>
    %35 = arith.mulf %34, %34 : vector<16x32xf32>
    %cst_15 = arith.constant dense<0.000000e+00> : vector<16xf32>
    %36 = vector.multi_reduction <add>, %35, %cst_15 [1] : vector<16x32xf32> to vector<16xf32>
    %37 = vector.shape_cast %36 : vector<16xf32> to vector<16x1xf32>
    %cst_16 = arith.constant 3.200000e+01 : f32
    %38 = vector.broadcast %cst_16 : f32 to vector<16x1xf32>
    %39 = arith.divf %37, %38 : vector<16x1xf32>
    %40 = vector.broadcast %32 : vector<16x1xf32> to vector<16x32xf32>
    %41 = arith.subf %1, %40 : vector<16x32xf32>
    %cst_17 = arith.constant 9.99999997E-7 : f32
    %42 = vector.broadcast %cst_17 : f32 to vector<16x1xf32>
    %43 = arith.addf %39, %42 : vector<16x1xf32>
    %44 = math.rsqrt %43 : vector<16x1xf32>
    %45 = vector.broadcast %44 : vector<16x1xf32> to vector<16x32xf32>
    %46 = arith.mulf %41, %45 : vector<16x32xf32>
    %cst_18 = arith.constant 1.000000e+00 : f32
    %47 = vector.broadcast %cst_18 : f32 to vector<1x32xf32>
    %48 = arith.addf %47, %18 : vector<1x32xf32>
    %49 = vector.broadcast %48 : vector<1x32xf32> to vector<16x32xf32>
    %50 = arith.mulf %46, %49 : vector<16x32xf32>
    %51 = vector.broadcast %17 : vector<1x32xf32> to vector<16x32xf32>
    %52 = arith.addf %50, %51 : vector<16x32xf32>
    %53 = arith.truncf %52 : vector<16x32xf32> to vector<16x32xbf16>
    %cst_19 = arith.constant dense<0.000000e+00> : vector<8xf32>
    %54 = vector.multi_reduction <add>, %3, %cst_19 [1] : vector<8x32xf32> to vector<8xf32>
    %55 = vector.shape_cast %54 : vector<8xf32> to vector<8x1xf32>
    %cst_20 = arith.constant 3.200000e+01 : f32
    %56 = vector.broadcast %cst_20 : f32 to vector<8x1xf32>
    %57 = arith.divf %55, %56 : vector<8x1xf32>
    %58 = vector.broadcast %57 : vector<8x1xf32> to vector<8x32xf32>
    %59 = arith.subf %3, %58 : vector<8x32xf32>
    %60 = arith.mulf %59, %59 : vector<8x32xf32>
    %cst_21 = arith.constant dense<0.000000e+00> : vector<8xf32>
    %61 = vector.multi_reduction <add>, %60, %cst_21 [1] : vector<8x32xf32> to vector<8xf32>
    %62 = vector.shape_cast %61 : vector<8xf32> to vector<8x1xf32>
    %cst_22 = arith.constant 3.200000e+01 : f32
    %63 = vector.broadcast %cst_22 : f32 to vector<8x1xf32>
    %64 = arith.divf %62, %63 : vector<8x1xf32>
    %65 = vector.broadcast %57 : vector<8x1xf32> to vector<8x32xf32>
    %66 = arith.subf %3, %65 : vector<8x32xf32>
    %cst_23 = arith.constant 9.99999997E-7 : f32
    %67 = vector.broadcast %cst_23 : f32 to vector<8x1xf32>
    %68 = arith.addf %64, %67 : vector<8x1xf32>
    %69 = math.rsqrt %68 : vector<8x1xf32>
    %70 = vector.broadcast %69 : vector<8x1xf32> to vector<8x32xf32>
    %71 = arith.mulf %66, %70 : vector<8x32xf32>
    %cst_24 = arith.constant 1.000000e+00 : f32
    %72 = vector.broadcast %cst_24 : f32 to vector<1x32xf32>
    %73 = arith.addf %72, %24 : vector<1x32xf32>
    %74 = vector.broadcast %73 : vector<1x32xf32> to vector<8x32xf32>
    %75 = arith.mulf %71, %74 : vector<8x32xf32>
    %76 = vector.broadcast %23 : vector<1x32xf32> to vector<8x32xf32>
    %77 = arith.addf %75, %76 : vector<8x32xf32>
    %78 = arith.truncf %77 : vector<8x32xf32> to vector<8x32xbf16>
    %c0_25 = arith.constant 0 : index
    %c1536 = arith.constant 1536 : index
    %79 = vector.load %arg4[%c0_25, %c1536] : memref<32x3072xbf16, #tpu.memory_space<vmem>>, vector<32x384xbf16>
    %cst_26 = arith.constant dense<0.000000e+00> : vector<16x384xf32>
    %80 = tpu.matmul %53, %79, %cst_26 {dimension_numbers = #tpu.dot_dimension_numbers<[1], [0], [0], [1], [0, 0, 1, 1], [], []>} : vector<16x32xbf16>, vector<32x384xbf16>, vector<16x384xf32> -> vector<16x384xf32>
    %c0_27 = arith.constant 0 : index
    %c1536_28 = arith.constant 1536 : index
    %81 = vector.load %arg6[%c0_27, %c1536_28] : memref<1x4096xf32, #tpu.memory_space<vmem>>, vector<1x384xf32>
    %82 = vector.broadcast %81 : vector<1x384xf32> to vector<16x384xf32>
    %83 = arith.addf %80, %82 : vector<16x384xf32>
    %c0_29 = arith.constant 0 : index
    %c1920 = arith.constant 1920 : index
    %84 = vector.load %arg4[%c0_29, %c1920] : memref<32x3072xbf16, #tpu.memory_space<vmem>>, vector<32x384xbf16>
    %cst_30 = arith.constant dense<0.000000e+00> : vector<8x384xf32>
    %85 = tpu.matmul %78, %84, %cst_30 {dimension_numbers = #tpu.dot_dimension_numbers<[1], [0], [0], [1], [0, 0, 1, 1], [], []>} : vector<8x32xbf16>, vector<32x384xbf16>, vector<8x384xf32> -> vector<8x384xf32>
    %c0_31 = arith.constant 0 : index
    %c1920_32 = arith.constant 1920 : index
    %86 = vector.load %arg6[%c0_31, %c1920_32] : memref<1x4096xf32, #tpu.memory_space<vmem>>, vector<1x384xf32>
    %87 = vector.broadcast %86 : vector<1x384xf32> to vector<8x384xf32>
    %88 = arith.addf %85, %87 : vector<8x384xf32>
    %89 = vector.extract_strided_slice %83 {offsets = [0, 0], sizes = [16, 32], strides = [1, 1]} : vector<16x384xf32> to vector<16x32xf32>
    %90 = vector.extract_strided_slice %83 {offsets = [0, 128], sizes = [16, 32], strides = [1, 1]} : vector<16x384xf32> to vector<16x32xf32>
    %91 = vector.extract_strided_slice %83 {offsets = [0, 256], sizes = [16, 32], strides = [1, 1]} : vector<16x384xf32> to vector<16x32xf32>
    %92 = vector.extract_strided_slice %88 {offsets = [0, 0], sizes = [8, 32], strides = [1, 1]} : vector<8x384xf32> to vector<8x32xf32>
    %93 = vector.extract_strided_slice %88 {offsets = [0, 128], sizes = [8, 32], strides = [1, 1]} : vector<8x384xf32> to vector<8x32xf32>
    %94 = vector.extract_strided_slice %88 {offsets = [0, 256], sizes = [8, 32], strides = [1, 1]} : vector<8x384xf32> to vector<8x32xf32>
    %c0_33 = arith.constant 0 : index
    %c2816 = arith.constant 2816 : index
    %95 = vector.load %arg4[%c0_33, %c2816] : memref<32x3072xbf16, #tpu.memory_space<vmem>>, vector<32x2xbf16>
    %c0_34 = arith.constant 0 : index
    %c2944 = arith.constant 2944 : index
    %96 = vector.load %arg4[%c0_34, %c2944] : memref<32x3072xbf16, #tpu.memory_space<vmem>>, vector<2x32xbf16>
    %c0_35 = arith.constant 0 : index
    %c3072 = arith.constant 3072 : index
    %97 = vector.load %arg6[%c0_35, %c3072] : memref<1x4096xf32, #tpu.memory_space<vmem>>, vector<1x32xf32>
    %c0_36 = arith.constant 0 : index
    %c3200 = arith.constant 3200 : index
    %98 = vector.load %arg6[%c0_36, %c3200] : memref<1x4096xf32, #tpu.memory_space<vmem>>, vector<1x32xf32>
    %99 = arith.truncf %89 : vector<16x32xf32> to vector<16x32xbf16>
    %cst_37 = arith.constant dense<0.000000e+00> : vector<16x2xf32>
    %100 = tpu.matmul %99, %95, %cst_37 {dimension_numbers = #tpu.dot_dimension_numbers<[1], [0], [0], [1], [0, 0, 1, 1], [], []>} : vector<16x32xbf16>, vector<32x2xbf16>, vector<16x2xf32> -> vector<16x2xf32>
    %101 = arith.truncf %100 : vector<16x2xf32> to vector<16x2xbf16>
    %cst_38 = arith.constant dense<0.000000e+00> : vector<16x32xf32>
    %102 = tpu.matmul %101, %96, %cst_38 {dimension_numbers = #tpu.dot_dimension_numbers<[1], [0], [0], [1], [0, 0, 1, 1], [], []>} : vector<16x2xbf16>, vector<2x32xbf16>, vector<16x32xf32> -> vector<16x32xf32>
    %103 = arith.subf %89, %102 : vector<16x32xf32>
    %104 = arith.mulf %103, %103 : vector<16x32xf32>
    %105 = arith.truncf %104 : vector<16x32xf32> to vector<16x32xbf16>
    %cst_39 = arith.constant dense<0.000000e+00> : vector<16x2xf32>
    %106 = tpu.matmul %105, %95, %cst_39 {dimension_numbers = #tpu.dot_dimension_numbers<[1], [0], [0], [1], [0, 0, 1, 1], [], []>} : vector<16x32xbf16>, vector<32x2xbf16>, vector<16x2xf32> -> vector<16x2xf32>
    %107 = arith.truncf %106 : vector<16x2xf32> to vector<16x2xbf16>
    %cst_40 = arith.constant dense<0.000000e+00> : vector<16x32xf32>
    %108 = tpu.matmul %107, %96, %cst_40 {dimension_numbers = #tpu.dot_dimension_numbers<[1], [0], [0], [1], [0, 0, 1, 1], [], []>} : vector<16x2xbf16>, vector<2x32xbf16>, vector<16x32xf32> -> vector<16x32xf32>
    %cst_41 = arith.constant 9.99999974E-6 : f32
    %109 = vector.broadcast %cst_41 : f32 to vector<16x32xf32>
    %110 = arith.addf %108, %109 : vector<16x32xf32>
    %111 = math.rsqrt %110 : vector<16x32xf32>
    %112 = arith.mulf %103, %111 : vector<16x32xf32>
    %113 = vector.broadcast %97 : vector<1x32xf32> to vector<16x32xf32>
    %114 = arith.mulf %112, %113 : vector<16x32xf32>
    %115 = vector.broadcast %98 : vector<1x32xf32> to vector<16x32xf32>
    %116 = arith.addf %114, %115 : vector<16x32xf32>
    %c0_42 = arith.constant 0 : index
    %c3584 = arith.constant 3584 : index
    %117 = vector.load %arg6[%c0_42, %c3584] : memref<1x4096xf32, #tpu.memory_space<vmem>>, vector<1x32xf32>
    %c0_43 = arith.constant 0 : index
    %c3712 = arith.constant 3712 : index
    %118 = vector.load %arg6[%c0_43, %c3712] : memref<1x4096xf32, #tpu.memory_space<vmem>>, vector<1x32xf32>
    %119 = arith.truncf %92 : vector<8x32xf32> to vector<8x32xbf16>
    %cst_44 = arith.constant dense<0.000000e+00> : vector<8x2xf32>
    %120 = tpu.matmul %119, %95, %cst_44 {dimension_numbers = #tpu.dot_dimension_numbers<[1], [0], [0], [1], [0, 0, 1, 1], [], []>} : vector<8x32xbf16>, vector<32x2xbf16>, vector<8x2xf32> -> vector<8x2xf32>
    %121 = arith.truncf %120 : vector<8x2xf32> to vector<8x2xbf16>
    %cst_45 = arith.constant dense<0.000000e+00> : vector<8x32xf32>
    %122 = tpu.matmul %121, %96, %cst_45 {dimension_numbers = #tpu.dot_dimension_numbers<[1], [0], [0], [1], [0, 0, 1, 1], [], []>} : vector<8x2xbf16>, vector<2x32xbf16>, vector<8x32xf32> -> vector<8x32xf32>
    %123 = arith.subf %92, %122 : vector<8x32xf32>
    %124 = arith.mulf %123, %123 : vector<8x32xf32>
    %125 = arith.truncf %124 : vector<8x32xf32> to vector<8x32xbf16>
    %cst_46 = arith.constant dense<0.000000e+00> : vector<8x2xf32>
    %126 = tpu.matmul %125, %95, %cst_46 {dimension_numbers = #tpu.dot_dimension_numbers<[1], [0], [0], [1], [0, 0, 1, 1], [], []>} : vector<8x32xbf16>, vector<32x2xbf16>, vector<8x2xf32> -> vector<8x2xf32>
    %127 = arith.truncf %126 : vector<8x2xf32> to vector<8x2xbf16>
    %cst_47 = arith.constant dense<0.000000e+00> : vector<8x32xf32>
    %128 = tpu.matmul %127, %96, %cst_47 {dimension_numbers = #tpu.dot_dimension_numbers<[1], [0], [0], [1], [0, 0, 1, 1], [], []>} : vector<8x2xbf16>, vector<2x32xbf16>, vector<8x32xf32> -> vector<8x32xf32>
    %cst_48 = arith.constant 9.99999974E-6 : f32
    %129 = vector.broadcast %cst_48 : f32 to vector<8x32xf32>
    %130 = arith.addf %128, %129 : vector<8x32xf32>
    %131 = math.rsqrt %130 : vector<8x32xf32>
    %132 = arith.mulf %123, %131 : vector<8x32xf32>
    %133 = vector.broadcast %117 : vector<1x32xf32> to vector<8x32xf32>
    %134 = arith.mulf %132, %133 : vector<8x32xf32>
    %135 = vector.broadcast %118 : vector<1x32xf32> to vector<8x32xf32>
    %136 = arith.addf %134, %135 : vector<8x32xf32>
    %137 = tpu.concatenate %116, %136 in 0 : vector<16x32xf32>, vector<8x32xf32> -> vector<24x32xf32>
    %138 = arith.truncf %137 : vector<24x32xf32> to vector<24x32xbf16>
    %c0_49 = arith.constant 0 : index
    %c3328 = arith.constant 3328 : index
    %139 = vector.load %arg6[%c0_49, %c3328] : memref<1x4096xf32, #tpu.memory_space<vmem>>, vector<1x32xf32>
    %c0_50 = arith.constant 0 : index
    %c3456 = arith.constant 3456 : index
    %140 = vector.load %arg6[%c0_50, %c3456] : memref<1x4096xf32, #tpu.memory_space<vmem>>, vector<1x32xf32>
    %141 = arith.truncf %90 : vector<16x32xf32> to vector<16x32xbf16>
    %cst_51 = arith.constant dense<0.000000e+00> : vector<16x2xf32>
    %142 = tpu.matmul %141, %95, %cst_51 {dimension_numbers = #tpu.dot_dimension_numbers<[1], [0], [0], [1], [0, 0, 1, 1], [], []>} : vector<16x32xbf16>, vector<32x2xbf16>, vector<16x2xf32> -> vector<16x2xf32>
    %143 = arith.truncf %142 : vector<16x2xf32> to vector<16x2xbf16>
    %cst_52 = arith.constant dense<0.000000e+00> : vector<16x32xf32>
    %144 = tpu.matmul %143, %96, %cst_52 {dimension_numbers = #tpu.dot_dimension_numbers<[1], [0], [0], [1], [0, 0, 1, 1], [], []>} : vector<16x2xbf16>, vector<2x32xbf16>, vector<16x32xf32> -> vector<16x32xf32>
    %145 = arith.subf %90, %144 : vector<16x32xf32>
    %146 = arith.mulf %145, %145 : vector<16x32xf32>
    %147 = arith.truncf %146 : vector<16x32xf32> to vector<16x32xbf16>
    %cst_53 = arith.constant dense<0.000000e+00> : vector<16x2xf32>
    %148 = tpu.matmul %147, %95, %cst_53 {dimension_numbers = #tpu.dot_dimension_numbers<[1], [0], [0], [1], [0, 0, 1, 1], [], []>} : vector<16x32xbf16>, vector<32x2xbf16>, vector<16x2xf32> -> vector<16x2xf32>
    %149 = arith.truncf %148 : vector<16x2xf32> to vector<16x2xbf16>
    %cst_54 = arith.constant dense<0.000000e+00> : vector<16x32xf32>
    %150 = tpu.matmul %149, %96, %cst_54 {dimension_numbers = #tpu.dot_dimension_numbers<[1], [0], [0], [1], [0, 0, 1, 1], [], []>} : vector<16x2xbf16>, vector<2x32xbf16>, vector<16x32xf32> -> vector<16x32xf32>
    %cst_55 = arith.constant 9.99999974E-6 : f32
    %151 = vector.broadcast %cst_55 : f32 to vector<16x32xf32>
    %152 = arith.addf %150, %151 : vector<16x32xf32>
    %153 = math.rsqrt %152 : vector<16x32xf32>
    %154 = arith.mulf %145, %153 : vector<16x32xf32>
    %155 = vector.broadcast %139 : vector<1x32xf32> to vector<16x32xf32>
    %156 = arith.mulf %154, %155 : vector<16x32xf32>
    %157 = vector.broadcast %140 : vector<1x32xf32> to vector<16x32xf32>
    %158 = arith.addf %156, %157 : vector<16x32xf32>
    %c0_56 = arith.constant 0 : index
    %c3840 = arith.constant 3840 : index
    %159 = vector.load %arg6[%c0_56, %c3840] : memref<1x4096xf32, #tpu.memory_space<vmem>>, vector<1x32xf32>
    %c0_57 = arith.constant 0 : index
    %c3968 = arith.constant 3968 : index
    %160 = vector.load %arg6[%c0_57, %c3968] : memref<1x4096xf32, #tpu.memory_space<vmem>>, vector<1x32xf32>
    %161 = arith.truncf %93 : vector<8x32xf32> to vector<8x32xbf16>
    %cst_58 = arith.constant dense<0.000000e+00> : vector<8x2xf32>
    %162 = tpu.matmul %161, %95, %cst_58 {dimension_numbers = #tpu.dot_dimension_numbers<[1], [0], [0], [1], [0, 0, 1, 1], [], []>} : vector<8x32xbf16>, vector<32x2xbf16>, vector<8x2xf32> -> vector<8x2xf32>
    %163 = arith.truncf %162 : vector<8x2xf32> to vector<8x2xbf16>
    %cst_59 = arith.constant dense<0.000000e+00> : vector<8x32xf32>
    %164 = tpu.matmul %163, %96, %cst_59 {dimension_numbers = #tpu.dot_dimension_numbers<[1], [0], [0], [1], [0, 0, 1, 1], [], []>} : vector<8x2xbf16>, vector<2x32xbf16>, vector<8x32xf32> -> vector<8x32xf32>
    %165 = arith.subf %93, %164 : vector<8x32xf32>
    %166 = arith.mulf %165, %165 : vector<8x32xf32>
    %167 = arith.truncf %166 : vector<8x32xf32> to vector<8x32xbf16>
    %cst_60 = arith.constant dense<0.000000e+00> : vector<8x2xf32>
    %168 = tpu.matmul %167, %95, %cst_60 {dimension_numbers = #tpu.dot_dimension_numbers<[1], [0], [0], [1], [0, 0, 1, 1], [], []>} : vector<8x32xbf16>, vector<32x2xbf16>, vector<8x2xf32> -> vector<8x2xf32>
    %169 = arith.truncf %168 : vector<8x2xf32> to vector<8x2xbf16>
    %cst_61 = arith.constant dense<0.000000e+00> : vector<8x32xf32>
    %170 = tpu.matmul %169, %96, %cst_61 {dimension_numbers = #tpu.dot_dimension_numbers<[1], [0], [0], [1], [0, 0, 1, 1], [], []>} : vector<8x2xbf16>, vector<2x32xbf16>, vector<8x32xf32> -> vector<8x32xf32>
    %cst_62 = arith.constant 9.99999974E-6 : f32
    %171 = vector.broadcast %cst_62 : f32 to vector<8x32xf32>
    %172 = arith.addf %170, %171 : vector<8x32xf32>
    %173 = math.rsqrt %172 : vector<8x32xf32>
    %174 = arith.mulf %165, %173 : vector<8x32xf32>
    %175 = vector.broadcast %159 : vector<1x32xf32> to vector<8x32xf32>
    %176 = arith.mulf %174, %175 : vector<8x32xf32>
    %177 = vector.broadcast %160 : vector<1x32xf32> to vector<8x32xf32>
    %178 = arith.addf %176, %177 : vector<8x32xf32>
    %179 = tpu.concatenate %158, %178 in 0 : vector<16x32xf32>, vector<8x32xf32> -> vector<24x32xf32>
    %180 = arith.truncf %179 : vector<24x32xf32> to vector<24x32xbf16>
    %181 = tpu.concatenate %91, %94 in 0 : vector<16x32xf32>, vector<8x32xf32> -> vector<24x32xf32>
    %182 = arith.truncf %181 : vector<24x32xf32> to vector<24x32xbf16>
    %cst_63 = arith.constant 0.000000e+00 : f32
    %183 = vector.broadcast %cst_63 : f32 to vector<16x32xf32>
    %cst_64 = arith.constant 0.000000e+00 : f32
    %184 = vector.broadcast %cst_64 : f32 to vector<8x32xf32>
    %185 = vector.extract_strided_slice %138 {offsets = [0, 0], sizes = [24, 16], strides = [1, 1]} : vector<24x32xbf16> to vector<24x16xbf16>
    %186 = vector.extract_strided_slice %180 {offsets = [0, 0], sizes = [24, 16], strides = [1, 1]} : vector<24x32xbf16> to vector<24x16xbf16>
    %cst_65 = arith.constant dense<0.000000e+00> : vector<24x24xf32>
    %187 = tpu.matmul %185, %186, %cst_65 {dimension_numbers = #tpu.dot_dimension_numbers<[1], [1], [0], [0], [0, 0, 1, 0], [], []>} : vector<24x16xbf16>, vector<24x16xbf16>, vector<24x24xf32> -> vector<24x24xf32>
    %cst_66 = arith.constant 2.500000e-01 : f32
    %188 = vector.broadcast %cst_66 : f32 to vector<24x24xf32>
    %189 = arith.mulf %187, %188 : vector<24x24xf32>
    %cst_67 = arith.constant dense<0xFF800000> : vector<24xf32>
    %190 = vector.multi_reduction <maximumf>, %189, %cst_67 [1] : vector<24x24xf32> to vector<24xf32>
    %191 = vector.shape_cast %190 : vector<24xf32> to vector<24x1xf32>
    %192 = vector.broadcast %191 : vector<24x1xf32> to vector<24x24xf32>
    %193 = arith.subf %189, %192 : vector<24x24xf32>
    %194 = math.exp %193 : vector<24x24xf32>
    %cst_68 = arith.constant dense<0.000000e+00> : vector<24xf32>
    %195 = vector.multi_reduction <add>, %194, %cst_68 [1] : vector<24x24xf32> to vector<24xf32>
    %196 = vector.shape_cast %195 : vector<24xf32> to vector<24x1xf32>
    %197 = tpu.reciprocal %196 {approx = true} : vector<24x1xf32> -> vector<24x1xf32>
    %198 = vector.broadcast %197 : vector<24x1xf32> to vector<24x24xf32>
    %199 = arith.mulf %194, %198 : vector<24x24xf32>
    %200 = arith.truncf %199 : vector<24x24xf32> to vector<24x24xbf16>
    %201 = vector.extract_strided_slice %182 {offsets = [0, 0], sizes = [24, 16], strides = [1, 1]} : vector<24x32xbf16> to vector<24x16xbf16>
    %cst_69 = arith.constant dense<0.000000e+00> : vector<24x16xf32>
    %202 = tpu.matmul %200, %201, %cst_69 {dimension_numbers = #tpu.dot_dimension_numbers<[1], [0], [0], [1], [0, 0, 1, 1], [], []>} : vector<24x24xbf16>, vector<24x16xbf16>, vector<24x16xf32> -> vector<24x16xf32>
    %203 = arith.truncf %202 : vector<24x16xf32> to vector<24x16xbf16>
    %204 = vector.extract_strided_slice %203 {offsets = [0, 0], sizes = [16, 16], strides = [1, 1]} : vector<24x16xbf16> to vector<16x16xbf16>
    %c0_70 = arith.constant 0 : index
    %c2304 = arith.constant 2304 : index
    %205 = vector.load %arg4[%c0_70, %c2304] : memref<32x3072xbf16, #tpu.memory_space<vmem>>, vector<16x32xbf16>
    %cst_71 = arith.constant dense<0.000000e+00> : vector<16x32xf32>
    %206 = tpu.matmul %204, %205, %cst_71 {dimension_numbers = #tpu.dot_dimension_numbers<[1], [0], [0], [1], [0, 0, 1, 1], [], []>} : vector<16x16xbf16>, vector<16x32xbf16>, vector<16x32xf32> -> vector<16x32xf32>
    %207 = arith.addf %183, %206 : vector<16x32xf32>
    %208 = vector.extract_strided_slice %203 {offsets = [16, 0], sizes = [8, 16], strides = [1, 1]} : vector<24x16xbf16> to vector<8x16xbf16>
    %c0_72 = arith.constant 0 : index
    %c2432 = arith.constant 2432 : index
    %209 = vector.load %arg4[%c0_72, %c2432] : memref<32x3072xbf16, #tpu.memory_space<vmem>>, vector<16x32xbf16>
    %cst_73 = arith.constant dense<0.000000e+00> : vector<8x32xf32>
    %210 = tpu.matmul %208, %209, %cst_73 {dimension_numbers = #tpu.dot_dimension_numbers<[1], [0], [0], [1], [0, 0, 1, 1], [], []>} : vector<8x16xbf16>, vector<16x32xbf16>, vector<8x32xf32> -> vector<8x32xf32>
    %211 = arith.addf %184, %210 : vector<8x32xf32>
    %212 = vector.extract_strided_slice %138 {offsets = [0, 16], sizes = [24, 16], strides = [1, 1]} : vector<24x32xbf16> to vector<24x16xbf16>
    %213 = vector.extract_strided_slice %180 {offsets = [0, 16], sizes = [24, 16], strides = [1, 1]} : vector<24x32xbf16> to vector<24x16xbf16>
    %cst_74 = arith.constant dense<0.000000e+00> : vector<24x24xf32>
    %214 = tpu.matmul %212, %213, %cst_74 {dimension_numbers = #tpu.dot_dimension_numbers<[1], [1], [0], [0], [0, 0, 1, 0], [], []>} : vector<24x16xbf16>, vector<24x16xbf16>, vector<24x24xf32> -> vector<24x24xf32>
    %cst_75 = arith.constant 2.500000e-01 : f32
    %215 = vector.broadcast %cst_75 : f32 to vector<24x24xf32>
    %216 = arith.mulf %214, %215 : vector<24x24xf32>
    %cst_76 = arith.constant dense<0xFF800000> : vector<24xf32>
    %217 = vector.multi_reduction <maximumf>, %216, %cst_76 [1] : vector<24x24xf32> to vector<24xf32>
    %218 = vector.shape_cast %217 : vector<24xf32> to vector<24x1xf32>
    %219 = vector.broadcast %218 : vector<24x1xf32> to vector<24x24xf32>
    %220 = arith.subf %216, %219 : vector<24x24xf32>
    %221 = math.exp %220 : vector<24x24xf32>
    %cst_77 = arith.constant dense<0.000000e+00> : vector<24xf32>
    %222 = vector.multi_reduction <add>, %221, %cst_77 [1] : vector<24x24xf32> to vector<24xf32>
    %223 = vector.shape_cast %222 : vector<24xf32> to vector<24x1xf32>
    %224 = tpu.reciprocal %223 {approx = true} : vector<24x1xf32> -> vector<24x1xf32>
    %225 = vector.broadcast %224 : vector<24x1xf32> to vector<24x24xf32>
    %226 = arith.mulf %221, %225 : vector<24x24xf32>
    %227 = arith.truncf %226 : vector<24x24xf32> to vector<24x24xbf16>
    %228 = vector.extract_strided_slice %182 {offsets = [0, 16], sizes = [24, 16], strides = [1, 1]} : vector<24x32xbf16> to vector<24x16xbf16>
    %cst_78 = arith.constant dense<0.000000e+00> : vector<24x16xf32>
    %229 = tpu.matmul %227, %228, %cst_78 {dimension_numbers = #tpu.dot_dimension_numbers<[1], [0], [0], [1], [0, 0, 1, 1], [], []>} : vector<24x24xbf16>, vector<24x16xbf16>, vector<24x16xf32> -> vector<24x16xf32>
    %230 = arith.truncf %229 : vector<24x16xf32> to vector<24x16xbf16>
    %231 = vector.extract_strided_slice %230 {offsets = [0, 0], sizes = [16, 16], strides = [1, 1]} : vector<24x16xbf16> to vector<16x16xbf16>
    %c16 = arith.constant 16 : index
    %c2304_79 = arith.constant 2304 : index
    %232 = vector.load %arg4[%c16, %c2304_79] : memref<32x3072xbf16, #tpu.memory_space<vmem>>, vector<16x32xbf16>
    %cst_80 = arith.constant dense<0.000000e+00> : vector<16x32xf32>
    %233 = tpu.matmul %231, %232, %cst_80 {dimension_numbers = #tpu.dot_dimension_numbers<[1], [0], [0], [1], [0, 0, 1, 1], [], []>} : vector<16x16xbf16>, vector<16x32xbf16>, vector<16x32xf32> -> vector<16x32xf32>
    %234 = arith.addf %207, %233 : vector<16x32xf32>
    %235 = vector.extract_strided_slice %230 {offsets = [16, 0], sizes = [8, 16], strides = [1, 1]} : vector<24x16xbf16> to vector<8x16xbf16>
    %c16_81 = arith.constant 16 : index
    %c2432_82 = arith.constant 2432 : index
    %236 = vector.load %arg4[%c16_81, %c2432_82] : memref<32x3072xbf16, #tpu.memory_space<vmem>>, vector<16x32xbf16>
    %cst_83 = arith.constant dense<0.000000e+00> : vector<8x32xf32>
    %237 = tpu.matmul %235, %236, %cst_83 {dimension_numbers = #tpu.dot_dimension_numbers<[1], [0], [0], [1], [0, 0, 1, 1], [], []>} : vector<8x16xbf16>, vector<16x32xbf16>, vector<8x32xf32> -> vector<8x32xf32>
    %238 = arith.addf %211, %237 : vector<8x32xf32>
    %c0_84 = arith.constant 0 : index
    %c2304_85 = arith.constant 2304 : index
    %239 = vector.load %arg6[%c0_84, %c2304_85] : memref<1x4096xf32, #tpu.memory_space<vmem>>, vector<1x32xf32>
    %240 = vector.broadcast %239 : vector<1x32xf32> to vector<16x32xf32>
    %241 = arith.addf %234, %240 : vector<16x32xf32>
    %c0_86 = arith.constant 0 : index
    %c2432_87 = arith.constant 2432 : index
    %242 = vector.load %arg6[%c0_86, %c2432_87] : memref<1x4096xf32, #tpu.memory_space<vmem>>, vector<1x32xf32>
    %243 = vector.broadcast %242 : vector<1x32xf32> to vector<8x32xf32>
    %244 = arith.addf %238, %243 : vector<8x32xf32>
    %245 = vector.broadcast %19 : vector<1x32xf32> to vector<16x32xf32>
    %246 = arith.mulf %245, %241 : vector<16x32xf32>
    %247 = arith.addf %1, %246 : vector<16x32xf32>
    %cst_88 = arith.constant dense<0.000000e+00> : vector<16xf32>
    %248 = vector.multi_reduction <add>, %247, %cst_88 [1] : vector<16x32xf32> to vector<16xf32>
    %249 = vector.shape_cast %248 : vector<16xf32> to vector<16x1xf32>
    %cst_89 = arith.constant 3.200000e+01 : f32
    %250 = vector.broadcast %cst_89 : f32 to vector<16x1xf32>
    %251 = arith.divf %249, %250 : vector<16x1xf32>
    %252 = vector.broadcast %251 : vector<16x1xf32> to vector<16x32xf32>
    %253 = arith.subf %247, %252 : vector<16x32xf32>
    %254 = arith.mulf %253, %253 : vector<16x32xf32>
    %cst_90 = arith.constant dense<0.000000e+00> : vector<16xf32>
    %255 = vector.multi_reduction <add>, %254, %cst_90 [1] : vector<16x32xf32> to vector<16xf32>
    %256 = vector.shape_cast %255 : vector<16xf32> to vector<16x1xf32>
    %cst_91 = arith.constant 3.200000e+01 : f32
    %257 = vector.broadcast %cst_91 : f32 to vector<16x1xf32>
    %258 = arith.divf %256, %257 : vector<16x1xf32>
    %259 = vector.broadcast %251 : vector<16x1xf32> to vector<16x32xf32>
    %260 = arith.subf %247, %259 : vector<16x32xf32>
    %cst_92 = arith.constant 9.99999997E-7 : f32
    %261 = vector.broadcast %cst_92 : f32 to vector<16x1xf32>
    %262 = arith.addf %258, %261 : vector<16x1xf32>
    %263 = math.rsqrt %262 : vector<16x1xf32>
    %264 = vector.broadcast %263 : vector<16x1xf32> to vector<16x32xf32>
    %265 = arith.mulf %260, %264 : vector<16x32xf32>
    %cst_93 = arith.constant 1.000000e+00 : f32
    %266 = vector.broadcast %cst_93 : f32 to vector<1x32xf32>
    %267 = arith.addf %266, %21 : vector<1x32xf32>
    %268 = vector.broadcast %267 : vector<1x32xf32> to vector<16x32xf32>
    %269 = arith.mulf %265, %268 : vector<16x32xf32>
    %270 = vector.broadcast %20 : vector<1x32xf32> to vector<16x32xf32>
    %271 = arith.addf %269, %270 : vector<16x32xf32>
    %272 = arith.truncf %271 : vector<16x32xf32> to vector<16x32xbf16>
    %c0_94 = arith.constant 0 : index
    %c2560 = arith.constant 2560 : index
    %273 = vector.load %arg4[%c0_94, %c2560] : memref<32x3072xbf16, #tpu.memory_space<vmem>>, vector<32x128xbf16>
    %cst_95 = arith.constant dense<0.000000e+00> : vector<16x128xf32>
    %274 = tpu.matmul %272, %273, %cst_95 {dimension_numbers = #tpu.dot_dimension_numbers<[1], [0], [0], [1], [0, 0, 1, 1], [], []>} : vector<16x32xbf16>, vector<32x128xbf16>, vector<16x128xf32> -> vector<16x128xf32>
    %c0_96 = arith.constant 0 : index
    %c2560_97 = arith.constant 2560 : index
    %275 = vector.load %arg6[%c0_96, %c2560_97] : memref<1x4096xf32, #tpu.memory_space<vmem>>, vector<1x128xf32>
    %276 = vector.broadcast %275 : vector<1x128xf32> to vector<16x128xf32>
    %277 = arith.addf %274, %276 : vector<16x128xf32>
    %cst_98 = arith.constant 5.000000e-01 : f32
    %278 = vector.broadcast %cst_98 : f32 to vector<16x128xf32>
    %279 = arith.mulf %278, %277 : vector<16x128xf32>
    %cst_99 = arith.constant 4.471500e-02 : f32
    %280 = vector.broadcast %cst_99 : f32 to vector<16x128xf32>
    %281 = arith.mulf %280, %277 : vector<16x128xf32>
    %282 = arith.mulf %281, %277 : vector<16x128xf32>
    %283 = arith.mulf %282, %277 : vector<16x128xf32>
    %284 = arith.addf %277, %283 : vector<16x128xf32>
    %cst_100 = arith.constant 0.797884583 : f32
    %285 = vector.broadcast %cst_100 : f32 to vector<16x128xf32>
    %286 = arith.mulf %285, %284 : vector<16x128xf32>
    %287 = math.tanh %286 : vector<16x128xf32>
    %cst_101 = arith.constant 1.000000e+00 : f32
    %288 = vector.broadcast %cst_101 : f32 to vector<16x128xf32>
    %289 = arith.addf %288, %287 : vector<16x128xf32>
    %290 = arith.mulf %279, %289 : vector<16x128xf32>
    %291 = arith.truncf %290 : vector<16x128xf32> to vector<16x128xbf16>
    %c0_102 = arith.constant 0 : index
    %c0_103 = arith.constant 0 : index
    %292 = vector.load %arg5[%c0_102, %c0_103] : memref<128x256xbf16, #tpu.memory_space<vmem>>, vector<128x32xbf16>
    %cst_104 = arith.constant dense<0.000000e+00> : vector<16x32xf32>
    %293 = tpu.matmul %291, %292, %cst_104 {dimension_numbers = #tpu.dot_dimension_numbers<[1], [0], [0], [1], [0, 0, 1, 1], [], []>} : vector<16x128xbf16>, vector<128x32xbf16>, vector<16x32xf32> -> vector<16x32xf32>
    %c0_105 = arith.constant 0 : index
    %c2816_106 = arith.constant 2816 : index
    %294 = vector.load %arg6[%c0_105, %c2816_106] : memref<1x4096xf32, #tpu.memory_space<vmem>>, vector<1x32xf32>
    %295 = vector.broadcast %294 : vector<1x32xf32> to vector<16x32xf32>
    %296 = arith.addf %293, %295 : vector<16x32xf32>
    %297 = vector.broadcast %22 : vector<1x32xf32> to vector<16x32xf32>
    %298 = arith.mulf %297, %296 : vector<16x32xf32>
    %299 = arith.addf %247, %298 : vector<16x32xf32>
    %c0_107 = arith.constant 0 : index
    %c0_108 = arith.constant 0 : index
    %c0_109 = arith.constant 0 : index
    %300 = vector.load %arg7[%c0_107, %c0_108, %c0_109] : memref<1x16x32xf32, #tpu.memory_space<vmem>>, vector<1x16x32xf32>
    %301 = vector.shape_cast %300 : vector<1x16x32xf32> to vector<16x32xf32>
    %302 = vector.shape_cast %299 : vector<16x32xf32> to vector<1x16x32xf32>
    tpu.vector_store %arg7[%c0_107, %c0_108, %c0_109], %302 {strides = array<i32>} : memref<1x16x32xf32, #tpu.memory_space<vmem>>, vector<1x16x32xf32>,
    %303 = vector.broadcast %25 : vector<1x32xf32> to vector<8x32xf32>
    %304 = arith.mulf %303, %244 : vector<8x32xf32>
    %305 = arith.addf %3, %304 : vector<8x32xf32>
    %cst_110 = arith.constant dense<0.000000e+00> : vector<8xf32>
    %306 = vector.multi_reduction <add>, %305, %cst_110 [1] : vector<8x32xf32> to vector<8xf32>
    %307 = vector.shape_cast %306 : vector<8xf32> to vector<8x1xf32>
    %cst_111 = arith.constant 3.200000e+01 : f32
    %308 = vector.broadcast %cst_111 : f32 to vector<8x1xf32>
    %309 = arith.divf %307, %308 : vector<8x1xf32>
    %310 = vector.broadcast %309 : vector<8x1xf32> to vector<8x32xf32>
    %311 = arith.subf %305, %310 : vector<8x32xf32>
    %312 = arith.mulf %311, %311 : vector<8x32xf32>
    %cst_112 = arith.constant dense<0.000000e+00> : vector<8xf32>
    %313 = vector.multi_reduction <add>, %312, %cst_112 [1] : vector<8x32xf32> to vector<8xf32>
    %314 = vector.shape_cast %313 : vector<8xf32> to vector<8x1xf32>
    %cst_113 = arith.constant 3.200000e+01 : f32
    %315 = vector.broadcast %cst_113 : f32 to vector<8x1xf32>
    %316 = arith.divf %314, %315 : vector<8x1xf32>
    %317 = vector.broadcast %309 : vector<8x1xf32> to vector<8x32xf32>
    %318 = arith.subf %305, %317 : vector<8x32xf32>
    %cst_114 = arith.constant 9.99999997E-7 : f32
    %319 = vector.broadcast %cst_114 : f32 to vector<8x1xf32>
    %320 = arith.addf %316, %319 : vector<8x1xf32>
    %321 = math.rsqrt %320 : vector<8x1xf32>
    %322 = vector.broadcast %321 : vector<8x1xf32> to vector<8x32xf32>
    %323 = arith.mulf %318, %322 : vector<8x32xf32>
    %cst_115 = arith.constant 1.000000e+00 : f32
    %324 = vector.broadcast %cst_115 : f32 to vector<1x32xf32>
    %325 = arith.addf %324, %27 : vector<1x32xf32>
    %326 = vector.broadcast %325 : vector<1x32xf32> to vector<8x32xf32>
    %327 = arith.mulf %323, %326 : vector<8x32xf32>
    %328 = vector.broadcast %26 : vector<1x32xf32> to vector<8x32xf32>
    %329 = arith.addf %327, %328 : vector<8x32xf32>
    %330 = arith.truncf %329 : vector<8x32xf32> to vector<8x32xbf16>
    %c0_116 = arith.constant 0 : index
    %c2688 = arith.constant 2688 : index
    %331 = vector.load %arg4[%c0_116, %c2688] : memref<32x3072xbf16, #tpu.memory_space<vmem>>, vector<32x128xbf16>
    %cst_117 = arith.constant dense<0.000000e+00> : vector<8x128xf32>
    %332 = tpu.matmul %330, %331, %cst_117 {dimension_numbers = #tpu.dot_dimension_numbers<[1], [0], [0], [1], [0, 0, 1, 1], [], []>} : vector<8x32xbf16>, vector<32x128xbf16>, vector<8x128xf32> -> vector<8x128xf32>
    %c0_118 = arith.constant 0 : index
    %c2688_119 = arith.constant 2688 : index
    %333 = vector.load %arg6[%c0_118, %c2688_119] : memref<1x4096xf32, #tpu.memory_space<vmem>>, vector<1x128xf32>
    %334 = vector.broadcast %333 : vector<1x128xf32> to vector<8x128xf32>
    %335 = arith.addf %332, %334 : vector<8x128xf32>
    %cst_120 = arith.constant 5.000000e-01 : f32
    %336 = vector.broadcast %cst_120 : f32 to vector<8x128xf32>
    %337 = arith.mulf %336, %335 : vector<8x128xf32>
    %cst_121 = arith.constant 4.471500e-02 : f32
    %338 = vector.broadcast %cst_121 : f32 to vector<8x128xf32>
    %339 = arith.mulf %338, %335 : vector<8x128xf32>
    %340 = arith.mulf %339, %335 : vector<8x128xf32>
    %341 = arith.mulf %340, %335 : vector<8x128xf32>
    %342 = arith.addf %335, %341 : vector<8x128xf32>
    %cst_122 = arith.constant 0.797884583 : f32
    %343 = vector.broadcast %cst_122 : f32 to vector<8x128xf32>
    %344 = arith.mulf %343, %342 : vector<8x128xf32>
    %345 = math.tanh %344 : vector<8x128xf32>
    %cst_123 = arith.constant 1.000000e+00 : f32
    %346 = vector.broadcast %cst_123 : f32 to vector<8x128xf32>
    %347 = arith.addf %346, %345 : vector<8x128xf32>
    %348 = arith.mulf %337, %347 : vector<8x128xf32>
    %349 = arith.truncf %348 : vector<8x128xf32> to vector<8x128xbf16>
    %c0_124 = arith.constant 0 : index
    %c128 = arith.constant 128 : index
    %350 = vector.load %arg5[%c0_124, %c128] : memref<128x256xbf16, #tpu.memory_space<vmem>>, vector<128x32xbf16>
    %cst_125 = arith.constant dense<0.000000e+00> : vector<8x32xf32>
    %351 = tpu.matmul %349, %350, %cst_125 {dimension_numbers = #tpu.dot_dimension_numbers<[1], [0], [0], [1], [0, 0, 1, 1], [], []>} : vector<8x128xbf16>, vector<128x32xbf16>, vector<8x32xf32> -> vector<8x32xf32>
    %c0_126 = arith.constant 0 : index
    %c2944_127 = arith.constant 2944 : index
    %352 = vector.load %arg6[%c0_126, %c2944_127] : memref<1x4096xf32, #tpu.memory_space<vmem>>, vector<1x32xf32>
    %353 = vector.broadcast %352 : vector<1x32xf32> to vector<8x32xf32>
    %354 = arith.addf %351, %353 : vector<8x32xf32>
    %355 = vector.broadcast %28 : vector<1x32xf32> to vector<8x32xf32>
    %356 = arith.mulf %355, %354 : vector<8x32xf32>
    %357 = arith.addf %305, %356 : vector<8x32xf32>
    %c0_128 = arith.constant 0 : index
    %c0_129 = arith.constant 0 : index
    %c0_130 = arith.constant 0 : index
    %358 = vector.load %arg8[%c0_128, %c0_129, %c0_130] : memref<1x8x32xf32, #tpu.memory_space<vmem>>, vector<1x8x32xf32>
    %359 = vector.shape_cast %358 : vector<1x8x32xf32> to vector<8x32xf32>
    %360 = vector.shape_cast %357 : vector<8x32xf32> to vector<1x8x32xf32>
    tpu.vector_store %arg8[%c0_128, %c0_129, %c0_130], %360 {strides = array<i32>} : memref<1x8x32xf32, #tpu.memory_space<vmem>>, vector<1x8x32xf32>,
    return
  }
  func.func @transform_0(%arg0: i32) -> (i32, i32, i32) {
    %c0_i32 = arith.constant 0 : i32
    %c0_i32_0 = arith.constant 0 : i32
    %c0_i32_1 = arith.constant 0 : i32
    return %arg0, %c0_i32, %c0_i32_0 : i32, i32, i32
  }
  func.func @transform_1(%arg0: i32) -> (i32, i32, i32) {
    %c0_i32 = arith.constant 0 : i32
    %c0_i32_0 = arith.constant 0 : i32
    %c0_i32_1 = arith.constant 0 : i32
    return %arg0, %c0_i32, %c0_i32_0 : i32, i32, i32
  }
  func.func @transform_2(%arg0: i32) -> (i32, i32, i32) {
    %c0_i32 = arith.constant 0 : i32
    %c0_i32_0 = arith.constant 0 : i32
    %c0_i32_1 = arith.constant 0 : i32
    return %arg0, %c0_i32, %c0_i32_0 : i32, i32, i32
  }
  func.func @transform_3(%arg0: i32) -> (i32, i32) {
    %c0_i32 = arith.constant 0 : i32
    %c0_i32_0 = arith.constant 0 : i32
    %c0_i32_1 = arith.constant 0 : i32
    return %c0_i32, %c0_i32_0 : i32, i32
  }
  func.func @transform_4(%arg0: i32) -> (i32, i32) {
    %c0_i32 = arith.constant 0 : i32
    %c0_i32_0 = arith.constant 0 : i32
    %c0_i32_1 = arith.constant 0 : i32
    return %c0_i32, %c0_i32_0 : i32, i32
  }
  func.func @transform_5(%arg0: i32) -> (i32, i32) {
    %c0_i32 = arith.constant 0 : i32
    %c0_i32_0 = arith.constant 0 : i32
    %c0_i32_1 = arith.constant 0 : i32
    return %c0_i32, %c0_i32_0 : i32, i32
  }
  func.func @transform_6(%arg0: i32) -> (i32, i32, i32) {
    %c0_i32 = arith.constant 0 : i32
    %c0_i32_0 = arith.constant 0 : i32
    %c0_i32_1 = arith.constant 0 : i32
    return %arg0, %c0_i32, %c0_i32_0 : i32, i32, i32
  }
  func.func @transform_7(%arg0: i32) -> (i32, i32, i32) {
    %c0_i32 = arith.constant 0 : i32
    %c0_i32_0 = arith.constant 0 : i32
    %c0_i32_1 = arith.constant 0 : i32
    return %arg0, %c0_i32, %c0_i32_0 : i32, i32, i32
  }
}

module attributes {stable_mosaic.version = 11 : i64} {
  func.func @_joint_block_kernel(%arg0: i32, %arg1: memref<1x16x32xf32, #tpu.memory_space<vmem>>, %arg2: memref<1x8x32xf32, #tpu.memory_space<vmem>>, %arg3: memref<1x1x32xf32, #tpu.memory_space<vmem>>, %arg4: memref<32x3072xbf16, #tpu.memory_space<vmem>>, %arg5: memref<128x256xbf16, #tpu.memory_space<vmem>>, %arg6: memref<1x4096xf32, #tpu.memory_space<vmem>>, %arg7: memref<1x16x32xf32, #tpu.memory_space<vmem>>, %arg8: memref<1x8x32xf32, #tpu.memory_space<vmem>>) attributes {dimension_semantics = [#tpu.dimension_semantics<parallel>], iteration_bounds = array<i64: 2>, scalar_prefetch = 0 : i64, scratch_operands = 0 : i64, tpu.core_type = #tpu.core_type<tc>, window_params = [{transform_indices = @transform_0, window_bounds = array<i64: 1, 16, 32>}, {transform_indices = @transform_1, window_bounds = array<i64: 1, 8, 32>}, {transform_indices = @transform_2, window_bounds = array<i64: 1, 1, 32>}, {pipeline_mode = #tpu.pipeline_mode<synchronous>, transform_indices = @transform_3, window_bounds = array<i64: 32, 3072>}, {pipeline_mode = #tpu.pipeline_mode<synchronous>, transform_indices = @transform_4, window_bounds = array<i64: 128, 256>}, {pipeline_mode = #tpu.pipeline_mode<synchronous>, transform_indices = @transform_5, window_bounds = array<i64: 1, 4096>}, {transform_indices = @transform_6, window_bounds = array<i64: 1, 16, 32>}, {transform_indices = @transform_7, window_bounds = array<i64: 1, 8, 32>}]} {
    %c0 = arith.constant 0 : index
    %c0_0 = arith.constant 0 : index
    %c0_1 = arith.constant 0 : index
    %0 = vector.load %arg1[%c0, %c0_0, %c0_1] : memref<1x16x32xf32, #tpu.memory_space<vmem>>, vector<1x16x32xf32>
    %1 = vector.shape_cast %0 : vector<1x16x32xf32> to vector<16x32xf32>
    %c0_2 = arith.constant 0 : index
    %c0_3 = arith.constant 0 : index
    %c0_4 = arith.constant 0 : index
    %2 = vector.load %arg2[%c0_2, %c0_3, %c0_4] : memref<1x8x32xf32, #tpu.memory_space<vmem>>, vector<1x8x32xf32>
    %3 = vector.shape_cast %2 : vector<1x8x32xf32> to vector<8x32xf32>
    %c0_5 = arith.constant 0 : index
    %c0_6 = arith.constant 0 : index
    %c0_7 = arith.constant 0 : index
    %4 = vector.load %arg3[%c0_5, %c0_6, %c0_7] : memref<1x1x32xf32, #tpu.memory_space<vmem>>, vector<1x1x32xf32>
    %5 = vector.shape_cast %4 : vector<1x1x32xf32> to vector<1x32xf32>
    %6 = arith.negf %5 : vector<1x32xf32>
    %7 = math.exp %6 : vector<1x32xf32>
    %cst = arith.constant 1.000000e+00 : f32
    %8 = vector.broadcast %cst : f32 to vector<1x32xf32>
    %9 = arith.addf %8, %7 : vector<1x32xf32>
    %10 = arith.divf %8, %9 : vector<1x32xf32>
    %11 = arith.mulf %5, %10 : vector<1x32xf32>
    %12 = arith.truncf %11 : vector<1x32xf32> to vector<1x32xbf16>
    %c0_8 = arith.constant 0 : index
    %c0_9 = arith.constant 0 : index
    %13 = vector.load %arg4[%c0_8, %c0_9] : memref<32x3072xbf16, #tpu.memory_space<vmem>>, vector<32x1536xbf16>
    %cst_10 = arith.constant dense<0.000000e+00> : vector<1x1536xf32>
    %14 = tpu.matmul %12, %13, %cst_10 {dimension_numbers = #tpu.dot_dimension_numbers<[1], [0], [0], [1], [0, 0, 1, 1], [], []>} : vector<1x32xbf16>, vector<32x1536xbf16>, vector<1x1536xf32> -> vector<1x1536xf32>
    %c0_11 = arith.constant 0 : index
    %c0_12 = arith.constant 0 : index
    %15 = vector.load %arg6[%c0_11, %c0_12] : memref<1x4096xf32, #tpu.memory_space<vmem>>, vector<1x1536xf32>
    %16 = arith.addf %14, %15 : vector<1x1536xf32>
    %17 = vector.extract_strided_slice %16 {offsets = [0, 0], sizes = [1, 32], strides = [1, 1]} : vector<1x1536xf32> to vector<1x32xf32>
    %18 = vector.extract_strided_slice %16 {offsets = [0, 128], sizes = [1, 32], strides = [1, 1]} : vector<1x1536xf32> to vector<1x32xf32>
    %19 = vector.extract_strided_slice %16 {offsets = [0, 256], sizes = [1, 32], strides = [1, 1]} : vector<1x1536xf32> to vector<1x32xf32>
    %20 = vector.extract_strided_slice %16 {offsets = [0, 384], sizes = [1, 32], strides = [1, 1]} : vector<1x1536xf32> to vector<1x32xf32>
    %21 = vector.extract_strided_slice %16 {offsets = [0, 512], sizes = [1, 32], strides = [1, 1]} : vector<1x1536xf32> to vector<1x32xf32>
    %22 = vector.extract_strided_slice %16 {offsets = [0, 640], sizes = [1, 32], strides = [1, 1]} : vector<1x1536xf32> to vector<1x32xf32>
    %23 = vector.extract_strided_slice %16 {offsets = [0, 768], sizes = [1, 32], strides = [1, 1]} : vector<1x1536xf32> to vector<1x32xf32>
    %24 = vector.extract_strided_slice %16 {offsets = [0, 896], sizes = [1, 32], strides = [1, 1]} : vector<1x1536xf32> to vector<1x32xf32>
    %25 = vector.extract_strided_slice %16 {offsets = [0, 1024], sizes = [1, 32], strides = [1, 1]} : vector<1x1536xf32> to vector<1x32xf32>
    %26 = vector.extract_strided_slice %16 {offsets = [0, 1152], sizes = [1, 32], strides = [1, 1]} : vector<1x1536xf32> to vector<1x32xf32>
    %27 = vector.extract_strided_slice %16 {offsets = [0, 1280], sizes = [1, 32], strides = [1, 1]} : vector<1x1536xf32> to vector<1x32xf32>
    %28 = vector.extract_strided_slice %16 {offsets = [0, 1408], sizes = [1, 32], strides = [1, 1]} : vector<1x1536xf32> to vector<1x32xf32>
    %cst_13 = arith.constant dense<0.000000e+00> : vector<16xf32>
    %29 = vector.multi_reduction <add>, %1, %cst_13 [1] : vector<16x32xf32> to vector<16xf32>
    %30 = vector.shape_cast %29 : vector<16xf32> to vector<16x1xf32>
    %cst_14 = arith.constant 3.200000e+01 : f32
    %31 = vector.broadcast %cst_14 : f32 to vector<16x1xf32>
    %32 = arith.divf %30, %31 : vector<16x1xf32>
    %33 = vector.broadcast %32 : vector<16x1xf32> to vector<16x32xf32>
    %34 = arith.subf %1, %33 : vector<16x32xf32>
    %35 = arith.mulf %34, %34 : vector<16x32xf32>
    %cst_15 = arith.constant dense<0.000000e+00> : vector<16xf32>
    %36 = vector.multi_reduction <add>, %35, %cst_15 [1] : vector<16x32xf32> to vector<16xf32>
    %37 = vector.shape_cast %36 : vector<16xf32> to vector<16x1xf32>
    %cst_16 = arith.constant 3.200000e+01 : f32
    %38 = vector.broadcast %cst_16 : f32 to vector<16x1xf32>
    %39 = arith.divf %37, %38 : vector<16x1xf32>
    %40 = vector.broadcast %32 : vector<16x1xf32> to vector<16x32xf32>
    %41 = arith.subf %1, %40 : vector<16x32xf32>
    %cst_17 = arith.constant 9.99999997E-7 : f32
    %42 = vector.broadcast %cst_17 : f32 to vector<16x1xf32>
    %43 = arith.addf %39, %42 : vector<16x1xf32>
    %44 = math.rsqrt %43 : vector<16x1xf32>
    %45 = vector.broadcast %44 : vector<16x1xf32> to vector<16x32xf32>
    %46 = arith.mulf %41, %45 : vector<16x32xf32>
    %cst_18 = arith.constant 1.000000e+00 : f32
    %47 = vector.broadcast %cst_18 : f32 to vector<1x32xf32>
    %48 = arith.addf %47, %18 : vector<1x32xf32>
    %49 = vector.broadcast %48 : vector<1x32xf32> to vector<16x32xf32>
    %50 = arith.mulf %46, %49 : vector<16x32xf32>
    %51 = vector.broadcast %17 : vector<1x32xf32> to vector<16x32xf32>
    %52 = arith.addf %50, %51 : vector<16x32xf32>
    %53 = arith.truncf %52 : vector<16x32xf32> to vector<16x32xbf16>
    %cst_19 = arith.constant dense<0.000000e+00> : vector<8xf32>
    %54 = vector.multi_reduction <add>, %3, %cst_19 [1] : vector<8x32xf32> to vector<8xf32>
    %55 = vector.shape_cast %54 : vector<8xf32> to vector<8x1xf32>
    %cst_20 = arith.constant 3.200000e+01 : f32
    %56 = vector.broadcast %cst_20 : f32 to vector<8x1xf32>
    %57 = arith.divf %55, %56 : vector<8x1xf32>
    %58 = vector.broadcast %57 : vector<8x1xf32> to vector<8x32xf32>
    %59 = arith.subf %3, %58 : vector<8x32xf32>
    %60 = arith.mulf %59, %59 : vector<8x32xf32>
    %cst_21 = arith.constant dense<0.000000e+00> : vector<8xf32>
    %61 = vector.multi_reduction <add>, %60, %cst_21 [1] : vector<8x32xf32> to vector<8xf32>
    %62 = vector.shape_cast %61 : vector<8xf32> to vector<8x1xf32>
    %cst_22 = arith.constant 3.200000e+01 : f32
    %63 = vector.broadcast %cst_22 : f32 to vector<8x1xf32>
    %64 = arith.divf %62, %63 : vector<8x1xf32>
    %65 = vector.broadcast %57 : vector<8x1xf32> to vector<8x32xf32>
    %66 = arith.subf %3, %65 : vector<8x32xf32>
    %cst_23 = arith.constant 9.99999997E-7 : f32
    %67 = vector.broadcast %cst_23 : f32 to vector<8x1xf32>
    %68 = arith.addf %64, %67 : vector<8x1xf32>
    %69 = math.rsqrt %68 : vector<8x1xf32>
    %70 = vector.broadcast %69 : vector<8x1xf32> to vector<8x32xf32>
    %71 = arith.mulf %66, %70 : vector<8x32xf32>
    %cst_24 = arith.constant 1.000000e+00 : f32
    %72 = vector.broadcast %cst_24 : f32 to vector<1x32xf32>
    %73 = arith.addf %72, %24 : vector<1x32xf32>
    %74 = vector.broadcast %73 : vector<1x32xf32> to vector<8x32xf32>
    %75 = arith.mulf %71, %74 : vector<8x32xf32>
    %76 = vector.broadcast %23 : vector<1x32xf32> to vector<8x32xf32>
    %77 = arith.addf %75, %76 : vector<8x32xf32>
    %78 = arith.truncf %77 : vector<8x32xf32> to vector<8x32xbf16>
    %c0_25 = arith.constant 0 : index
    %c1536 = arith.constant 1536 : index
    %79 = vector.load %arg4[%c0_25, %c1536] : memref<32x3072xbf16, #tpu.memory_space<vmem>>, vector<32x384xbf16>
    %cst_26 = arith.constant dense<0.000000e+00> : vector<16x384xf32>
    %80 = tpu.matmul %53, %79, %cst_26 {dimension_numbers = #tpu.dot_dimension_numbers<[1], [0], [0], [1], [0, 0, 1, 1], [], []>} : vector<16x32xbf16>, vector<32x384xbf16>, vector<16x384xf32> -> vector<16x384xf32>
    %c0_27 = arith.constant 0 : index
    %c1536_28 = arith.constant 1536 : index
    %81 = vector.load %arg6[%c0_27, %c1536_28] : memref<1x4096xf32, #tpu.memory_space<vmem>>, vector<1x384xf32>
    %82 = vector.broadcast %81 : vector<1x384xf32> to vector<16x384xf32>
    %83 = arith.addf %80, %82 : vector<16x384xf32>
    %c0_29 = arith.constant 0 : index
    %c1920 = arith.constant 1920 : index
    %84 = vector.load %arg4[%c0_29, %c1920] : memref<32x3072xbf16, #tpu.memory_space<vmem>>, vector<32x384xbf16>
    %cst_30 = arith.constant dense<0.000000e+00> : vector<8x384xf32>
    %85 = tpu.matmul %78, %84, %cst_30 {dimension_numbers = #tpu.dot_dimension_numbers<[1], [0], [0], [1], [0, 0, 1, 1], [], []>} : vector<8x32xbf16>, vector<32x384xbf16>, vector<8x384xf32> -> vector<8x384xf32>
    %c0_31 = arith.constant 0 : index
    %c1920_32 = arith.constant 1920 : index
    %86 = vector.load %arg6[%c0_31, %c1920_32] : memref<1x4096xf32, #tpu.memory_space<vmem>>, vector<1x384xf32>
    %87 = vector.broadcast %86 : vector<1x384xf32> to vector<8x384xf32>
    %88 = arith.addf %85, %87 : vector<8x384xf32>
    %89 = vector.extract_strided_slice %83 {offsets = [0, 0], sizes = [16, 32], strides = [1, 1]} : vector<16x384xf32> to vector<16x32xf32>
    %90 = vector.extract_strided_slice %83 {offsets = [0, 128], sizes = [16, 32], strides = [1, 1]} : vector<16x384xf32> to vector<16x32xf32>
    %91 = vector.extract_strided_slice %83 {offsets = [0, 256], sizes = [16, 32], strides = [1, 1]} : vector<16x384xf32> to vector<16x32xf32>
    %92 = vector.extract_strided_slice %88 {offsets = [0, 0], sizes = [8, 32], strides = [1, 1]} : vector<8x384xf32> to vector<8x32xf32>
    %93 = vector.extract_strided_slice %88 {offsets = [0, 128], sizes = [8, 32], strides = [1, 1]} : vector<8x384xf32> to vector<8x32xf32>
    %94 = vector.extract_strided_slice %88 {offsets = [0, 256], sizes = [8, 32], strides = [1, 1]} : vector<8x384xf32> to vector<8x32xf32>
    %c0_33 = arith.constant 0 : index
    %c2816 = arith.constant 2816 : index
    %95 = vector.load %arg4[%c0_33, %c2816] : memref<32x3072xbf16, #tpu.memory_space<vmem>>, vector<32x2xbf16>
    %c0_34 = arith.constant 0 : index
    %c2944 = arith.constant 2944 : index
    %96 = vector.load %arg4[%c0_34, %c2944] : memref<32x3072xbf16, #tpu.memory_space<vmem>>, vector<2x32xbf16>
    %c0_35 = arith.constant 0 : index
    %c3072 = arith.constant 3072 : index
    %97 = vector.load %arg6[%c0_35, %c3072] : memref<1x4096xf32, #tpu.memory_space<vmem>>, vector<1x32xf32>
    %c0_36 = arith.constant 0 : index
    %c3200 = arith.constant 3200 : index
    %98 = vector.load %arg6[%c0_36, %c3200] : memref<1x4096xf32, #tpu.memory_space<vmem>>, vector<1x32xf32>
    %99 = arith.truncf %89 : vector<16x32xf32> to vector<16x32xbf16>
    %cst_37 = arith.constant dense<0.000000e+00> : vector<16x2xf32>
    %100 = tpu.matmul %99, %95, %cst_37 {dimension_numbers = #tpu.dot_dimension_numbers<[1], [0], [0], [1], [0, 0, 1, 1], [], []>} : vector<16x32xbf16>, vector<32x2xbf16>, vector<16x2xf32> -> vector<16x2xf32>
    %101 = arith.truncf %100 : vector<16x2xf32> to vector<16x2xbf16>
    %cst_38 = arith.constant dense<0.000000e+00> : vector<16x32xf32>
    %102 = tpu.matmul %101, %96, %cst_38 {dimension_numbers = #tpu.dot_dimension_numbers<[1], [0], [0], [1], [0, 0, 1, 1], [], []>} : vector<16x2xbf16>, vector<2x32xbf16>, vector<16x32xf32> -> vector<16x32xf32>
    %103 = arith.subf %89, %102 : vector<16x32xf32>
    %104 = arith.mulf %103, %103 : vector<16x32xf32>
    %105 = arith.truncf %104 : vector<16x32xf32> to vector<16x32xbf16>
    %cst_39 = arith.constant dense<0.000000e+00> : vector<16x2xf32>
    %106 = tpu.matmul %105, %95, %cst_39 {dimension_numbers = #tpu.dot_dimension_numbers<[1], [0], [0], [1], [0, 0, 1, 1], [], []>} : vector<16x32xbf16>, vector<32x2xbf16>, vector<16x2xf32> -> vector<16x2xf32>
    %107 = arith.truncf %106 : vector<16x2xf32> to vector<16x2xbf16>
    %cst_40 = arith.constant dense<0.000000e+00> : vector<16x32xf32>
    %108 = tpu.matmul %107, %96, %cst_40 {dimension_numbers = #tpu.dot_dimension_numbers<[1], [0], [0], [1], [0, 0, 1, 1], [], []>} : vector<16x2xbf16>, vector<2x32xbf16>, vector<16x32xf32> -> vector<16x32xf32>
    %cst_41 = arith.constant 9.99999974E-6 : f32
    %109 = vector.broadcast %cst_41 : f32 to vector<16x32xf32>
    %110 = arith.addf %108, %109 : vector<16x32xf32>
    %111 = math.rsqrt %110 : vector<16x32xf32>
    %112 = arith.mulf %103, %111 : vector<16x32xf32>
    %113 = vector.broadcast %97 : vector<1x32xf32> to vector<16x32xf32>
    %114 = arith.mulf %112, %113 : vector<16x32xf32>
    %115 = vector.broadcast %98 : vector<1x32xf32> to vector<16x32xf32>
    %116 = arith.addf %114, %115 : vector<16x32xf32>
    %c0_42 = arith.constant 0 : index
    %c3584 = arith.constant 3584 : index
    %117 = vector.load %arg6[%c0_42, %c3584] : memref<1x4096xf32, #tpu.memory_space<vmem>>, vector<1x32xf32>
    %c0_43 = arith.constant 0 : index
    %c3712 = arith.constant 3712 : index
    %118 = vector.load %arg6[%c0_43, %c3712] : memref<1x4096xf32, #tpu.memory_space<vmem>>, vector<1x32xf32>
    %119 = arith.truncf %92 : vector<8x32xf32> to vector<8x32xbf16>
    %cst_44 = arith.constant dense<0.000000e+00> : vector<8x2xf32>
    %120 = tpu.matmul %119, %95, %cst_44 {dimension_numbers = #tpu.dot_dimension_numbers<[1], [0], [0], [1], [0, 0, 1, 1], [], []>} : vector<8x32xbf16>, vector<32x2xbf16>, vector<8x2xf32> -> vector<8x2xf32>
    %121 = arith.truncf %120 : vector<8x2xf32> to vector<8x2xbf16>
    %cst_45 = arith.constant dense<0.000000e+00> : vector<8x32xf32>
    %122 = tpu.matmul %121, %96, %cst_45 {dimension_numbers = #tpu.dot_dimension_numbers<[1], [0], [0], [1], [0, 0, 1, 1], [], []>} : vector<8x2xbf16>, vector<2x32xbf16>, vector<8x32xf32> -> vector<8x32xf32>
    %123 = arith.subf %92, %122 : vector<8x32xf32>
    %124 = arith.mulf %123, %123 : vector<8x32xf32>
    %125 = arith.truncf %124 : vector<8x32xf32> to vector<8x32xbf16>
    %cst_46 = arith.constant dense<0.000000e+00> : vector<8x2xf32>
    %126 = tpu.matmul %125, %95, %cst_46 {dimension_numbers = #tpu.dot_dimension_numbers<[1], [0], [0], [1], [0, 0, 1, 1], [], []>} : vector<8x32xbf16>, vector<32x2xbf16>, vector<8x2xf32> -> vector<8x2xf32>
    %127 = arith.truncf %126 : vector<8x2xf32> to vector<8x2xbf16>
    %cst_47 = arith.constant dense<0.000000e+00> : vector<8x32xf32>
    %128 = tpu.matmul %127, %96, %cst_47 {dimension_numbers = #tpu.dot_dimension_numbers<[1], [0], [0], [1], [0, 0, 1, 1], [], []>} : vector<8x2xbf16>, vector<2x32xbf16>, vector<8x32xf32> -> vector<8x32xf32>
    %cst_48 = arith.constant 9.99999974E-6 : f32
    %129 = vector.broadcast %cst_48 : f32 to vector<8x32xf32>
    %130 = arith.addf %128, %129 : vector<8x32xf32>
    %131 = math.rsqrt %130 : vector<8x32xf32>
    %132 = arith.mulf %123, %131 : vector<8x32xf32>
    %133 = vector.broadcast %117 : vector<1x32xf32> to vector<8x32xf32>
    %134 = arith.mulf %132, %133 : vector<8x32xf32>
    %135 = vector.broadcast %118 : vector<1x32xf32> to vector<8x32xf32>
    %136 = arith.addf %134, %135 : vector<8x32xf32>
    %137 = tpu.concatenate %116, %136 in 0 : vector<16x32xf32>, vector<8x32xf32> -> vector<24x32xf32>
    %138 = arith.truncf %137 : vector<24x32xf32> to vector<24x32xbf16>
    %c0_49 = arith.constant 0 : index
    %c3328 = arith.constant 3328 : index
    %139 = vector.load %arg6[%c0_49, %c3328] : memref<1x4096xf32, #tpu.memory_space<vmem>>, vector<1x32xf32>
    %c0_50 = arith.constant 0 : index
    %c3456 = arith.constant 3456 : index
    %140 = vector.load %arg6[%c0_50, %c3456] : memref<1x4096xf32, #tpu.memory_space<vmem>>, vector<1x32xf32>
    %141 = arith.truncf %90 : vector<16x32xf32> to vector<16x32xbf16>
    %cst_51 = arith.constant dense<0.000000e+00> : vector<16x2xf32>
    %142 = tpu.matmul %141, %95, %cst_51 {dimension_numbers = #tpu.dot_dimension_numbers<[1], [0], [0], [1], [0, 0, 1, 1], [], []>} : vector<16x32xbf16>, vector<32x2xbf16>, vector<16x2xf32> -> vector<16x2xf32>
    %143 = arith.truncf %142 : vector<16x2xf32> to vector<16x2xbf16>
    %cst_52 = arith.constant dense<0.000000e+00> : vector<16x32xf32>
    %144 = tpu.matmul %143, %96, %cst_52 {dimension_numbers = #tpu.dot_dimension_numbers<[1], [0], [0], [1], [0, 0, 1, 1], [], []>} : vector<16x2xbf16>, vector<2x32xbf16>, vector<16x32xf32> -> vector<16x32xf32>
    %145 = arith.subf %90, %144 : vector<16x32xf32>
    %146 = arith.mulf %145, %145 : vector<16x32xf32>
    %147 = arith.truncf %146 : vector<16x32xf32> to vector<16x32xbf16>
    %cst_53 = arith.constant dense<0.000000e+00> : vector<16x2xf32>
    %148 = tpu.matmul %147, %95, %cst_53 {dimension_numbers = #tpu.dot_dimension_numbers<[1], [0], [0], [1], [0, 0, 1, 1], [], []>} : vector<16x32xbf16>, vector<32x2xbf16>, vector<16x2xf32> -> vector<16x2xf32>
    %149 = arith.truncf %148 : vector<16x2xf32> to vector<16x2xbf16>
    %cst_54 = arith.constant dense<0.000000e+00> : vector<16x32xf32>
    %150 = tpu.matmul %149, %96, %cst_54 {dimension_numbers = #tpu.dot_dimension_numbers<[1], [0], [0], [1], [0, 0, 1, 1], [], []>} : vector<16x2xbf16>, vector<2x32xbf16>, vector<16x32xf32> -> vector<16x32xf32>
    %cst_55 = arith.constant 9.99999974E-6 : f32
    %151 = vector.broadcast %cst_55 : f32 to vector<16x32xf32>
    %152 = arith.addf %150, %151 : vector<16x32xf32>
    %153 = math.rsqrt %152 : vector<16x32xf32>
    %154 = arith.mulf %145, %153 : vector<16x32xf32>
    %155 = vector.broadcast %139 : vector<1x32xf32> to vector<16x32xf32>
    %156 = arith.mulf %154, %155 : vector<16x32xf32>
    %157 = vector.broadcast %140 : vector<1x32xf32> to vector<16x32xf32>
    %158 = arith.addf %156, %157 : vector<16x32xf32>
    %c0_56 = arith.constant 0 : index
    %c3840 = arith.constant 3840 : index
    %159 = vector.load %arg6[%c0_56, %c3840] : memref<1x4096xf32, #tpu.memory_space<vmem>>, vector<1x32xf32>
    %c0_57 = arith.constant 0 : index
    %c3968 = arith.constant 3968 : index
    %160 = vector.load %arg6[%c0_57, %c3968] : memref<1x4096xf32, #tpu.memory_space<vmem>>, vector<1x32xf32>
    %161 = arith.truncf %93 : vector<8x32xf32> to vector<8x32xbf16>
    %cst_58 = arith.constant dense<0.000000e+00> : vector<8x2xf32>
    %162 = tpu.matmul %161, %95, %cst_58 {dimension_numbers = #tpu.dot_dimension_numbers<[1], [0], [0], [1], [0, 0, 1, 1], [], []>} : vector<8x32xbf16>, vector<32x2xbf16>, vector<8x2xf32> -> vector<8x2xf32>
    %163 = arith.truncf %162 : vector<8x2xf32> to vector<8x2xbf16>
    %cst_59 = arith.constant dense<0.000000e+00> : vector<8x32xf32>
    %164 = tpu.matmul %163, %96, %cst_59 {dimension_numbers = #tpu.dot_dimension_numbers<[1], [0], [0], [1], [0, 0, 1, 1], [], []>} : vector<8x2xbf16>, vector<2x32xbf16>, vector<8x32xf32> -> vector<8x32xf32>
    %165 = arith.subf %93, %164 : vector<8x32xf32>
    %166 = arith.mulf %165, %165 : vector<8x32xf32>
    %167 = arith.truncf %166 : vector<8x32xf32> to vector<8x32xbf16>
    %cst_60 = arith.constant dense<0.000000e+00> : vector<8x2xf32>
    %168 = tpu.matmul %167, %95, %cst_60 {dimension_numbers = #tpu.dot_dimension_numbers<[1], [0], [0], [1], [0, 0, 1, 1], [], []>} : vector<8x32xbf16>, vector<32x2xbf16>, vector<8x2xf32> -> vector<8x2xf32>
    %169 = arith.truncf %168 : vector<8x2xf32> to vector<8x2xbf16>
    %cst_61 = arith.constant dense<0.000000e+00> : vector<8x32xf32>
    %170 = tpu.matmul %169, %96, %cst_61 {dimension_numbers = #tpu.dot_dimension_numbers<[1], [0], [0], [1], [0, 0, 1, 1], [], []>} : vector<8x2xbf16>, vector<2x32xbf16>, vector<8x32xf32> -> vector<8x32xf32>
    %cst_62 = arith.constant 9.99999974E-6 : f32
    %171 = vector.broadcast %cst_62 : f32 to vector<8x32xf32>
    %172 = arith.addf %170, %171 : vector<8x32xf32>
    %173 = math.rsqrt %172 : vector<8x32xf32>
    %174 = arith.mulf %165, %173 : vector<8x32xf32>
    %175 = vector.broadcast %159 : vector<1x32xf32> to vector<8x32xf32>
    %176 = arith.mulf %174, %175 : vector<8x32xf32>
    %177 = vector.broadcast %160 : vector<1x32xf32> to vector<8x32xf32>
    %178 = arith.addf %176, %177 : vector<8x32xf32>
    %179 = tpu.concatenate %158, %178 in 0 : vector<16x32xf32>, vector<8x32xf32> -> vector<24x32xf32>
    %180 = arith.truncf %179 : vector<24x32xf32> to vector<24x32xbf16>
    %181 = tpu.concatenate %91, %94 in 0 : vector<16x32xf32>, vector<8x32xf32> -> vector<24x32xf32>
    %182 = arith.truncf %181 : vector<24x32xf32> to vector<24x32xbf16>
    %cst_63 = arith.constant 0.000000e+00 : f32
    %183 = vector.broadcast %cst_63 : f32 to vector<16x32xf32>
    %cst_64 = arith.constant 0.000000e+00 : f32
    %184 = vector.broadcast %cst_64 : f32 to vector<8x32xf32>
    %185 = vector.extract_strided_slice %138 {offsets = [0, 0], sizes = [24, 16], strides = [1, 1]} : vector<24x32xbf16> to vector<24x16xbf16>
    %186 = vector.extract_strided_slice %180 {offsets = [0, 0], sizes = [24, 16], strides = [1, 1]} : vector<24x32xbf16> to vector<24x16xbf16>
    %cst_65 = arith.constant dense<0.000000e+00> : vector<24x24xf32>
    %187 = tpu.matmul %185, %186, %cst_65 {dimension_numbers = #tpu.dot_dimension_numbers<[1], [1], [0], [0], [0, 0, 1, 0], [], []>} : vector<24x16xbf16>, vector<24x16xbf16>, vector<24x24xf32> -> vector<24x24xf32>
    %cst_66 = arith.constant 2.500000e-01 : f32
    %188 = vector.broadcast %cst_66 : f32 to vector<24x24xf32>
    %189 = arith.mulf %187, %188 : vector<24x24xf32>
    %cst_67 = arith.constant dense<0xFF800000> : vector<24xf32>
    %190 = vector.multi_reduction <maximumf>, %189, %cst_67 [1] : vector<24x24xf32> to vector<24xf32>
    %191 = vector.shape_cast %190 : vector<24xf32> to vector<24x1xf32>
    %192 = vector.broadcast %191 : vector<24x1xf32> to vector<24x24xf32>
    %193 = arith.subf %189, %192 : vector<24x24xf32>
    %194 = math.exp %193 : vector<24x24xf32>
    %cst_68 = arith.constant dense<0.000000e+00> : vector<24xf32>
    %195 = vector.multi_reduction <add>, %194, %cst_68 [1] : vector<24x24xf32> to vector<24xf32>
    %196 = vector.shape_cast %195 : vector<24xf32> to vector<24x1xf32>
    %197 = tpu.reciprocal %196 {approx = true} : vector<24x1xf32> -> vector<24x1xf32>
    %198 = vector.broadcast %197 : vector<24x1xf32> to vector<24x24xf32>
    %199 = arith.mulf %194, %198 : vector<24x24xf32>
    %200 = arith.truncf %199 : vector<24x24xf32> to vector<24x24xbf16>
    %201 = vector.extract_strided_slice %182 {offsets = [0, 0], sizes = [24, 16], strides = [1, 1]} : vector<24x32xbf16> to vector<24x16xbf16>
    %cst_69 = arith.constant dense<0.000000e+00> : vector<24x16xf32>
    %202 = tpu.matmul %200, %201, %cst_69 {dimension_numbers = #tpu.dot_dimension_numbers<[1], [0], [0], [1], [0, 0, 1, 1], [], []>} : vector<24x24xbf16>, vector<24x16xbf16>, vector<24x16xf32> -> vector<24x16xf32>
    %203 = arith.truncf %202 : vector<24x16xf32> to vector<24x16xbf16>
    %204 = vector.extract_strided_slice %203 {offsets = [0, 0], sizes = [16, 16], strides = [1, 1]} : vector<24x16xbf16> to vector<16x16xbf16>
    %c0_70 = arith.constant 0 : index
    %c2304 = arith.constant 2304 : index
    %205 = vector.load %arg4[%c0_70, %c2304] : memref<32x3072xbf16, #tpu.memory_space<vmem>>, vector<16x32xbf16>
    %cst_71 = arith.constant dense<0.000000e+00> : vector<16x32xf32>
    %206 = tpu.matmul %204, %205, %cst_71 {dimension_numbers = #tpu.dot_dimension_numbers<[1], [0], [0], [1], [0, 0, 1, 1], [], []>} : vector<16x16xbf16>, vector<16x32xbf16>, vector<16x32xf32> -> vector<16x32xf32>
    %207 = arith.addf %183, %206 : vector<16x32xf32>
    %208 = vector.extract_strided_slice %203 {offsets = [16, 0], sizes = [8, 16], strides = [1, 1]} : vector<24x16xbf16> to vector<8x16xbf16>
    %c0_72 = arith.constant 0 : index
    %c2432 = arith.constant 2432 : index
    %209 = vector.load %arg4[%c0_72, %c2432] : memref<32x3072xbf16, #tpu.memory_space<vmem>>, vector<16x32xbf16>
    %cst_73 = arith.constant dense<0.000000e+00> : vector<8x32xf32>
    %210 = tpu.matmul %208, %209, %cst_73 {dimension_numbers = #tpu.dot_dimension_numbers<[1], [0], [0], [1], [0, 0, 1, 1], [], []>} : vector<8x16xbf16>, vector<16x32xbf16>, vector<8x32xf32> -> vector<8x32xf32>
    %211 = arith.addf %184, %210 : vector<8x32xf32>
    %212 = vector.extract_strided_slice %138 {offsets = [0, 16], sizes = [24, 16], strides = [1, 1]} : vector<24x32xbf16> to vector<24x16xbf16>
    %213 = vector.extract_strided_slice %180 {offsets = [0, 16], sizes = [24, 16], strides = [1, 1]} : vector<24x32xbf16> to vector<24x16xbf16>
    %cst_74 = arith.constant dense<0.000000e+00> : vector<24x24xf32>
    %214 = tpu.matmul %212, %213, %cst_74 {dimension_numbers = #tpu.dot_dimension_numbers<[1], [1], [0], [0], [0, 0, 1, 0], [], []>} : vector<24x16xbf16>, vector<24x16xbf16>, vector<24x24xf32> -> vector<24x24xf32>
    %cst_75 = arith.constant 2.500000e-01 : f32
    %215 = vector.broadcast %cst_75 : f32 to vector<24x24xf32>
    %216 = arith.mulf %214, %215 : vector<24x24xf32>
    %cst_76 = arith.constant dense<0xFF800000> : vector<24xf32>
    %217 = vector.multi_reduction <maximumf>, %216, %cst_76 [1] : vector<24x24xf32> to vector<24xf32>
    %218 = vector.shape_cast %217 : vector<24xf32> to vector<24x1xf32>
    %219 = vector.broadcast %218 : vector<24x1xf32> to vector<24x24xf32>
    %220 = arith.subf %216, %219 : vector<24x24xf32>
    %221 = math.exp %220 : vector<24x24xf32>
    %cst_77 = arith.constant dense<0.000000e+00> : vector<24xf32>
    %222 = vector.multi_reduction <add>, %221, %cst_77 [1] : vector<24x24xf32> to vector<24xf32>
    %223 = vector.shape_cast %222 : vector<24xf32> to vector<24x1xf32>
    %224 = tpu.reciprocal %223 {approx = true} : vector<24x1xf32> -> vector<24x1xf32>
    %225 = vector.broadcast %224 : vector<24x1xf32> to vector<24x24xf32>
    %226 = arith.mulf %221, %225 : vector<24x24xf32>
    %227 = arith.truncf %226 : vector<24x24xf32> to vector<24x24xbf16>
    %228 = vector.extract_strided_slice %182 {offsets = [0, 16], sizes = [24, 16], strides = [1, 1]} : vector<24x32xbf16> to vector<24x16xbf16>
    %cst_78 = arith.constant dense<0.000000e+00> : vector<24x16xf32>
    %229 = tpu.matmul %227, %228, %cst_78 {dimension_numbers = #tpu.dot_dimension_numbers<[1], [0], [0], [1], [0, 0, 1, 1], [], []>} : vector<24x24xbf16>, vector<24x16xbf16>, vector<24x16xf32> -> vector<24x16xf32>
    %230 = arith.truncf %229 : vector<24x16xf32> to vector<24x16xbf16>
    %231 = vector.extract_strided_slice %230 {offsets = [0, 0], sizes = [16, 16], strides = [1, 1]} : vector<24x16xbf16> to vector<16x16xbf16>
    %c16 = arith.constant 16 : index
    %c2304_79 = arith.constant 2304 : index
    %232 = vector.load %arg4[%c16, %c2304_79] : memref<32x3072xbf16, #tpu.memory_space<vmem>>, vector<16x32xbf16>
    %cst_80 = arith.constant dense<0.000000e+00> : vector<16x32xf32>
    %233 = tpu.matmul %231, %232, %cst_80 {dimension_numbers = #tpu.dot_dimension_numbers<[1], [0], [0], [1], [0, 0, 1, 1], [], []>} : vector<16x16xbf16>, vector<16x32xbf16>, vector<16x32xf32> -> vector<16x32xf32>
    %234 = arith.addf %207, %233 : vector<16x32xf32>
    %235 = vector.extract_strided_slice %230 {offsets = [16, 0], sizes = [8, 16], strides = [1, 1]} : vector<24x16xbf16> to vector<8x16xbf16>
    %c16_81 = arith.constant 16 : index
    %c2432_82 = arith.constant 2432 : index
    %236 = vector.load %arg4[%c16_81, %c2432_82] : memref<32x3072xbf16, #tpu.memory_space<vmem>>, vector<16x32xbf16>
    %cst_83 = arith.constant dense<0.000000e+00> : vector<8x32xf32>
    %237 = tpu.matmul %235, %236, %cst_83 {dimension_numbers = #tpu.dot_dimension_numbers<[1], [0], [0], [1], [0, 0, 1, 1], [], []>} : vector<8x16xbf16>, vector<16x32xbf16>, vector<8x32xf32> -> vector<8x32xf32>
    %238 = arith.addf %211, %237 : vector<8x32xf32>
    %c0_84 = arith.constant 0 : index
    %c2304_85 = arith.constant 2304 : index
    %239 = vector.load %arg6[%c0_84, %c2304_85] : memref<1x4096xf32, #tpu.memory_space<vmem>>, vector<1x32xf32>
    %240 = vector.broadcast %239 : vector<1x32xf32> to vector<16x32xf32>
    %241 = arith.addf %234, %240 : vector<16x32xf32>
    %c0_86 = arith.constant 0 : index
    %c2432_87 = arith.constant 2432 : index
    %242 = vector.load %arg6[%c0_86, %c2432_87] : memref<1x4096xf32, #tpu.memory_space<vmem>>, vector<1x32xf32>
    %243 = vector.broadcast %242 : vector<1x32xf32> to vector<8x32xf32>
    %244 = arith.addf %238, %243 : vector<8x32xf32>
    %245 = vector.broadcast %19 : vector<1x32xf32> to vector<16x32xf32>
    %246 = arith.mulf %245, %241 : vector<16x32xf32>
    %247 = arith.addf %1, %246 : vector<16x32xf32>
    %cst_88 = arith.constant dense<0.000000e+00> : vector<16xf32>
    %248 = vector.multi_reduction <add>, %247, %cst_88 [1] : vector<16x32xf32> to vector<16xf32>
    %249 = vector.shape_cast %248 : vector<16xf32> to vector<16x1xf32>
    %cst_89 = arith.constant 3.200000e+01 : f32
    %250 = vector.broadcast %cst_89 : f32 to vector<16x1xf32>
    %251 = arith.divf %249, %250 : vector<16x1xf32>
    %252 = vector.broadcast %251 : vector<16x1xf32> to vector<16x32xf32>
    %253 = arith.subf %247, %252 : vector<16x32xf32>
    %254 = arith.mulf %253, %253 : vector<16x32xf32>
    %cst_90 = arith.constant dense<0.000000e+00> : vector<16xf32>
    %255 = vector.multi_reduction <add>, %254, %cst_90 [1] : vector<16x32xf32> to vector<16xf32>
    %256 = vector.shape_cast %255 : vector<16xf32> to vector<16x1xf32>
    %cst_91 = arith.constant 3.200000e+01 : f32
    %257 = vector.broadcast %cst_91 : f32 to vector<16x1xf32>
    %258 = arith.divf %256, %257 : vector<16x1xf32>
    %259 = vector.broadcast %251 : vector<16x1xf32> to vector<16x32xf32>
    %260 = arith.subf %247, %259 : vector<16x32xf32>
    %cst_92 = arith.constant 9.99999997E-7 : f32
    %261 = vector.broadcast %cst_92 : f32 to vector<16x1xf32>
    %262 = arith.addf %258, %261 : vector<16x1xf32>
    %263 = math.rsqrt %262 : vector<16x1xf32>
    %264 = vector.broadcast %263 : vector<16x1xf32> to vector<16x32xf32>
    %265 = arith.mulf %260, %264 : vector<16x32xf32>
    %cst_93 = arith.constant 1.000000e+00 : f32
    %266 = vector.broadcast %cst_93 : f32 to vector<1x32xf32>
    %267 = arith.addf %266, %21 : vector<1x32xf32>
    %268 = vector.broadcast %267 : vector<1x32xf32> to vector<16x32xf32>
    %269 = arith.mulf %265, %268 : vector<16x32xf32>
    %270 = vector.broadcast %20 : vector<1x32xf32> to vector<16x32xf32>
    %271 = arith.addf %269, %270 : vector<16x32xf32>
    %272 = arith.truncf %271 : vector<16x32xf32> to vector<16x32xbf16>
    %c0_94 = arith.constant 0 : index
    %c2560 = arith.constant 2560 : index
    %273 = vector.load %arg4[%c0_94, %c2560] : memref<32x3072xbf16, #tpu.memory_space<vmem>>, vector<32x128xbf16>
    %cst_95 = arith.constant dense<0.000000e+00> : vector<16x128xf32>
    %274 = tpu.matmul %272, %273, %cst_95 {dimension_numbers = #tpu.dot_dimension_numbers<[1], [0], [0], [1], [0, 0, 1, 1], [], []>} : vector<16x32xbf16>, vector<32x128xbf16>, vector<16x128xf32> -> vector<16x128xf32>
    %c0_96 = arith.constant 0 : index
    %c2560_97 = arith.constant 2560 : index
    %275 = vector.load %arg6[%c0_96, %c2560_97] : memref<1x4096xf32, #tpu.memory_space<vmem>>, vector<1x128xf32>
    %276 = vector.broadcast %275 : vector<1x128xf32> to vector<16x128xf32>
    %277 = arith.addf %274, %276 : vector<16x128xf32>
    %cst_98 = arith.constant 5.000000e-01 : f32
    %278 = vector.broadcast %cst_98 : f32 to vector<16x128xf32>
    %279 = arith.mulf %278, %277 : vector<16x128xf32>
    %cst_99 = arith.constant 4.471500e-02 : f32
    %280 = vector.broadcast %cst_99 : f32 to vector<16x128xf32>
    %281 = arith.mulf %280, %277 : vector<16x128xf32>
    %282 = arith.mulf %281, %277 : vector<16x128xf32>
    %283 = arith.mulf %282, %277 : vector<16x128xf32>
    %284 = arith.addf %277, %283 : vector<16x128xf32>
    %cst_100 = arith.constant 0.797884583 : f32
    %285 = vector.broadcast %cst_100 : f32 to vector<16x128xf32>
    %286 = arith.mulf %285, %284 : vector<16x128xf32>
    %287 = math.tanh %286 : vector<16x128xf32>
    %cst_101 = arith.constant 1.000000e+00 : f32
    %288 = vector.broadcast %cst_101 : f32 to vector<16x128xf32>
    %289 = arith.addf %288, %287 : vector<16x128xf32>
    %290 = arith.mulf %279, %289 : vector<16x128xf32>
    %291 = arith.truncf %290 : vector<16x128xf32> to vector<16x128xbf16>
    %c0_102 = arith.constant 0 : index
    %c0_103 = arith.constant 0 : index
    %292 = vector.load %arg5[%c0_102, %c0_103] : memref<128x256xbf16, #tpu.memory_space<vmem>>, vector<128x32xbf16>
    %cst_104 = arith.constant dense<0.000000e+00> : vector<16x32xf32>
    %293 = tpu.matmul %291, %292, %cst_104 {dimension_numbers = #tpu.dot_dimension_numbers<[1], [0], [0], [1], [0, 0, 1, 1], [], []>} : vector<16x128xbf16>, vector<128x32xbf16>, vector<16x32xf32> -> vector<16x32xf32>
    %c0_105 = arith.constant 0 : index
    %c2816_106 = arith.constant 2816 : index
    %294 = vector.load %arg6[%c0_105, %c2816_106] : memref<1x4096xf32, #tpu.memory_space<vmem>>, vector<1x32xf32>
    %295 = vector.broadcast %294 : vector<1x32xf32> to vector<16x32xf32>
    %296 = arith.addf %293, %295 : vector<16x32xf32>
    %297 = vector.broadcast %22 : vector<1x32xf32> to vector<16x32xf32>
    %298 = arith.mulf %297, %296 : vector<16x32xf32>
    %299 = arith.addf %247, %298 : vector<16x32xf32>
    %c0_107 = arith.constant 0 : index
    %c0_108 = arith.constant 0 : index
    %c0_109 = arith.constant 0 : index
    %300 = vector.load %arg7[%c0_107, %c0_108, %c0_109] : memref<1x16x32xf32, #tpu.memory_space<vmem>>, vector<1x16x32xf32>
    %301 = vector.shape_cast %300 : vector<1x16x32xf32> to vector<16x32xf32>
    %302 = vector.shape_cast %299 : vector<16x32xf32> to vector<1x16x32xf32>
    tpu.vector_store %arg7[%c0_107, %c0_108, %c0_109], %302 {strides = array<i32>} : memref<1x16x32xf32, #tpu.memory_space<vmem>>, vector<1x16x32xf32>,
    %303 = vector.broadcast %25 : vector<1x32xf32> to vector<8x32xf32>
    %304 = arith.mulf %303, %244 : vector<8x32xf32>
    %305 = arith.addf %3, %304 : vector<8x32xf32>
    %cst_110 = arith.constant dense<0.000000e+00> : vector<8xf32>
    %306 = vector.multi_reduction <add>, %305, %cst_110 [1] : vector<8x32xf32> to vector<8xf32>
    %307 = vector.shape_cast %306 : vector<8xf32> to vector<8x1xf32>
    %cst_111 = arith.constant 3.200000e+01 : f32
    %308 = vector.broadcast %cst_111 : f32 to vector<8x1xf32>
    %309 = arith.divf %307, %308 : vector<8x1xf32>
    %310 = vector.broadcast %309 : vector<8x1xf32> to vector<8x32xf32>
    %311 = arith.subf %305, %310 : vector<8x32xf32>
    %312 = arith.mulf %311, %311 : vector<8x32xf32>
    %cst_112 = arith.constant dense<0.000000e+00> : vector<8xf32>
    %313 = vector.multi_reduction <add>, %312, %cst_112 [1] : vector<8x32xf32> to vector<8xf32>
    %314 = vector.shape_cast %313 : vector<8xf32> to vector<8x1xf32>
    %cst_113 = arith.constant 3.200000e+01 : f32
    %315 = vector.broadcast %cst_113 : f32 to vector<8x1xf32>
    %316 = arith.divf %314, %315 : vector<8x1xf32>
    %317 = vector.broadcast %309 : vector<8x1xf32> to vector<8x32xf32>
    %318 = arith.subf %305, %317 : vector<8x32xf32>
    %cst_114 = arith.constant 9.99999997E-7 : f32
    %319 = vector.broadcast %cst_114 : f32 to vector<8x1xf32>
    %320 = arith.addf %316, %319 : vector<8x1xf32>
    %321 = math.rsqrt %320 : vector<8x1xf32>
    %322 = vector.broadcast %321 : vector<8x1xf32> to vector<8x32xf32>
    %323 = arith.mulf %318, %322 : vector<8x32xf32>
    %cst_115 = arith.constant 1.000000e+00 : f32
    %324 = vector.broadcast %cst_115 : f32 to vector<1x32xf32>
    %325 = arith.addf %324, %27 : vector<1x32xf32>
    %326 = vector.broadcast %325 : vector<1x32xf32> to vector<8x32xf32>
    %327 = arith.mulf %323, %326 : vector<8x32xf32>
    %328 = vector.broadcast %26 : vector<1x32xf32> to vector<8x32xf32>
    %329 = arith.addf %327, %328 : vector<8x32xf32>
    %330 = arith.truncf %329 : vector<8x32xf32> to vector<8x32xbf16>
    %c0_116 = arith.constant 0 : index
    %c2688 = arith.constant 2688 : index
    %331 = vector.load %arg4[%c0_116, %c2688] : memref<32x3072xbf16, #tpu.memory_space<vmem>>, vector<32x128xbf16>
    %cst_117 = arith.constant dense<0.000000e+00> : vector<8x128xf32>
    %332 = tpu.matmul %330, %331, %cst_117 {dimension_numbers = #tpu.dot_dimension_numbers<[1], [0], [0], [1], [0, 0, 1, 1], [], []>} : vector<8x32xbf16>, vector<32x128xbf16>, vector<8x128xf32> -> vector<8x128xf32>
    %c0_118 = arith.constant 0 : index
    %c2688_119 = arith.constant 2688 : index
    %333 = vector.load %arg6[%c0_118, %c2688_119] : memref<1x4096xf32, #tpu.memory_space<vmem>>, vector<1x128xf32>
    %334 = vector.broadcast %333 : vector<1x128xf32> to vector<8x128xf32>
    %335 = arith.addf %332, %334 : vector<8x128xf32>
    %cst_120 = arith.constant 5.000000e-01 : f32
    %336 = vector.broadcast %cst_120 : f32 to vector<8x128xf32>
    %337 = arith.mulf %336, %335 : vector<8x128xf32>
    %cst_121 = arith.constant 4.471500e-02 : f32
    %338 = vector.broadcast %cst_121 : f32 to vector<8x128xf32>
    %339 = arith.mulf %338, %335 : vector<8x128xf32>
    %340 = arith.mulf %339, %335 : vector<8x128xf32>
    %341 = arith.mulf %340, %335 : vector<8x128xf32>
    %342 = arith.addf %335, %341 : vector<8x128xf32>
    %cst_122 = arith.constant 0.797884583 : f32
    %343 = vector.broadcast %cst_122 : f32 to vector<8x128xf32>
    %344 = arith.mulf %343, %342 : vector<8x128xf32>
    %345 = math.tanh %344 : vector<8x128xf32>
    %cst_123 = arith.constant 1.000000e+00 : f32
    %346 = vector.broadcast %cst_123 : f32 to vector<8x128xf32>
    %347 = arith.addf %346, %345 : vector<8x128xf32>
    %348 = arith.mulf %337, %347 : vector<8x128xf32>
    %349 = arith.truncf %348 : vector<8x128xf32> to vector<8x128xbf16>
    %c0_124 = arith.constant 0 : index
    %c128 = arith.constant 128 : index
    %350 = vector.load %arg5[%c0_124, %c128] : memref<128x256xbf16, #tpu.memory_space<vmem>>, vector<128x32xbf16>
    %cst_125 = arith.constant dense<0.000000e+00> : vector<8x32xf32>
    %351 = tpu.matmul %349, %350, %cst_125 {dimension_numbers = #tpu.dot_dimension_numbers<[1], [0], [0], [1], [0, 0, 1, 1], [], []>} : vector<8x128xbf16>, vector<128x32xbf16>, vector<8x32xf32> -> vector<8x32xf32>
    %c0_126 = arith.constant 0 : index
    %c2944_127 = arith.constant 2944 : index
    %352 = vector.load %arg6[%c0_126, %c2944_127] : memref<1x4096xf32, #tpu.memory_space<vmem>>, vector<1x32xf32>
    %353 = vector.broadcast %352 : vector<1x32xf32> to vector<8x32xf32>
    %354 = arith.addf %351, %353 : vector<8x32xf32>
    %355 = vector.broadcast %28 : vector<1x32xf32> to vector<8x32xf32>
    %356 = arith.mulf %355, %354 : vector<8x32xf32>
    %357 = arith.addf %305, %356 : vector<8x32xf32>
    %c0_128 = arith.constant 0 : index
    %c0_129 = arith.constant 0 : index
    %c0_130 = arith.constant 0 : index
    %358 = vector.load %arg8[%c0_128, %c0_129, %c0_130] : memref<1x8x32xf32, #tpu.memory_space<vmem>>, vector<1x8x32xf32>
    %359 = vector.shape_cast %358 : vector<1x8x32xf32> to vector<8x32xf32>
    %360 = vector.shape_cast %357 : vector<8x32xf32> to vector<1x8x32xf32>
    tpu.vector_store %arg8[%c0_128, %c0_129, %c0_130], %360 {strides = array<i32>} : memref<1x8x32xf32, #tpu.memory_space<vmem>>, vector<1x8x32xf32>,
    return
  }
  func.func @transform_0(%arg0: i32) -> (i32, i32, i32) {
    %c0_i32 = arith.constant 0 : i32
    %c0_i32_0 = arith.constant 0 : i32
    %c0_i32_1 = arith.constant 0 : i32
    return %arg0, %c0_i32, %c0_i32_0 : i32, i32, i32
  }
  func.func @transform_1(%arg0: i32) -> (i32, i32, i32) {
    %c0_i32 = arith.constant 0 : i32
    %c0_i32_0 = arith.constant 0 : i32
    %c0_i32_1 = arith.constant 0 : i32
    return %arg0, %c0_i32, %c0_i32_0 : i32, i32, i32
  }
  func.func @transform_2(%arg0: i32) -> (i32, i32, i32) {
    %c0_i32 = arith.constant 0 : i32
    %c0_i32_0 = arith.constant 0 : i32
    %c0_i32_1 = arith.constant 0 : i32
    return %arg0, %c0_i32, %c0_i32_0 : i32, i32, i32
  }
  func.func @transform_3(%arg0: i32) -> (i32, i32) {
    %c0_i32 = arith.constant 0 : i32
    %c0_i32_0 = arith.constant 0 : i32
    %c0_i32_1 = arith.constant 0 : i32
    return %c0_i32, %c0_i32_0 : i32, i32
  }
  func.func @transform_4(%arg0: i32) -> (i32, i32) {
    %c0_i32 = arith.constant 0 : i32
    %c0_i32_0 = arith.constant 0 : i32
    %c0_i32_1 = arith.constant 0 : i32
    return %c0_i32, %c0_i32_0 : i32, i32
  }
  func.func @transform_5(%arg0: i32) -> (i32, i32) {
    %c0_i32 = arith.constant 0 : i32
    %c0_i32_0 = arith.constant 0 : i32
    %c0_i32_1 = arith.constant 0 : i32
    return %c0_i32, %c0_i32_0 : i32, i32
  }
  func.func @transform_6(%arg0: i32) -> (i32, i32, i32) {
    %c0_i32 = arith.constant 0 : i32
    %c0_i32_0 = arith.constant 0 : i32
    %c0_i32_1 = arith.constant 0 : i32
    return %arg0, %c0_i32, %c0_i32_0 : i32, i32, i32
  }
  func.func @transform_7(%arg0: i32) -> (i32, i32, i32) {
    %c0_i32 = arith.constant 0 : i32
    %c0_i32_0 = arith.constant 0 : i32
    %c0_i32_1 = arith.constant 0 : i32
    return %arg0, %c0_i32, %c0_i32_0 : i32, i32, i32
  }
}

</mosaic_0001>

<llo_original>
// kernel: tpu_custom_call.1
$region0: #{tpu_custom_call.1}
  #allocation0 [shape = 'u32[]', space=smem, size = 0x4, offset = 0x4, fixed_abs, tag = 'smem constant byte address 0x4 - core index']
  #allocation1 [shape = 'u32[144,128]{1,0:T(1,128)}', space=vmem, size = 0x12000, scoped, tag = 'internal scratch']
  %s0 = inlined_call_operand.hbm [shape: f32[2,16,32], index: 0, kind: input, shape index: {}]
  %s1 = inlined_call_operand.hbm [shape: f32[2,8,32], index: 1, kind: input, shape index: {}]
  %s2 = inlined_call_operand.vmem [shape: f32[2,1,32], index: 2, kind: input, shape index: {}]
  %s3 = inlined_call_operand.hbm [shape: bf16[32,3072], index: 3, kind: input, shape index: {}]
  %s4 = inlined_call_operand.hbm [shape: bf16[128,256], index: 4, kind: input, shape index: {}]
  %s5 = inlined_call_operand.hbm [shape: f32[1,4096], index: 5, kind: input, shape index: {}]
  %s6 = inlined_call_operand.hbm [shape: f32[2,16,32], index: 6, kind: output, shape index: {0}]
  %s7 = inlined_call_operand.hbm [shape: f32[2,8,32], index: 7, kind: output, shape index: {1}]
  %8 = xla_tuple %s6, %s7
  %s9 = sld [smem:[#allocation0]]
  $region85: #{tpu_custom_call.1} parent=0
    _
  %s11 = ssub.s32 1, %s9
  %s12 = scalar_select 0, %s11, %s9
  $region1: #{tpu_custom_call.1} parent=0
    #allocation2 [shape = 'u8[16384]{0}', space=vmem, size = 0x4000, scoped, tag = 'input window, operand 0']
    #allocation3 [shape = 's32[2]{0}', space=sflag, size = 0x8, scoped, tag = 'scoped memory for tpu_custom_call.1']
    #allocation4 [shape = 's32[2]{0}', space=sflag, size = 0x8, scoped, tag = 'scoped memory for tpu_custom_call.1']
    #allocation5 [shape = 'u8[8192]{0}', space=vmem, size = 0x2000, scoped, tag = 'input window, operand 1']
    #allocation6 [shape = 's32[2]{0}', space=sflag, size = 0x8, scoped, tag = 'scoped memory for tpu_custom_call.1']
    #allocation7 [shape = 'u8[196608]{0}', space=vmem, size = 0x30000, scoped, tag = 'input window, operand 3, single buffered']
    #allocation8 [shape = 'u8[65536]{0}', space=vmem, size = 0x10000, scoped, tag = 'input window, operand 4, single buffered']
    #allocation9 [shape = 's32[1]{0}', space=sflag, size = 0x4, scoped, tag = 'scoped memory for tpu_custom_call.1']
    #allocation10 [shape = 'u8[16384]{0}', space=vmem, size = 0x4000, scoped, tag = 'input window, operand 5, single buffered']
    #allocation11 [shape = 'u8[16384]{0}', space=vmem, size = 0x4000, scoped, tag = 'output window, operand 0']
    #allocation12 [shape = 'u8[8192]{0}', space=vmem, size = 0x2000, scoped, tag = 'output window, operand 1']
    #allocation13 [shape = 's32[2]{0}', space=sflag, size = 0x8, scoped, tag = 'scoped memory for tpu_custom_call.1']
    %13 = vsyncpa [#allocation3], 0
    %s14 = scalar_lea.sflag [#allocation3], 1
    %15 = vsyncpa %s14, 0
    %16 = vsyncpa [#allocation6], 0
    %s17 = scalar_lea.sflag [#allocation6], 1
    %18 = vsyncpa %s17, 0
    %19 = vsyncpa [#allocation9], 0
    %20 = vsyncpa [#allocation4], 0
    %s21 = scalar_lea.sflag [#allocation4], 1
    %22 = vsyncpa %s21, 0
    %23 = vsyncpa [#allocation13], 0
    %s24 = scalar_lea.sflag [#allocation13], 1
    %25 = vsyncpa %s24, 0
    loop: start=0, step=1, limit=4
    $region2: #{tpu_custom_call.1} parent=1 // loop_pre_header
      _
    $region3: #{tpu_custom_call.1} parent=1 // loop_header
      %s27 = sphi 0, %s31
      %p28 = scmp.ge.s32.totalorder %s27, 4
      %s37 = sphi 0, %s39
      %s40 = sphi 0, %s37
      %s41 = sphi 0, %s40
      %s57 = sphi 0, %s41
      %s63 = sphi 0, %s65
      %s66 = sphi 0, %s63
      %s67 = sphi 0, %s66
      %s83 = sphi 0, %s67
      %s89 = sphi 0, %s91
      %s92 = sphi 0, %s89
      %s93 = sphi 0, %s92
      %s109 = sphi 0, %s93
      %s113 = sphi 0, %s113
      %s115 = sphi 0, %s113
      %s116 = sphi 0, %s115
      %s130 = sphi 0, %s116
      %s134 = sphi 0, %s134
      %s136 = sphi 0, %s134
      %s137 = sphi 0, %s136
      %s151 = sphi 0, %s137
      %s155 = sphi 0, %s155
      %s157 = sphi 0, %s155
      %s158 = sphi 0, %s157
      %s172 = sphi 0, %s158
      %s178 = sphi 0, %s180
      %s181 = sphi 0, %s178
      %s182 = sphi 0, %s181
      %s198 = sphi 0, %s182
      %s204 = sphi 0, %s206
      %s207 = sphi 0, %s204
      %s208 = sphi 0, %s207
      %s224 = sphi 0, %s208
    $region4: #{tpu_custom_call.1} parent=1 // loop_header_branch
      %30 = sbr.rel (%p28) target = $region8
    $region5: #{tpu_custom_call.1} parent=1 // loop_body
      %s32 = ssub.s32 %s27, 1
      %s33 = ssub.s32 %s27, 2
      %s34 = sadd.s32 %s27, 1
      %s35 = ssub.s32 %s27, %s34
      %p36 = scmp.eq.s32.totalorder %s35, 0
      %s38 = sadd.s32 %s37, 1
      %s39 = scalar_select %p36, %s37, %s38
      %p42 = pneg %p36
      %p43 = scmp.eq.s32.totalorder %s27, 1
      %p44 = por %p42, %p43
      %p45 = scmp.ne.s32.totalorder %s37, %s40
      %p46 = scmp.eq.s32.totalorder %s27, 0
      %p47 = por %p45, %p46
      %p48 = scmp.ne.s32.totalorder %s37, %s40
      %p49 = scmp.eq.s32.totalorder %s32, 1
      %p50 = por %p48, %p49
      %p51 = scmp.ne.s32.totalorder %s40, %s41
      %p52 = scmp.eq.s32.totalorder %s32, 0
      %p53 = por %p51, %p52
      %p54 = scmp.ne.s32.totalorder %s40, %s41
      %p55 = scmp.eq.s32.totalorder %s33, 1
      %p56 = por %p54, %p55
      %p58 = scmp.ne.s32.totalorder %s41, %s57
      %p59 = scmp.eq.s32.totalorder %s33, 0
      %p60 = por %p58, %p59
      %s61 = ssub.s32 %s27, %s34
      %p62 = scmp.eq.s32.totalorder %s61, 0
      %s64 = sadd.s32 %s63, 1
      %s65 = scalar_select %p62, %s63, %s64
      %p68 = pneg %p62
      %p69 = scmp.eq.s32.totalorder %s27, 1
      %p70 = por %p68, %p69
      %p71 = scmp.ne.s32.totalorder %s63, %s66
      %p72 = scmp.eq.s32.totalorder %s27, 0
      %p73 = por %p71, %p72
      %p74 = scmp.ne.s32.totalorder %s63, %s66
      %p75 = scmp.eq.s32.totalorder %s32, 1
      %p76 = por %p74, %p75
      %p77 = scmp.ne.s32.totalorder %s66, %s67
      %p78 = scmp.eq.s32.totalorder %s32, 0
      %p79 = por %p77, %p78
      %p80 = scmp.ne.s32.totalorder %s66, %s67
      %p81 = scmp.eq.s32.totalorder %s33, 1
      %p82 = por %p80, %p81
      %p84 = scmp.ne.s32.totalorder %s67, %s83
      %p85 = scmp.eq.s32.totalorder %s33, 0
      %p86 = por %p84, %p85
      %s87 = ssub.s32 %s27, %s34
      %p88 = scmp.eq.s32.totalorder %s87, 0
      %s90 = sadd.s32 %s89, 1
      %s91 = scalar_select %p88, %s89, %s90
      %p94 = pneg %p88
      %p95 = scmp.eq.s32.totalorder %s27, 1
      %p96 = por %p94, %p95
      %p97 = scmp.ne.s32.totalorder %s89, %s92
      %p98 = scmp.eq.s32.totalorder %s27, 0
      %p99 = por %p97, %p98
      %p100 = scmp.ne.s32.totalorder %s89, %s92
      %p101 = scmp.eq.s32.totalorder %s32, 1
      %p102 = por %p100, %p101
      %p103 = scmp.ne.s32.totalorder %s92, %s93
      %p104 = scmp.eq.s32.totalorder %s32, 0
      %p105 = por %p103, %p104
      %p106 = scmp.ne.s32.totalorder %s92, %s93
      %p107 = scmp.eq.s32.totalorder %s33, 1
      %p108 = por %p106, %p107
      %p110 = scmp.ne.s32.totalorder %s93, %s109
      %p111 = scmp.eq.s32.totalorder %s33, 0
      %p112 = por %p110, %p111
      %s114 = sadd.s32 %s113, 1
      %p117 = scmp.eq.s32.totalorder %s27, 1
      %p118 = scmp.ne.s32.totalorder %s113, %s115
      %p119 = scmp.eq.s32.totalorder %s27, 0
      %p120 = por %p118, %p119
      %p121 = scmp.ne.s32.totalorder %s113, %s115
      %p122 = scmp.eq.s32.totalorder %s32, 1
      %p123 = por %p121, %p122
      %p124 = scmp.ne.s32.totalorder %s115, %s116
      %p125 = scmp.eq.s32.totalorder %s32, 0
      %p126 = por %p124, %p125
      %p127 = scmp.ne.s32.totalorder %s115, %s116
      %p128 = scmp.eq.s32.totalorder %s33, 1
      %p129 = por %p127, %p128
      %p131 = scmp.ne.s32.totalorder %s116, %s130
      %p132 = scmp.eq.s32.totalorder %s33, 0
      %p133 = por %p131, %p132
      %s135 = sadd.s32 %s134, 1
      %p138 = scmp.eq.s32.totalorder %s27, 1
      %p139 = scmp.ne.s32.totalorder %s134, %s136
      %p140 = scmp.eq.s32.totalorder %s27, 0
      %p141 = por %p139, %p140
      %p142 = scmp.ne.s32.totalorder %s134, %s136
      %p143 = scmp.eq.s32.totalorder %s32, 1
      %p144 = por %p142, %p143
      %p145 = scmp.ne.s32.totalorder %s136, %s137
      %p146 = scmp.eq.s32.totalorder %s32, 0
      %p147 = por %p145, %p146
      %p148 = scmp.ne.s32.totalorder %s136, %s137
      %p149 = scmp.eq.s32.totalorder %s33, 1
      %p150 = por %p148, %p149
      %p152 = scmp.ne.s32.totalorder %s137, %s151
      %p153 = scmp.eq.s32.totalorder %s33, 0
      %p154 = por %p152, %p153
      %s156 = sadd.s32 %s155, 1
      %p159 = scmp.eq.s32.totalorder %s27, 1
      %p160 = scmp.ne.s32.totalorder %s155, %s157
      %p161 = scmp.eq.s32.totalorder %s27, 0
      %p162 = por %p160, %p161
      %p163 = scmp.ne.s32.totalorder %s155, %s157
      %p164 = scmp.eq.s32.totalorder %s32, 1
      %p165 = por %p163, %p164
      %p166 = scmp.ne.s32.totalorder %s157, %s158
      %p167 = scmp.eq.s32.totalorder %s32, 0
      %p168 = por %p166, %p167
      %p169 = scmp.ne.s32.totalorder %s157, %s158
      %p170 = scmp.eq.s32.totalorder %s33, 1
      %p171 = por %p169, %p170
      %p173 = scmp.ne.s32.totalorder %s158, %s172
      %p174 = scmp.eq.s32.totalorder %s33, 0
      %p175 = por %p173, %p174
      %s176 = ssub.s32 %s27, %s34
      %p177 = scmp.eq.s32.totalorder %s176, 0
      %s179 = sadd.s32 %s178, 1
      %s180 = scalar_select %p177, %s178, %s179
      %p183 = pneg %p177
      %p184 = scmp.eq.s32.totalorder %s27, 1
      %p185 = por %p183, %p184
      %p186 = scmp.ne.s32.totalorder %s178, %s181
      %p187 = scmp.eq.s32.totalorder %s27, 0
      %p188 = por %p186, %p187
      %p189 = scmp.ne.s32.totalorder %s178, %s181
      %p190 = scmp.eq.s32.totalorder %s32, 1
      %p191 = por %p189, %p190
      %p192 = scmp.ne.s32.totalorder %s181, %s182
      %p193 = scmp.eq.s32.totalorder %s32, 0
      %p194 = por %p192, %p193
      %p195 = scmp.ne.s32.totalorder %s181, %s182
      %p196 = scmp.eq.s32.totalorder %s33, 1
      %p197 = por %p195, %p196
      %p199 = scmp.ne.s32.totalorder %s182, %s198
      %p200 = scmp.eq.s32.totalorder %s33, 0
      %p201 = por %p199, %p200
      %s202 = ssub.s32 %s27, %s34
      %p203 = scmp.eq.s32.totalorder %s202, 0
      %s205 = sadd.s32 %s204, 1
      %s206 = scalar_select %p203, %s204, %s205
      %p209 = pneg %p203
      %p210 = scmp.eq.s32.totalorder %s27, 1
      %p211 = por %p209, %p210
      %p212 = scmp.ne.s32.totalorder %s204, %s207
      %p213 = scmp.eq.s32.totalorder %s27, 0
      %p214 = por %p212, %p213
      %p215 = scmp.ne.s32.totalorder %s204, %s207
      %p216 = scmp.eq.s32.totalorder %s32, 1
      %p217 = por %p215, %p216
      %p218 = scmp.ne.s32.totalorder %s207, %s208
      %p219 = scmp.eq.s32.totalorder %s32, 0
      %p220 = por %p218, %p219
      %p221 = scmp.ne.s32.totalorder %s207, %s208
      %p222 = scmp.eq.s32.totalorder %s33, 1
      %p223 = por %p221, %p222
      %p225 = scmp.ne.s32.totalorder %s208, %s224
      %p226 = scmp.eq.s32.totalorder %s33, 0
      %p227 = por %p225, %p226
      %p228 = scmp.le.s32.totalorder 1, %s27
      %p229 = scmp.lt.s32.totalorder %s27, 3
      %p230 = pnand %p228, %p229
      %p231 = pneg %p230
      // Predicated region
      $region9: #{tpu_custom_call.1} parent=5 // pred_check
        _
      $region10: #{tpu_custom_call.1} parent=5 // pred_check_branch
        %233 = sbr.rel (%p230) target = $region12
      $region11: #{tpu_custom_call.1} parent=5 // pred_region
        %s234 = ssub.s32 %s27, 1
        // Predicated region
        $region13: #{tpu_custom_call.1} parent=11 // pred_check
          %p235 = pneg %p126
        $region14: #{tpu_custom_call.1} parent=11 // pred_check_branch
          %237 = sbr.rel (%p235) target = $region16
        $region15: #{tpu_custom_call.1} parent=11 // pred_region
          %s239 = ssub.s32 6144, 6144
          %240 = vsyncadd [#allocation6], %s239
          %s241 = sshll.u32 [#allocation7], 4
          %s242 = int_to_ptr.vmem [resolvable:$true] %s241
          %247 = dma.hbm_to_vmem [thread:$0]  %s3, 6144, %s242, [#allocation6], 1536, 1536, 96
        $region16: #{tpu_custom_call.1} parent=11 // pred_fallthru
          _
        // Predicated region
        $region17: #{tpu_custom_call.1} parent=11 // pred_check
          %p248 = pneg %p147
        $region18: #{tpu_custom_call.1} parent=11 // pred_check_branch
          %250 = sbr.rel (%p248) target = $region20
        $region19: #{tpu_custom_call.1} parent=11 // pred_region
          %s252 = ssub.s32 2048, 2048
          %253 = vsyncadd [#allocation9], %s252
          %s254 = sshll.u32 [#allocation8], 4
          %s255 = int_to_ptr.vmem [resolvable:$true] %s254
          %260 = dma.hbm_to_vmem [thread:$0]  %s4, 2048, %s255, [#allocation9], 128, 128, 8
        $region20: #{tpu_custom_call.1} parent=11 // pred_fallthru
          _
        // Predicated region
        $region21: #{tpu_custom_call.1} parent=11 // pred_check
          %p261 = pneg %p168
        $region22: #{tpu_custom_call.1} parent=11 // pred_check_branch
          %263 = sbr.rel (%p261) target = $region24
        $region23: #{tpu_custom_call.1} parent=11 // pred_region
          %s265 = ssub.s32 512, 512
          %266 = vsyncadd [#allocation9], %s265
          %s268 = sshll.u32 [#allocation10], 4
          %s269 = int_to_ptr.vmem [resolvable:$true] %s268
          %271 = dma.hbm_to_vmem [thread:$0]  %s5, 512, %s269, [#allocation9]
        $region24: #{tpu_custom_call.1} parent=11 // pred_fallthru
          _
      $region12: #{tpu_custom_call.1} parent=5 // pred_fallthru
        _
      %p272 = scmp.lt.s32.totalorder %s27, 2
      // Predicated region
      $region25: #{tpu_custom_call.1} parent=5 // pred_check
        %p273 = pneg %p272
      $region26: #{tpu_custom_call.1} parent=5 // pred_check_branch
        %275 = sbr.rel (%p273) target = $region28
      $region27: #{tpu_custom_call.1} parent=5 // pred_region
        // Predicated region
        $region29: #{tpu_custom_call.1} parent=27 // pred_check
          %p276 = pneg %p47
        $region30: #{tpu_custom_call.1} parent=27 // pred_check_branch
          %278 = sbr.rel (%p276) target = $region32
        $region31: #{tpu_custom_call.1} parent=27 // pred_region
          %s279 = sand.u32 %s37, 1
          %s280 = scalar_lea.sflag [#allocation3], %s279
          %s281 = sand.u32 %s37, 1
          %s282 = smul.addr %s281, 16
          %s283 = scalar_lea.vmem [#allocation2], %s282
          %s285 = ssub.s32 256, 256
          %286 = vsyncadd %s280, %s285
          %s287 = smul.addr %s27, 2
          %s288 = smul.addr %s287, 128
          %s289 = scalar_lea.hbm %s0, %s288
          %s290 = sshll.u32 %s283, 4
          %s291 = int_to_ptr.vmem [resolvable:$true] %s290
          %296 = dma.hbm_to_vmem [thread:$0]  %s289, 256, %s291, %s280, 128, 128, 8
        $region32: #{tpu_custom_call.1} parent=27 // pred_fallthru
          _
        // Predicated region
        $region33: #{tpu_custom_call.1} parent=27 // pred_check
          %p297 = pneg %p73
        $region34: #{tpu_custom_call.1} parent=27 // pred_check_branch
          %299 = sbr.rel (%p297) target = $region36
        $region35: #{tpu_custom_call.1} parent=27 // pred_region
          %s300 = sand.u32 %s27, 1
          %s301 = scalar_lea.sflag [#allocation6], %s300
          %s302 = sand.u32 %s63, 1
          %s303 = smul.addr %s302, 8
          %s304 = scalar_lea.vmem [#allocation5], %s303
          %s306 = ssub.s32 128, 128
          %307 = vsyncadd %s301, %s306
          %s308 = smul.addr %s27, 128
          %s309 = scalar_lea.hbm %s1, %s308
          %s311 = sshll.u32 %s304, 4
          %s312 = int_to_ptr.vmem [resolvable:$true] %s311
          %314 = dma.hbm_to_vmem [thread:$0]  %s309, 128, %s312, %s301
        $region36: #{tpu_custom_call.1} parent=27 // pred_fallthru
          _
        // Predicated region
        $region37: #{tpu_custom_call.1} parent=27 // pred_check
          %p315 = pneg %p99
        $region38: #{tpu_custom_call.1} parent=27 // pred_check_branch
          %317 = sbr.rel (%p315) target = $region40
        $region39: #{tpu_custom_call.1} parent=27 // pred_region
          %p318 = scmp.lt.s32.totalorder %s27, 1
          %s319 = scalar_select %p318, %s27, 1
          %s320 = scalar_lea.vmem %s2, %s319
        $region40: #{tpu_custom_call.1} parent=27 // pred_fallthru
          _
      $region28: #{tpu_custom_call.1} parent=5 // pred_fallthru
        _
      %p321 = scmp.le.s32.totalorder 1, %s27
      %p322 = scmp.lt.s32.totalorder %s27, 3
      %p323 = pnand %p321, %p322
      %p324 = pneg %p323
      // Predicated region
      $region41: #{tpu_custom_call.1} parent=5 // pred_check
        _
      $region42: #{tpu_custom_call.1} parent=5 // pred_check_branch
        %326 = sbr.rel (%p323) target = $region44
      $region43: #{tpu_custom_call.1} parent=5 // pred_region
        %s327 = ssub.s32 %s27, 1
        %s328 = sand.u32 %s40, 1
        %s329 = scalar_lea.sflag [#allocation3], %s328
        %s330 = sand.u32 %s40, 1
        %s331 = smul.addr %s330, 16
        %s332 = scalar_lea.vmem [#allocation2], %s331
        // Predicated region
        $region45: #{tpu_custom_call.1} parent=43 // pred_check
          %p333 = pneg %p53
        $region46: #{tpu_custom_call.1} parent=43 // pred_check_branch
          %335 = sbr.rel (%p333) target = $region48
        $region47: #{tpu_custom_call.1} parent=43 // pred_region
          %336 = dma.done %s329, 256
        $region48: #{tpu_custom_call.1} parent=43 // pred_fallthru
          _
        %s337 = sand.u32 %s32, 1
        %s338 = scalar_lea.sflag [#allocation6], %s337
        %s339 = sand.u32 %s66, 1
        %s340 = smul.addr %s339, 8
        %s341 = scalar_lea.vmem [#allocation5], %s340
        // Predicated region
        $region49: #{tpu_custom_call.1} parent=43 // pred_check
          %p342 = pneg %p79
        $region50: #{tpu_custom_call.1} parent=43 // pred_check_branch
          %344 = sbr.rel (%p342) target = $region52
        $region51: #{tpu_custom_call.1} parent=43 // pred_region
          %345 = dma.done %s338, 128
        $region52: #{tpu_custom_call.1} parent=43 // pred_fallthru
          _
        // Predicated region
        $region53: #{tpu_custom_call.1} parent=43 // pred_check
          %p346 = pneg %p126
        $region54: #{tpu_custom_call.1} parent=43 // pred_check_branch
          %348 = sbr.rel (%p346) target = $region56
        $region55: #{tpu_custom_call.1} parent=43 // pred_region
          %349 = dma.done [#allocation6], 6144
        $region56: #{tpu_custom_call.1} parent=43 // pred_fallthru
          _
        // Predicated region
        $region57: #{tpu_custom_call.1} parent=43 // pred_check
          %p350 = pneg %p147
        $region58: #{tpu_custom_call.1} parent=43 // pred_check_branch
          %352 = sbr.rel (%p350) target = $region60
        $region59: #{tpu_custom_call.1} parent=43 // pred_region
          %353 = dma.done [#allocation9], 2048
        $region60: #{tpu_custom_call.1} parent=43 // pred_fallthru
          _
        // Predicated region
        $region61: #{tpu_custom_call.1} parent=43 // pred_check
          %p354 = pneg %p168
        $region62: #{tpu_custom_call.1} parent=43 // pred_check_branch
          %356 = sbr.rel (%p354) target = $region64
        $region63: #{tpu_custom_call.1} parent=43 // pred_region
          %357 = dma.done [#allocation9], 512
        $region64: #{tpu_custom_call.1} parent=43 // pred_fallthru
          _
        %s358 = sand.u32 %s40, 1
        %s359 = scalar_lea.sflag [#allocation3], %s358
        %s360 = sand.u32 %s40, 1
        %s361 = smul.addr %s360, 16
        %s362 = scalar_lea.vmem [#allocation2], %s361
        %p363 = pneg %p53
        %p364 = pneg %p50
        %s365 = sand.u32 %s32, 1
        %s366 = scalar_lea.sflag [#allocation6], %s365
        %s367 = sand.u32 %s66, 1
        %s368 = smul.addr %s367, 8
        %s369 = scalar_lea.vmem [#allocation5], %s368
        %p370 = pneg %p79
        %p371 = pneg %p76
        %p372 = scmp.lt.s32.totalorder %s32, 1
        %s373 = scalar_select %p372, %s32, 1
        %s374 = scalar_lea.vmem %s2, %s373
        %p375 = pneg %p105
        %p376 = pneg %p102
        %p377 = pneg %p126
        %p378 = pneg %p123
        %p379 = pneg %p147
        %p380 = pneg %p144
        %p381 = pneg %p168
        %p382 = pneg %p165
        %p383 = pneg %p194
        %p384 = pneg %p191
        %s385 = sand.u32 %s181, 1
        %s386 = scalar_lea.sflag [#allocation4], %s385
        %s387 = sand.u32 %s181, 1
        %s388 = smul.addr %s387, 16
        %s389 = scalar_lea.vmem [#allocation11], %s388
        %p390 = pneg %p220
        %p391 = pneg %p217
        %s392 = sand.u32 %s207, 1
        %s393 = scalar_lea.sflag [#allocation13], %s392
        %s394 = sand.u32 %s207, 1
        %s395 = smul.addr %s394, 8
        %s396 = scalar_lea.vmem [#allocation12], %s395
        %p397 = scmp.lt.s32.totalorder %s32, 1
        %s398 = scalar_select %p397, %s32, 1
        %s399 = scalar_lea.vmem %s2, %s398
        %v401 = vld [vmem:[%s332] sm:$0xff]
        %v402 = vld [vmem:[%s332 + $0x8] sm:$0xff]
        %v403 = vld [vmem:[%s341] sm:$0xff]
        %v404 = vld [vmem:[%s399] sm:$0x1]
        %v405 = vxor.u32 %v404, 2147483648
        %v406 = vmul.f32 %v405, 1.442695
        %v407 = vpow.pop %v406
        %v408 = vadd.f32 %v407, 1.0
        %v409 = vrcp.pop %v408
        %v410 = vmul.f32 1.0, %v409
        %v411 = vmul.f32 %v404, %v410
        %v412 = vpack.c.bf16 %v411, %v411
        %v413 = vld [vmem:[#allocation7] sm:$0xff]
        %v414 = vld [vmem:[#allocation7 + $0x8] sm:$0xff]
        %v415 = vld [vmem:[#allocation7 + $0x10] sm:$0xff]
        %v416 = vld [vmem:[#allocation7 + $0x18] sm:$0xff]
        %v417 = vld [vmem:[#allocation7 + $0x20] sm:$0xff]
        %v418 = vld [vmem:[#allocation7 + $0x28] sm:$0xff]
        %v419 = vld [vmem:[#allocation7 + $0x60] sm:$0xff]
        %v420 = vld [vmem:[#allocation7 + $0x68] sm:$0xff]
        %v421 = vld [vmem:[#allocation7 + $0x70] sm:$0xff]
        %v422 = vld [vmem:[#allocation7 + $0x78] sm:$0xff]
        %v423 = vld [vmem:[#allocation7 + $0x80] sm:$0xff]
        %v424 = vld [vmem:[#allocation7 + $0x88] sm:$0xff]
        %v425 = vld [vmem:[#allocation7 + $0xc0] sm:$0xff]
        %v426 = vld [vmem:[#allocation7 + $0xc8] sm:$0xff]
        %v427 = vld [vmem:[#allocation7 + $0xd0] sm:$0xff]
        %v428 = vld [vmem:[#allocation7 + $0xd8] sm:$0xff]
        %v429 = vld [vmem:[#allocation7 + $0xe0] sm:$0xff]
        %v430 = vld [vmem:[#allocation7 + $0xe8] sm:$0xff]
        %v431 = vld [vmem:[#allocation7 + $0x120] sm:$0xff]
        %v432 = vld [vmem:[#allocation7 + $0x128] sm:$0xff]
        %v433 = vld [vmem:[#allocation7 + $0x130] sm:$0xff]
        %v434 = vld [vmem:[#allocation7 + $0x138] sm:$0xff]
        %v435 = vld [vmem:[#allocation7 + $0x140] sm:$0xff]
        %v436 = vld [vmem:[#allocation7 + $0x148] sm:$0xff]
        %v437 = vld [vmem:[#allocation10] sm:$0xff]
        %v438 = vld [vmem:[#allocation10 + $0x8] sm:$0xf]
        %v463 = vunpack.c.l.b16 %v413
        %v464 = vunpack.c.h.b16 %v413
        %v465 = vunpack.c.l.b16 %v414
        %v466 = vunpack.c.h.b16 %v414
        %v467 = vunpack.c.l.b16 %v415
        %v468 = vunpack.c.h.b16 %v415
        %v469 = vunpack.c.l.b16 %v416
        %v470 = vunpack.c.h.b16 %v416
        %v471 = vunpack.c.l.b16 %v417
        %v472 = vunpack.c.h.b16 %v417
        %v473 = vunpack.c.l.b16 %v418
        %v474 = vunpack.c.h.b16 %v418
        %v475 = vunpack.c.l.b16 %v419
        %v476 = vunpack.c.h.b16 %v419
        %v477 = vunpack.c.l.b16 %v420
        %v478 = vunpack.c.h.b16 %v420
        %v479 = vunpack.c.l.b16 %v421
        %v480 = vunpack.c.h.b16 %v421
        %v481 = vunpack.c.l.b16 %v422
        %v482 = vunpack.c.h.b16 %v422
        %v483 = vunpack.c.l.b16 %v423
        %v484 = vunpack.c.h.b16 %v423
        %v485 = vunpack.c.l.b16 %v424
        %v486 = vunpack.c.h.b16 %v424
        %v487 = vunpack.c.l.b16 %v425
        %v488 = vunpack.c.h.b16 %v425
        %v489 = vunpack.c.l.b16 %v426
        %v490 = vunpack.c.h.b16 %v426
        %v491 = vunpack.c.l.b16 %v427
        %v492 = vunpack.c.h.b16 %v427
        %v493 = vunpack.c.l.b16 %v428
        %v494 = vunpack.c.h.b16 %v428
        %v495 = vunpack.c.l.b16 %v429
        %v496 = vunpack.c.h.b16 %v429
        %v497 = vunpack.c.l.b16 %v430
        %v498 = vunpack.c.h.b16 %v430
        %v499 = vunpack.c.l.b16 %v431
        %v500 = vunpack.c.h.b16 %v431
        %v501 = vunpack.c.l.b16 %v432
        %v502 = vunpack.c.h.b16 %v432
        %v503 = vunpack.c.l.b16 %v433
        %v504 = vunpack.c.h.b16 %v433
        %v505 = vunpack.c.l.b16 %v434
        %v506 = vunpack.c.h.b16 %v434
        %v507 = vunpack.c.l.b16 %v435
        %v508 = vunpack.c.h.b16 %v435
        %v509 = vunpack.c.l.b16 %v436
        %v510 = vunpack.c.h.b16 %v436
        %v511 = vpack.c.b16 %v475, %v463
        %v512 = vpack.c.b16 %v476, %v464
        %v513 = vpack.c.b16 %v477, %v465
        %v514 = vpack.c.b16 %v478, %v466
        %v515 = vpack.c.b16 %v479, %v467
        %v516 = vpack.c.b16 %v480, %v468
        %v517 = vpack.c.b16 %v481, %v469
        %v518 = vpack.c.b16 %v482, %v470
        %v519 = vpack.c.b16 %v483, %v471
        %v520 = vpack.c.b16 %v484, %v472
        %v521 = vpack.c.b16 %v485, %v473
        %v522 = vpack.c.b16 %v486, %v474
        %v523 = vpack.c.b16 %v499, %v487
        %v524 = vpack.c.b16 %v500, %v488
        %v525 = vpack.c.b16 %v501, %v489
        %v526 = vpack.c.b16 %v502, %v490
        %v527 = vpack.c.b16 %v503, %v491
        %v528 = vpack.c.b16 %v504, %v492
        %v529 = vpack.c.b16 %v505, %v493
        %v530 = vpack.c.b16 %v506, %v494
        %v531 = vpack.c.b16 %v507, %v495
        %v532 = vpack.c.b16 %v508, %v496
        %v533 = vpack.c.b16 %v509, %v497
        %v534 = vpack.c.b16 %v510, %v498
        %v561 = vlaneseq
        %v562 = vshrl.u32 %v561, 7
        %v563 = vsub.s32 0, %v562
        %v564 = vrot.slane %v437, %v563
        %v565 = vlaneseq
        %v566 = vshrl.u32 %v565, 7
        %v567 = vsub.s32 1, %v566
        %v568 = vrot.slane %v437, %v567
        %v569 = vlaneseq
        %v570 = vshrl.u32 %v569, 7
        %v571 = vsub.s32 2, %v570
        %v572 = vrot.slane %v437, %v571
        %v573 = vlaneseq
        %v574 = vshrl.u32 %v573, 7
        %v575 = vsub.s32 3, %v574
        %v576 = vrot.slane %v437, %v575
        %v577 = vlaneseq
        %v578 = vshrl.u32 %v577, 7
        %v579 = vsub.s32 4, %v578
        %v580 = vrot.slane %v437, %v579
        %v581 = vlaneseq
        %v582 = vshrl.u32 %v581, 7
        %v583 = vsub.s32 5, %v582
        %v584 = vrot.slane %v437, %v583
        %v585 = vlaneseq
        %v586 = vshrl.u32 %v585, 7
        %v587 = vsub.s32 6, %v586
        %v588 = vrot.slane %v437, %v587
        %v589 = vlaneseq
        %v590 = vshrl.u32 %v589, 7
        %v591 = vsub.s32 7, %v590
        %v592 = vrot.slane %v437, %v591
        %v593 = vlaneseq
        %v594 = vshrl.u32 %v593, 7
        %v595 = vsub.s32 0, %v594
        %v596 = vrot.slane %v438, %v595
        %v597 = vlaneseq
        %v598 = vshrl.u32 %v597, 7
        %v599 = vsub.s32 1, %v598
        %v600 = vrot.slane %v438, %v599
        %v601 = vlaneseq
        %v602 = vshrl.u32 %v601, 7
        %v603 = vsub.s32 2, %v602
        %v604 = vrot.slane %v438, %v603
        %v605 = vlaneseq
        %v606 = vshrl.u32 %v605, 7
        %v607 = vsub.s32 3, %v606
        %v608 = vrot.slane %v438, %v607
        %vm621 = vcmask 261120
        %v623 = vsel %vm621, %v412, 0
        %625 = vmatprep.subr.bf16.mxu0 0
        %626 = vmatpush1.bf16.msra.mxu0 0
        %627 = vmatprep.subr.bf16.mxu0 0
        %628 = vmatpush1.bf16.msra.mxu0 0
        %629 = vmatprep.subr.bf16.mxu0 0
        %630 = vmatpush1.bf16.msra.mxu0 0
        %631 = vmatprep.subr.bf16.mxu0 0
        %632 = vmatpush1.bf16.msra.mxu0 0
        %633 = vmatprep.subr.bf16.mxu0 0
        %634 = vmatpush1.bf16.msra.mxu0 0
        %635 = vmatprep.subr.bf16.mxu0 0
        %636 = vmatpush1.bf16.msra.mxu0 0
        %637 = vmatprep.subr.bf16.mxu0 %v524
        %638 = vmatpush1.bf16.msra.mxu0 %v523
        %639 = vmatprep.subr.bf16.mxu0 %v512
        %640 = vmatpush1.bf16.msra.mxu0 %v511
        %641 = vmatprep.subr.bf16.mxu0 0
        %642 = vmatpush2.bf16.msra.mxu0 0
        %643 = vmatprep.subr.bf16.mxu0 0
        %644 = vmatpush2.bf16.msra.mxu0 0
        %645 = vmatprep.subr.bf16.mxu0 0
        %646 = vmatpush2.bf16.msra.mxu0 0
        %647 = vmatprep.subr.bf16.mxu0 0
        %648 = vmatpush2.bf16.msra.mxu0 0
        %649 = vmatprep.subr.bf16.mxu0 0
        %650 = vmatpush2.bf16.msra.mxu0 0
        %651 = vmatprep.subr.bf16.mxu0 0
        %652 = vmatpush2.bf16.msra.mxu0 0
        %653 = vmatprep.subr.bf16.mxu0 0
        %654 = vmatpush2.bf16.msra.mxu0 0
        %655 = vmatprep.subr.bf16.mxu0 0
        %656 = vmatpush2.bf16.msra.mxu0 0
        %657 = vmatprep.mubr.bf16.mxu0 0
        %658 = vmatmul.mubr.bf16.gmra.mxu0 %v623
        %v659 = vpop.f32.mrf.mxu0
        %v660 = vadd.f32 %v564, %v659
        %v661 = vpop.f32.mrf.mxu0
        %v662 = vadd.f32 %v568, %v661
        %v663 = vpop.f32.mrf.mxu0
        %v664 = vpop.f32.mrf.mxu0
        %665 = vdwg.mxu0
        %666 = vmatprep.subr.bf16.mxu0 0
        %667 = vmatpush1.bf16.msra.mxu0 0
        %668 = vmatprep.subr.bf16.mxu0 0
        %669 = vmatpush1.bf16.msra.mxu0 0
        %670 = vmatprep.subr.bf16.mxu0 0
        %671 = vmatpush1.bf16.msra.mxu0 0
        %672 = vmatprep.subr.bf16.mxu0 0
        %673 = vmatpush1.bf16.msra.mxu0 0
        %674 = vmatprep.subr.bf16.mxu0 0
        %675 = vmatpush1.bf16.msra.mxu0 0
        %676 = vmatprep.subr.bf16.mxu0 0
        %677 = vmatpush1.bf16.msra.mxu0 0
        %678 = vmatprep.subr.bf16.mxu0 %v526
        %679 = vmatpush1.bf16.msra.mxu0 %v525
        %680 = vmatprep.subr.bf16.mxu0 %v514
        %681 = vmatpush1.bf16.msra.mxu0 %v513
        %682 = vmatprep.subr.bf16.mxu0 0
        %683 = vmatpush2.bf16.msra.mxu0 0
        %684 = vmatprep.subr.bf16.mxu0 0
        %685 = vmatpush2.bf16.msra.mxu0 0
        %686 = vmatprep.subr.bf16.mxu0 0
        %687 = vmatpush2.bf16.msra.mxu0 0
        %688 = vmatprep.subr.bf16.mxu0 0
        %689 = vmatpush2.bf16.msra.mxu0 0
        %690 = vmatprep.subr.bf16.mxu0 0
        %691 = vmatpush2.bf16.msra.mxu0 0
        %692 = vmatprep.subr.bf16.mxu0 0
        %693 = vmatpush2.bf16.msra.mxu0 0
        %694 = vmatprep.subr.bf16.mxu0 0
        %695 = vmatpush2.bf16.msra.mxu0 0
        %696 = vmatprep.subr.bf16.mxu0 0
        %697 = vmatpush2.bf16.msra.mxu0 0
        %698 = vmatprep.mubr.bf16.mxu0 0
        %699 = vmatmul.mubr.bf16.gmra.mxu0 %v623
        %v700 = vpop.f32.mrf.mxu0
        %v701 = vadd.f32 %v572, %v700
        %v702 = vpop.f32.mrf.mxu0
        %v703 = vadd.f32 %v576, %v702
        %v704 = vpop.f32.mrf.mxu0
        %v705 = vpop.f32.mrf.mxu0
        %706 = vdwg.mxu0
        %707 = vmatprep.subr.bf16.mxu0 0
        %708 = vmatpush1.bf16.msra.mxu0 0
        %709 = vmatprep.subr.bf16.mxu0 0
        %710 = vmatpush1.bf16.msra.mxu0 0
        %711 = vmatprep.subr.bf16.mxu0 0
        %712 = vmatpush1.bf16.msra.mxu0 0
        %713 = vmatprep.subr.bf16.mxu0 0
        %714 = vmatpush1.bf16.msra.mxu0 0
        %715 = vmatprep.subr.bf16.mxu0 0
        %716 = vmatpush1.bf16.msra.mxu0 0
        %717 = vmatprep.subr.bf16.mxu0 0
        %718 = vmatpush1.bf16.msra.mxu0 0
        %719 = vmatprep.subr.bf16.mxu0 %v528
        %720 = vmatpush1.bf16.msra.mxu0 %v527
        %721 = vmatprep.subr.bf16.mxu0 %v516
        %722 = vmatpush1.bf16.msra.mxu0 %v515
        %723 = vmatprep.subr.bf16.mxu0 0
        %724 = vmatpush2.bf16.msra.mxu0 0
        %725 = vmatprep.subr.bf16.mxu0 0
        %726 = vmatpush2.bf16.msra.mxu0 0
        %727 = vmatprep.subr.bf16.mxu0 0
        %728 = vmatpush2.bf16.msra.mxu0 0
        %729 = vmatprep.subr.bf16.mxu0 0
        %730 = vmatpush2.bf16.msra.mxu0 0
        %731 = vmatprep.subr.bf16.mxu0 0
        %732 = vmatpush2.bf16.msra.mxu0 0
        %733 = vmatprep.subr.bf16.mxu0 0
        %734 = vmatpush2.bf16.msra.mxu0 0
        %735 = vmatprep.subr.bf16.mxu0 0
        %736 = vmatpush2.bf16.msra.mxu0 0
        %737 = vmatprep.subr.bf16.mxu0 0
        %738 = vmatpush2.bf16.msra.mxu0 0
        %739 = vmatprep.mubr.bf16.mxu0 0
        %740 = vmatmul.mubr.bf16.gmra.mxu0 %v623
        %v741 = vpop.f32.mrf.mxu0
        %v742 = vadd.f32 %v580, %v741
        %v743 = vpop.f32.mrf.mxu0
        %v744 = vadd.f32 %v584, %v743
        %v745 = vpop.f32.mrf.mxu0
        %v746 = vpop.f32.mrf.mxu0
        %747 = vdwg.mxu0
        %748 = vmatprep.subr.bf16.mxu0 0
        %749 = vmatpush1.bf16.msra.mxu0 0
        %750 = vmatprep.subr.bf16.mxu0 0
        %751 = vmatpush1.bf16.msra.mxu0 0
        %752 = vmatprep.subr.bf16.mxu0 0
        %753 = vmatpush1.bf16.msra.mxu0 0
        %754 = vmatprep.subr.bf16.mxu0 0
        %755 = vmatpush1.bf16.msra.mxu0 0
        %756 = vmatprep.subr.bf16.mxu0 0
        %757 = vmatpush1.bf16.msra.mxu0 0
        %758 = vmatprep.subr.bf16.mxu0 0
        %759 = vmatpush1.bf16.msra.mxu0 0
        %760 = vmatprep.subr.bf16.mxu0 %v530
        %761 = vmatpush1.bf16.msra.mxu0 %v529
        %762 = vmatprep.subr.bf16.mxu0 %v518
        %763 = vmatpush1.bf16.msra.mxu0 %v517
        %764 = vmatprep.subr.bf16.mxu0 0
        %765 = vmatpush2.bf16.msra.mxu0 0
        %766 = vmatprep.subr.bf16.mxu0 0
        %767 = vmatpush2.bf16.msra.mxu0 0
        %768 = vmatprep.subr.bf16.mxu0 0
        %769 = vmatpush2.bf16.msra.mxu0 0
        %770 = vmatprep.subr.bf16.mxu0 0
        %771 = vmatpush2.bf16.msra.mxu0 0
        %772 = vmatprep.subr.bf16.mxu0 0
        %773 = vmatpush2.bf16.msra.mxu0 0
        %774 = vmatprep.subr.bf16.mxu0 0
        %775 = vmatpush2.bf16.msra.mxu0 0
        %776 = vmatprep.subr.bf16.mxu0 0
        %777 = vmatpush2.bf16.msra.mxu0 0
        %778 = vmatprep.subr.bf16.mxu0 0
        %779 = vmatpush2.bf16.msra.mxu0 0
        %780 = vmatprep.mubr.bf16.mxu0 0
        %781 = vmatmul.mubr.bf16.gmra.mxu0 %v623
        %v782 = vpop.f32.mrf.mxu0
        %v783 = vadd.f32 %v588, %v782
        %v784 = vpop.f32.mrf.mxu0
        %v785 = vadd.f32 %v592, %v784
        %v786 = vpop.f32.mrf.mxu0
        %v787 = vpop.f32.mrf.mxu0
        %788 = vdwg.mxu0
        %789 = vmatprep.subr.bf16.mxu0 0
        %790 = vmatpush1.bf16.msra.mxu0 0
        %791 = vmatprep.subr.bf16.mxu0 0
        %792 = vmatpush1.bf16.msra.mxu0 0
        %793 = vmatprep.subr.bf16.mxu0 0
        %794 = vmatpush1.bf16.msra.mxu0 0
        %795 = vmatprep.subr.bf16.mxu0 0
        %796 = vmatpush1.bf16.msra.mxu0 0
        %797 = vmatprep.subr.bf16.mxu0 0
        %798 = vmatpush1.bf16.msra.mxu0 0
        %799 = vmatprep.subr.bf16.mxu0 0
        %800 = vmatpush1.bf16.msra.mxu0 0
        %801 = vmatprep.subr.bf16.mxu0 %v532
        %802 = vmatpush1.bf16.msra.mxu0 %v531
        %803 = vmatprep.subr.bf16.mxu0 %v520
        %804 = vmatpush1.bf16.msra.mxu0 %v519
        %805 = vmatprep.subr.bf16.mxu0 0
        %806 = vmatpush2.bf16.msra.mxu0 0
        %807 = vmatprep.subr.bf16.mxu0 0
        %808 = vmatpush2.bf16.msra.mxu0 0
        %809 = vmatprep.subr.bf16.mxu0 0
        %810 = vmatpush2.bf16.msra.mxu0 0
        %811 = vmatprep.subr.bf16.mxu0 0
        %812 = vmatpush2.bf16.msra.mxu0 0
        %813 = vmatprep.subr.bf16.mxu0 0
        %814 = vmatpush2.bf16.msra.mxu0 0
        %815 = vmatprep.subr.bf16.mxu0 0
        %816 = vmatpush2.bf16.msra.mxu0 0
        %817 = vmatprep.subr.bf16.mxu0 0
        %818 = vmatpush2.bf16.msra.mxu0 0
        %819 = vmatprep.subr.bf16.mxu0 0
        %820 = vmatpush2.bf16.msra.mxu0 0
        %821 = vmatprep.mubr.bf16.mxu0 0
        %822 = vmatmul.mubr.bf16.gmra.mxu0 %v623
        %v823 = vpop.f32.mrf.mxu0
        %v824 = vadd.f32 %v596, %v823
        %v825 = vpop.f32.mrf.mxu0
        %v826 = vadd.f32 %v600, %v825
        %v827 = vpop.f32.mrf.mxu0
        %v828 = vpop.f32.mrf.mxu0
        %829 = vdwg.mxu0
        %830 = vmatprep.subr.bf16.mxu0 0
        %831 = vmatpush1.bf16.msra.mxu0 0
        %832 = vmatprep.subr.bf16.mxu0 0
        %833 = vmatpush1.bf16.msra.mxu0 0
        %834 = vmatprep.subr.bf16.mxu0 0
        %835 = vmatpush1.bf16.msra.mxu0 0
        %836 = vmatprep.subr.bf16.mxu0 0
        %837 = vmatpush1.bf16.msra.mxu0 0
        %838 = vmatprep.subr.bf16.mxu0 0
        %839 = vmatpush1.bf16.msra.mxu0 0
        %840 = vmatprep.subr.bf16.mxu0 0
        %841 = vmatpush1.bf16.msra.mxu0 0
        %842 = vmatprep.subr.bf16.mxu0 %v534
        %843 = vmatpush1.bf16.msra.mxu0 %v533
        %844 = vmatprep.subr.bf16.mxu0 %v522
        %845 = vmatpush1.bf16.msra.mxu0 %v521
        %846 = vmatprep.subr.bf16.mxu0 0
        %847 = vmatpush2.bf16.msra.mxu0 0
        %848 = vmatprep.subr.bf16.mxu0 0
        %849 = vmatpush2.bf16.msra.mxu0 0
        %850 = vmatprep.subr.bf16.mxu0 0
        %851 = vmatpush2.bf16.msra.mxu0 0
        %852 = vmatprep.subr.bf16.mxu0 0
        %853 = vmatpush2.bf16.msra.mxu0 0
        %854 = vmatprep.subr.bf16.mxu0 0
        %855 = vmatpush2.bf16.msra.mxu0 0
        %856 = vmatprep.subr.bf16.mxu0 0
        %857 = vmatpush2.bf16.msra.mxu0 0
        %858 = vmatprep.subr.bf16.mxu0 0
        %859 = vmatpush2.bf16.msra.mxu0 0
        %860 = vmatprep.subr.bf16.mxu0 0
        %861 = vmatpush2.bf16.msra.mxu0 0
        %862 = vmatprep.mubr.bf16.mxu0 0
        %863 = vmatmul.mubr.bf16.gmra.mxu0 %v623
        %v864 = vpop.f32.mrf.mxu0
        %v865 = vadd.f32 %v604, %v864
        %v866 = vpop.f32.mrf.mxu0
        %v867 = vadd.f32 %v608, %v866
        %v868 = vpop.f32.mrf.mxu0
        %v869 = vpop.f32.mrf.mxu0
        %870 = vdwg.mxu0
        %v871 = vsel %vm621, %v401, 0.0
        %872 = vadd.xlane.f32.xlu0 %v871
        %v873 = vpop.xlane.xlu0 %872
        %v874 = vsel %vm621, %v402, 0.0
        %875 = vadd.xlane.f32.xlu0 %v874
        %v876 = vpop.xlane.xlu0 %875
        %v877 = vrcp.pop 32.0
        %v878 = vmul.f32 %v873, %v877
        %v879 = vmul.f32 %v876, %v877
        %v880 = vsub.f32 %v401, %v878
        %v881 = vsub.f32 %v402, %v879
        %v882 = vmul.f32 %v880, %v880
        %v883 = vmul.f32 %v881, %v881
        %v884 = vsel %vm621, %v882, 0.0
        %885 = vadd.xlane.f32.xlu0 %v884
        %v886 = vpop.xlane.xlu0 %885
        %v887 = vsel %vm621, %v883, 0.0
        %888 = vadd.xlane.f32.xlu0 %v887
        %v889 = vpop.xlane.xlu0 %888
        %v890 = vmul.f32 %v886, %v877
        %v891 = vmul.f32 %v889, %v877
        %v892 = vadd.f32 %v890, 1e-06
        %v893 = vadd.f32 %v891, 1e-06
        %v894 = vrsqrt.pop %v892
        %v895 = vrsqrt.pop %v893
        %v896 = vmul.f32 %v880, %v894
        %v897 = vmul.f32 %v881, %v895
        %v898 = vadd.f32 %v662, 1.0
        %v899 = vlaneseq
        %v900 = vshrl.u32 %v899, 7
        %v901 = vsub.s32 0, %v900
        %v902 = vrot.slane %v898, %v901
        %v903 = vmul.f32 %v896, %v902
        %v904 = vmul.f32 %v897, %v902
        %v905 = vlaneseq
        %v906 = vshrl.u32 %v905, 7
        %v907 = vsub.s32 0, %v906
        %v908 = vrot.slane %v660, %v907
        %v909 = vadd.f32 %v903, %v908
        %v910 = vadd.f32 %v904, %v908
        %v911 = vpack.c.bf16 %v910, %v909
        %v912 = vsel %vm621, %v403, 0.0
        %913 = vadd.xlane.f32.xlu0 %v912
        %v914 = vpop.xlane.xlu0 %913
        %v915 = vmul.f32 %v914, %v877
        %v916 = vsub.f32 %v403, %v915
        %v917 = vmul.f32 %v916, %v916
        %v918 = vsel %vm621, %v917, 0.0
        %919 = vadd.xlane.f32.xlu0 %v918
        %v920 = vpop.xlane.xlu0 %919
        %v921 = vmul.f32 %v920, %v877
        %v922 = vadd.f32 %v921, 1e-06
        %v923 = vrsqrt.pop %v922
        %v924 = vmul.f32 %v916, %v923
        %v925 = vadd.f32 %v785, 1.0
        %v926 = vlaneseq
        %v927 = vshrl.u32 %v926, 7
        %v928 = vsub.s32 0, %v927
        %v929 = vrot.slane %v925, %v928
        %v930 = vmul.f32 %v924, %v929
        %v931 = vlaneseq
        %v932 = vshrl.u32 %v931, 7
        %v933 = vsub.s32 0, %v932
        %v934 = vrot.slane %v783, %v933
        %v935 = vadd.f32 %v930, %v934
        %v936 = vpack.c.bf16 %v935, %v935
        %v937 = vld [vmem:[#allocation7 + $0x30] sm:$0xff]
        %v938 = vld [vmem:[#allocation7 + $0x38] sm:$0xf]
        %v939 = vld [vmem:[#allocation7 + $0x90] sm:$0xff]
        %v940 = vld [vmem:[#allocation7 + $0x98] sm:$0xf]
        %v941 = vld [vmem:[#allocation7 + $0xf0] sm:$0xff]
        %v942 = vld [vmem:[#allocation7 + $0xf8] sm:$0xf]
        %v943 = vld [vmem:[#allocation7 + $0x150] sm:$0xff]
        %v944 = vld [vmem:[#allocation7 + $0x158] sm:$0xf]
        %v945 = vld [vmem:[#allocation10 + $0xc] sm:$0x7]
        %v947 = vlaneseq
        %v948 = vshrl.u32 %v947, 7
        %v949 = vsub.s32 0, %v948
        %v950 = vrot.slane %v945, %v949
        %v951 = vlaneseq
        %v952 = vshrl.u32 %v951, 7
        %v953 = vsub.s32 1, %v952
        %v954 = vrot.slane %v945, %v953
        %v955 = vlaneseq
        %v956 = vshrl.u32 %v955, 7
        %v957 = vsub.s32 2, %v956
        %v958 = vrot.slane %v945, %v957
        %v970 = vunpack.c.l.b16 %v937
        %v971 = vunpack.c.h.b16 %v937
        %v972 = vunpack.c.l.b16 %v938
        %v973 = vunpack.c.l.b16 %v939
        %v974 = vunpack.c.h.b16 %v939
        %v975 = vunpack.c.l.b16 %v940
        %v976 = vunpack.c.l.b16 %v941
        %v977 = vunpack.c.h.b16 %v941
        %v978 = vunpack.c.l.b16 %v942
        %v979 = vunpack.c.l.b16 %v943
        %v980 = vunpack.c.h.b16 %v943
        %v981 = vunpack.c.l.b16 %v944
        %v982 = vpack.c.b16 %v973, %v970
        %v983 = vpack.c.b16 %v974, %v971
        %v984 = vpack.c.b16 %v975, %v972
        %v985 = vpack.c.b16 %v979, %v976
        %v986 = vpack.c.b16 %v980, %v977
        %v987 = vpack.c.b16 %v981, %v978
        %v995 = vsel %vm621, %v911, 0
        %997 = vmatprep.subr.bf16.mxu0 0
        %998 = vmatpush1.bf16.msra.mxu0 0
        %999 = vmatprep.subr.bf16.mxu0 0
        %1000 = vmatpush1.bf16.msra.mxu0 0
        %1001 = vmatprep.subr.bf16.mxu0 0
        %1002 = vmatpush1.bf16.msra.mxu0 0
        %1003 = vmatprep.subr.bf16.mxu0 0
        %1004 = vmatpush1.bf16.msra.mxu0 0
        %1005 = vmatprep.subr.bf16.mxu0 0
        %1006 = vmatpush1.bf16.msra.mxu0 0
        %1007 = vmatprep.subr.bf16.mxu0 0
        %1008 = vmatpush1.bf16.msra.mxu0 0
        %1009 = vmatprep.subr.bf16.mxu0 %v986
        %1010 = vmatpush1.bf16.msra.mxu0 %v985
        %1011 = vmatprep.subr.bf16.mxu0 %v983
        %1012 = vmatpush1.bf16.msra.mxu0 %v982
        %1013 = vmatprep.subr.bf16.mxu0 0
        %1014 = vmatpush2.bf16.msra.mxu0 0
        %1015 = vmatprep.subr.bf16.mxu0 0
        %1016 = vmatpush2.bf16.msra.mxu0 0
        %1017 = vmatprep.subr.bf16.mxu0 0
        %1018 = vmatpush2.bf16.msra.mxu0 0
        %1019 = vmatprep.subr.bf16.mxu0 0
        %1020 = vmatpush2.bf16.msra.mxu0 0
        %1021 = vmatprep.subr.bf16.mxu0 0
        %1022 = vmatpush2.bf16.msra.mxu0 0
        %1023 = vmatprep.subr.bf16.mxu0 0
        %1024 = vmatpush2.bf16.msra.mxu0 0
        %1025 = vmatprep.subr.bf16.mxu0 0
        %1026 = vmatpush2.bf16.msra.mxu0 0
        %1027 = vmatprep.subr.bf16.mxu0 0
        %1028 = vmatpush2.bf16.msra.mxu0 0
        %1029 = vmatprep.mubr.bf16.mxu0 0
        %1030 = vmatmul.mubr.bf16.gmra.mxu0 %v995
        %v1031 = vpop.f32.mrf.mxu0
        %v1032 = vadd.f32 %v950, %v1031
        %v1033 = vpop.f32.mrf.mxu0
        %v1034 = vadd.f32 %v954, %v1033
        %v1035 = vpop.f32.mrf.mxu0
        %v1036 = vadd.f32 %v950, %v1035
        %v1037 = vpop.f32.mrf.mxu0
        %v1038 = vadd.f32 %v954, %v1037
        %1039 = vdwg.mxu0
        %1040 = vmatprep.subr.bf16.mxu0 0
        %1041 = vmatpush1.bf16.msra.mxu0 0
        %1042 = vmatprep.subr.bf16.mxu0 0
        %1043 = vmatpush1.bf16.msra.mxu0 0
        %1044 = vmatprep.subr.bf16.mxu0 0
        %1045 = vmatpush1.bf16.msra.mxu0 0
        %1046 = vmatprep.subr.bf16.mxu0 0
        %1047 = vmatpush1.bf16.msra.mxu0 0
        %1048 = vmatprep.subr.bf16.mxu0 0
        %1049 = vmatpush1.bf16.msra.mxu0 0
        %1050 = vmatprep.subr.bf16.mxu0 0
        %1051 = vmatpush1.bf16.msra.mxu0 0
        %1052 = vmatprep.subr.bf16.mxu0 0
        %1053 = vmatpush1.bf16.msra.mxu0 %v987
        %1054 = vmatprep.subr.bf16.mxu0 0
        %1055 = vmatpush1.bf16.msra.mxu0 %v984
        %1056 = vmatprep.subr.bf16.mxu0 0
        %1057 = vmatpush2.bf16.msra.mxu0 0
        %1058 = vmatprep.subr.bf16.mxu0 0
        %1059 = vmatpush2.bf16.msra.mxu0 0
        %1060 = vmatprep.subr.bf16.mxu0 0
        %1061 = vmatpush2.bf16.msra.mxu0 0
        %1062 = vmatprep.subr.bf16.mxu0 0
        %1063 = vmatpush2.bf16.msra.mxu0 0
        %1064 = vmatprep.subr.bf16.mxu0 0
        %1065 = vmatpush2.bf16.msra.mxu0 0
        %1066 = vmatprep.subr.bf16.mxu0 0
        %1067 = vmatpush2.bf16.msra.mxu0 0
        %1068 = vmatprep.subr.bf16.mxu0 0
        %1069 = vmatpush2.bf16.msra.mxu0 0
        %1070 = vmatprep.subr.bf16.mxu0 0
        %1071 = vmatpush2.bf16.msra.mxu0 0
        %1072 = vmatprep.mubr.bf16.mxu0 0
        %1073 = vmatmul.mubr.bf16.gmra.mxu0 %v995
        %v1074 = vpop.f32.mrf.mxu0
        %v1075 = vadd.f32 %v958, %v1074
        %v1076 = vpop.f32.mrf.mxu0
        %v1077 = vpop.f32.mrf.mxu0
        %v1078 = vadd.f32 %v958, %v1077
        %v1079 = vpop.f32.mrf.mxu0
        %1080 = vdwg.mxu0
        %v1081 = vld [vmem:[#allocation7 + $0x3c] sm:$0xff]
        %v1082 = vld [vmem:[#allocation7 + $0x44] sm:$0xf]
        %v1083 = vld [vmem:[#allocation7 + $0x9c] sm:$0xff]
        %v1084 = vld [vmem:[#allocation7 + $0xa4] sm:$0xf]
        %v1085 = vld [vmem:[#allocation7 + $0xfc] sm:$0xff]
        %v1086 = vld [vmem:[#allocation7 + $0x104] sm:$0xf]
        %v1087 = vld [vmem:[#allocation7 + $0x15c] sm:$0xff]
        %v1088 = vld [vmem:[#allocation7 + $0x164] sm:$0xf]
        %v1089 = vld [vmem:[#allocation10 + $0xf] sm:$0x7]
        %v1091 = vlaneseq
        %v1092 = vshrl.u32 %v1091, 7
        %v1093 = vsub.s32 0, %v1092
        %v1094 = vrot.slane %v1089, %v1093
        %v1095 = vlaneseq
        %v1096 = vshrl.u32 %v1095, 7
        %v1097 = vsub.s32 1, %v1096
        %v1098 = vrot.slane %v1089, %v1097
        %v1099 = vlaneseq
        %v1100 = vshrl.u32 %v1099, 7
        %v1101 = vsub.s32 2, %v1100
        %v1102 = vrot.slane %v1089, %v1101
        %v1114 = vunpack.c.l.b16 %v1081
        %v1115 = vunpack.c.h.b16 %v1081
        %v1116 = vunpack.c.l.b16 %v1082
        %v1117 = vunpack.c.l.b16 %v1083
        %v1118 = vunpack.c.h.b16 %v1083
        %v1119 = vunpack.c.l.b16 %v1084
        %v1120 = vunpack.c.l.b16 %v1085
        %v1121 = vunpack.c.h.b16 %v1085
        %v1122 = vunpack.c.l.b16 %v1086
        %v1123 = vunpack.c.l.b16 %v1087
        %v1124 = vunpack.c.h.b16 %v1087
        %v1125 = vunpack.c.l.b16 %v1088
        %v1126 = vpack.c.b16 %v1117, %v1114
        %v1127 = vpack.c.b16 %v1118, %v1115
        %v1128 = vpack.c.b16 %v1119, %v1116
        %v1129 = vpack.c.b16 %v1123, %v1120
        %v1130 = vpack.c.b16 %v1124, %v1121
        %v1131 = vpack.c.b16 %v1125, %v1122
        %v1139 = vsel %vm621, %v936, 0
        %1141 = vmatprep.subr.bf16.mxu0 0
        %1142 = vmatpush1.bf16.msra.mxu0 0
        %1143 = vmatprep.subr.bf16.mxu0 0
        %1144 = vmatpush1.bf16.msra.mxu0 0
        %1145 = vmatprep.subr.bf16.mxu0 0
        %1146 = vmatpush1.bf16.msra.mxu0 0
        %1147 = vmatprep.subr.bf16.mxu0 0
        %1148 = vmatpush1.bf16.msra.mxu0 0
        %1149 = vmatprep.subr.bf16.mxu0 0
        %1150 = vmatpush1.bf16.msra.mxu0 0
        %1151 = vmatprep.subr.bf16.mxu0 0
        %1152 = vmatpush1.bf16.msra.mxu0 0
        %1153 = vmatprep.subr.bf16.mxu0 %v1130
        %1154 = vmatpush1.bf16.msra.mxu0 %v1129
        %1155 = vmatprep.subr.bf16.mxu0 %v1127
        %1156 = vmatpush1.bf16.msra.mxu0 %v1126
        %1157 = vmatprep.subr.bf16.mxu0 0
        %1158 = vmatpush2.bf16.msra.mxu0 0
        %1159 = vmatprep.subr.bf16.mxu0 0
        %1160 = vmatpush2.bf16.msra.mxu0 0
        %1161 = vmatprep.subr.bf16.mxu0 0
        %1162 = vmatpush2.bf16.msra.mxu0 0
        %1163 = vmatprep.subr.bf16.mxu0 0
        %1164 = vmatpush2.bf16.msra.mxu0 0
        %1165 = vmatprep.subr.bf16.mxu0 0
        %1166 = vmatpush2.bf16.msra.mxu0 0
        %1167 = vmatprep.subr.bf16.mxu0 0
        %1168 = vmatpush2.bf16.msra.mxu0 0
        %1169 = vmatprep.subr.bf16.mxu0 0
        %1170 = vmatpush2.bf16.msra.mxu0 0
        %1171 = vmatprep.subr.bf16.mxu0 0
        %1172 = vmatpush2.bf16.msra.mxu0 0
        %1173 = vmatprep.mubr.bf16.mxu0 0
        %1174 = vmatmul.mubr.bf16.gmra.mxu0 %v1139
        %v1175 = vpop.f32.mrf.mxu0
        %v1176 = vadd.f32 %v1094, %v1175
        %v1177 = vpop.f32.mrf.mxu0
        %v1178 = vadd.f32 %v1098, %v1177
        %v1179 = vpop.f32.mrf.mxu0
        %v1180 = vpop.f32.mrf.mxu0
        %1181 = vdwg.mxu0
        %1182 = vmatprep.subr.bf16.mxu0 0
        %1183 = vmatpush1.bf16.msra.mxu0 0
        %1184 = vmatprep.subr.bf16.mxu0 0
        %1185 = vmatpush1.bf16.msra.mxu0 0
        %1186 = vmatprep.subr.bf16.mxu0 0
        %1187 = vmatpush1.bf16.msra.mxu0 0
        %1188 = vmatprep.subr.bf16.mxu0 0
        %1189 = vmatpush1.bf16.msra.mxu0 0
        %1190 = vmatprep.subr.bf16.mxu0 0
        %1191 = vmatpush1.bf16.msra.mxu0 0
        %1192 = vmatprep.subr.bf16.mxu0 0
        %1193 = vmatpush1.bf16.msra.mxu0 0
        %1194 = vmatprep.subr.bf16.mxu0 0
        %1195 = vmatpush1.bf16.msra.mxu0 %v1131
        %1196 = vmatprep.subr.bf16.mxu0 0
        %1197 = vmatpush1.bf16.msra.mxu0 %v1128
        %1198 = vmatprep.subr.bf16.mxu0 0
        %1199 = vmatpush2.bf16.msra.mxu0 0
        %1200 = vmatprep.subr.bf16.mxu0 0
        %1201 = vmatpush2.bf16.msra.mxu0 0
        %1202 = vmatprep.subr.bf16.mxu0 0
        %1203 = vmatpush2.bf16.msra.mxu0 0
        %1204 = vmatprep.subr.bf16.mxu0 0
        %1205 = vmatpush2.bf16.msra.mxu0 0
        %1206 = vmatprep.subr.bf16.mxu0 0
        %1207 = vmatpush2.bf16.msra.mxu0 0
        %1208 = vmatprep.subr.bf16.mxu0 0
        %1209 = vmatpush2.bf16.msra.mxu0 0
        %1210 = vmatprep.subr.bf16.mxu0 0
        %1211 = vmatpush2.bf16.msra.mxu0 0
        %1212 = vmatprep.subr.bf16.mxu0 0
        %1213 = vmatpush2.bf16.msra.mxu0 0
        %1214 = vmatprep.mubr.bf16.mxu0 0
        %1215 = vmatmul.mubr.bf16.gmra.mxu0 %v1139
        %v1216 = vpop.f32.mrf.mxu0
        %v1217 = vadd.f32 %v1102, %v1216
        %v1218 = vpop.f32.mrf.mxu0
        %v1219 = vpop.f32.mrf.mxu0
        %v1220 = vpop.f32.mrf.mxu0
        %1221 = vdwg.mxu0
        %v1222 = vld [vmem:[#allocation7 + $0x58] sm:$0xf]
        %v1223 = vld [vmem:[#allocation7 + $0xb8] sm:$0xf]
        %v1224 = vld [vmem:[#allocation7 + $0x118] sm:$0xf]
        %v1225 = vld [vmem:[#allocation7 + $0x178] sm:$0xf]
        %v1226 = vld [vmem:[#allocation7 + $0x5c] sm:$0x1]
        %v1227 = vld [vmem:[#allocation10 + $0x18] sm:$0x1]
        %v1228 = vld [vmem:[#allocation10 + $0x19] sm:$0x1]
        %v1229 = vpack.c.bf16 %v1036, %v1032
        %v1234 = vunpack.c.l.b16 %v1222
        %v1235 = vunpack.c.l.b16 %v1223
        %v1236 = vunpack.c.l.b16 %v1224
        %v1237 = vunpack.c.l.b16 %v1225
        %v1238 = vpack.c.b16 %v1235, %v1234
        %v1239 = vpack.c.b16 %v1237, %v1236
        %v1243 = vsel %vm621, %v1229, 0
        %1245 = vmatprep.subr.bf16.mxu0 0
        %1246 = vmatpush1.bf16.msra.mxu0 0
        %1247 = vmatprep.subr.bf16.mxu0 0
        %1248 = vmatpush1.bf16.msra.mxu0 0
        %1249 = vmatprep.subr.bf16.mxu0 0
        %1250 = vmatpush1.bf16.msra.mxu0 0
        %1251 = vmatprep.subr.bf16.mxu0 0
        %1252 = vmatpush1.bf16.msra.mxu0 0
        %1253 = vmatprep.subr.bf16.mxu0 0
        %1254 = vmatpush1.bf16.msra.mxu0 0
        %1255 = vmatprep.subr.bf16.mxu0 0
        %1256 = vmatpush1.bf16.msra.mxu0 0
        %1257 = vmatprep.subr.bf16.mxu0 0
        %1258 = vmatpush1.bf16.msra.mxu0 %v1239
        %1259 = vmatprep.subr.bf16.mxu0 0
        %1260 = vmatpush1.bf16.msra.mxu0 %v1238
        %1261 = vmatprep.subr.bf16.mxu0 0
        %1262 = vmatpush2.bf16.msra.mxu0 0
        %1263 = vmatprep.subr.bf16.mxu0 0
        %1264 = vmatpush2.bf16.msra.mxu0 0
        %1265 = vmatprep.subr.bf16.mxu0 0
        %1266 = vmatpush2.bf16.msra.mxu0 0
        %1267 = vmatprep.subr.bf16.mxu0 0
        %1268 = vmatpush2.bf16.msra.mxu0 0
        %1269 = vmatprep.subr.bf16.mxu0 0
        %1270 = vmatpush2.bf16.msra.mxu0 0
        %1271 = vmatprep.subr.bf16.mxu0 0
        %1272 = vmatpush2.bf16.msra.mxu0 0
        %1273 = vmatprep.subr.bf16.mxu0 0
        %1274 = vmatpush2.bf16.msra.mxu0 0
        %1275 = vmatprep.subr.bf16.mxu0 0
        %1276 = vmatpush2.bf16.msra.mxu0 0
        %1277 = vmatprep.mubr.bf16.mxu0 0
        %1278 = vmatmul.mubr.bf16.gmra.mxu0 %v1243
        %v1279 = vpop.f32.mrf.mxu0
        %v1280 = vadd.f32 0.0, %v1279
        %v1281 = vpop.f32.mrf.mxu0
        %v1282 = vpop.f32.mrf.mxu0
        %v1283 = vadd.f32 0.0, %v1282
        %v1284 = vpop.f32.mrf.mxu0
        %1285 = vdwg.mxu0
        %v1286 = vpack.c.bf16 %v1283, %v1280
        %vm1287 = vcmask 15360
        %v1289 = vsel %vm1287, %v1286, 0
        %vm1291 = vcmask 1040384
        %v1293 = vsel %vm1291, %v1226, 0
        %1295 = vmatprep.subr.bf16.mxu0 0
        %1296 = vmatpush1.bf16.msra.mxu0 0
        %1297 = vmatprep.subr.bf16.mxu0 0
        %1298 = vmatpush1.bf16.msra.mxu0 0
        %1299 = vmatprep.subr.bf16.mxu0 0
        %1300 = vmatpush1.bf16.msra.mxu0 0
        %1301 = vmatprep.subr.bf16.mxu0 0
        %1302 = vmatpush1.bf16.msra.mxu0 0
        %1303 = vmatprep.subr.bf16.mxu0 0
        %1304 = vmatpush1.bf16.msra.mxu0 0
        %1305 = vmatprep.subr.bf16.mxu0 0
        %1306 = vmatpush1.bf16.msra.mxu0 0
        %1307 = vmatprep.subr.bf16.mxu0 0
        %1308 = vmatpush1.bf16.msra.mxu0 0
        %1309 = vmatprep.subr.bf16.mxu0 0
        %1310 = vmatpush1.bf16.msra.mxu0 %v1293
        %1311 = vmatprep.subr.bf16.mxu0 0
        %1312 = vmatpush2.bf16.msra.mxu0 0
        %1313 = vmatprep.subr.bf16.mxu0 0
        %1314 = vmatpush2.bf16.msra.mxu0 0
        %1315 = vmatprep.subr.bf16.mxu0 0
        %1316 = vmatpush2.bf16.msra.mxu0 0
        %1317 = vmatprep.subr.bf16.mxu0 0
        %1318 = vmatpush2.bf16.msra.mxu0 0
        %1319 = vmatprep.subr.bf16.mxu0 0
        %1320 = vmatpush2.bf16.msra.mxu0 0
        %1321 = vmatprep.subr.bf16.mxu0 0
        %1322 = vmatpush2.bf16.msra.mxu0 0
        %1323 = vmatprep.subr.bf16.mxu0 0
        %1324 = vmatpush2.bf16.msra.mxu0 0
        %1325 = vmatprep.subr.bf16.mxu0 0
        %1326 = vmatpush2.bf16.msra.mxu0 0
        %1327 = vmatprep.mubr.bf16.mxu0 0
        %1328 = vmatmul.mubr.bf16.gmra.mxu0 %v1289
        %v1329 = vpop.f32.mrf.mxu0
        %v1330 = vadd.f32 0.0, %v1329
        %v1331 = vpop.f32.mrf.mxu0
        %v1332 = vpop.f32.mrf.mxu0
        %v1333 = vadd.f32 0.0, %v1332
        %v1334 = vpop.f32.mrf.mxu0
        %1335 = vdwg.mxu0
        %v1336 = vsub.f32 %v1032, %v1330
        %v1337 = vsub.f32 %v1036, %v1333
        %v1338 = vmul.f32 %v1336, %v1336
        %v1339 = vmul.f32 %v1337, %v1337
        %v1340 = vpack.c.bf16 %v1339, %v1338
        %v1342 = vsel %vm621, %v1340, 0
        %1344 = vmatprep.subr.bf16.mxu0 0
        %1345 = vmatpush1.bf16.msra.mxu0 0
        %1346 = vmatprep.subr.bf16.mxu0 0
        %1347 = vmatpush1.bf16.msra.mxu0 0
        %1348 = vmatprep.subr.bf16.mxu0 0
        %1349 = vmatpush1.bf16.msra.mxu0 0
        %1350 = vmatprep.subr.bf16.mxu0 0
        %1351 = vmatpush1.bf16.msra.mxu0 0
        %1352 = vmatprep.subr.bf16.mxu0 0
        %1353 = vmatpush1.bf16.msra.mxu0 0
        %1354 = vmatprep.subr.bf16.mxu0 0
        %1355 = vmatpush1.bf16.msra.mxu0 0
        %1356 = vmatprep.subr.bf16.mxu0 0
        %1357 = vmatpush1.bf16.msra.mxu0 %v1239
        %1358 = vmatprep.subr.bf16.mxu0 0
        %1359 = vmatpush1.bf16.msra.mxu0 %v1238
        %1360 = vmatprep.subr.bf16.mxu0 0
        %1361 = vmatpush2.bf16.msra.mxu0 0
        %1362 = vmatprep.subr.bf16.mxu0 0
        %1363 = vmatpush2.bf16.msra.mxu0 0
        %1364 = vmatprep.subr.bf16.mxu0 0
        %1365 = vmatpush2.bf16.msra.mxu0 0
        %1366 = vmatprep.subr.bf16.mxu0 0
        %1367 = vmatpush2.bf16.msra.mxu0 0
        %1368 = vmatprep.subr.bf16.mxu0 0
        %1369 = vmatpush2.bf16.msra.mxu0 0
        %1370 = vmatprep.subr.bf16.mxu0 0
        %1371 = vmatpush2.bf16.msra.mxu0 0
        %1372 = vmatprep.subr.bf16.mxu0 0
        %1373 = vmatpush2.bf16.msra.mxu0 0
        %1374 = vmatprep.subr.bf16.mxu0 0
        %1375 = vmatpush2.bf16.msra.mxu0 0
        %1376 = vmatprep.mubr.bf16.mxu0 0
        %1377 = vmatmul.mubr.bf16.gmra.mxu0 %v1342
        %v1378 = vpop.f32.mrf.mxu0
        %v1379 = vadd.f32 0.0, %v1378
        %v1380 = vpop.f32.mrf.mxu0
        %v1381 = vpop.f32.mrf.mxu0
        %v1382 = vadd.f32 0.0, %v1381
        %v1383 = vpop.f32.mrf.mxu0
        %1384 = vdwg.mxu0
        %v1385 = vpack.c.bf16 %v1382, %v1379
        %v1387 = vsel %vm1287, %v1385, 0
        %1389 = vmatprep.subr.bf16.mxu0 0
        %1390 = vmatpush1.bf16.msra.mxu0 0
        %1391 = vmatprep.subr.bf16.mxu0 0
        %1392 = vmatpush1.bf16.msra.mxu0 0
        %1393 = vmatprep.subr.bf16.mxu0 0
        %1394 = vmatpush1.bf16.msra.mxu0 0
        %1395 = vmatprep.subr.bf16.mxu0 0
        %1396 = vmatpush1.bf16.msra.mxu0 0
        %1397 = vmatprep.subr.bf16.mxu0 0
        %1398 = vmatpush1.bf16.msra.mxu0 0
        %1399 = vmatprep.subr.bf16.mxu0 0
        %1400 = vmatpush1.bf16.msra.mxu0 0
        %1401 = vmatprep.subr.bf16.mxu0 0
        %1402 = vmatpush1.bf16.msra.mxu0 0
        %1403 = vmatprep.subr.bf16.mxu0 0
        %1404 = vmatpush1.bf16.msra.mxu0 %v1293
        %1405 = vmatprep.subr.bf16.mxu0 0
        %1406 = vmatpush2.bf16.msra.mxu0 0
        %1407 = vmatprep.subr.bf16.mxu0 0
        %1408 = vmatpush2.bf16.msra.mxu0 0
        %1409 = vmatprep.subr.bf16.mxu0 0
        %1410 = vmatpush2.bf16.msra.mxu0 0
        %1411 = vmatprep.subr.bf16.mxu0 0
        %1412 = vmatpush2.bf16.msra.mxu0 0
        %1413 = vmatprep.subr.bf16.mxu0 0
        %1414 = vmatpush2.bf16.msra.mxu0 0
        %1415 = vmatprep.subr.bf16.mxu0 0
        %1416 = vmatpush2.bf16.msra.mxu0 0
        %1417 = vmatprep.subr.bf16.mxu0 0
        %1418 = vmatpush2.bf16.msra.mxu0 0
        %1419 = vmatprep.subr.bf16.mxu0 0
        %1420 = vmatpush2.bf16.msra.mxu0 0
        %1421 = vmatprep.mubr.bf16.mxu0 0
        %1422 = vmatmul.mubr.bf16.gmra.mxu0 %v1387
        %v1423 = vpop.f32.mrf.mxu0
        %v1424 = vadd.f32 1e-05, %v1423
        %v1425 = vpop.f32.mrf.mxu0
        %v1426 = vpop.f32.mrf.mxu0
        %v1427 = vadd.f32 1e-05, %v1426
        %v1428 = vpop.f32.mrf.mxu0
        %1429 = vdwg.mxu0
        %v1430 = vrsqrt.pop %v1424
        %v1431 = vrsqrt.pop %v1427
        %v1432 = vmul.f32 %v1336, %v1430
        %v1433 = vmul.f32 %v1337, %v1431
        %v1435 = vlaneseq
        %v1436 = vshrl.u32 %v1435, 7
        %v1437 = vsub.s32 0, %v1436
        %v1438 = vrot.slane %v1227, %v1437
        %v1440 = vmul.f32 %v1432, %v1438
        %v1441 = vmul.f32 %v1433, %v1438
        %v1443 = vlaneseq
        %v1444 = vshrl.u32 %v1443, 7
        %v1445 = vsub.s32 0, %v1444
        %v1446 = vrot.slane %v1228, %v1445
        %v1448 = vadd.f32 %v1440, %v1446
        %v1449 = vadd.f32 %v1441, %v1446
        %v1450 = vld [vmem:[#allocation10 + $0x1c] sm:$0x1]
        %v1451 = vld [vmem:[#allocation10 + $0x1d] sm:$0x1]
        %v1452 = vpack.c.bf16 %v1176, %v1176
        %v1454 = vsel %vm621, %v1452, 0
        %1456 = vmatprep.subr.bf16.mxu0 0
        %1457 = vmatpush1.bf16.msra.mxu0 0
        %1458 = vmatprep.subr.bf16.mxu0 0
        %1459 = vmatpush1.bf16.msra.mxu0 0
        %1460 = vmatprep.subr.bf16.mxu0 0
        %1461 = vmatpush1.bf16.msra.mxu0 0
        %1462 = vmatprep.subr.bf16.mxu0 0
        %1463 = vmatpush1.bf16.msra.mxu0 0
        %1464 = vmatprep.subr.bf16.mxu0 0
        %1465 = vmatpush1.bf16.msra.mxu0 0
        %1466 = vmatprep.subr.bf16.mxu0 0
        %1467 = vmatpush1.bf16.msra.mxu0 0
        %1468 = vmatprep.subr.bf16.mxu0 0
        %1469 = vmatpush1.bf16.msra.mxu0 %v1239
        %1470 = vmatprep.subr.bf16.mxu0 0
        %1471 = vmatpush1.bf16.msra.mxu0 %v1238
        %1472 = vmatprep.subr.bf16.mxu0 0
        %1473 = vmatpush2.bf16.msra.mxu0 0
        %1474 = vmatprep.subr.bf16.mxu0 0
        %1475 = vmatpush2.bf16.msra.mxu0 0
        %1476 = vmatprep.subr.bf16.mxu0 0
        %1477 = vmatpush2.bf16.msra.mxu0 0
        %1478 = vmatprep.subr.bf16.mxu0 0
        %1479 = vmatpush2.bf16.msra.mxu0 0
        %1480 = vmatprep.subr.bf16.mxu0 0
        %1481 = vmatpush2.bf16.msra.mxu0 0
        %1482 = vmatprep.subr.bf16.mxu0 0
        %1483 = vmatpush2.bf16.msra.mxu0 0
        %1484 = vmatprep.subr.bf16.mxu0 0
        %1485 = vmatpush2.bf16.msra.mxu0 0
        %1486 = vmatprep.subr.bf16.mxu0 0
        %1487 = vmatpush2.bf16.msra.mxu0 0
        %1488 = vmatprep.mubr.bf16.mxu0 0
        %1489 = vmatmul.mubr.bf16.gmra.mxu0 %v1454
        %v1490 = vpop.f32.mrf.mxu0
        %v1491 = vadd.f32 0.0, %v1490
        %v1492 = vpop.f32.mrf.mxu0
        %v1493 = vpop.f32.mrf.mxu0
        %v1494 = vpop.f32.mrf.mxu0
        %1495 = vdwg.mxu0
        %v1496 = vpack.c.bf16 %v1491, %v1491
        %v1498 = vsel %vm1287, %v1496, 0
        %1500 = vmatprep.subr.bf16.mxu0 0
        %1501 = vmatpush1.bf16.msra.mxu0 0
        %1502 = vmatprep.subr.bf16.mxu0 0
        %1503 = vmatpush1.bf16.msra.mxu0 0
        %1504 = vmatprep.subr.bf16.mxu0 0
        %1505 = vmatpush1.bf16.msra.mxu0 0
        %1506 = vmatprep.subr.bf16.mxu0 0
        %1507 = vmatpush1.bf16.msra.mxu0 0
        %1508 = vmatprep.subr.bf16.mxu0 0
        %1509 = vmatpush1.bf16.msra.mxu0 0
        %1510 = vmatprep.subr.bf16.mxu0 0
        %1511 = vmatpush1.bf16.msra.mxu0 0
        %1512 = vmatprep.subr.bf16.mxu0 0
        %1513 = vmatpush1.bf16.msra.mxu0 0
        %1514 = vmatprep.subr.bf16.mxu0 0
        %1515 = vmatpush1.bf16.msra.mxu0 %v1293
        %1516 = vmatprep.subr.bf16.mxu0 0
        %1517 = vmatpush2.bf16.msra.mxu0 0
        %1518 = vmatprep.subr.bf16.mxu0 0
        %1519 = vmatpush2.bf16.msra.mxu0 0
        %1520 = vmatprep.subr.bf16.mxu0 0
        %1521 = vmatpush2.bf16.msra.mxu0 0
        %1522 = vmatprep.subr.bf16.mxu0 0
        %1523 = vmatpush2.bf16.msra.mxu0 0
        %1524 = vmatprep.subr.bf16.mxu0 0
        %1525 = vmatpush2.bf16.msra.mxu0 0
        %1526 = vmatprep.subr.bf16.mxu0 0
        %1527 = vmatpush2.bf16.msra.mxu0 0
        %1528 = vmatprep.subr.bf16.mxu0 0
        %1529 = vmatpush2.bf16.msra.mxu0 0
        %1530 = vmatprep.subr.bf16.mxu0 0
        %1531 = vmatpush2.bf16.msra.mxu0 0
        %1532 = vmatprep.mubr.bf16.mxu0 0
        %1533 = vmatmul.mubr.bf16.gmra.mxu0 %v1498
        %v1534 = vpop.f32.mrf.mxu0
        %v1535 = vadd.f32 0.0, %v1534
        %v1536 = vpop.f32.mrf.mxu0
        %v1537 = vpop.f32.mrf.mxu0
        %v1538 = vpop.f32.mrf.mxu0
        %1539 = vdwg.mxu0
        %v1540 = vsub.f32 %v1176, %v1535
        %v1541 = vmul.f32 %v1540, %v1540
        %v1542 = vpack.c.bf16 %v1541, %v1541
        %v1544 = vsel %vm621, %v1542, 0
        %1546 = vmatprep.subr.bf16.mxu0 0
        %1547 = vmatpush1.bf16.msra.mxu0 0
        %1548 = vmatprep.subr.bf16.mxu0 0
        %1549 = vmatpush1.bf16.msra.mxu0 0
        %1550 = vmatprep.subr.bf16.mxu0 0
        %1551 = vmatpush1.bf16.msra.mxu0 0
        %1552 = vmatprep.subr.bf16.mxu0 0
        %1553 = vmatpush1.bf16.msra.mxu0 0
        %1554 = vmatprep.subr.bf16.mxu0 0
        %1555 = vmatpush1.bf16.msra.mxu0 0
        %1556 = vmatprep.subr.bf16.mxu0 0
        %1557 = vmatpush1.bf16.msra.mxu0 0
        %1558 = vmatprep.subr.bf16.mxu0 0
        %1559 = vmatpush1.bf16.msra.mxu0 %v1239
        %1560 = vmatprep.subr.bf16.mxu0 0
        %1561 = vmatpush1.bf16.msra.mxu0 %v1238
        %1562 = vmatprep.subr.bf16.mxu0 0
        %1563 = vmatpush2.bf16.msra.mxu0 0
        %1564 = vmatprep.subr.bf16.mxu0 0
        %1565 = vmatpush2.bf16.msra.mxu0 0
        %1566 = vmatprep.subr.bf16.mxu0 0
        %1567 = vmatpush2.bf16.msra.mxu0 0
        %1568 = vmatprep.subr.bf16.mxu0 0
        %1569 = vmatpush2.bf16.msra.mxu0 0
        %1570 = vmatprep.subr.bf16.mxu0 0
        %1571 = vmatpush2.bf16.msra.mxu0 0
        %1572 = vmatprep.subr.bf16.mxu0 0
        %1573 = vmatpush2.bf16.msra.mxu0 0
        %1574 = vmatprep.subr.bf16.mxu0 0
        %1575 = vmatpush2.bf16.msra.mxu0 0
        %1576 = vmatprep.subr.bf16.mxu0 0
        %1577 = vmatpush2.bf16.msra.mxu0 0
        %1578 = vmatprep.mubr.bf16.mxu0 0
        %1579 = vmatmul.mubr.bf16.gmra.mxu0 %v1544
        %v1580 = vpop.f32.mrf.mxu0
        %v1581 = vadd.f32 0.0, %v1580
        %v1582 = vpop.f32.mrf.mxu0
        %v1583 = vpop.f32.mrf.mxu0
        %v1584 = vpop.f32.mrf.mxu0
        %1585 = vdwg.mxu0
        %v1586 = vpack.c.bf16 %v1581, %v1581
        %v1588 = vsel %vm1287, %v1586, 0
        %1590 = vmatprep.subr.bf16.mxu0 0
        %1591 = vmatpush1.bf16.msra.mxu0 0
        %1592 = vmatprep.subr.bf16.mxu0 0
        %1593 = vmatpush1.bf16.msra.mxu0 0
        %1594 = vmatprep.subr.bf16.mxu0 0
        %1595 = vmatpush1.bf16.msra.mxu0 0
        %1596 = vmatprep.subr.bf16.mxu0 0
        %1597 = vmatpush1.bf16.msra.mxu0 0
        %1598 = vmatprep.subr.bf16.mxu0 0
        %1599 = vmatpush1.bf16.msra.mxu0 0
        %1600 = vmatprep.subr.bf16.mxu0 0
        %1601 = vmatpush1.bf16.msra.mxu0 0
        %1602 = vmatprep.subr.bf16.mxu0 0
        %1603 = vmatpush1.bf16.msra.mxu0 0
        %1604 = vmatprep.subr.bf16.mxu0 0
        %1605 = vmatpush1.bf16.msra.mxu0 %v1293
        %1606 = vmatprep.subr.bf16.mxu0 0
        %1607 = vmatpush2.bf16.msra.mxu0 0
        %1608 = vmatprep.subr.bf16.mxu0 0
        %1609 = vmatpush2.bf16.msra.mxu0 0
        %1610 = vmatprep.subr.bf16.mxu0 0
        %1611 = vmatpush2.bf16.msra.mxu0 0
        %1612 = vmatprep.subr.bf16.mxu0 0
        %1613 = vmatpush2.bf16.msra.mxu0 0
        %1614 = vmatprep.subr.bf16.mxu0 0
        %1615 = vmatpush2.bf16.msra.mxu0 0
        %1616 = vmatprep.subr.bf16.mxu0 0
        %1617 = vmatpush2.bf16.msra.mxu0 0
        %1618 = vmatprep.subr.bf16.mxu0 0
        %1619 = vmatpush2.bf16.msra.mxu0 0
        %1620 = vmatprep.subr.bf16.mxu0 0
        %1621 = vmatpush2.bf16.msra.mxu0 0
        %1622 = vmatprep.mubr.bf16.mxu0 0
        %1623 = vmatmul.mubr.bf16.gmra.mxu0 %v1588
        %v1624 = vpop.f32.mrf.mxu0
        %v1625 = vadd.f32 1e-05, %v1624
        %v1626 = vpop.f32.mrf.mxu0
        %v1627 = vpop.f32.mrf.mxu0
        %v1628 = vpop.f32.mrf.mxu0
        %1629 = vdwg.mxu0
        %v1630 = vrsqrt.pop %v1625
        %v1631 = vmul.f32 %v1540, %v1630
        %v1633 = vlaneseq
        %v1634 = vshrl.u32 %v1633, 7
        %v1635 = vsub.s32 0, %v1634
        %v1636 = vrot.slane %v1450, %v1635
        %v1638 = vmul.f32 %v1631, %v1636
        %v1640 = vlaneseq
        %v1641 = vshrl.u32 %v1640, 7
        %v1642 = vsub.s32 0, %v1641
        %v1643 = vrot.slane %v1451, %v1642
        %v1645 = vadd.f32 %v1638, %v1643
        %v1646 = vpack.c.bf16 %v1449, %v1448
        %v1647 = vpack.c.bf16 %v1645, %v1645
        %v1648 = vld [vmem:[#allocation10 + $0x1a] sm:$0x1]
        %v1649 = vld [vmem:[#allocation10 + $0x1b] sm:$0x1]
        %v1650 = vpack.c.bf16 %v1038, %v1034
        %v1652 = vsel %vm621, %v1650, 0
        %1654 = vmatprep.subr.bf16.mxu0 0
        %1655 = vmatpush1.bf16.msra.mxu0 0
        %1656 = vmatprep.subr.bf16.mxu0 0
        %1657 = vmatpush1.bf16.msra.mxu0 0
        %1658 = vmatprep.subr.bf16.mxu0 0
        %1659 = vmatpush1.bf16.msra.mxu0 0
        %1660 = vmatprep.subr.bf16.mxu0 0
        %1661 = vmatpush1.bf16.msra.mxu0 0
        %1662 = vmatprep.subr.bf16.mxu0 0
        %1663 = vmatpush1.bf16.msra.mxu0 0
        %1664 = vmatprep.subr.bf16.mxu0 0
        %1665 = vmatpush1.bf16.msra.mxu0 0
        %1666 = vmatprep.subr.bf16.mxu0 0
        %1667 = vmatpush1.bf16.msra.mxu0 %v1239
        %1668 = vmatprep.subr.bf16.mxu0 0
        %1669 = vmatpush1.bf16.msra.mxu0 %v1238
        %1670 = vmatprep.subr.bf16.mxu0 0
        %1671 = vmatpush2.bf16.msra.mxu0 0
        %1672 = vmatprep.subr.bf16.mxu0 0
        %1673 = vmatpush2.bf16.msra.mxu0 0
        %1674 = vmatprep.subr.bf16.mxu0 0
        %1675 = vmatpush2.bf16.msra.mxu0 0
        %1676 = vmatprep.subr.bf16.mxu0 0
        %1677 = vmatpush2.bf16.msra.mxu0 0
        %1678 = vmatprep.subr.bf16.mxu0 0
        %1679 = vmatpush2.bf16.msra.mxu0 0
        %1680 = vmatprep.subr.bf16.mxu0 0
        %1681 = vmatpush2.bf16.msra.mxu0 0
        %1682 = vmatprep.subr.bf16.mxu0 0
        %1683 = vmatpush2.bf16.msra.mxu0 0
        %1684 = vmatprep.subr.bf16.mxu0 0
        %1685 = vmatpush2.bf16.msra.mxu0 0
        %1686 = vmatprep.mubr.bf16.mxu0 0
        %1687 = vmatmul.mubr.bf16.gmra.mxu0 %v1652
        %v1688 = vpop.f32.mrf.mxu0
        %v1689 = vadd.f32 0.0, %v1688
        %v1690 = vpop.f32.mrf.mxu0
        %v1691 = vpop.f32.mrf.mxu0
        %v1692 = vadd.f32 0.0, %v1691
        %v1693 = vpop.f32.mrf.mxu0
        %1694 = vdwg.mxu0
        %v1695 = vpack.c.bf16 %v1692, %v1689
        %v1697 = vsel %vm1287, %v1695, 0
        %1699 = vmatprep.subr.bf16.mxu0 0
        %1700 = vmatpush1.bf16.msra.mxu0 0
        %1701 = vmatprep.subr.bf16.mxu0 0
        %1702 = vmatpush1.bf16.msra.mxu0 0
        %1703 = vmatprep.subr.bf16.mxu0 0
        %1704 = vmatpush1.bf16.msra.mxu0 0
        %1705 = vmatprep.subr.bf16.mxu0 0
        %1706 = vmatpush1.bf16.msra.mxu0 0
        %1707 = vmatprep.subr.bf16.mxu0 0
        %1708 = vmatpush1.bf16.msra.mxu0 0
        %1709 = vmatprep.subr.bf16.mxu0 0
        %1710 = vmatpush1.bf16.msra.mxu0 0
        %1711 = vmatprep.subr.bf16.mxu0 0
        %1712 = vmatpush1.bf16.msra.mxu0 0
        %1713 = vmatprep.subr.bf16.mxu0 0
        %1714 = vmatpush1.bf16.msra.mxu0 %v1293
        %1715 = vmatprep.subr.bf16.mxu0 0
        %1716 = vmatpush2.bf16.msra.mxu0 0
        %1717 = vmatprep.subr.bf16.mxu0 0
        %1718 = vmatpush2.bf16.msra.mxu0 0
        %1719 = vmatprep.subr.bf16.mxu0 0
        %1720 = vmatpush2.bf16.msra.mxu0 0
        %1721 = vmatprep.subr.bf16.mxu0 0
        %1722 = vmatpush2.bf16.msra.mxu0 0
        %1723 = vmatprep.subr.bf16.mxu0 0
        %1724 = vmatpush2.bf16.msra.mxu0 0
        %1725 = vmatprep.subr.bf16.mxu0 0
        %1726 = vmatpush2.bf16.msra.mxu0 0
        %1727 = vmatprep.subr.bf16.mxu0 0
        %1728 = vmatpush2.bf16.msra.mxu0 0
        %1729 = vmatprep.subr.bf16.mxu0 0
        %1730 = vmatpush2.bf16.msra.mxu0 0
        %1731 = vmatprep.mubr.bf16.mxu0 0
        %1732 = vmatmul.mubr.bf16.gmra.mxu0 %v1697
        %v1733 = vpop.f32.mrf.mxu0
        %v1734 = vadd.f32 0.0, %v1733
        %v1735 = vpop.f32.mrf.mxu0
        %v1736 = vpop.f32.mrf.mxu0
        %v1737 = vadd.f32 0.0, %v1736
        %v1738 = vpop.f32.mrf.mxu0
        %1739 = vdwg.mxu0
        %v1740 = vsub.f32 %v1034, %v1734
        %v1741 = vsub.f32 %v1038, %v1737
        %v1742 = vmul.f32 %v1740, %v1740
        %v1743 = vmul.f32 %v1741, %v1741
        %v1744 = vpack.c.bf16 %v1743, %v1742
        %v1746 = vsel %vm621, %v1744, 0
        %1748 = vmatprep.subr.bf16.mxu0 0
        %1749 = vmatpush1.bf16.msra.mxu0 0
        %1750 = vmatprep.subr.bf16.mxu0 0
        %1751 = vmatpush1.bf16.msra.mxu0 0
        %1752 = vmatprep.subr.bf16.mxu0 0
        %1753 = vmatpush1.bf16.msra.mxu0 0
        %1754 = vmatprep.subr.bf16.mxu0 0
        %1755 = vmatpush1.bf16.msra.mxu0 0
        %1756 = vmatprep.subr.bf16.mxu0 0
        %1757 = vmatpush1.bf16.msra.mxu0 0
        %1758 = vmatprep.subr.bf16.mxu0 0
        %1759 = vmatpush1.bf16.msra.mxu0 0
        %1760 = vmatprep.subr.bf16.mxu0 0
        %1761 = vmatpush1.bf16.msra.mxu0 %v1239
        %1762 = vmatprep.subr.bf16.mxu0 0
        %1763 = vmatpush1.bf16.msra.mxu0 %v1238
        %1764 = vmatprep.subr.bf16.mxu0 0
        %1765 = vmatpush2.bf16.msra.mxu0 0
        %1766 = vmatprep.subr.bf16.mxu0 0
        %1767 = vmatpush2.bf16.msra.mxu0 0
        %1768 = vmatprep.subr.bf16.mxu0 0
        %1769 = vmatpush2.bf16.msra.mxu0 0
        %1770 = vmatprep.subr.bf16.mxu0 0
        %1771 = vmatpush2.bf16.msra.mxu0 0
        %1772 = vmatprep.subr.bf16.mxu0 0
        %1773 = vmatpush2.bf16.msra.mxu0 0
        %1774 = vmatprep.subr.bf16.mxu0 0
        %1775 = vmatpush2.bf16.msra.mxu0 0
        %1776 = vmatprep.subr.bf16.mxu0 0
        %1777 = vmatpush2.bf16.msra.mxu0 0
        %1778 = vmatprep.subr.bf16.mxu0 0
        %1779 = vmatpush2.bf16.msra.mxu0 0
        %1780 = vmatprep.mubr.bf16.mxu0 0
        %1781 = vmatmul.mubr.bf16.gmra.mxu0 %v1746
        %v1782 = vpop.f32.mrf.mxu0
        %v1783 = vadd.f32 0.0, %v1782
        %v1784 = vpop.f32.mrf.mxu0
        %v1785 = vpop.f32.mrf.mxu0
        %v1786 = vadd.f32 0.0, %v1785
        %v1787 = vpop.f32.mrf.mxu0
        %1788 = vdwg.mxu0
        %v1789 = vpack.c.bf16 %v1786, %v1783
        %v1791 = vsel %vm1287, %v1789, 0
        %1793 = vmatprep.subr.bf16.mxu0 0
        %1794 = vmatpush1.bf16.msra.mxu0 0
        %1795 = vmatprep.subr.bf16.mxu0 0
        %1796 = vmatpush1.bf16.msra.mxu0 0
        %1797 = vmatprep.subr.bf16.mxu0 0
        %1798 = vmatpush1.bf16.msra.mxu0 0
        %1799 = vmatprep.subr.bf16.mxu0 0
        %1800 = vmatpush1.bf16.msra.mxu0 0
        %1801 = vmatprep.subr.bf16.mxu0 0
        %1802 = vmatpush1.bf16.msra.mxu0 0
        %1803 = vmatprep.subr.bf16.mxu0 0
        %1804 = vmatpush1.bf16.msra.mxu0 0
        %1805 = vmatprep.subr.bf16.mxu0 0
        %1806 = vmatpush1.bf16.msra.mxu0 0
        %1807 = vmatprep.subr.bf16.mxu0 0
        %1808 = vmatpush1.bf16.msra.mxu0 %v1293
        %1809 = vmatprep.subr.bf16.mxu0 0
        %1810 = vmatpush2.bf16.msra.mxu0 0
        %1811 = vmatprep.subr.bf16.mxu0 0
        %1812 = vmatpush2.bf16.msra.mxu0 0
        %1813 = vmatprep.subr.bf16.mxu0 0
        %1814 = vmatpush2.bf16.msra.mxu0 0
        %1815 = vmatprep.subr.bf16.mxu0 0
        %1816 = vmatpush2.bf16.msra.mxu0 0
        %1817 = vmatprep.subr.bf16.mxu0 0
        %1818 = vmatpush2.bf16.msra.mxu0 0
        %1819 = vmatprep.subr.bf16.mxu0 0
        %1820 = vmatpush2.bf16.msra.mxu0 0
        %1821 = vmatprep.subr.bf16.mxu0 0
        %1822 = vmatpush2.bf16.msra.mxu0 0
        %1823 = vmatprep.subr.bf16.mxu0 0
        %1824 = vmatpush2.bf16.msra.mxu0 0
        %1825 = vmatprep.mubr.bf16.mxu0 0
        %1826 = vmatmul.mubr.bf16.gmra.mxu0 %v1791
        %v1827 = vpop.f32.mrf.mxu0
        %v1828 = vadd.f32 1e-05, %v1827
        %v1829 = vpop.f32.mrf.mxu0
        %v1830 = vpop.f32.mrf.mxu0
        %v1831 = vadd.f32 1e-05, %v1830
        %v1832 = vpop.f32.mrf.mxu0
        %1833 = vdwg.mxu0
        %v1834 = vrsqrt.pop %v1828
        %v1835 = vrsqrt.pop %v1831
        %v1836 = vmul.f32 %v1740, %v1834
        %v1837 = vmul.f32 %v1741, %v1835
        %v1839 = vlaneseq
        %v1840 = vshrl.u32 %v1839, 7
        %v1841 = vsub.s32 0, %v1840
        %v1842 = vrot.slane %v1648, %v1841
        %v1844 = vmul.f32 %v1836, %v1842
        %v1845 = vmul.f32 %v1837, %v1842
        %v1847 = vlaneseq
        %v1848 = vshrl.u32 %v1847, 7
        %v1849 = vsub.s32 0, %v1848
        %v1850 = vrot.slane %v1649, %v1849
        %v1852 = vadd.f32 %v1844, %v1850
        %v1853 = vadd.f32 %v1845, %v1850
        %v1854 = vld [vmem:[#allocation10 + $0x1e] sm:$0x1]
        %v1855 = vld [vmem:[#allocation10 + $0x1f] sm:$0x1]
        %v1856 = vpack.c.bf16 %v1178, %v1178
        %v1858 = vsel %vm621, %v1856, 0
        %1860 = vmatprep.subr.bf16.mxu0 0
        %1861 = vmatpush1.bf16.msra.mxu0 0
        %1862 = vmatprep.subr.bf16.mxu0 0
        %1863 = vmatpush1.bf16.msra.mxu0 0
        %1864 = vmatprep.subr.bf16.mxu0 0
        %1865 = vmatpush1.bf16.msra.mxu0 0
        %1866 = vmatprep.subr.bf16.mxu0 0
        %1867 = vmatpush1.bf16.msra.mxu0 0
        %1868 = vmatprep.subr.bf16.mxu0 0
        %1869 = vmatpush1.bf16.msra.mxu0 0
        %1870 = vmatprep.subr.bf16.mxu0 0
        %1871 = vmatpush1.bf16.msra.mxu0 0
        %1872 = vmatprep.subr.bf16.mxu0 0
        %1873 = vmatpush1.bf16.msra.mxu0 %v1239
        %1874 = vmatprep.subr.bf16.mxu0 0
        %1875 = vmatpush1.bf16.msra.mxu0 %v1238
        %1876 = vmatprep.subr.bf16.mxu0 0
        %1877 = vmatpush2.bf16.msra.mxu0 0
        %1878 = vmatprep.subr.bf16.mxu0 0
        %1879 = vmatpush2.bf16.msra.mxu0 0
        %1880 = vmatprep.subr.bf16.mxu0 0
        %1881 = vmatpush2.bf16.msra.mxu0 0
        %1882 = vmatprep.subr.bf16.mxu0 0
        %1883 = vmatpush2.bf16.msra.mxu0 0
        %1884 = vmatprep.subr.bf16.mxu0 0
        %1885 = vmatpush2.bf16.msra.mxu0 0
        %1886 = vmatprep.subr.bf16.mxu0 0
        %1887 = vmatpush2.bf16.msra.mxu0 0
        %1888 = vmatprep.subr.bf16.mxu0 0
        %1889 = vmatpush2.bf16.msra.mxu0 0
        %1890 = vmatprep.subr.bf16.mxu0 0
        %1891 = vmatpush2.bf16.msra.mxu0 0
        %1892 = vmatprep.mubr.bf16.mxu0 0
        %1893 = vmatmul.mubr.bf16.gmra.mxu0 %v1858
        %v1894 = vpop.f32.mrf.mxu0
        %v1895 = vadd.f32 0.0, %v1894
        %v1896 = vpop.f32.mrf.mxu0
        %v1897 = vpop.f32.mrf.mxu0
        %v1898 = vpop.f32.mrf.mxu0
        %1899 = vdwg.mxu0
        %v1900 = vpack.c.bf16 %v1895, %v1895
        %v1902 = vsel %vm1287, %v1900, 0
        %1904 = vmatprep.subr.bf16.mxu0 0
        %1905 = vmatpush1.bf16.msra.mxu0 0
        %1906 = vmatprep.subr.bf16.mxu0 0
        %1907 = vmatpush1.bf16.msra.mxu0 0
        %1908 = vmatprep.subr.bf16.mxu0 0
        %1909 = vmatpush1.bf16.msra.mxu0 0
        %1910 = vmatprep.subr.bf16.mxu0 0
        %1911 = vmatpush1.bf16.msra.mxu0 0
        %1912 = vmatprep.subr.bf16.mxu0 0
        %1913 = vmatpush1.bf16.msra.mxu0 0
        %1914 = vmatprep.subr.bf16.mxu0 0
        %1915 = vmatpush1.bf16.msra.mxu0 0
        %1916 = vmatprep.subr.bf16.mxu0 0
        %1917 = vmatpush1.bf16.msra.mxu0 0
        %1918 = vmatprep.subr.bf16.mxu0 0
        %1919 = vmatpush1.bf16.msra.mxu0 %v1293
        %1920 = vmatprep.subr.bf16.mxu0 0
        %1921 = vmatpush2.bf16.msra.mxu0 0
        %1922 = vmatprep.subr.bf16.mxu0 0
        %1923 = vmatpush2.bf16.msra.mxu0 0
        %1924 = vmatprep.subr.bf16.mxu0 0
        %1925 = vmatpush2.bf16.msra.mxu0 0
        %1926 = vmatprep.subr.bf16.mxu0 0
        %1927 = vmatpush2.bf16.msra.mxu0 0
        %1928 = vmatprep.subr.bf16.mxu0 0
        %1929 = vmatpush2.bf16.msra.mxu0 0
        %1930 = vmatprep.subr.bf16.mxu0 0
        %1931 = vmatpush2.bf16.msra.mxu0 0
        %1932 = vmatprep.subr.bf16.mxu0 0
        %1933 = vmatpush2.bf16.msra.mxu0 0
        %1934 = vmatprep.subr.bf16.mxu0 0
        %1935 = vmatpush2.bf16.msra.mxu0 0
        %1936 = vmatprep.mubr.bf16.mxu0 0
        %1937 = vmatmul.mubr.bf16.gmra.mxu0 %v1902
        %v1938 = vpop.f32.mrf.mxu0
        %v1939 = vadd.f32 0.0, %v1938
        %v1940 = vpop.f32.mrf.mxu0
        %v1941 = vpop.f32.mrf.mxu0
        %v1942 = vpop.f32.mrf.mxu0
        %1943 = vdwg.mxu0
        %v1944 = vsub.f32 %v1178, %v1939
        %v1945 = vmul.f32 %v1944, %v1944
        %v1946 = vpack.c.bf16 %v1945, %v1945
        %v1948 = vsel %vm621, %v1946, 0
        %1950 = vmatprep.subr.bf16.mxu0 0
        %1951 = vmatpush1.bf16.msra.mxu0 0
        %1952 = vmatprep.subr.bf16.mxu0 0
        %1953 = vmatpush1.bf16.msra.mxu0 0
        %1954 = vmatprep.subr.bf16.mxu0 0
        %1955 = vmatpush1.bf16.msra.mxu0 0
        %1956 = vmatprep.subr.bf16.mxu0 0
        %1957 = vmatpush1.bf16.msra.mxu0 0
        %1958 = vmatprep.subr.bf16.mxu0 0
        %1959 = vmatpush1.bf16.msra.mxu0 0
        %1960 = vmatprep.subr.bf16.mxu0 0
        %1961 = vmatpush1.bf16.msra.mxu0 0
        %1962 = vmatprep.subr.bf16.mxu0 0
        %1963 = vmatpush1.bf16.msra.mxu0 %v1239
        %1964 = vmatprep.subr.bf16.mxu0 0
        %1965 = vmatpush1.bf16.msra.mxu0 %v1238
        %1966 = vmatprep.subr.bf16.mxu0 0
        %1967 = vmatpush2.bf16.msra.mxu0 0
        %1968 = vmatprep.subr.bf16.mxu0 0
        %1969 = vmatpush2.bf16.msra.mxu0 0
        %1970 = vmatprep.subr.bf16.mxu0 0
        %1971 = vmatpush2.bf16.msra.mxu0 0
        %1972 = vmatprep.subr.bf16.mxu0 0
        %1973 = vmatpush2.bf16.msra.mxu0 0
        %1974 = vmatprep.subr.bf16.mxu0 0
        %1975 = vmatpush2.bf16.msra.mxu0 0
        %1976 = vmatprep.subr.bf16.mxu0 0
        %1977 = vmatpush2.bf16.msra.mxu0 0
        %1978 = vmatprep.subr.bf16.mxu0 0
        %1979 = vmatpush2.bf16.msra.mxu0 0
        %1980 = vmatprep.subr.bf16.mxu0 0
        %1981 = vmatpush2.bf16.msra.mxu0 0
        %1982 = vmatprep.mubr.bf16.mxu0 0
        %1983 = vmatmul.mubr.bf16.gmra.mxu0 %v1948
        %v1984 = vpop.f32.mrf.mxu0
        %v1985 = vadd.f32 0.0, %v1984
        %v1986 = vpop.f32.mrf.mxu0
        %v1987 = vpop.f32.mrf.mxu0
        %v1988 = vpop.f32.mrf.mxu0
        %1989 = vdwg.mxu0
        %v1990 = vpack.c.bf16 %v1985, %v1985
        %v1992 = vsel %vm1287, %v1990, 0
        %1994 = vmatprep.subr.bf16.mxu0 0
        %1995 = vmatpush1.bf16.msra.mxu0 0
        %1996 = vmatprep.subr.bf16.mxu0 0
        %1997 = vmatpush1.bf16.msra.mxu0 0
        %1998 = vmatprep.subr.bf16.mxu0 0
        %1999 = vmatpush1.bf16.msra.mxu0 0
        %2000 = vmatprep.subr.bf16.mxu0 0
        %2001 = vmatpush1.bf16.msra.mxu0 0
        %2002 = vmatprep.subr.bf16.mxu0 0
        %2003 = vmatpush1.bf16.msra.mxu0 0
        %2004 = vmatprep.subr.bf16.mxu0 0
        %2005 = vmatpush1.bf16.msra.mxu0 0
        %2006 = vmatprep.subr.bf16.mxu0 0
        %2007 = vmatpush1.bf16.msra.mxu0 0
        %2008 = vmatprep.subr.bf16.mxu0 0
        %2009 = vmatpush1.bf16.msra.mxu0 %v1293
        %2010 = vmatprep.subr.bf16.mxu0 0
        %2011 = vmatpush2.bf16.msra.mxu0 0
        %2012 = vmatprep.subr.bf16.mxu0 0
        %2013 = vmatpush2.bf16.msra.mxu0 0
        %2014 = vmatprep.subr.bf16.mxu0 0
        %2015 = vmatpush2.bf16.msra.mxu0 0
        %2016 = vmatprep.subr.bf16.mxu0 0
        %2017 = vmatpush2.bf16.msra.mxu0 0
        %2018 = vmatprep.subr.bf16.mxu0 0
        %2019 = vmatpush2.bf16.msra.mxu0 0
        %2020 = vmatprep.subr.bf16.mxu0 0
        %2021 = vmatpush2.bf16.msra.mxu0 0
        %2022 = vmatprep.subr.bf16.mxu0 0
        %2023 = vmatpush2.bf16.msra.mxu0 0
        %2024 = vmatprep.subr.bf16.mxu0 0
        %2025 = vmatpush2.bf16.msra.mxu0 0
        %2026 = vmatprep.mubr.bf16.mxu0 0
        %2027 = vmatmul.mubr.bf16.gmra.mxu0 %v1992
        %v2028 = vpop.f32.mrf.mxu0
        %v2029 = vadd.f32 1e-05, %v2028
        %v2030 = vpop.f32.mrf.mxu0
        %v2031 = vpop.f32.mrf.mxu0
        %v2032 = vpop.f32.mrf.mxu0
        %2033 = vdwg.mxu0
        %v2034 = vrsqrt.pop %v2029
        %v2035 = vmul.f32 %v1944, %v2034
        %v2037 = vlaneseq
        %v2038 = vshrl.u32 %v2037, 7
        %v2039 = vsub.s32 0, %v2038
        %v2040 = vrot.slane %v1854, %v2039
        %v2042 = vmul.f32 %v2035, %v2040
        %v2044 = vlaneseq
        %v2045 = vshrl.u32 %v2044, 7
        %v2046 = vsub.s32 0, %v2045
        %v2047 = vrot.slane %v1855, %v2046
        %v2049 = vadd.f32 %v2042, %v2047
        %v2050 = vpack.c.bf16 %v1853, %v1852
        %v2051 = vpack.c.bf16 %v2049, %v2049
        %v2052 = vpack.c.bf16 %v1078, %v1075
        %v2053 = vpack.c.bf16 %v1217, %v1217
        %vm2054 = vcmask 130048
        %v2056 = vsel %vm2054, %v1646, 0
        %v2059 = vsel %vm2054, %v1647, 0
        %v2062 = vsel %vm2054, %v2050, 0
        %v2065 = vsel %vm2054, %v2051, 0
        %2067 = vmatprep.subr.bf16.mxu0 0
        %2068 = vmatpush1.bf16.xpose.msra.mxu0 0
        %2069 = vmatprep.subr.bf16.mxu0 0
        %2070 = vmatpush1.bf16.xpose.msra.mxu0 0
        %2071 = vmatprep.subr.bf16.mxu0 0
        %2072 = vmatpush1.bf16.xpose.msra.mxu0 0
        %2073 = vmatprep.subr.bf16.mxu0 0
        %2074 = vmatpush1.bf16.xpose.msra.mxu0 0
        %2075 = vmatprep.subr.bf16.mxu0 0
        %2076 = vmatpush1.bf16.xpose.msra.mxu0 0
        %2077 = vmatprep.subr.bf16.mxu0 0
        %2078 = vmatpush1.bf16.xpose.msra.mxu0 0
        %2079 = vmatprep.subr.bf16.mxu0 0
        %2080 = vmatpush1.bf16.xpose.msra.mxu0 %v2065
        %2081 = vmatprep.subr.bf16.mxu0 0
        %2082 = vmatpush1.bf16.xpose.msra.mxu0 %v2062
        %2083 = vmatprep.subr.bf16.mxu0 0
        %2084 = vmatpush2.bf16.xpose.msra.mxu0 0
        %2085 = vmatprep.subr.bf16.mxu0 0
        %2086 = vmatpush2.bf16.xpose.msra.mxu0 0
        %2087 = vmatprep.subr.bf16.mxu0 0
        %2088 = vmatpush2.bf16.xpose.msra.mxu0 0
        %2089 = vmatprep.subr.bf16.mxu0 0
        %2090 = vmatpush2.bf16.xpose.msra.mxu0 0
        %2091 = vmatprep.subr.bf16.mxu0 0
        %2092 = vmatpush2.bf16.xpose.msra.mxu0 0
        %2093 = vmatprep.subr.bf16.mxu0 0
        %2094 = vmatpush2.bf16.xpose.msra.mxu0 0
        %2095 = vmatprep.subr.bf16.mxu0 0
        %2096 = vmatpush2.bf16.xpose.msra.mxu0 0
        %2097 = vmatprep.subr.bf16.mxu0 0
        %2098 = vmatpush2.bf16.xpose.msra.mxu0 0
        %2099 = vmatprep.mubr.bf16.mxu0 0
        %2100 = vmatmul.mubr.bf16.gmra.mxu0 %v2056
        %v2101 = vpop.f32.mrf.mxu0
        %v2102 = vadd.f32 0.0, %v2101
        %v2103 = vpop.f32.mrf.mxu0
        %v2104 = vpop.f32.mrf.mxu0
        %v2105 = vadd.f32 0.0, %v2104
        %v2106 = vpop.f32.mrf.mxu0
        %2107 = vmatprep.mubr.bf16.mxu0 0
        %2108 = vmatmul.mubr.bf16.gmra.mxu0 %v2059
        %v2109 = vpop.f32.mrf.mxu0
        %v2110 = vadd.f32 0.0, %v2109
        %v2111 = vpop.f32.mrf.mxu0
        %v2112 = vpop.f32.mrf.mxu0
        %v2113 = vpop.f32.mrf.mxu0
        %2114 = vdwg.mxu0
        %v2115 = vmul.f32 %v2102, 0.25
        %v2116 = vmul.f32 %v2105, 0.25
        %v2117 = vmul.f32 %v2110, 0.25
        %vm2118 = vcmask 195584
        %v2119 = vsel %vm2118, %v2115, -inf
        %2120 = vmax.xlane.f32.xlu0 %v2119
        %v2121 = vpop.xlane.xlu0 %2120
        %v2122 = vsel %vm2118, %v2116, -inf
        %2123 = vmax.xlane.f32.xlu0 %v2122
        %v2124 = vpop.xlane.xlu0 %2123
        %v2125 = vsel %vm2118, %v2117, -inf
        %2126 = vmax.xlane.f32.xlu0 %v2125
        %v2127 = vpop.xlane.xlu0 %2126
        %v2128 = vsub.f32 %v2115, %v2121
        %v2129 = vsub.f32 %v2116, %v2124
        %v2130 = vsub.f32 %v2117, %v2127
        %v2131 = vmul.f32 %v2128, 1.442695
        %v2132 = vpow.pop %v2131
        %v2133 = vmul.f32 %v2129, 1.442695
        %v2134 = vpow.pop %v2133
        %v2135 = vmul.f32 %v2130, 1.442695
        %v2136 = vpow.pop %v2135
        %v2137 = vsel %vm2118, %v2132, 0.0
        %2138 = vadd.xlane.f32.xlu0 %v2137
        %v2139 = vpop.xlane.xlu0 %2138
        %v2140 = vsel %vm2118, %v2134, 0.0
        %2141 = vadd.xlane.f32.xlu0 %v2140
        %v2142 = vpop.xlane.xlu0 %2141
        %v2143 = vsel %vm2118, %v2136, 0.0
        %2144 = vadd.xlane.f32.xlu0 %v2143
        %v2145 = vpop.xlane.xlu0 %2144
        %v2146 = vrcp.pop %v2139
        %v2147 = vrcp.pop %v2142
        %v2148 = vrcp.pop %v2145
        %v2149 = vmul.f32 %v2132, %v2146
        %v2150 = vmul.f32 %v2134, %v2147
        %v2151 = vmul.f32 %v2136, %v2148
        %v2152 = vpack.c.bf16 %v2150, %v2149
        %v2153 = vpack.c.bf16 %v2151, %v2151
        %v2155 = vsel %vm2118, %v2152, 0
        %v2158 = vsel %vm2118, %v2153, 0
        %vm2160 = vcmask 1043456
        %v2162 = vsel %vm2160, %v2053, 0
        %2164 = vmatprep.subr.bf16.mxu0 0
        %2165 = vmatpush1.bf16.msra.mxu0 0
        %2166 = vmatprep.subr.bf16.mxu0 0
        %2167 = vmatpush1.bf16.msra.mxu0 0
        %2168 = vmatprep.subr.bf16.mxu0 0
        %2169 = vmatpush1.bf16.msra.mxu0 0
        %2170 = vmatprep.subr.bf16.mxu0 0
        %2171 = vmatpush1.bf16.msra.mxu0 0
        %2172 = vmatprep.subr.bf16.mxu0 0
        %2173 = vmatpush1.bf16.msra.mxu0 0
        %2174 = vmatprep.subr.bf16.mxu0 0
        %2175 = vmatpush1.bf16.msra.mxu0 0
        %2176 = vmatprep.subr.bf16.mxu0 0
        %2177 = vmatpush1.bf16.msra.mxu0 %v2162
        %2178 = vmatprep.subr.bf16.mxu0 0
        %2179 = vmatpush1.bf16.msra.mxu0 %v2052
        %2180 = vmatprep.subr.bf16.mxu0 0
        %2181 = vmatpush2.bf16.msra.mxu0 0
        %2182 = vmatprep.subr.bf16.mxu0 0
        %2183 = vmatpush2.bf16.msra.mxu0 0
        %2184 = vmatprep.subr.bf16.mxu0 0
        %2185 = vmatpush2.bf16.msra.mxu0 0
        %2186 = vmatprep.subr.bf16.mxu0 0
        %2187 = vmatpush2.bf16.msra.mxu0 0
        %2188 = vmatprep.subr.bf16.mxu0 0
        %2189 = vmatpush2.bf16.msra.mxu0 0
        %2190 = vmatprep.subr.bf16.mxu0 0
        %2191 = vmatpush2.bf16.msra.mxu0 0
        %2192 = vmatprep.subr.bf16.mxu0 0
        %2193 = vmatpush2.bf16.msra.mxu0 0
        %2194 = vmatprep.subr.bf16.mxu0 0
        %2195 = vmatpush2.bf16.msra.mxu0 0
        %2196 = vmatprep.mubr.bf16.mxu0 0
        %2197 = vmatmul.mubr.bf16.gmra.mxu0 %v2155
        %v2198 = vpop.f32.mrf.mxu0
        %v2199 = vadd.f32 0.0, %v2198
        %v2200 = vpop.f32.mrf.mxu0
        %v2201 = vpop.f32.mrf.mxu0
        %v2202 = vadd.f32 0.0, %v2201
        %v2203 = vpop.f32.mrf.mxu0
        %2204 = vmatprep.mubr.bf16.mxu0 0
        %2205 = vmatmul.mubr.bf16.gmra.mxu0 %v2158
        %v2206 = vpop.f32.mrf.mxu0
        %v2207 = vadd.f32 0.0, %v2206
        %v2208 = vpop.f32.mrf.mxu0
        %v2209 = vpop.f32.mrf.mxu0
        %v2210 = vpop.f32.mrf.mxu0
        %2211 = vdwg.mxu0
        %v2212 = vpack.c.bf16 %v2202, %v2199
        %v2213 = vpack.c.bf16 %v2207, %v2207
        %v2214 = vld [vmem:[#allocation7 + $0x48] sm:$0xf]
        %v2215 = vld [vmem:[#allocation7 + $0xa8] sm:$0xf]
        %v2216 = vld [vmem:[#allocation7 + $0x4c] sm:$0xf]
        %v2217 = vld [vmem:[#allocation7 + $0xac] sm:$0xf]
        %2220 = vrot.lane.b32.xlu0 %v1646, 112
        %v2221 = vpop.permute.xlu0 %2220
        %2222 = vrot.lane.b32.xlu0 %v1647, 112
        %v2223 = vpop.permute.xlu0 %2222
        %2226 = vrot.lane.b32.xlu0 %v2050, 112
        %v2227 = vpop.permute.xlu0 %2226
        %2228 = vrot.lane.b32.xlu0 %v2051, 112
        %v2229 = vpop.permute.xlu0 %2228
        %v2231 = vsel %vm2054, %v2221, 0
        %v2234 = vsel %vm2054, %v2223, 0
        %v2237 = vsel %vm2054, %v2227, 0
        %v2240 = vsel %vm2054, %v2229, 0
        %2242 = vmatprep.subr.bf16.mxu0 0
        %2243 = vmatpush1.bf16.xpose.msra.mxu0 0
        %2244 = vmatprep.subr.bf16.mxu0 0
        %2245 = vmatpush1.bf16.xpose.msra.mxu0 0
        %2246 = vmatprep.subr.bf16.mxu0 0
        %2247 = vmatpush1.bf16.xpose.msra.mxu0 0
        %2248 = vmatprep.subr.bf16.mxu0 0
        %2249 = vmatpush1.bf16.xpose.msra.mxu0 0
        %2250 = vmatprep.subr.bf16.mxu0 0
        %2251 = vmatpush1.bf16.xpose.msra.mxu0 0
        %2252 = vmatprep.subr.bf16.mxu0 0
        %2253 = vmatpush1.bf16.xpose.msra.mxu0 0
        %2254 = vmatprep.subr.bf16.mxu0 0
        %2255 = vmatpush1.bf16.xpose.msra.mxu0 %v2240
        %2256 = vmatprep.subr.bf16.mxu0 0
        %2257 = vmatpush1.bf16.xpose.msra.mxu0 %v2237
        %2258 = vmatprep.subr.bf16.mxu0 0
        %2259 = vmatpush2.bf16.xpose.msra.mxu0 0
        %2260 = vmatprep.subr.bf16.mxu0 0
        %2261 = vmatpush2.bf16.xpose.msra.mxu0 0
        %2262 = vmatprep.subr.bf16.mxu0 0
        %2263 = vmatpush2.bf16.xpose.msra.mxu0 0
        %2264 = vmatprep.subr.bf16.mxu0 0
        %2265 = vmatpush2.bf16.xpose.msra.mxu0 0
        %2266 = vmatprep.subr.bf16.mxu0 0
        %2267 = vmatpush2.bf16.xpose.msra.mxu0 0
        %2268 = vmatprep.subr.bf16.mxu0 0
        %2269 = vmatpush2.bf16.xpose.msra.mxu0 0
        %2270 = vmatprep.subr.bf16.mxu0 0
        %2271 = vmatpush2.bf16.xpose.msra.mxu0 0
        %2272 = vmatprep.subr.bf16.mxu0 0
        %2273 = vmatpush2.bf16.xpose.msra.mxu0 0
        %2274 = vmatprep.mubr.bf16.mxu0 0
        %2275 = vmatmul.mubr.bf16.gmra.mxu0 %v2231
        %v2276 = vpop.f32.mrf.mxu0
        %v2277 = vadd.f32 0.0, %v2276
        %v2278 = vpop.f32.mrf.mxu0
        %v2279 = vpop.f32.mrf.mxu0
        %v2280 = vadd.f32 0.0, %v2279
        %v2281 = vpop.f32.mrf.mxu0
        %2282 = vmatprep.mubr.bf16.mxu0 0
        %2283 = vmatmul.mubr.bf16.gmra.mxu0 %v2234
        %v2284 = vpop.f32.mrf.mxu0
        %v2285 = vadd.f32 0.0, %v2284
        %v2286 = vpop.f32.mrf.mxu0
        %v2287 = vpop.f32.mrf.mxu0
        %v2288 = vpop.f32.mrf.mxu0
        %2289 = vdwg.mxu0
        %v2290 = vmul.f32 %v2277, 0.25
        %v2291 = vmul.f32 %v2280, 0.25
        %v2292 = vmul.f32 %v2285, 0.25
        %v2293 = vsel %vm2118, %v2290, -inf
        %2294 = vmax.xlane.f32.xlu0 %v2293
        %v2295 = vpop.xlane.xlu0 %2294
        %v2296 = vsel %vm2118, %v2291, -inf
        %2297 = vmax.xlane.f32.xlu0 %v2296
        %v2298 = vpop.xlane.xlu0 %2297
        %v2299 = vsel %vm2118, %v2292, -inf
        %2300 = vmax.xlane.f32.xlu0 %v2299
        %v2301 = vpop.xlane.xlu0 %2300
        %v2302 = vsub.f32 %v2290, %v2295
        %v2303 = vsub.f32 %v2291, %v2298
        %v2304 = vsub.f32 %v2292, %v2301
        %v2305 = vmul.f32 %v2302, 1.442695
        %v2306 = vpow.pop %v2305
        %v2307 = vmul.f32 %v2303, 1.442695
        %v2308 = vpow.pop %v2307
        %v2309 = vmul.f32 %v2304, 1.442695
        %v2310 = vpow.pop %v2309
        %v2311 = vsel %vm2118, %v2306, 0.0
        %2312 = vadd.xlane.f32.xlu0 %v2311
        %v2313 = vpop.xlane.xlu0 %2312
        %v2314 = vsel %vm2118, %v2308, 0.0
        %2315 = vadd.xlane.f32.xlu0 %v2314
        %v2316 = vpop.xlane.xlu0 %2315
        %v2317 = vsel %vm2118, %v2310, 0.0
        %2318 = vadd.xlane.f32.xlu0 %v2317
        %v2319 = vpop.xlane.xlu0 %2318
        %v2320 = vrcp.pop %v2313
        %v2321 = vrcp.pop %v2316
        %v2322 = vrcp.pop %v2319
        %v2323 = vmul.f32 %v2306, %v2320
        %v2324 = vmul.f32 %v2308, %v2321
        %v2325 = vmul.f32 %v2310, %v2322
        %v2326 = vpack.c.bf16 %v2324, %v2323
        %v2327 = vpack.c.bf16 %v2325, %v2325
        %2330 = vrot.lane.b32.xlu0 %v2052, 112
        %v2331 = vpop.permute.xlu0 %2330
        %2332 = vrot.lane.b32.xlu0 %v2053, 112
        %v2333 = vpop.permute.xlu0 %2332
        %v2336 = vsel %vm2118, %v2326, 0
        %v2339 = vsel %vm2118, %v2327, 0
        %v2342 = vsel %vm2160, %v2333, 0
        %2344 = vmatprep.subr.bf16.mxu0 0
        %2345 = vmatpush1.bf16.msra.mxu0 0
        %2346 = vmatprep.subr.bf16.mxu0 0
        %2347 = vmatpush1.bf16.msra.mxu0 0
        %2348 = vmatprep.subr.bf16.mxu0 0
        %2349 = vmatpush1.bf16.msra.mxu0 0
        %2350 = vmatprep.subr.bf16.mxu0 0
        %2351 = vmatpush1.bf16.msra.mxu0 0
        %2352 = vmatprep.subr.bf16.mxu0 0
        %2353 = vmatpush1.bf16.msra.mxu0 0
        %2354 = vmatprep.subr.bf16.mxu0 0
        %2355 = vmatpush1.bf16.msra.mxu0 0
        %2356 = vmatprep.subr.bf16.mxu0 0
        %2357 = vmatpush1.bf16.msra.mxu0 %v2342
        %2358 = vmatprep.subr.bf16.mxu0 0
        %2359 = vmatpush1.bf16.msra.mxu0 %v2331
        %2360 = vmatprep.subr.bf16.mxu0 0
        %2361 = vmatpush2.bf16.msra.mxu0 0
        %2362 = vmatprep.subr.bf16.mxu0 0
        %2363 = vmatpush2.bf16.msra.mxu0 0
        %2364 = vmatprep.subr.bf16.mxu0 0
        %2365 = vmatpush2.bf16.msra.mxu0 0
        %2366 = vmatprep.subr.bf16.mxu0 0
        %2367 = vmatpush2.bf16.msra.mxu0 0
        %2368 = vmatprep.subr.bf16.mxu0 0
        %2369 = vmatpush2.bf16.msra.mxu0 0
        %2370 = vmatprep.subr.bf16.mxu0 0
        %2371 = vmatpush2.bf16.msra.mxu0 0
        %2372 = vmatprep.subr.bf16.mxu0 0
        %2373 = vmatpush2.bf16.msra.mxu0 0
        %2374 = vmatprep.subr.bf16.mxu0 0
        %2375 = vmatpush2.bf16.msra.mxu0 0
        %2376 = vmatprep.mubr.bf16.mxu0 0
        %2377 = vmatmul.mubr.bf16.gmra.mxu0 %v2336
        %v2378 = vpop.f32.mrf.mxu0
        %v2379 = vadd.f32 0.0, %v2378
        %v2380 = vpop.f32.mrf.mxu0
        %v2381 = vpop.f32.mrf.mxu0
        %v2382 = vadd.f32 0.0, %v2381
        %v2383 = vpop.f32.mrf.mxu0
        %2384 = vmatprep.mubr.bf16.mxu0 0
        %2385 = vmatmul.mubr.bf16.gmra.mxu0 %v2339
        %v2386 = vpop.f32.mrf.mxu0
        %v2387 = vadd.f32 0.0, %v2386
        %v2388 = vpop.f32.mrf.mxu0
        %v2389 = vpop.f32.mrf.mxu0
        %v2390 = vpop.f32.mrf.mxu0
        %2391 = vdwg.mxu0
        %v2392 = vpack.c.bf16 %v2382, %v2379
        %v2393 = vpack.c.bf16 %v2387, %v2387
        %v2394 = vld [vmem:[#allocation7 + $0x108] sm:$0xf]
        %v2395 = vld [vmem:[#allocation7 + $0x168] sm:$0xf]
        %v2398 = vunpack.c.l.b16 %v2394
        %v2399 = vunpack.c.l.b16 %v2395
        %v2400 = vpack.c.b16 %v2399, %v2398
        %v2403 = vsel %vm2054, %v2392, 0
        %2405 = vmatprep.subr.bf16.mxu0 0
        %2406 = vmatpush1.bf16.msra.mxu0 0
        %2407 = vmatprep.subr.bf16.mxu0 0
        %2408 = vmatpush1.bf16.msra.mxu0 0
        %2409 = vmatprep.subr.bf16.mxu0 0
        %2410 = vmatpush1.bf16.msra.mxu0 0
        %2411 = vmatprep.subr.bf16.mxu0 0
        %2412 = vmatpush1.bf16.msra.mxu0 0
        %2413 = vmatprep.subr.bf16.mxu0 0
        %2414 = vmatpush1.bf16.msra.mxu0 0
        %2415 = vmatprep.subr.bf16.mxu0 0
        %2416 = vmatpush1.bf16.msra.mxu0 0
        %2417 = vmatprep.subr.bf16.mxu0 0
        %2418 = vmatpush1.bf16.msra.mxu0 0
        %2419 = vmatprep.subr.bf16.mxu0 0
        %2420 = vmatpush1.bf16.msra.mxu0 %v2400
        %2421 = vmatprep.subr.bf16.mxu0 0
        %2422 = vmatpush2.bf16.msra.mxu0 0
        %2423 = vmatprep.subr.bf16.mxu0 0
        %2424 = vmatpush2.bf16.msra.mxu0 0
        %2425 = vmatprep.subr.bf16.mxu0 0
        %2426 = vmatpush2.bf16.msra.mxu0 0
        %2427 = vmatprep.subr.bf16.mxu0 0
        %2428 = vmatpush2.bf16.msra.mxu0 0
        %2429 = vmatprep.subr.bf16.mxu0 0
        %2430 = vmatpush2.bf16.msra.mxu0 0
        %2431 = vmatprep.subr.bf16.mxu0 0
        %2432 = vmatpush2.bf16.msra.mxu0 0
        %2433 = vmatprep.subr.bf16.mxu0 0
        %2434 = vmatpush2.bf16.msra.mxu0 0
        %2435 = vmatprep.subr.bf16.mxu0 0
        %2436 = vmatpush2.bf16.msra.mxu0 0
        %2437 = vmatprep.mubr.bf16.mxu0 0
        %2438 = vmatmul.mubr.bf16.gmra.mxu0 %v2403
        %v2439 = vpop.f32.mrf.mxu0
        %v2440 = vadd.f32 0.0, %v2439
        %v2441 = vpop.f32.mrf.mxu0
        %v2442 = vpop.f32.mrf.mxu0
        %v2443 = vadd.f32 0.0, %v2442
        %v2444 = vpop.f32.mrf.mxu0
        %2445 = vdwg.mxu0
        %v2448 = vunpack.c.l.b16 %v2214
        %v2449 = vunpack.c.l.b16 %v2215
        %v2450 = vpack.c.b16 %v2449, %v2448
        %v2453 = vsel %vm2054, %v2212, 0
        %2455 = vmatprep.subr.bf16.mxu0 0
        %2456 = vmatpush1.bf16.msra.mxu0 0
        %2457 = vmatprep.subr.bf16.mxu0 0
        %2458 = vmatpush1.bf16.msra.mxu0 0
        %2459 = vmatprep.subr.bf16.mxu0 0
        %2460 = vmatpush1.bf16.msra.mxu0 0
        %2461 = vmatprep.subr.bf16.mxu0 0
        %2462 = vmatpush1.bf16.msra.mxu0 0
        %2463 = vmatprep.subr.bf16.mxu0 0
        %2464 = vmatpush1.bf16.msra.mxu0 0
        %2465 = vmatprep.subr.bf16.mxu0 0
        %2466 = vmatpush1.bf16.msra.mxu0 0
        %2467 = vmatprep.subr.bf16.mxu0 0
        %2468 = vmatpush1.bf16.msra.mxu0 0
        %2469 = vmatprep.subr.bf16.mxu0 0
        %2470 = vmatpush1.bf16.msra.mxu0 %v2450
        %2471 = vmatprep.subr.bf16.mxu0 0
        %2472 = vmatpush2.bf16.msra.mxu0 0
        %2473 = vmatprep.subr.bf16.mxu0 0
        %2474 = vmatpush2.bf16.msra.mxu0 0
        %2475 = vmatprep.subr.bf16.mxu0 0
        %2476 = vmatpush2.bf16.msra.mxu0 0
        %2477 = vmatprep.subr.bf16.mxu0 0
        %2478 = vmatpush2.bf16.msra.mxu0 0
        %2479 = vmatprep.subr.bf16.mxu0 0
        %2480 = vmatpush2.bf16.msra.mxu0 0
        %2481 = vmatprep.subr.bf16.mxu0 0
        %2482 = vmatpush2.bf16.msra.mxu0 0
        %2483 = vmatprep.subr.bf16.mxu0 0
        %2484 = vmatpush2.bf16.msra.mxu0 0
        %2485 = vmatprep.subr.bf16.mxu0 0
        %2486 = vmatpush2.bf16.msra.mxu0 0
        %2487 = vmatprep.mubr.bf16.mxu0 0
        %2488 = vmatmul.mubr.bf16.gmra.mxu0 %v2453
        %v2489 = vpop.f32.mrf.mxu0
        %v2490 = vadd.f32 %v2440, %v2489
        %v2491 = vpop.f32.mrf.mxu0
        %v2492 = vpop.f32.mrf.mxu0
        %v2493 = vadd.f32 %v2443, %v2492
        %v2494 = vpop.f32.mrf.mxu0
        %2495 = vdwg.mxu0
        %v2496 = vld [vmem:[#allocation7 + $0x10c] sm:$0xf]
        %v2497 = vld [vmem:[#allocation7 + $0x16c] sm:$0xf]
        %v2500 = vunpack.c.l.b16 %v2496
        %v2501 = vunpack.c.l.b16 %v2497
        %v2502 = vpack.c.b16 %v2501, %v2500
        %v2505 = vsel %vm2054, %v2393, 0
        %2507 = vmatprep.subr.bf16.mxu0 0
        %2508 = vmatpush1.bf16.msra.mxu0 0
        %2509 = vmatprep.subr.bf16.mxu0 0
        %2510 = vmatpush1.bf16.msra.mxu0 0
        %2511 = vmatprep.subr.bf16.mxu0 0
        %2512 = vmatpush1.bf16.msra.mxu0 0
        %2513 = vmatprep.subr.bf16.mxu0 0
        %2514 = vmatpush1.bf16.msra.mxu0 0
        %2515 = vmatprep.subr.bf16.mxu0 0
        %2516 = vmatpush1.bf16.msra.mxu0 0
        %2517 = vmatprep.subr.bf16.mxu0 0
        %2518 = vmatpush1.bf16.msra.mxu0 0
        %2519 = vmatprep.subr.bf16.mxu0 0
        %2520 = vmatpush1.bf16.msra.mxu0 0
        %2521 = vmatprep.subr.bf16.mxu0 0
        %2522 = vmatpush1.bf16.msra.mxu0 %v2502
        %2523 = vmatprep.subr.bf16.mxu0 0
        %2524 = vmatpush2.bf16.msra.mxu0 0
        %2525 = vmatprep.subr.bf16.mxu0 0
        %2526 = vmatpush2.bf16.msra.mxu0 0
        %2527 = vmatprep.subr.bf16.mxu0 0
        %2528 = vmatpush2.bf16.msra.mxu0 0
        %2529 = vmatprep.subr.bf16.mxu0 0
        %2530 = vmatpush2.bf16.msra.mxu0 0
        %2531 = vmatprep.subr.bf16.mxu0 0
        %2532 = vmatpush2.bf16.msra.mxu0 0
        %2533 = vmatprep.subr.bf16.mxu0 0
        %2534 = vmatpush2.bf16.msra.mxu0 0
        %2535 = vmatprep.subr.bf16.mxu0 0
        %2536 = vmatpush2.bf16.msra.mxu0 0
        %2537 = vmatprep.subr.bf16.mxu0 0
        %2538 = vmatpush2.bf16.msra.mxu0 0
        %2539 = vmatprep.mubr.bf16.mxu0 0
        %2540 = vmatmul.mubr.bf16.gmra.mxu0 %v2505
        %v2541 = vpop.f32.mrf.mxu0
        %v2542 = vadd.f32 0.0, %v2541
        %v2543 = vpop.f32.mrf.mxu0
        %v2544 = vpop.f32.mrf.mxu0
        %v2545 = vpop.f32.mrf.mxu0
        %2546 = vdwg.mxu0
        %v2549 = vunpack.c.l.b16 %v2216
        %v2550 = vunpack.c.l.b16 %v2217
        %v2551 = vpack.c.b16 %v2550, %v2549
        %v2554 = vsel %vm2054, %v2213, 0
        %2556 = vmatprep.subr.bf16.mxu0 0
        %2557 = vmatpush1.bf16.msra.mxu0 0
        %2558 = vmatprep.subr.bf16.mxu0 0
        %2559 = vmatpush1.bf16.msra.mxu0 0
        %2560 = vmatprep.subr.bf16.mxu0 0
        %2561 = vmatpush1.bf16.msra.mxu0 0
        %2562 = vmatprep.subr.bf16.mxu0 0
        %2563 = vmatpush1.bf16.msra.mxu0 0
        %2564 = vmatprep.subr.bf16.mxu0 0
        %2565 = vmatpush1.bf16.msra.mxu0 0
        %2566 = vmatprep.subr.bf16.mxu0 0
        %2567 = vmatpush1.bf16.msra.mxu0 0
        %2568 = vmatprep.subr.bf16.mxu0 0
        %2569 = vmatpush1.bf16.msra.mxu0 0
        %2570 = vmatprep.subr.bf16.mxu0 0
        %2571 = vmatpush1.bf16.msra.mxu0 %v2551
        %2572 = vmatprep.subr.bf16.mxu0 0
        %2573 = vmatpush2.bf16.msra.mxu0 0
        %2574 = vmatprep.subr.bf16.mxu0 0
        %2575 = vmatpush2.bf16.msra.mxu0 0
        %2576 = vmatprep.subr.bf16.mxu0 0
        %2577 = vmatpush2.bf16.msra.mxu0 0
        %2578 = vmatprep.subr.bf16.mxu0 0
        %2579 = vmatpush2.bf16.msra.mxu0 0
        %2580 = vmatprep.subr.bf16.mxu0 0
        %2581 = vmatpush2.bf16.msra.mxu0 0
        %2582 = vmatprep.subr.bf16.mxu0 0
        %2583 = vmatpush2.bf16.msra.mxu0 0
        %2584 = vmatprep.subr.bf16.mxu0 0
        %2585 = vmatpush2.bf16.msra.mxu0 0
        %2586 = vmatprep.subr.bf16.mxu0 0
        %2587 = vmatpush2.bf16.msra.mxu0 0
        %2588 = vmatprep.mubr.bf16.mxu0 0
        %2589 = vmatmul.mubr.bf16.gmra.mxu0 %v2554
        %v2590 = vpop.f32.mrf.mxu0
        %v2591 = vadd.f32 %v2542, %v2590
        %v2592 = vpop.f32.mrf.mxu0
        %v2593 = vpop.f32.mrf.mxu0
        %v2594 = vpop.f32.mrf.mxu0
        %2595 = vdwg.mxu0
        %v2596 = vld [vmem:[#allocation10 + $0x12] sm:$0x1]
        %v2598 = vlaneseq
        %v2599 = vshrl.u32 %v2598, 7
        %v2600 = vsub.s32 0, %v2599
        %v2601 = vrot.slane %v2596, %v2600
        %v2603 = vadd.f32 %v2490, %v2601
        %v2604 = vadd.f32 %v2493, %v2601
        %v2605 = vld [vmem:[#allocation10 + $0x13] sm:$0x1]
        %v2607 = vlaneseq
        %v2608 = vshrl.u32 %v2607, 7
        %v2609 = vsub.s32 0, %v2608
        %v2610 = vrot.slane %v2605, %v2609
        %v2612 = vadd.f32 %v2591, %v2610
        %v2613 = vlaneseq
        %v2614 = vshrl.u32 %v2613, 7
        %v2615 = vsub.s32 0, %v2614
        %v2616 = vrot.slane %v701, %v2615
        %v2617 = vmul.f32 %v2616, %v2603
        %v2618 = vmul.f32 %v2616, %v2604
        %v2619 = vadd.f32 %v401, %v2617
        %v2620 = vadd.f32 %v402, %v2618
        %v2621 = vsel %vm621, %v2619, 0.0
        %2622 = vadd.xlane.f32.xlu0 %v2621
        %v2623 = vpop.xlane.xlu0 %2622
        %v2624 = vsel %vm621, %v2620, 0.0
        %2625 = vadd.xlane.f32.xlu0 %v2624
        %v2626 = vpop.xlane.xlu0 %2625
        %v2627 = vmul.f32 %v2623, %v877
        %v2628 = vmul.f32 %v2626, %v877
        %v2629 = vsub.f32 %v2619, %v2627
        %v2630 = vsub.f32 %v2620, %v2628
        %v2631 = vmul.f32 %v2629, %v2629
        %v2632 = vmul.f32 %v2630, %v2630
        %v2633 = vsel %vm621, %v2631, 0.0
        %2634 = vadd.xlane.f32.xlu0 %v2633
        %v2635 = vpop.xlane.xlu0 %2634
        %v2636 = vsel %vm621, %v2632, 0.0
        %2637 = vadd.xlane.f32.xlu0 %v2636
        %v2638 = vpop.xlane.xlu0 %2637
        %v2639 = vmul.f32 %v2635, %v877
        %v2640 = vmul.f32 %v2638, %v877
        %v2641 = vadd.f32 %v2639, 1e-06
        %v2642 = vadd.f32 %v2640, 1e-06
        %v2643 = vrsqrt.pop %v2641
        %v2644 = vrsqrt.pop %v2642
        %v2645 = vmul.f32 %v2629, %v2643
        %v2646 = vmul.f32 %v2630, %v2644
        %v2647 = vadd.f32 %v742, 1.0
        %v2648 = vlaneseq
        %v2649 = vshrl.u32 %v2648, 7
        %v2650 = vsub.s32 0, %v2649
        %v2651 = vrot.slane %v2647, %v2650
        %v2652 = vmul.f32 %v2645, %v2651
        %v2653 = vmul.f32 %v2646, %v2651
        %v2654 = vlaneseq
        %v2655 = vshrl.u32 %v2654, 7
        %v2656 = vsub.s32 0, %v2655
        %v2657 = vrot.slane %v703, %v2656
        %v2658 = vadd.f32 %v2652, %v2657
        %v2659 = vadd.f32 %v2653, %v2657
        %v2660 = vpack.c.bf16 %v2659, %v2658
        %v2661 = vld [vmem:[#allocation7 + $0x50] sm:$0xf]
        %v2662 = vld [vmem:[#allocation7 + $0xb0] sm:$0xf]
        %v2663 = vld [vmem:[#allocation7 + $0x110] sm:$0xf]
        %v2664 = vld [vmem:[#allocation7 + $0x170] sm:$0xf]
        %v2665 = vld [vmem:[#allocation10 + $0x14] sm:$0x1]
        %v2667 = vlaneseq
        %v2668 = vshrl.u32 %v2667, 7
        %v2669 = vsub.s32 0, %v2668
        %v2670 = vrot.slane %v2665, %v2669
        %v2676 = vunpack.c.l.b16 %v2661
        %v2677 = vunpack.c.l.b16 %v2662
        %v2678 = vunpack.c.l.b16 %v2663
        %v2679 = vunpack.c.l.b16 %v2664
        %v2680 = vpack.c.b16 %v2677, %v2676
        %v2681 = vpack.c.b16 %v2679, %v2678
        %v2685 = vsel %vm621, %v2660, 0
        %2687 = vmatprep.subr.bf16.mxu0 0
        %2688 = vmatpush1.bf16.msra.mxu0 0
        %2689 = vmatprep.subr.bf16.mxu0 0
        %2690 = vmatpush1.bf16.msra.mxu0 0
        %2691 = vmatprep.subr.bf16.mxu0 0
        %2692 = vmatpush1.bf16.msra.mxu0 0
        %2693 = vmatprep.subr.bf16.mxu0 0
        %2694 = vmatpush1.bf16.msra.mxu0 0
        %2695 = vmatprep.subr.bf16.mxu0 0
        %2696 = vmatpush1.bf16.msra.mxu0 0
        %2697 = vmatprep.subr.bf16.mxu0 0
        %2698 = vmatpush1.bf16.msra.mxu0 0
        %2699 = vmatprep.subr.bf16.mxu0 0
        %2700 = vmatpush1.bf16.msra.mxu0 %v2681
        %2701 = vmatprep.subr.bf16.mxu0 0
        %2702 = vmatpush1.bf16.msra.mxu0 %v2680
        %2703 = vmatprep.subr.bf16.mxu0 0
        %2704 = vmatpush2.bf16.msra.mxu0 0
        %2705 = vmatprep.subr.bf16.mxu0 0
        %2706 = vmatpush2.bf16.msra.mxu0 0
        %2707 = vmatprep.subr.bf16.mxu0 0
        %2708 = vmatpush2.bf16.msra.mxu0 0
        %2709 = vmatprep.subr.bf16.mxu0 0
        %2710 = vmatpush2.bf16.msra.mxu0 0
        %2711 = vmatprep.subr.bf16.mxu0 0
        %2712 = vmatpush2.bf16.msra.mxu0 0
        %2713 = vmatprep.subr.bf16.mxu0 0
        %2714 = vmatpush2.bf16.msra.mxu0 0
        %2715 = vmatprep.subr.bf16.mxu0 0
        %2716 = vmatpush2.bf16.msra.mxu0 0
        %2717 = vmatprep.subr.bf16.mxu0 0
        %2718 = vmatpush2.bf16.msra.mxu0 0
        %2719 = vmatprep.mubr.bf16.mxu0 0
        %2720 = vmatmul.mubr.bf16.gmra.mxu0 %v2685
        %v2721 = vpop.f32.mrf.mxu0
        %v2722 = vadd.f32 %v2670, %v2721
        %v2723 = vpop.f32.mrf.mxu0
        %v2724 = vpop.f32.mrf.mxu0
        %v2725 = vadd.f32 %v2670, %v2724
        %v2726 = vpop.f32.mrf.mxu0
        %2727 = vdwg.mxu0
        %v2728 = vmul.f32 %v2722, 0.5
        %v2729 = vmul.f32 %v2725, 0.5
        %v2730 = vmul.f32 %v2722, 0.044715
        %v2731 = vmul.f32 %v2725, 0.044715
        %v2732 = vmul.f32 %v2730, %v2722
        %v2733 = vmul.f32 %v2731, %v2725
        %v2734 = vmul.f32 %v2732, %v2722
        %v2735 = vmul.f32 %v2733, %v2725
        %v2736 = vadd.f32 %v2722, %v2734
        %v2737 = vadd.f32 %v2725, %v2735
        %v2738 = vmul.f32 %v2736, 0.7978846
        %v2739 = vmul.f32 %v2737, 0.7978846
        %v2740 = vtanh.pop %v2738
        %v2741 = vtanh.pop %v2739
        %v2742 = vadd.f32 %v2740, 1.0
        %v2743 = vadd.f32 %v2741, 1.0
        %v2744 = vmul.f32 %v2728, %v2742
        %v2745 = vmul.f32 %v2729, %v2743
        %v2746 = vpack.c.bf16 %v2745, %v2744
        %v2747 = vld [vmem:[#allocation8] sm:$0xf]
        %v2748 = vld [vmem:[#allocation8 + $0x8] sm:$0xf]
        %v2749 = vld [vmem:[#allocation8 + $0x10] sm:$0xf]
        %v2750 = vld [vmem:[#allocation8 + $0x18] sm:$0xf]
        %v2751 = vld [vmem:[#allocation8 + $0x20] sm:$0xf]
        %v2752 = vld [vmem:[#allocation8 + $0x28] sm:$0xf]
        %v2753 = vld [vmem:[#allocation8 + $0x30] sm:$0xf]
        %v2754 = vld [vmem:[#allocation8 + $0x38] sm:$0xf]
        %v2755 = vld [vmem:[#allocation8 + $0x40] sm:$0xf]
        %v2756 = vld [vmem:[#allocation8 + $0x48] sm:$0xf]
        %v2757 = vld [vmem:[#allocation8 + $0x50] sm:$0xf]
        %v2758 = vld [vmem:[#allocation8 + $0x58] sm:$0xf]
        %v2759 = vld [vmem:[#allocation8 + $0x60] sm:$0xf]
        %v2760 = vld [vmem:[#allocation8 + $0x68] sm:$0xf]
        %v2761 = vld [vmem:[#allocation8 + $0x70] sm:$0xf]
        %v2762 = vld [vmem:[#allocation8 + $0x78] sm:$0xf]
        %v2763 = vld [vmem:[#allocation10 + $0x16] sm:$0x1]
        %v2765 = vlaneseq
        %v2766 = vshrl.u32 %v2765, 7
        %v2767 = vsub.s32 0, %v2766
        %v2768 = vrot.slane %v2763, %v2767
        %v2786 = vunpack.c.l.b16 %v2747
        %v2787 = vunpack.c.l.b16 %v2748
        %v2788 = vunpack.c.l.b16 %v2749
        %v2789 = vunpack.c.l.b16 %v2750
        %v2790 = vunpack.c.l.b16 %v2751
        %v2791 = vunpack.c.l.b16 %v2752
        %v2792 = vunpack.c.l.b16 %v2753
        %v2793 = vunpack.c.l.b16 %v2754
        %v2794 = vunpack.c.l.b16 %v2755
        %v2795 = vunpack.c.l.b16 %v2756
        %v2796 = vunpack.c.l.b16 %v2757
        %v2797 = vunpack.c.l.b16 %v2758
        %v2798 = vunpack.c.l.b16 %v2759
        %v2799 = vunpack.c.l.b16 %v2760
        %v2800 = vunpack.c.l.b16 %v2761
        %v2801 = vunpack.c.l.b16 %v2762
        %v2802 = vpack.c.b16 %v2787, %v2786
        %v2803 = vpack.c.b16 %v2789, %v2788
        %v2804 = vpack.c.b16 %v2791, %v2790
        %v2805 = vpack.c.b16 %v2793, %v2792
        %v2806 = vpack.c.b16 %v2795, %v2794
        %v2807 = vpack.c.b16 %v2797, %v2796
        %v2808 = vpack.c.b16 %v2799, %v2798
        %v2809 = vpack.c.b16 %v2801, %v2800
        %2818 = vmatprep.subr.bf16.mxu0 0
        %2819 = vmatpush1.bf16.msra.mxu0 %v2809
        %2820 = vmatprep.subr.bf16.mxu0 0
        %2821 = vmatpush1.bf16.msra.mxu0 %v2808
        %2822 = vmatprep.subr.bf16.mxu0 0
        %2823 = vmatpush1.bf16.msra.mxu0 %v2807
        %2824 = vmatprep.subr.bf16.mxu0 0
        %2825 = vmatpush1.bf16.msra.mxu0 %v2806
        %2826 = vmatprep.subr.bf16.mxu0 0
        %2827 = vmatpush1.bf16.msra.mxu0 %v2805
        %2828 = vmatprep.subr.bf16.mxu0 0
        %2829 = vmatpush1.bf16.msra.mxu0 %v2804
        %2830 = vmatprep.subr.bf16.mxu0 0
        %2831 = vmatpush1.bf16.msra.mxu0 %v2803
        %2832 = vmatprep.subr.bf16.mxu0 0
        %2833 = vmatpush1.bf16.msra.mxu0 %v2802
        %2834 = vmatprep.subr.bf16.mxu0 0
        %2835 = vmatpush2.bf16.msra.mxu0 0
        %2836 = vmatprep.subr.bf16.mxu0 0
        %2837 = vmatpush2.bf16.msra.mxu0 0
        %2838 = vmatprep.subr.bf16.mxu0 0
        %2839 = vmatpush2.bf16.msra.mxu0 0
        %2840 = vmatprep.subr.bf16.mxu0 0
        %2841 = vmatpush2.bf16.msra.mxu0 0
        %2842 = vmatprep.subr.bf16.mxu0 0
        %2843 = vmatpush2.bf16.msra.mxu0 0
        %2844 = vmatprep.subr.bf16.mxu0 0
        %2845 = vmatpush2.bf16.msra.mxu0 0
        %2846 = vmatprep.subr.bf16.mxu0 0
        %2847 = vmatpush2.bf16.msra.mxu0 0
        %2848 = vmatprep.subr.bf16.mxu0 0
        %2849 = vmatpush2.bf16.msra.mxu0 0
        %2850 = vmatprep.mubr.bf16.mxu0 0
        %2851 = vmatmul.mubr.bf16.gmra.mxu0 %v2746
        %v2852 = vpop.f32.mrf.mxu0
        %v2853 = vadd.f32 %v2768, %v2852
        %v2854 = vpop.f32.mrf.mxu0
        %v2855 = vpop.f32.mrf.mxu0
        %v2856 = vadd.f32 %v2768, %v2855
        %v2857 = vpop.f32.mrf.mxu0
        %2858 = vdwg.mxu0
        %v2859 = vlaneseq
        %v2860 = vshrl.u32 %v2859, 7
        %v2861 = vsub.s32 0, %v2860
        %v2862 = vrot.slane %v744, %v2861
        %v2863 = vmul.f32 %v2862, %v2853
        %v2864 = vmul.f32 %v2862, %v2856
        %v2865 = vadd.f32 %v2619, %v2863
        %v2866 = vadd.f32 %v2620, %v2864
        %2867 = vst.msk [vmem:[%s389] sm:$0xff] %vm621, %v2865
        %2868 = vst.msk [vmem:[%s389 + $0x8] sm:$0xff] %vm621, %v2866
        %v2869 = vlaneseq
        %v2870 = vshrl.u32 %v2869, 7
        %v2871 = vsub.s32 0, %v2870
        %v2872 = vrot.slane %v824, %v2871
        %v2873 = vmul.f32 %v2872, %v2612
        %v2874 = vadd.f32 %v403, %v2873
        %v2875 = vsel %vm621, %v2874, 0.0
        %2876 = vadd.xlane.f32.xlu0 %v2875
        %v2877 = vpop.xlane.xlu0 %2876
        %v2878 = vmul.f32 %v2877, %v877
        %v2879 = vsub.f32 %v2874, %v2878
        %v2880 = vmul.f32 %v2879, %v2879
        %v2881 = vsel %vm621, %v2880, 0.0
        %2882 = vadd.xlane.f32.xlu0 %v2881
        %v2883 = vpop.xlane.xlu0 %2882
        %v2884 = vmul.f32 %v2883, %v877
        %v2885 = vadd.f32 %v2884, 1e-06
        %v2886 = vrsqrt.pop %v2885
        %v2887 = vmul.f32 %v2879, %v2886
        %v2888 = vadd.f32 %v865, 1.0
        %v2889 = vlaneseq
        %v2890 = vshrl.u32 %v2889, 7
        %v2891 = vsub.s32 0, %v2890
        %v2892 = vrot.slane %v2888, %v2891
        %v2893 = vmul.f32 %v2887, %v2892
        %v2894 = vlaneseq
        %v2895 = vshrl.u32 %v2894, 7
        %v2896 = vsub.s32 0, %v2895
        %v2897 = vrot.slane %v826, %v2896
        %v2898 = vadd.f32 %v2893, %v2897
        %v2899 = vpack.c.bf16 %v2898, %v2898
        %v2900 = vld [vmem:[#allocation7 + $0x54] sm:$0xf]
        %v2901 = vld [vmem:[#allocation7 + $0xb4] sm:$0xf]
        %v2902 = vld [vmem:[#allocation7 + $0x114] sm:$0xf]
        %v2903 = vld [vmem:[#allocation7 + $0x174] sm:$0xf]
        %v2904 = vld [vmem:[#allocation10 + $0x15] sm:$0x1]
        %v2906 = vlaneseq
        %v2907 = vshrl.u32 %v2906, 7
        %v2908 = vsub.s32 0, %v2907
        %v2909 = vrot.slane %v2904, %v2908
        %v2915 = vunpack.c.l.b16 %v2900
        %v2916 = vunpack.c.l.b16 %v2901
        %v2917 = vunpack.c.l.b16 %v2902
        %v2918 = vunpack.c.l.b16 %v2903
        %v2919 = vpack.c.b16 %v2916, %v2915
        %v2920 = vpack.c.b16 %v2918, %v2917
        %v2924 = vsel %vm621, %v2899, 0
        %2926 = vmatprep.subr.bf16.mxu0 0
        %2927 = vmatpush1.bf16.msra.mxu0 0
        %2928 = vmatprep.subr.bf16.mxu0 0
        %2929 = vmatpush1.bf16.msra.mxu0 0
        %2930 = vmatprep.subr.bf16.mxu0 0
        %2931 = vmatpush1.bf16.msra.mxu0 0
        %2932 = vmatprep.subr.bf16.mxu0 0
        %2933 = vmatpush1.bf16.msra.mxu0 0
        %2934 = vmatprep.subr.bf16.mxu0 0
        %2935 = vmatpush1.bf16.msra.mxu0 0
        %2936 = vmatprep.subr.bf16.mxu0 0
        %2937 = vmatpush1.bf16.msra.mxu0 0
        %2938 = vmatprep.subr.bf16.mxu0 0
        %2939 = vmatpush1.bf16.msra.mxu0 %v2920
        %2940 = vmatprep.subr.bf16.mxu0 0
        %2941 = vmatpush1.bf16.msra.mxu0 %v2919
        %2942 = vmatprep.subr.bf16.mxu0 0
        %2943 = vmatpush2.bf16.msra.mxu0 0
        %2944 = vmatprep.subr.bf16.mxu0 0
        %2945 = vmatpush2.bf16.msra.mxu0 0
        %2946 = vmatprep.subr.bf16.mxu0 0
        %2947 = vmatpush2.bf16.msra.mxu0 0
        %2948 = vmatprep.subr.bf16.mxu0 0
        %2949 = vmatpush2.bf16.msra.mxu0 0
        %2950 = vmatprep.subr.bf16.mxu0 0
        %2951 = vmatpush2.bf16.msra.mxu0 0
        %2952 = vmatprep.subr.bf16.mxu0 0
        %2953 = vmatpush2.bf16.msra.mxu0 0
        %2954 = vmatprep.subr.bf16.mxu0 0
        %2955 = vmatpush2.bf16.msra.mxu0 0
        %2956 = vmatprep.subr.bf16.mxu0 0
        %2957 = vmatpush2.bf16.msra.mxu0 0
        %2958 = vmatprep.mubr.bf16.mxu0 0
        %2959 = vmatmul.mubr.bf16.gmra.mxu0 %v2924
        %v2960 = vpop.f32.mrf.mxu0
        %v2961 = vadd.f32 %v2909, %v2960
        %v2962 = vpop.f32.mrf.mxu0
        %v2963 = vpop.f32.mrf.mxu0
        %v2964 = vpop.f32.mrf.mxu0
        %2965 = vdwg.mxu0
        %v2966 = vmul.f32 %v2961, 0.5
        %v2967 = vmul.f32 %v2961, 0.044715
        %v2968 = vmul.f32 %v2967, %v2961
        %v2969 = vmul.f32 %v2968, %v2961
        %v2970 = vadd.f32 %v2961, %v2969
        %v2971 = vmul.f32 %v2970, 0.7978846
        %v2972 = vtanh.pop %v2971
        %v2973 = vadd.f32 %v2972, 1.0
        %v2974 = vmul.f32 %v2966, %v2973
        %v2975 = vpack.c.bf16 %v2974, %v2974
        %v2976 = vld [vmem:[#allocation8 + $0x4] sm:$0xf]
        %v2977 = vld [vmem:[#allocation8 + $0xc] sm:$0xf]
        %v2978 = vld [vmem:[#allocation8 + $0x14] sm:$0xf]
        %v2979 = vld [vmem:[#allocation8 + $0x1c] sm:$0xf]
        %v2980 = vld [vmem:[#allocation8 + $0x24] sm:$0xf]
        %v2981 = vld [vmem:[#allocation8 + $0x2c] sm:$0xf]
        %v2982 = vld [vmem:[#allocation8 + $0x34] sm:$0xf]
        %v2983 = vld [vmem:[#allocation8 + $0x3c] sm:$0xf]
        %v2984 = vld [vmem:[#allocation8 + $0x44] sm:$0xf]
        %v2985 = vld [vmem:[#allocation8 + $0x4c] sm:$0xf]
        %v2986 = vld [vmem:[#allocation8 + $0x54] sm:$0xf]
        %v2987 = vld [vmem:[#allocation8 + $0x5c] sm:$0xf]
        %v2988 = vld [vmem:[#allocation8 + $0x64] sm:$0xf]
        %v2989 = vld [vmem:[#allocation8 + $0x6c] sm:$0xf]
        %v2990 = vld [vmem:[#allocation8 + $0x74] sm:$0xf]
        %v2991 = vld [vmem:[#allocation8 + $0x7c] sm:$0xf]
        %v2992 = vld [vmem:[#allocation10 + $0x17] sm:$0x1]
        %v2994 = vlaneseq
        %v2995 = vshrl.u32 %v2994, 7
        %v2996 = vsub.s32 0, %v2995
        %v2997 = vrot.slane %v2992, %v2996
        %v3015 = vunpack.c.l.b16 %v2976
        %v3016 = vunpack.c.l.b16 %v2977
        %v3017 = vunpack.c.l.b16 %v2978
        %v3018 = vunpack.c.l.b16 %v2979
        %v3019 = vunpack.c.l.b16 %v2980
        %v3020 = vunpack.c.l.b16 %v2981
        %v3021 = vunpack.c.l.b16 %v2982
        %v3022 = vunpack.c.l.b16 %v2983
        %v3023 = vunpack.c.l.b16 %v2984
        %v3024 = vunpack.c.l.b16 %v2985
        %v3025 = vunpack.c.l.b16 %v2986
        %v3026 = vunpack.c.l.b16 %v2987
        %v3027 = vunpack.c.l.b16 %v2988
        %v3028 = vunpack.c.l.b16 %v2989
        %v3029 = vunpack.c.l.b16 %v2990
        %v3030 = vunpack.c.l.b16 %v2991
        %v3031 = vpack.c.b16 %v3016, %v3015
        %v3032 = vpack.c.b16 %v3018, %v3017
        %v3033 = vpack.c.b16 %v3020, %v3019
        %v3034 = vpack.c.b16 %v3022, %v3021
        %v3035 = vpack.c.b16 %v3024, %v3023
        %v3036 = vpack.c.b16 %v3026, %v3025
        %v3037 = vpack.c.b16 %v3028, %v3027
        %v3038 = vpack.c.b16 %v3030, %v3029
        %3047 = vmatprep.subr.bf16.mxu0 0
        %3048 = vmatpush1.bf16.msra.mxu0 %v3038
        %3049 = vmatprep.subr.bf16.mxu0 0
        %3050 = vmatpush1.bf16.msra.mxu0 %v3037
        %3051 = vmatprep.subr.bf16.mxu0 0
        %3052 = vmatpush1.bf16.msra.mxu0 %v3036
        %3053 = vmatprep.subr.bf16.mxu0 0
        %3054 = vmatpush1.bf16.msra.mxu0 %v3035
        %3055 = vmatprep.subr.bf16.mxu0 0
        %3056 = vmatpush1.bf16.msra.mxu0 %v3034
        %3057 = vmatprep.subr.bf16.mxu0 0
        %3058 = vmatpush1.bf16.msra.mxu0 %v3033
        %3059 = vmatprep.subr.bf16.mxu0 0
        %3060 = vmatpush1.bf16.msra.mxu0 %v3032
        %3061 = vmatprep.subr.bf16.mxu0 0
        %3062 = vmatpush1.bf16.msra.mxu0 %v3031
        %3063 = vmatprep.subr.bf16.mxu0 0
        %3064 = vmatpush2.bf16.msra.mxu0 0
        %3065 = vmatprep.subr.bf16.mxu0 0
        %3066 = vmatpush2.bf16.msra.mxu0 0
        %3067 = vmatprep.subr.bf16.mxu0 0
        %3068 = vmatpush2.bf16.msra.mxu0 0
        %3069 = vmatprep.subr.bf16.mxu0 0
        %3070 = vmatpush2.bf16.msra.mxu0 0
        %3071 = vmatprep.subr.bf16.mxu0 0
        %3072 = vmatpush2.bf16.msra.mxu0 0
        %3073 = vmatprep.subr.bf16.mxu0 0
        %3074 = vmatpush2.bf16.msra.mxu0 0
        %3075 = vmatprep.subr.bf16.mxu0 0
        %3076 = vmatpush2.bf16.msra.mxu0 0
        %3077 = vmatprep.subr.bf16.mxu0 0
        %3078 = vmatpush2.bf16.msra.mxu0 0
        %3079 = vmatprep.mubr.bf16.mxu0 0
        %3080 = vmatmul.mubr.bf16.gmra.mxu0 %v2975
        %v3081 = vpop.f32.mrf.mxu0
        %v3082 = vadd.f32 %v2997, %v3081
        %v3083 = vpop.f32.mrf.mxu0
        %v3084 = vpop.f32.mrf.mxu0
        %v3085 = vpop.f32.mrf.mxu0
        %3086 = vdwg.mxu0
        %v3087 = vlaneseq
        %v3088 = vshrl.u32 %v3087, 7
        %v3089 = vsub.s32 0, %v3088
        %v3090 = vrot.slane %v867, %v3089
        %v3091 = vmul.f32 %v3090, %v3082
        %v3092 = vadd.f32 %v2874, %v3091
        %3093 = vst.msk [vmem:[%s396] sm:$0xff] %vm621, %v3092
        %s3094 = sand.u32 %s181, 1
        %s3095 = scalar_lea.sflag [#allocation4], %s3094
        %s3096 = sand.u32 %s181, 1
        %s3097 = smul.addr %s3096, 16
        %s3098 = scalar_lea.vmem [#allocation11], %s3097
        %s3099 = sand.u32 %s207, 1
        %s3100 = scalar_lea.sflag [#allocation13], %s3099
        %s3101 = sand.u32 %s207, 1
        %s3102 = smul.addr %s3101, 8
        %s3103 = scalar_lea.vmem [#allocation12], %s3102
        // Predicated region
        $region65: #{tpu_custom_call.1} parent=43 // pred_check
          %p3104 = pneg %p191
        $region66: #{tpu_custom_call.1} parent=43 // pred_check_branch
          %3106 = sbr.rel (%p3104) target = $region68
        $region67: #{tpu_custom_call.1} parent=43 // pred_region
          %s3108 = ssub.s32 256, 256
          %3109 = vsyncadd %s3095, %s3108
          %s3110 = smul.addr %s32, 2
          %s3111 = smul.addr %s3110, 128
          %s3112 = scalar_lea.hbm %s6, %s3111
          %s3113 = sshll.u32 %s3098, 4
          %s3114 = int_to_ptr.vmem [resolvable:$true] %s3113
          %3119 = dma.vmem_to_hbm [thread:$0]  %s3114, 256, %s3112, %s3095, 128, 128, 8
        $region68: #{tpu_custom_call.1} parent=43 // pred_fallthru
          _
        // Predicated region
        $region69: #{tpu_custom_call.1} parent=43 // pred_check
          %p3120 = pneg %p217
        $region70: #{tpu_custom_call.1} parent=43 // pred_check_branch
          %3122 = sbr.rel (%p3120) target = $region72
        $region71: #{tpu_custom_call.1} parent=43 // pred_region
          %s3124 = ssub.s32 128, 128
          %3125 = vsyncadd %s3100, %s3124
          %s3126 = smul.addr %s32, 128
          %s3127 = scalar_lea.hbm %s7, %s3126
          %s3129 = sshll.u32 %s3103, 4
          %s3130 = int_to_ptr.vmem [resolvable:$true] %s3129
          %3132 = dma.vmem_to_hbm [thread:$0]  %s3130, 128, %s3127, %s3100
        $region72: #{tpu_custom_call.1} parent=43 // pred_fallthru
          _
      $region44: #{tpu_custom_call.1} parent=5 // pred_fallthru
        _
      %p3133 = scmp.le.s32.totalorder 2, %s27
      // Predicated region
      $region73: #{tpu_custom_call.1} parent=5 // pred_check
        %p3134 = pneg %p3133
      $region74: #{tpu_custom_call.1} parent=5 // pred_check_branch
        %3136 = sbr.rel (%p3134) target = $region76
      $region75: #{tpu_custom_call.1} parent=5 // pred_region
        %s3137 = ssub.s32 %s27, 2
        // Predicated region
        $region77: #{tpu_custom_call.1} parent=75 // pred_check
          %p3138 = pneg %p197
        $region78: #{tpu_custom_call.1} parent=75 // pred_check_branch
          %3140 = sbr.rel (%p3138) target = $region80
        $region79: #{tpu_custom_call.1} parent=75 // pred_region
          %s3141 = sand.u32 %s182, 1
          %s3142 = scalar_lea.sflag [#allocation4], %s3141
          %s3143 = sand.u32 %s182, 1
          %s3144 = smul.addr %s3143, 16
          %s3145 = scalar_lea.vmem [#allocation11], %s3144
          %3146 = dma.done %s3142, 256
        $region80: #{tpu_custom_call.1} parent=75 // pred_fallthru
          _
        // Predicated region
        $region81: #{tpu_custom_call.1} parent=75 // pred_check
          %p3147 = pneg %p223
        $region82: #{tpu_custom_call.1} parent=75 // pred_check_branch
          %3149 = sbr.rel (%p3147) target = $region84
        $region83: #{tpu_custom_call.1} parent=75 // pred_region
          %s3150 = sand.u32 %s208, 1
          %s3151 = scalar_lea.sflag [#allocation13], %s3150
          %s3152 = sand.u32 %s208, 1
          %s3153 = smul.addr %s3152, 8
          %s3154 = scalar_lea.vmem [#allocation12], %s3153
          %3155 = dma.done %s3151, 128
        $region84: #{tpu_custom_call.1} parent=75 // pred_fallthru
          _
      $region76: #{tpu_custom_call.1} parent=5 // pred_fallthru
        _
    $region6: #{tpu_custom_call.1} parent=1 // loop_footer
      %s31 = sadd.s32 1, %s27
    $region7: #{tpu_custom_call.1} parent=1 // loop_footer_branch
      %26 = sbr.rel target = $region3
    $region8: #{tpu_custom_call.1} parent=1 // loop_exit
      _
    %3156 = vsyncpa [#allocation3], 1
    %s3157 = scalar_lea.sflag [#allocation3], 1
    %3158 = vsyncpa %s3157, 1
    %3159 = vsyncpa [#allocation6], 1
    %s3160 = scalar_lea.sflag [#allocation6], 1
    %3161 = vsyncpa %s3160, 1
    %3162 = vsyncpa [#allocation9], 1
    %3163 = vsyncpa [#allocation4], 1
    %s3164 = scalar_lea.sflag [#allocation4], 1
    %3165 = vsyncpa %s3164, 1
    %3166 = vsyncpa [#allocation13], 1
    %s3167 = scalar_lea.sflag [#allocation13], 1
    %3168 = vsyncpa %s3167, 1

// kernel: tpu_custom_call.1
$region0: #{tpu_custom_call.1}
  #allocation0 [shape = 'u32[]', space=smem, size = 0x4, offset = 0x4, fixed_abs, tag = 'smem constant byte address 0x4 - core index']
  #allocation1 [shape = 'u32[144,128]{1,0:T(1,128)}', space=vmem, size = 0x12000, scoped, tag = 'internal scratch']
  %s0 = inlined_call_operand.hbm [shape: f32[2,16,32], index: 0, kind: input, shape index: {}]
  %s1 = inlined_call_operand.hbm [shape: f32[2,8,32], index: 1, kind: input, shape index: {}]
  %s2 = inlined_call_operand.vmem [shape: f32[2,1,32], index: 2, kind: input, shape index: {}]
  %s3 = inlined_call_operand.hbm [shape: bf16[32,3072], index: 3, kind: input, shape index: {}]
  %s4 = inlined_call_operand.hbm [shape: bf16[128,256], index: 4, kind: input, shape index: {}]
  %s5 = inlined_call_operand.hbm [shape: f32[1,4096], index: 5, kind: input, shape index: {}]
  %s6 = inlined_call_operand.hbm [shape: f32[2,16,32], index: 6, kind: output, shape index: {0}]
  %s7 = inlined_call_operand.hbm [shape: f32[2,8,32], index: 7, kind: output, shape index: {1}]
  %8 = xla_tuple %s6, %s7
  %s9 = sld [smem:[#allocation0]]
  $region85: #{tpu_custom_call.1} parent=0
    _
  %s11 = ssub.s32 1, %s9
  %s12 = scalar_select 0, %s11, %s9
  $region1: #{tpu_custom_call.1} parent=0
    #allocation2 [shape = 'u8[16384]{0}', space=vmem, size = 0x4000, scoped, tag = 'input window, operand 0']
    #allocation3 [shape = 's32[2]{0}', space=sflag, size = 0x8, scoped, tag = 'scoped memory for tpu_custom_call.1']
    #allocation4 [shape = 's32[2]{0}', space=sflag, size = 0x8, scoped, tag = 'scoped memory for tpu_custom_call.1']
    #allocation5 [shape = 'u8[8192]{0}', space=vmem, size = 0x2000, scoped, tag = 'input window, operand 1']
    #allocation6 [shape = 's32[2]{0}', space=sflag, size = 0x8, scoped, tag = 'scoped memory for tpu_custom_call.1']
    #allocation7 [shape = 'u8[196608]{0}', space=vmem, size = 0x30000, scoped, tag = 'input window, operand 3, single buffered']
    #allocation8 [shape = 'u8[65536]{0}', space=vmem, size = 0x10000, scoped, tag = 'input window, operand 4, single buffered']
    #allocation9 [shape = 's32[1]{0}', space=sflag, size = 0x4, scoped, tag = 'scoped memory for tpu_custom_call.1']
    #allocation10 [shape = 'u8[16384]{0}', space=vmem, size = 0x4000, scoped, tag = 'input window, operand 5, single buffered']
    #allocation11 [shape = 'u8[16384]{0}', space=vmem, size = 0x4000, scoped, tag = 'output window, operand 0']
    #allocation12 [shape = 'u8[8192]{0}', space=vmem, size = 0x2000, scoped, tag = 'output window, operand 1']
    #allocation13 [shape = 's32[2]{0}', space=sflag, size = 0x8, scoped, tag = 'scoped memory for tpu_custom_call.1']
    %13 = vsyncpa [#allocation3], 0
    %s14 = scalar_lea.sflag [#allocation3], 1
    %15 = vsyncpa %s14, 0
    %16 = vsyncpa [#allocation6], 0
    %s17 = scalar_lea.sflag [#allocation6], 1
    %18 = vsyncpa %s17, 0
    %19 = vsyncpa [#allocation9], 0
    %20 = vsyncpa [#allocation4], 0
    %s21 = scalar_lea.sflag [#allocation4], 1
    %22 = vsyncpa %s21, 0
    %23 = vsyncpa [#allocation13], 0
    %s24 = scalar_lea.sflag [#allocation13], 1
    %25 = vsyncpa %s24, 0
    loop: start=0, step=1, limit=4
    $region2: #{tpu_custom_call.1} parent=1 // loop_pre_header
      _
    $region3: #{tpu_custom_call.1} parent=1 // loop_header
      %s27 = sphi 0, %s31
      %p28 = scmp.ge.s32.totalorder %s27, 4
      %s37 = sphi 0, %s39
      %s40 = sphi 0, %s37
      %s41 = sphi 0, %s40
      %s57 = sphi 0, %s41
      %s63 = sphi 0, %s65
      %s66 = sphi 0, %s63
      %s67 = sphi 0, %s66
      %s83 = sphi 0, %s67
      %s89 = sphi 0, %s91
      %s92 = sphi 0, %s89
      %s93 = sphi 0, %s92
      %s109 = sphi 0, %s93
      %s113 = sphi 0, %s113
      %s115 = sphi 0, %s113
      %s116 = sphi 0, %s115
      %s130 = sphi 0, %s116
      %s134 = sphi 0, %s134
      %s136 = sphi 0, %s134
      %s137 = sphi 0, %s136
      %s151 = sphi 0, %s137
      %s155 = sphi 0, %s155
      %s157 = sphi 0, %s155
      %s158 = sphi 0, %s157
      %s172 = sphi 0, %s158
      %s178 = sphi 0, %s180
      %s181 = sphi 0, %s178
      %s182 = sphi 0, %s181
      %s198 = sphi 0, %s182
      %s204 = sphi 0, %s206
      %s207 = sphi 0, %s204
      %s208 = sphi 0, %s207
      %s224 = sphi 0, %s208
    $region4: #{tpu_custom_call.1} parent=1 // loop_header_branch
      %30 = sbr.rel (%p28) target = $region8
    $region5: #{tpu_custom_call.1} parent=1 // loop_body
      %s32 = ssub.s32 %s27, 1
      %s33 = ssub.s32 %s27, 2
      %s34 = sadd.s32 %s27, 1
      %s35 = ssub.s32 %s27, %s34
      %p36 = scmp.eq.s32.totalorder %s35, 0
      %s38 = sadd.s32 %s37, 1
      %s39 = scalar_select %p36, %s37, %s38
      %p42 = pneg %p36
      %p43 = scmp.eq.s32.totalorder %s27, 1
      %p44 = por %p42, %p43
      %p45 = scmp.ne.s32.totalorder %s37, %s40
      %p46 = scmp.eq.s32.totalorder %s27, 0
      %p47 = por %p45, %p46
      %p48 = scmp.ne.s32.totalorder %s37, %s40
      %p49 = scmp.eq.s32.totalorder %s32, 1
      %p50 = por %p48, %p49
      %p51 = scmp.ne.s32.totalorder %s40, %s41
      %p52 = scmp.eq.s32.totalorder %s32, 0
      %p53 = por %p51, %p52
      %p54 = scmp.ne.s32.totalorder %s40, %s41
      %p55 = scmp.eq.s32.totalorder %s33, 1
      %p56 = por %p54, %p55
      %p58 = scmp.ne.s32.totalorder %s41, %s57
      %p59 = scmp.eq.s32.totalorder %s33, 0
      %p60 = por %p58, %p59
      %s61 = ssub.s32 %s27, %s34
      %p62 = scmp.eq.s32.totalorder %s61, 0
      %s64 = sadd.s32 %s63, 1
      %s65 = scalar_select %p62, %s63, %s64
      %p68 = pneg %p62
      %p69 = scmp.eq.s32.totalorder %s27, 1
      %p70 = por %p68, %p69
      %p71 = scmp.ne.s32.totalorder %s63, %s66
      %p72 = scmp.eq.s32.totalorder %s27, 0
      %p73 = por %p71, %p72
      %p74 = scmp.ne.s32.totalorder %s63, %s66
      %p75 = scmp.eq.s32.totalorder %s32, 1
      %p76 = por %p74, %p75
      %p77 = scmp.ne.s32.totalorder %s66, %s67
      %p78 = scmp.eq.s32.totalorder %s32, 0
      %p79 = por %p77, %p78
      %p80 = scmp.ne.s32.totalorder %s66, %s67
      %p81 = scmp.eq.s32.totalorder %s33, 1
      %p82 = por %p80, %p81
      %p84 = scmp.ne.s32.totalorder %s67, %s83
      %p85 = scmp.eq.s32.totalorder %s33, 0
      %p86 = por %p84, %p85
      %s87 = ssub.s32 %s27, %s34
      %p88 = scmp.eq.s32.totalorder %s87, 0
      %s90 = sadd.s32 %s89, 1
      %s91 = scalar_select %p88, %s89, %s90
      %p94 = pneg %p88
      %p95 = scmp.eq.s32.totalorder %s27, 1
      %p96 = por %p94, %p95
      %p97 = scmp.ne.s32.totalorder %s89, %s92
      %p98 = scmp.eq.s32.totalorder %s27, 0
      %p99 = por %p97, %p98
      %p100 = scmp.ne.s32.totalorder %s89, %s92
      %p101 = scmp.eq.s32.totalorder %s32, 1
      %p102 = por %p100, %p101
      %p103 = scmp.ne.s32.totalorder %s92, %s93
      %p104 = scmp.eq.s32.totalorder %s32, 0
      %p105 = por %p103, %p104
      %p106 = scmp.ne.s32.totalorder %s92, %s93
      %p107 = scmp.eq.s32.totalorder %s33, 1
      %p108 = por %p106, %p107
      %p110 = scmp.ne.s32.totalorder %s93, %s109
      %p111 = scmp.eq.s32.totalorder %s33, 0
      %p112 = por %p110, %p111
      %s114 = sadd.s32 %s113, 1
      %p117 = scmp.eq.s32.totalorder %s27, 1
      %p118 = scmp.ne.s32.totalorder %s113, %s115
      %p119 = scmp.eq.s32.totalorder %s27, 0
      %p120 = por %p118, %p119
      %p121 = scmp.ne.s32.totalorder %s113, %s115
      %p122 = scmp.eq.s32.totalorder %s32, 1
      %p123 = por %p121, %p122
      %p124 = scmp.ne.s32.totalorder %s115, %s116
      %p125 = scmp.eq.s32.totalorder %s32, 0
      %p126 = por %p124, %p125
      %p127 = scmp.ne.s32.totalorder %s115, %s116
      %p128 = scmp.eq.s32.totalorder %s33, 1
      %p129 = por %p127, %p128
      %p131 = scmp.ne.s32.totalorder %s116, %s130
      %p132 = scmp.eq.s32.totalorder %s33, 0
      %p133 = por %p131, %p132
      %s135 = sadd.s32 %s134, 1
      %p138 = scmp.eq.s32.totalorder %s27, 1
      %p139 = scmp.ne.s32.totalorder %s134, %s136
      %p140 = scmp.eq.s32.totalorder %s27, 0
      %p141 = por %p139, %p140
      %p142 = scmp.ne.s32.totalorder %s134, %s136
      %p143 = scmp.eq.s32.totalorder %s32, 1
      %p144 = por %p142, %p143
      %p145 = scmp.ne.s32.totalorder %s136, %s137
      %p146 = scmp.eq.s32.totalorder %s32, 0
      %p147 = por %p145, %p146
      %p148 = scmp.ne.s32.totalorder %s136, %s137
      %p149 = scmp.eq.s32.totalorder %s33, 1
      %p150 = por %p148, %p149
      %p152 = scmp.ne.s32.totalorder %s137, %s151
      %p153 = scmp.eq.s32.totalorder %s33, 0
      %p154 = por %p152, %p153
      %s156 = sadd.s32 %s155, 1
      %p159 = scmp.eq.s32.totalorder %s27, 1
      %p160 = scmp.ne.s32.totalorder %s155, %s157
      %p161 = scmp.eq.s32.totalorder %s27, 0
      %p162 = por %p160, %p161
      %p163 = scmp.ne.s32.totalorder %s155, %s157
      %p164 = scmp.eq.s32.totalorder %s32, 1
      %p165 = por %p163, %p164
      %p166 = scmp.ne.s32.totalorder %s157, %s158
      %p167 = scmp.eq.s32.totalorder %s32, 0
      %p168 = por %p166, %p167
      %p169 = scmp.ne.s32.totalorder %s157, %s158
      %p170 = scmp.eq.s32.totalorder %s33, 1
      %p171 = por %p169, %p170
      %p173 = scmp.ne.s32.totalorder %s158, %s172
      %p174 = scmp.eq.s32.totalorder %s33, 0
      %p175 = por %p173, %p174
      %s176 = ssub.s32 %s27, %s34
      %p177 = scmp.eq.s32.totalorder %s176, 0
      %s179 = sadd.s32 %s178, 1
      %s180 = scalar_select %p177, %s178, %s179
      %p183 = pneg %p177
      %p184 = scmp.eq.s32.totalorder %s27, 1
      %p185 = por %p183, %p184
      %p186 = scmp.ne.s32.totalorder %s178, %s181
      %p187 = scmp.eq.s32.totalorder %s27, 0
      %p188 = por %p186, %p187
      %p189 = scmp.ne.s32.totalorder %s178, %s181
      %p190 = scmp.eq.s32.totalorder %s32, 1
      %p191 = por %p189, %p190
      %p192 = scmp.ne.s32.totalorder %s181, %s182
      %p193 = scmp.eq.s32.totalorder %s32, 0
      %p194 = por %p192, %p193
      %p195 = scmp.ne.s32.totalorder %s181, %s182
      %p196 = scmp.eq.s32.totalorder %s33, 1
      %p197 = por %p195, %p196
      %p199 = scmp.ne.s32.totalorder %s182, %s198
      %p200 = scmp.eq.s32.totalorder %s33, 0
      %p201 = por %p199, %p200
      %s202 = ssub.s32 %s27, %s34
      %p203 = scmp.eq.s32.totalorder %s202, 0
      %s205 = sadd.s32 %s204, 1
      %s206 = scalar_select %p203, %s204, %s205
      %p209 = pneg %p203
      %p210 = scmp.eq.s32.totalorder %s27, 1
      %p211 = por %p209, %p210
      %p212 = scmp.ne.s32.totalorder %s204, %s207
      %p213 = scmp.eq.s32.totalorder %s27, 0
      %p214 = por %p212, %p213
      %p215 = scmp.ne.s32.totalorder %s204, %s207
      %p216 = scmp.eq.s32.totalorder %s32, 1
      %p217 = por %p215, %p216
      %p218 = scmp.ne.s32.totalorder %s207, %s208
      %p219 = scmp.eq.s32.totalorder %s32, 0
      %p220 = por %p218, %p219
      %p221 = scmp.ne.s32.totalorder %s207, %s208
      %p222 = scmp.eq.s32.totalorder %s33, 1
      %p223 = por %p221, %p222
      %p225 = scmp.ne.s32.totalorder %s208, %s224
      %p226 = scmp.eq.s32.totalorder %s33, 0
      %p227 = por %p225, %p226
      %p228 = scmp.le.s32.totalorder 1, %s27
      %p229 = scmp.lt.s32.totalorder %s27, 3
      %p230 = pnand %p228, %p229
      %p231 = pneg %p230
      // Predicated region
      $region9: #{tpu_custom_call.1} parent=5 // pred_check
        _
      $region10: #{tpu_custom_call.1} parent=5 // pred_check_branch
        %233 = sbr.rel (%p230) target = $region12
      $region11: #{tpu_custom_call.1} parent=5 // pred_region
        %s234 = ssub.s32 %s27, 1
        // Predicated region
        $region13: #{tpu_custom_call.1} parent=11 // pred_check
          %p235 = pneg %p126
        $region14: #{tpu_custom_call.1} parent=11 // pred_check_branch
          %237 = sbr.rel (%p235) target = $region16
        $region15: #{tpu_custom_call.1} parent=11 // pred_region
          %s239 = ssub.s32 6144, 6144
          %240 = vsyncadd [#allocation6], %s239
          %s241 = sshll.u32 [#allocation7], 4
          %s242 = int_to_ptr.vmem [resolvable:$true] %s241
          %247 = dma.hbm_to_vmem [thread:$0]  %s3, 6144, %s242, [#allocation6], 1536, 1536, 96
        $region16: #{tpu_custom_call.1} parent=11 // pred_fallthru
          _
        // Predicated region
        $region17: #{tpu_custom_call.1} parent=11 // pred_check
          %p248 = pneg %p147
        $region18: #{tpu_custom_call.1} parent=11 // pred_check_branch
          %250 = sbr.rel (%p248) target = $region20
        $region19: #{tpu_custom_call.1} parent=11 // pred_region
          %s252 = ssub.s32 2048, 2048
          %253 = vsyncadd [#allocation9], %s252
          %s254 = sshll.u32 [#allocation8], 4
          %s255 = int_to_ptr.vmem [resolvable:$true] %s254
          %260 = dma.hbm_to_vmem [thread:$0]  %s4, 2048, %s255, [#allocation9], 128, 128, 8
        $region20: #{tpu_custom_call.1} parent=11 // pred_fallthru
          _
        // Predicated region
        $region21: #{tpu_custom_call.1} parent=11 // pred_check
          %p261 = pneg %p168
        $region22: #{tpu_custom_call.1} parent=11 // pred_check_branch
          %263 = sbr.rel (%p261) target = $region24
        $region23: #{tpu_custom_call.1} parent=11 // pred_region
          %s265 = ssub.s32 512, 512
          %266 = vsyncadd [#allocation9], %s265
          %s268 = sshll.u32 [#allocation10], 4
          %s269 = int_to_ptr.vmem [resolvable:$true] %s268
          %271 = dma.hbm_to_vmem [thread:$0]  %s5, 512, %s269, [#allocation9]
        $region24: #{tpu_custom_call.1} parent=11 // pred_fallthru
          _
      $region12: #{tpu_custom_call.1} parent=5 // pred_fallthru
        _
      %p272 = scmp.lt.s32.totalorder %s27, 2
      // Predicated region
      $region25: #{tpu_custom_call.1} parent=5 // pred_check
        %p273 = pneg %p272
      $region26: #{tpu_custom_call.1} parent=5 // pred_check_branch
        %275 = sbr.rel (%p273) target = $region28
      $region27: #{tpu_custom_call.1} parent=5 // pred_region
        // Predicated region
        $region29: #{tpu_custom_call.1} parent=27 // pred_check
          %p276 = pneg %p47
        $region30: #{tpu_custom_call.1} parent=27 // pred_check_branch
          %278 = sbr.rel (%p276) target = $region32
        $region31: #{tpu_custom_call.1} parent=27 // pred_region
          %s279 = sand.u32 %s37, 1
          %s280 = scalar_lea.sflag [#allocation3], %s279
          %s281 = sand.u32 %s37, 1
          %s282 = smul.addr %s281, 16
          %s283 = scalar_lea.vmem [#allocation2], %s282
          %s285 = ssub.s32 256, 256
          %286 = vsyncadd %s280, %s285
          %s287 = smul.addr %s27, 2
          %s288 = smul.addr %s287, 128
          %s289 = scalar_lea.hbm %s0, %s288
          %s290 = sshll.u32 %s283, 4
          %s291 = int_to_ptr.vmem [resolvable:$true] %s290
          %296 = dma.hbm_to_vmem [thread:$0]  %s289, 256, %s291, %s280, 128, 128, 8
        $region32: #{tpu_custom_call.1} parent=27 // pred_fallthru
          _
        // Predicated region
        $region33: #{tpu_custom_call.1} parent=27 // pred_check
          %p297 = pneg %p73
        $region34: #{tpu_custom_call.1} parent=27 // pred_check_branch
          %299 = sbr.rel (%p297) target = $region36
        $region35: #{tpu_custom_call.1} parent=27 // pred_region
          %s300 = sand.u32 %s27, 1
          %s301 = scalar_lea.sflag [#allocation6], %s300
          %s302 = sand.u32 %s63, 1
          %s303 = smul.addr %s302, 8
          %s304 = scalar_lea.vmem [#allocation5], %s303
          %s306 = ssub.s32 128, 128
          %307 = vsyncadd %s301, %s306
          %s308 = smul.addr %s27, 128
          %s309 = scalar_lea.hbm %s1, %s308
          %s311 = sshll.u32 %s304, 4
          %s312 = int_to_ptr.vmem [resolvable:$true] %s311
          %314 = dma.hbm_to_vmem [thread:$0]  %s309, 128, %s312, %s301
        $region36: #{tpu_custom_call.1} parent=27 // pred_fallthru
          _
        // Predicated region
        $region37: #{tpu_custom_call.1} parent=27 // pred_check
          %p315 = pneg %p99
        $region38: #{tpu_custom_call.1} parent=27 // pred_check_branch
          %317 = sbr.rel (%p315) target = $region40
        $region39: #{tpu_custom_call.1} parent=27 // pred_region
          %p318 = scmp.lt.s32.totalorder %s27, 1
          %s319 = scalar_select %p318, %s27, 1
          %s320 = scalar_lea.vmem %s2, %s319
        $region40: #{tpu_custom_call.1} parent=27 // pred_fallthru
          _
      $region28: #{tpu_custom_call.1} parent=5 // pred_fallthru
        _
      %p321 = scmp.le.s32.totalorder 1, %s27
      %p322 = scmp.lt.s32.totalorder %s27, 3
      %p323 = pnand %p321, %p322
      %p324 = pneg %p323
      // Predicated region
      $region41: #{tpu_custom_call.1} parent=5 // pred_check
        _
      $region42: #{tpu_custom_call.1} parent=5 // pred_check_branch
        %326 = sbr.rel (%p323) target = $region44
      $region43: #{tpu_custom_call.1} parent=5 // pred_region
        %s327 = ssub.s32 %s27, 1
        %s328 = sand.u32 %s40, 1
        %s329 = scalar_lea.sflag [#allocation3], %s328
        %s330 = sand.u32 %s40, 1
        %s331 = smul.addr %s330, 16
        %s332 = scalar_lea.vmem [#allocation2], %s331
        // Predicated region
        $region45: #{tpu_custom_call.1} parent=43 // pred_check
          %p333 = pneg %p53
        $region46: #{tpu_custom_call.1} parent=43 // pred_check_branch
          %335 = sbr.rel (%p333) target = $region48
        $region47: #{tpu_custom_call.1} parent=43 // pred_region
          %336 = dma.done %s329, 256
        $region48: #{tpu_custom_call.1} parent=43 // pred_fallthru
          _
        %s337 = sand.u32 %s32, 1
        %s338 = scalar_lea.sflag [#allocation6], %s337
        %s339 = sand.u32 %s66, 1
        %s340 = smul.addr %s339, 8
        %s341 = scalar_lea.vmem [#allocation5], %s340
        // Predicated region
        $region49: #{tpu_custom_call.1} parent=43 // pred_check
          %p342 = pneg %p79
        $region50: #{tpu_custom_call.1} parent=43 // pred_check_branch
          %344 = sbr.rel (%p342) target = $region52
        $region51: #{tpu_custom_call.1} parent=43 // pred_region
          %345 = dma.done %s338, 128
        $region52: #{tpu_custom_call.1} parent=43 // pred_fallthru
          _
        // Predicated region
        $region53: #{tpu_custom_call.1} parent=43 // pred_check
          %p346 = pneg %p126
        $region54: #{tpu_custom_call.1} parent=43 // pred_check_branch
          %348 = sbr.rel (%p346) target = $region56
        $region55: #{tpu_custom_call.1} parent=43 // pred_region
          %349 = dma.done [#allocation6], 6144
        $region56: #{tpu_custom_call.1} parent=43 // pred_fallthru
          _
        // Predicated region
        $region57: #{tpu_custom_call.1} parent=43 // pred_check
          %p350 = pneg %p147
        $region58: #{tpu_custom_call.1} parent=43 // pred_check_branch
          %352 = sbr.rel (%p350) target = $region60
        $region59: #{tpu_custom_call.1} parent=43 // pred_region
          %353 = dma.done [#allocation9], 2048
        $region60: #{tpu_custom_call.1} parent=43 // pred_fallthru
          _
        // Predicated region
        $region61: #{tpu_custom_call.1} parent=43 // pred_check
          %p354 = pneg %p168
        $region62: #{tpu_custom_call.1} parent=43 // pred_check_branch
          %356 = sbr.rel (%p354) target = $region64
        $region63: #{tpu_custom_call.1} parent=43 // pred_region
          %357 = dma.done [#allocation9], 512
        $region64: #{tpu_custom_call.1} parent=43 // pred_fallthru
          _
        %s358 = sand.u32 %s40, 1
        %s359 = scalar_lea.sflag [#allocation3], %s358
        %s360 = sand.u32 %s40, 1
        %s361 = smul.addr %s360, 16
        %s362 = scalar_lea.vmem [#allocation2], %s361
        %p363 = pneg %p53
        %p364 = pneg %p50
        %s365 = sand.u32 %s32, 1
        %s366 = scalar_lea.sflag [#allocation6], %s365
        %s367 = sand.u32 %s66, 1
        %s368 = smul.addr %s367, 8
        %s369 = scalar_lea.vmem [#allocation5], %s368
        %p370 = pneg %p79
        %p371 = pneg %p76
        %p372 = scmp.lt.s32.totalorder %s32, 1
        %s373 = scalar_select %p372, %s32, 1
        %s374 = scalar_lea.vmem %s2, %s373
        %p375 = pneg %p105
        %p376 = pneg %p102
        %p377 = pneg %p126
        %p378 = pneg %p123
        %p379 = pneg %p147
        %p380 = pneg %p144
        %p381 = pneg %p168
        %p382 = pneg %p165
        %p383 = pneg %p194
        %p384 = pneg %p191
        %s385 = sand.u32 %s181, 1
        %s386 = scalar_lea.sflag [#allocation4], %s385
        %s387 = sand.u32 %s181, 1
        %s388 = smul.addr %s387, 16
        %s389 = scalar_lea.vmem [#allocation11], %s388
        %p390 = pneg %p220
        %p391 = pneg %p217
        %s392 = sand.u32 %s207, 1
        %s393 = scalar_lea.sflag [#allocation13], %s392
        %s394 = sand.u32 %s207, 1
        %s395 = smul.addr %s394, 8
        %s396 = scalar_lea.vmem [#allocation12], %s395
        %p397 = scmp.lt.s32.totalorder %s32, 1
        %s398 = scalar_select %p397, %s32, 1
        %s399 = scalar_lea.vmem %s2, %s398
        %v401 = vld [vmem:[%s332] sm:$0xff]
        %v402 = vld [vmem:[%s332 + $0x8] sm:$0xff]
        %v403 = vld [vmem:[%s341] sm:$0xff]
        %v404 = vld [vmem:[%s399] sm:$0x1]
        %v405 = vxor.u32 %v404, 2147483648
        %v406 = vmul.f32 %v405, 1.442695
        %v407 = vpow.pop %v406
        %v408 = vadd.f32 %v407, 1.0
        %v409 = vrcp.pop %v408
        %v410 = vmul.f32 1.0, %v409
        %v411 = vmul.f32 %v404, %v410
        %v412 = vpack.c.bf16 %v411, %v411
        %v413 = vld [vmem:[#allocation7] sm:$0xff]
        %v414 = vld [vmem:[#allocation7 + $0x8] sm:$0xff]
        %v415 = vld [vmem:[#allocation7 + $0x10] sm:$0xff]
        %v416 = vld [vmem:[#allocation7 + $0x18] sm:$0xff]
        %v417 = vld [vmem:[#allocation7 + $0x20] sm:$0xff]
        %v418 = vld [vmem:[#allocation7 + $0x28] sm:$0xff]
        %v419 = vld [vmem:[#allocation7 + $0x60] sm:$0xff]
        %v420 = vld [vmem:[#allocation7 + $0x68] sm:$0xff]
        %v421 = vld [vmem:[#allocation7 + $0x70] sm:$0xff]
        %v422 = vld [vmem:[#allocation7 + $0x78] sm:$0xff]
        %v423 = vld [vmem:[#allocation7 + $0x80] sm:$0xff]
        %v424 = vld [vmem:[#allocation7 + $0x88] sm:$0xff]
        %v425 = vld [vmem:[#allocation7 + $0xc0] sm:$0xff]
        %v426 = vld [vmem:[#allocation7 + $0xc8] sm:$0xff]
        %v427 = vld [vmem:[#allocation7 + $0xd0] sm:$0xff]
        %v428 = vld [vmem:[#allocation7 + $0xd8] sm:$0xff]
        %v429 = vld [vmem:[#allocation7 + $0xe0] sm:$0xff]
        %v430 = vld [vmem:[#allocation7 + $0xe8] sm:$0xff]
        %v431 = vld [vmem:[#allocation7 + $0x120] sm:$0xff]
        %v432 = vld [vmem:[#allocation7 + $0x128] sm:$0xff]
        %v433 = vld [vmem:[#allocation7 + $0x130] sm:$0xff]
        %v434 = vld [vmem:[#allocation7 + $0x138] sm:$0xff]
        %v435 = vld [vmem:[#allocation7 + $0x140] sm:$0xff]
        %v436 = vld [vmem:[#allocation7 + $0x148] sm:$0xff]
        %v437 = vld [vmem:[#allocation10] sm:$0xff]
        %v438 = vld [vmem:[#allocation10 + $0x8] sm:$0xf]
        %v463 = vunpack.c.l.b16 %v413
        %v464 = vunpack.c.h.b16 %v413
        %v465 = vunpack.c.l.b16 %v414
        %v466 = vunpack.c.h.b16 %v414
        %v467 = vunpack.c.l.b16 %v415
        %v468 = vunpack.c.h.b16 %v415
        %v469 = vunpack.c.l.b16 %v416
        %v470 = vunpack.c.h.b16 %v416
        %v471 = vunpack.c.l.b16 %v417
        %v472 = vunpack.c.h.b16 %v417
        %v473 = vunpack.c.l.b16 %v418
        %v474 = vunpack.c.h.b16 %v418
        %v475 = vunpack.c.l.b16 %v419
        %v476 = vunpack.c.h.b16 %v419
        %v477 = vunpack.c.l.b16 %v420
        %v478 = vunpack.c.h.b16 %v420
        %v479 = vunpack.c.l.b16 %v421
        %v480 = vunpack.c.h.b16 %v421
        %v481 = vunpack.c.l.b16 %v422
        %v482 = vunpack.c.h.b16 %v422
        %v483 = vunpack.c.l.b16 %v423
        %v484 = vunpack.c.h.b16 %v423
        %v485 = vunpack.c.l.b16 %v424
        %v486 = vunpack.c.h.b16 %v424
        %v487 = vunpack.c.l.b16 %v425
        %v488 = vunpack.c.h.b16 %v425
        %v489 = vunpack.c.l.b16 %v426
        %v490 = vunpack.c.h.b16 %v426
        %v491 = vunpack.c.l.b16 %v427
        %v492 = vunpack.c.h.b16 %v427
        %v493 = vunpack.c.l.b16 %v428
        %v494 = vunpack.c.h.b16 %v428
        %v495 = vunpack.c.l.b16 %v429
        %v496 = vunpack.c.h.b16 %v429
        %v497 = vunpack.c.l.b16 %v430
        %v498 = vunpack.c.h.b16 %v430
        %v499 = vunpack.c.l.b16 %v431
        %v500 = vunpack.c.h.b16 %v431
        %v501 = vunpack.c.l.b16 %v432
        %v502 = vunpack.c.h.b16 %v432
        %v503 = vunpack.c.l.b16 %v433
        %v504 = vunpack.c.h.b16 %v433
        %v505 = vunpack.c.l.b16 %v434
        %v506 = vunpack.c.h.b16 %v434
        %v507 = vunpack.c.l.b16 %v435
        %v508 = vunpack.c.h.b16 %v435
        %v509 = vunpack.c.l.b16 %v436
        %v510 = vunpack.c.h.b16 %v436
        %v511 = vpack.c.b16 %v475, %v463
        %v512 = vpack.c.b16 %v476, %v464
        %v513 = vpack.c.b16 %v477, %v465
        %v514 = vpack.c.b16 %v478, %v466
        %v515 = vpack.c.b16 %v479, %v467
        %v516 = vpack.c.b16 %v480, %v468
        %v517 = vpack.c.b16 %v481, %v469
        %v518 = vpack.c.b16 %v482, %v470
        %v519 = vpack.c.b16 %v483, %v471
        %v520 = vpack.c.b16 %v484, %v472
        %v521 = vpack.c.b16 %v485, %v473
        %v522 = vpack.c.b16 %v486, %v474
        %v523 = vpack.c.b16 %v499, %v487
        %v524 = vpack.c.b16 %v500, %v488
        %v525 = vpack.c.b16 %v501, %v489
        %v526 = vpack.c.b16 %v502, %v490
        %v527 = vpack.c.b16 %v503, %v491
        %v528 = vpack.c.b16 %v504, %v492
        %v529 = vpack.c.b16 %v505, %v493
        %v530 = vpack.c.b16 %v506, %v494
        %v531 = vpack.c.b16 %v507, %v495
        %v532 = vpack.c.b16 %v508, %v496
        %v533 = vpack.c.b16 %v509, %v497
        %v534 = vpack.c.b16 %v510, %v498
        %v561 = vlaneseq
        %v562 = vshrl.u32 %v561, 7
        %v563 = vsub.s32 0, %v562
        %v564 = vrot.slane %v437, %v563
        %v565 = vlaneseq
        %v566 = vshrl.u32 %v565, 7
        %v567 = vsub.s32 1, %v566
        %v568 = vrot.slane %v437, %v567
        %v569 = vlaneseq
        %v570 = vshrl.u32 %v569, 7
        %v571 = vsub.s32 2, %v570
        %v572 = vrot.slane %v437, %v571
        %v573 = vlaneseq
        %v574 = vshrl.u32 %v573, 7
        %v575 = vsub.s32 3, %v574
        %v576 = vrot.slane %v437, %v575
        %v577 = vlaneseq
        %v578 = vshrl.u32 %v577, 7
        %v579 = vsub.s32 4, %v578
        %v580 = vrot.slane %v437, %v579
        %v581 = vlaneseq
        %v582 = vshrl.u32 %v581, 7
        %v583 = vsub.s32 5, %v582
        %v584 = vrot.slane %v437, %v583
        %v585 = vlaneseq
        %v586 = vshrl.u32 %v585, 7
        %v587 = vsub.s32 6, %v586
        %v588 = vrot.slane %v437, %v587
        %v589 = vlaneseq
        %v590 = vshrl.u32 %v589, 7
        %v591 = vsub.s32 7, %v590
        %v592 = vrot.slane %v437, %v591
        %v593 = vlaneseq
        %v594 = vshrl.u32 %v593, 7
        %v595 = vsub.s32 0, %v594
        %v596 = vrot.slane %v438, %v595
        %v597 = vlaneseq
        %v598 = vshrl.u32 %v597, 7
        %v599 = vsub.s32 1, %v598
        %v600 = vrot.slane %v438, %v599
        %v601 = vlaneseq
        %v602 = vshrl.u32 %v601, 7
        %v603 = vsub.s32 2, %v602
        %v604 = vrot.slane %v438, %v603
        %v605 = vlaneseq
        %v606 = vshrl.u32 %v605, 7
        %v607 = vsub.s32 3, %v606
        %v608 = vrot.slane %v438, %v607
        %vm621 = vcmask 261120
        %v623 = vsel %vm621, %v412, 0
        %625 = vmatprep.subr.bf16.mxu0 0
        %626 = vmatpush1.bf16.msra.mxu0 0
        %627 = vmatprep.subr.bf16.mxu0 0
        %628 = vmatpush1.bf16.msra.mxu0 0
        %629 = vmatprep.subr.bf16.mxu0 0
        %630 = vmatpush1.bf16.msra.mxu0 0
        %631 = vmatprep.subr.bf16.mxu0 0
        %632 = vmatpush1.bf16.msra.mxu0 0
        %633 = vmatprep.subr.bf16.mxu0 0
        %634 = vmatpush1.bf16.msra.mxu0 0
        %635 = vmatprep.subr.bf16.mxu0 0
        %636 = vmatpush1.bf16.msra.mxu0 0
        %637 = vmatprep.subr.bf16.mxu0 %v524
        %638 = vmatpush1.bf16.msra.mxu0 %v523
        %639 = vmatprep.subr.bf16.mxu0 %v512
        %640 = vmatpush1.bf16.msra.mxu0 %v511
        %641 = vmatprep.subr.bf16.mxu0 0
        %642 = vmatpush2.bf16.msra.mxu0 0
        %643 = vmatprep.subr.bf16.mxu0 0
        %644 = vmatpush2.bf16.msra.mxu0 0
        %645 = vmatprep.subr.bf16.mxu0 0
        %646 = vmatpush2.bf16.msra.mxu0 0
        %647 = vmatprep.subr.bf16.mxu0 0
        %648 = vmatpush2.bf16.msra.mxu0 0
        %649 = vmatprep.subr.bf16.mxu0 0
        %650 = vmatpush2.bf16.msra.mxu0 0
        %651 = vmatprep.subr.bf16.mxu0 0
        %652 = vmatpush2.bf16.msra.mxu0 0
        %653 = vmatprep.subr.bf16.mxu0 0
        %654 = vmatpush2.bf16.msra.mxu0 0
        %655 = vmatprep.subr.bf16.mxu0 0
        %656 = vmatpush2.bf16.msra.mxu0 0
        %657 = vmatprep.mubr.bf16.mxu0 0
        %658 = vmatmul.mubr.bf16.gmra.mxu0 %v623
        %v659 = vpop.f32.mrf.mxu0
        %v660 = vadd.f32 %v564, %v659
        %v661 = vpop.f32.mrf.mxu0
        %v662 = vadd.f32 %v568, %v661
        %v663 = vpop.f32.mrf.mxu0
        %v664 = vpop.f32.mrf.mxu0
        %665 = vdwg.mxu0
        %666 = vmatprep.subr.bf16.mxu0 0
        %667 = vmatpush1.bf16.msra.mxu0 0
        %668 = vmatprep.subr.bf16.mxu0 0
        %669 = vmatpush1.bf16.msra.mxu0 0
        %670 = vmatprep.subr.bf16.mxu0 0
        %671 = vmatpush1.bf16.msra.mxu0 0
        %672 = vmatprep.subr.bf16.mxu0 0
        %673 = vmatpush1.bf16.msra.mxu0 0
        %674 = vmatprep.subr.bf16.mxu0 0
        %675 = vmatpush1.bf16.msra.mxu0 0
        %676 = vmatprep.subr.bf16.mxu0 0
        %677 = vmatpush1.bf16.msra.mxu0 0
        %678 = vmatprep.subr.bf16.mxu0 %v526
        %679 = vmatpush1.bf16.msra.mxu0 %v525
        %680 = vmatprep.subr.bf16.mxu0 %v514
        %681 = vmatpush1.bf16.msra.mxu0 %v513
        %682 = vmatprep.subr.bf16.mxu0 0
        %683 = vmatpush2.bf16.msra.mxu0 0
        %684 = vmatprep.subr.bf16.mxu0 0
        %685 = vmatpush2.bf16.msra.mxu0 0
        %686 = vmatprep.subr.bf16.mxu0 0
        %687 = vmatpush2.bf16.msra.mxu0 0
        %688 = vmatprep.subr.bf16.mxu0 0
        %689 = vmatpush2.bf16.msra.mxu0 0
        %690 = vmatprep.subr.bf16.mxu0 0
        %691 = vmatpush2.bf16.msra.mxu0 0
        %692 = vmatprep.subr.bf16.mxu0 0
        %693 = vmatpush2.bf16.msra.mxu0 0
        %694 = vmatprep.subr.bf16.mxu0 0
        %695 = vmatpush2.bf16.msra.mxu0 0
        %696 = vmatprep.subr.bf16.mxu0 0
        %697 = vmatpush2.bf16.msra.mxu0 0
        %698 = vmatprep.mubr.bf16.mxu0 0
        %699 = vmatmul.mubr.bf16.gmra.mxu0 %v623
        %v700 = vpop.f32.mrf.mxu0
        %v701 = vadd.f32 %v572, %v700
        %v702 = vpop.f32.mrf.mxu0
        %v703 = vadd.f32 %v576, %v702
        %v704 = vpop.f32.mrf.mxu0
        %v705 = vpop.f32.mrf.mxu0
        %706 = vdwg.mxu0
        %707 = vmatprep.subr.bf16.mxu0 0
        %708 = vmatpush1.bf16.msra.mxu0 0
        %709 = vmatprep.subr.bf16.mxu0 0
        %710 = vmatpush1.bf16.msra.mxu0 0
        %711 = vmatprep.subr.bf16.mxu0 0
        %712 = vmatpush1.bf16.msra.mxu0 0
        %713 = vmatprep.subr.bf16.mxu0 0
        %714 = vmatpush1.bf16.msra.mxu0 0
        %715 = vmatprep.subr.bf16.mxu0 0
        %716 = vmatpush1.bf16.msra.mxu0 0
        %717 = vmatprep.subr.bf16.mxu0 0
        %718 = vmatpush1.bf16.msra.mxu0 0
        %719 = vmatprep.subr.bf16.mxu0 %v528
        %720 = vmatpush1.bf16.msra.mxu0 %v527
        %721 = vmatprep.subr.bf16.mxu0 %v516
        %722 = vmatpush1.bf16.msra.mxu0 %v515
        %723 = vmatprep.subr.bf16.mxu0 0
        %724 = vmatpush2.bf16.msra.mxu0 0
        %725 = vmatprep.subr.bf16.mxu0 0
        %726 = vmatpush2.bf16.msra.mxu0 0
        %727 = vmatprep.subr.bf16.mxu0 0
        %728 = vmatpush2.bf16.msra.mxu0 0
        %729 = vmatprep.subr.bf16.mxu0 0
        %730 = vmatpush2.bf16.msra.mxu0 0
        %731 = vmatprep.subr.bf16.mxu0 0
        %732 = vmatpush2.bf16.msra.mxu0 0
        %733 = vmatprep.subr.bf16.mxu0 0
        %734 = vmatpush2.bf16.msra.mxu0 0
        %735 = vmatprep.subr.bf16.mxu0 0
        %736 = vmatpush2.bf16.msra.mxu0 0
        %737 = vmatprep.subr.bf16.mxu0 0
        %738 = vmatpush2.bf16.msra.mxu0 0
        %739 = vmatprep.mubr.bf16.mxu0 0
        %740 = vmatmul.mubr.bf16.gmra.mxu0 %v623
        %v741 = vpop.f32.mrf.mxu0
        %v742 = vadd.f32 %v580, %v741
        %v743 = vpop.f32.mrf.mxu0
        %v744 = vadd.f32 %v584, %v743
        %v745 = vpop.f32.mrf.mxu0
        %v746 = vpop.f32.mrf.mxu0
        %747 = vdwg.mxu0
        %748 = vmatprep.subr.bf16.mxu0 0
        %749 = vmatpush1.bf16.msra.mxu0 0
        %750 = vmatprep.subr.bf16.mxu0 0
        %751 = vmatpush1.bf16.msra.mxu0 0
        %752 = vmatprep.subr.bf16.mxu0 0
        %753 = vmatpush1.bf16.msra.mxu0 0
        %754 = vmatprep.subr.bf16.mxu0 0
        %755 = vmatpush1.bf16.msra.mxu0 0
        %756 = vmatprep.subr.bf16.mxu0 0
        %757 = vmatpush1.bf16.msra.mxu0 0
        %758 = vmatprep.subr.bf16.mxu0 0
        %759 = vmatpush1.bf16.msra.mxu0 0
        %760 = vmatprep.subr.bf16.mxu0 %v530
        %761 = vmatpush1.bf16.msra.mxu0 %v529
        %762 = vmatprep.subr.bf16.mxu0 %v518
        %763 = vmatpush1.bf16.msra.mxu0 %v517
        %764 = vmatprep.subr.bf16.mxu0 0
        %765 = vmatpush2.bf16.msra.mxu0 0
        %766 = vmatprep.subr.bf16.mxu0 0
        %767 = vmatpush2.bf16.msra.mxu0 0
        %768 = vmatprep.subr.bf16.mxu0 0
        %769 = vmatpush2.bf16.msra.mxu0 0
        %770 = vmatprep.subr.bf16.mxu0 0
        %771 = vmatpush2.bf16.msra.mxu0 0
        %772 = vmatprep.subr.bf16.mxu0 0
        %773 = vmatpush2.bf16.msra.mxu0 0
        %774 = vmatprep.subr.bf16.mxu0 0
        %775 = vmatpush2.bf16.msra.mxu0 0
        %776 = vmatprep.subr.bf16.mxu0 0
        %777 = vmatpush2.bf16.msra.mxu0 0
        %778 = vmatprep.subr.bf16.mxu0 0
        %779 = vmatpush2.bf16.msra.mxu0 0
        %780 = vmatprep.mubr.bf16.mxu0 0
        %781 = vmatmul.mubr.bf16.gmra.mxu0 %v623
        %v782 = vpop.f32.mrf.mxu0
        %v783 = vadd.f32 %v588, %v782
        %v784 = vpop.f32.mrf.mxu0
        %v785 = vadd.f32 %v592, %v784
        %v786 = vpop.f32.mrf.mxu0
        %v787 = vpop.f32.mrf.mxu0
        %788 = vdwg.mxu0
        %789 = vmatprep.subr.bf16.mxu0 0
        %790 = vmatpush1.bf16.msra.mxu0 0
        %791 = vmatprep.subr.bf16.mxu0 0
        %792 = vmatpush1.bf16.msra.mxu0 0
        %793 = vmatprep.subr.bf16.mxu0 0
        %794 = vmatpush1.bf16.msra.mxu0 0
        %795 = vmatprep.subr.bf16.mxu0 0
        %796 = vmatpush1.bf16.msra.mxu0 0
        %797 = vmatprep.subr.bf16.mxu0 0
        %798 = vmatpush1.bf16.msra.mxu0 0
        %799 = vmatprep.subr.bf16.mxu0 0
        %800 = vmatpush1.bf16.msra.mxu0 0
        %801 = vmatprep.subr.bf16.mxu0 %v532
        %802 = vmatpush1.bf16.msra.mxu0 %v531
        %803 = vmatprep.subr.bf16.mxu0 %v520
        %804 = vmatpush1.bf16.msra.mxu0 %v519
        %805 = vmatprep.subr.bf16.mxu0 0
        %806 = vmatpush2.bf16.msra.mxu0 0
        %807 = vmatprep.subr.bf16.mxu0 0
        %808 = vmatpush2.bf16.msra.mxu0 0
        %809 = vmatprep.subr.bf16.mxu0 0
        %810 = vmatpush2.bf16.msra.mxu0 0
        %811 = vmatprep.subr.bf16.mxu0 0
        %812 = vmatpush2.bf16.msra.mxu0 0
        %813 = vmatprep.subr.bf16.mxu0 0
        %814 = vmatpush2.bf16.msra.mxu0 0
        %815 = vmatprep.subr.bf16.mxu0 0
        %816 = vmatpush2.bf16.msra.mxu0 0
        %817 = vmatprep.subr.bf16.mxu0 0
        %818 = vmatpush2.bf16.msra.mxu0 0
        %819 = vmatprep.subr.bf16.mxu0 0
        %820 = vmatpush2.bf16.msra.mxu0 0
        %821 = vmatprep.mubr.bf16.mxu0 0
        %822 = vmatmul.mubr.bf16.gmra.mxu0 %v623
        %v823 = vpop.f32.mrf.mxu0
        %v824 = vadd.f32 %v596, %v823
        %v825 = vpop.f32.mrf.mxu0
        %v826 = vadd.f32 %v600, %v825
        %v827 = vpop.f32.mrf.mxu0
        %v828 = vpop.f32.mrf.mxu0
        %829 = vdwg.mxu0
        %830 = vmatprep.subr.bf16.mxu0 0
        %831 = vmatpush1.bf16.msra.mxu0 0
        %832 = vmatprep.subr.bf16.mxu0 0
        %833 = vmatpush1.bf16.msra.mxu0 0
        %834 = vmatprep.subr.bf16.mxu0 0
        %835 = vmatpush1.bf16.msra.mxu0 0
        %836 = vmatprep.subr.bf16.mxu0 0
        %837 = vmatpush1.bf16.msra.mxu0 0
        %838 = vmatprep.subr.bf16.mxu0 0
        %839 = vmatpush1.bf16.msra.mxu0 0
        %840 = vmatprep.subr.bf16.mxu0 0
        %841 = vmatpush1.bf16.msra.mxu0 0
        %842 = vmatprep.subr.bf16.mxu0 %v534
        %843 = vmatpush1.bf16.msra.mxu0 %v533
        %844 = vmatprep.subr.bf16.mxu0 %v522
        %845 = vmatpush1.bf16.msra.mxu0 %v521
        %846 = vmatprep.subr.bf16.mxu0 0
        %847 = vmatpush2.bf16.msra.mxu0 0
        %848 = vmatprep.subr.bf16.mxu0 0
        %849 = vmatpush2.bf16.msra.mxu0 0
        %850 = vmatprep.subr.bf16.mxu0 0
        %851 = vmatpush2.bf16.msra.mxu0 0
        %852 = vmatprep.subr.bf16.mxu0 0
        %853 = vmatpush2.bf16.msra.mxu0 0
        %854 = vmatprep.subr.bf16.mxu0 0
        %855 = vmatpush2.bf16.msra.mxu0 0
        %856 = vmatprep.subr.bf16.mxu0 0
        %857 = vmatpush2.bf16.msra.mxu0 0
        %858 = vmatprep.subr.bf16.mxu0 0
        %859 = vmatpush2.bf16.msra.mxu0 0
        %860 = vmatprep.subr.bf16.mxu0 0
        %861 = vmatpush2.bf16.msra.mxu0 0
        %862 = vmatprep.mubr.bf16.mxu0 0
        %863 = vmatmul.mubr.bf16.gmra.mxu0 %v623
        %v864 = vpop.f32.mrf.mxu0
        %v865 = vadd.f32 %v604, %v864
        %v866 = vpop.f32.mrf.mxu0
        %v867 = vadd.f32 %v608, %v866
        %v868 = vpop.f32.mrf.mxu0
        %v869 = vpop.f32.mrf.mxu0
        %870 = vdwg.mxu0
        %v871 = vsel %vm621, %v401, 0.0
        %872 = vadd.xlane.f32.xlu0 %v871
        %v873 = vpop.xlane.xlu0 %872
        %v874 = vsel %vm621, %v402, 0.0
        %875 = vadd.xlane.f32.xlu0 %v874
        %v876 = vpop.xlane.xlu0 %875
        %v877 = vrcp.pop 32.0
        %v878 = vmul.f32 %v873, %v877
        %v879 = vmul.f32 %v876, %v877
        %v880 = vsub.f32 %v401, %v878
        %v881 = vsub.f32 %v402, %v879
        %v882 = vmul.f32 %v880, %v880
        %v883 = vmul.f32 %v881, %v881
        %v884 = vsel %vm621, %v882, 0.0
        %885 = vadd.xlane.f32.xlu0 %v884
        %v886 = vpop.xlane.xlu0 %885
        %v887 = vsel %vm621, %v883, 0.0
        %888 = vadd.xlane.f32.xlu0 %v887
        %v889 = vpop.xlane.xlu0 %888
        %v890 = vmul.f32 %v886, %v877
        %v891 = vmul.f32 %v889, %v877
        %v892 = vadd.f32 %v890, 1e-06
        %v893 = vadd.f32 %v891, 1e-06
        %v894 = vrsqrt.pop %v892
        %v895 = vrsqrt.pop %v893
        %v896 = vmul.f32 %v880, %v894
        %v897 = vmul.f32 %v881, %v895
        %v898 = vadd.f32 %v662, 1.0
        %v899 = vlaneseq
        %v900 = vshrl.u32 %v899, 7
        %v901 = vsub.s32 0, %v900
        %v902 = vrot.slane %v898, %v901
        %v903 = vmul.f32 %v896, %v902
        %v904 = vmul.f32 %v897, %v902
        %v905 = vlaneseq
        %v906 = vshrl.u32 %v905, 7
        %v907 = vsub.s32 0, %v906
        %v908 = vrot.slane %v660, %v907
        %v909 = vadd.f32 %v903, %v908
        %v910 = vadd.f32 %v904, %v908
        %v911 = vpack.c.bf16 %v910, %v909
        %v912 = vsel %vm621, %v403, 0.0
        %913 = vadd.xlane.f32.xlu0 %v912
        %v914 = vpop.xlane.xlu0 %913
        %v915 = vmul.f32 %v914, %v877
        %v916 = vsub.f32 %v403, %v915
        %v917 = vmul.f32 %v916, %v916
        %v918 = vsel %vm621, %v917, 0.0
        %919 = vadd.xlane.f32.xlu0 %v918
        %v920 = vpop.xlane.xlu0 %919
        %v921 = vmul.f32 %v920, %v877
        %v922 = vadd.f32 %v921, 1e-06
        %v923 = vrsqrt.pop %v922
        %v924 = vmul.f32 %v916, %v923
        %v925 = vadd.f32 %v785, 1.0
        %v926 = vlaneseq
        %v927 = vshrl.u32 %v926, 7
        %v928 = vsub.s32 0, %v927
        %v929 = vrot.slane %v925, %v928
        %v930 = vmul.f32 %v924, %v929
        %v931 = vlaneseq
        %v932 = vshrl.u32 %v931, 7
        %v933 = vsub.s32 0, %v932
        %v934 = vrot.slane %v783, %v933
        %v935 = vadd.f32 %v930, %v934
        %v936 = vpack.c.bf16 %v935, %v935
        %v937 = vld [vmem:[#allocation7 + $0x30] sm:$0xff]
        %v938 = vld [vmem:[#allocation7 + $0x38] sm:$0xf]
        %v939 = vld [vmem:[#allocation7 + $0x90] sm:$0xff]
        %v940 = vld [vmem:[#allocation7 + $0x98] sm:$0xf]
        %v941 = vld [vmem:[#allocation7 + $0xf0] sm:$0xff]
        %v942 = vld [vmem:[#allocation7 + $0xf8] sm:$0xf]
        %v943 = vld [vmem:[#allocation7 + $0x150] sm:$0xff]
        %v944 = vld [vmem:[#allocation7 + $0x158] sm:$0xf]
        %v945 = vld [vmem:[#allocation10 + $0xc] sm:$0x7]
        %v947 = vlaneseq
        %v948 = vshrl.u32 %v947, 7
        %v949 = vsub.s32 0, %v948
        %v950 = vrot.slane %v945, %v949
        %v951 = vlaneseq
        %v952 = vshrl.u32 %v951, 7
        %v953 = vsub.s32 1, %v952
        %v954 = vrot.slane %v945, %v953
        %v955 = vlaneseq
        %v956 = vshrl.u32 %v955, 7
        %v957 = vsub.s32 2, %v956
        %v958 = vrot.slane %v945, %v957
        %v970 = vunpack.c.l.b16 %v937
        %v971 = vunpack.c.h.b16 %v937
        %v972 = vunpack.c.l.b16 %v938
        %v973 = vunpack.c.l.b16 %v939
        %v974 = vunpack.c.h.b16 %v939
        %v975 = vunpack.c.l.b16 %v940
        %v976 = vunpack.c.l.b16 %v941
        %v977 = vunpack.c.h.b16 %v941
        %v978 = vunpack.c.l.b16 %v942
        %v979 = vunpack.c.l.b16 %v943
        %v980 = vunpack.c.h.b16 %v943
        %v981 = vunpack.c.l.b16 %v944
        %v982 = vpack.c.b16 %v973, %v970
        %v983 = vpack.c.b16 %v974, %v971
        %v984 = vpack.c.b16 %v975, %v972
        %v985 = vpack.c.b16 %v979, %v976
        %v986 = vpack.c.b16 %v980, %v977
        %v987 = vpack.c.b16 %v981, %v978
        %v995 = vsel %vm621, %v911, 0
        %997 = vmatprep.subr.bf16.mxu0 0
        %998 = vmatpush1.bf16.msra.mxu0 0
        %999 = vmatprep.subr.bf16.mxu0 0
        %1000 = vmatpush1.bf16.msra.mxu0 0
        %1001 = vmatprep.subr.bf16.mxu0 0
        %1002 = vmatpush1.bf16.msra.mxu0 0
        %1003 = vmatprep.subr.bf16.mxu0 0
        %1004 = vmatpush1.bf16.msra.mxu0 0
        %1005 = vmatprep.subr.bf16.mxu0 0
        %1006 = vmatpush1.bf16.msra.mxu0 0
        %1007 = vmatprep.subr.bf16.mxu0 0
        %1008 = vmatpush1.bf16.msra.mxu0 0
        %1009 = vmatprep.subr.bf16.mxu0 %v986
        %1010 = vmatpush1.bf16.msra.mxu0 %v985
        %1011 = vmatprep.subr.bf16.mxu0 %v983
        %1012 = vmatpush1.bf16.msra.mxu0 %v982
        %1013 = vmatprep.subr.bf16.mxu0 0
        %1014 = vmatpush2.bf16.msra.mxu0 0
        %1015 = vmatprep.subr.bf16.mxu0 0
        %1016 = vmatpush2.bf16.msra.mxu0 0
        %1017 = vmatprep.subr.bf16.mxu0 0
        %1018 = vmatpush2.bf16.msra.mxu0 0
        %1019 = vmatprep.subr.bf16.mxu0 0
        %1020 = vmatpush2.bf16.msra.mxu0 0
        %1021 = vmatprep.subr.bf16.mxu0 0
        %1022 = vmatpush2.bf16.msra.mxu0 0
        %1023 = vmatprep.subr.bf16.mxu0 0
        %1024 = vmatpush2.bf16.msra.mxu0 0
        %1025 = vmatprep.subr.bf16.mxu0 0
        %1026 = vmatpush2.bf16.msra.mxu0 0
        %1027 = vmatprep.subr.bf16.mxu0 0
        %1028 = vmatpush2.bf16.msra.mxu0 0
        %1029 = vmatprep.mubr.bf16.mxu0 0
        %1030 = vmatmul.mubr.bf16.gmra.mxu0 %v995
        %v1031 = vpop.f32.mrf.mxu0
        %v1032 = vadd.f32 %v950, %v1031
        %v1033 = vpop.f32.mrf.mxu0
        %v1034 = vadd.f32 %v954, %v1033
        %v1035 = vpop.f32.mrf.mxu0
        %v1036 = vadd.f32 %v950, %v1035
        %v1037 = vpop.f32.mrf.mxu0
        %v1038 = vadd.f32 %v954, %v1037
        %1039 = vdwg.mxu0
        %1040 = vmatprep.subr.bf16.mxu0 0
        %1041 = vmatpush1.bf16.msra.mxu0 0
        %1042 = vmatprep.subr.bf16.mxu0 0
        %1043 = vmatpush1.bf16.msra.mxu0 0
        %1044 = vmatprep.subr.bf16.mxu0 0
        %1045 = vmatpush1.bf16.msra.mxu0 0
        %1046 = vmatprep.subr.bf16.mxu0 0
        %1047 = vmatpush1.bf16.msra.mxu0 0
        %1048 = vmatprep.subr.bf16.mxu0 0
        %1049 = vmatpush1.bf16.msra.mxu0 0
        %1050 = vmatprep.subr.bf16.mxu0 0
        %1051 = vmatpush1.bf16.msra.mxu0 0
        %1052 = vmatprep.subr.bf16.mxu0 0
        %1053 = vmatpush1.bf16.msra.mxu0 %v987
        %1054 = vmatprep.subr.bf16.mxu0 0
        %1055 = vmatpush1.bf16.msra.mxu0 %v984
        %1056 = vmatprep.subr.bf16.mxu0 0
        %1057 = vmatpush2.bf16.msra.mxu0 0
        %1058 = vmatprep.subr.bf16.mxu0 0
        %1059 = vmatpush2.bf16.msra.mxu0 0
        %1060 = vmatprep.subr.bf16.mxu0 0
        %1061 = vmatpush2.bf16.msra.mxu0 0
        %1062 = vmatprep.subr.bf16.mxu0 0
        %1063 = vmatpush2.bf16.msra.mxu0 0
        %1064 = vmatprep.subr.bf16.mxu0 0
        %1065 = vmatpush2.bf16.msra.mxu0 0
        %1066 = vmatprep.subr.bf16.mxu0 0
        %1067 = vmatpush2.bf16.msra.mxu0 0
        %1068 = vmatprep.subr.bf16.mxu0 0
        %1069 = vmatpush2.bf16.msra.mxu0 0
        %1070 = vmatprep.subr.bf16.mxu0 0
        %1071 = vmatpush2.bf16.msra.mxu0 0
        %1072 = vmatprep.mubr.bf16.mxu0 0
        %1073 = vmatmul.mubr.bf16.gmra.mxu0 %v995
        %v1074 = vpop.f32.mrf.mxu0
        %v1075 = vadd.f32 %v958, %v1074
        %v1076 = vpop.f32.mrf.mxu0
        %v1077 = vpop.f32.mrf.mxu0
        %v1078 = vadd.f32 %v958, %v1077
        %v1079 = vpop.f32.mrf.mxu0
        %1080 = vdwg.mxu0
        %v1081 = vld [vmem:[#allocation7 + $0x3c] sm:$0xff]
        %v1082 = vld [vmem:[#allocation7 + $0x44] sm:$0xf]
        %v1083 = vld [vmem:[#allocation7 + $0x9c] sm:$0xff]
        %v1084 = vld [vmem:[#allocation7 + $0xa4] sm:$0xf]
        %v1085 = vld [vmem:[#allocation7 + $0xfc] sm:$0xff]
        %v1086 = vld [vmem:[#allocation7 + $0x104] sm:$0xf]
        %v1087 = vld [vmem:[#allocation7 + $0x15c] sm:$0xff]
        %v1088 = vld [vmem:[#allocation7 + $0x164] sm:$0xf]
        %v1089 = vld [vmem:[#allocation10 + $0xf] sm:$0x7]
        %v1091 = vlaneseq
        %v1092 = vshrl.u32 %v1091, 7
        %v1093 = vsub.s32 0, %v1092
        %v1094 = vrot.slane %v1089, %v1093
        %v1095 = vlaneseq
        %v1096 = vshrl.u32 %v1095, 7
        %v1097 = vsub.s32 1, %v1096
        %v1098 = vrot.slane %v1089, %v1097
        %v1099 = vlaneseq
        %v1100 = vshrl.u32 %v1099, 7
        %v1101 = vsub.s32 2, %v1100
        %v1102 = vrot.slane %v1089, %v1101
        %v1114 = vunpack.c.l.b16 %v1081
        %v1115 = vunpack.c.h.b16 %v1081
        %v1116 = vunpack.c.l.b16 %v1082
        %v1117 = vunpack.c.l.b16 %v1083
        %v1118 = vunpack.c.h.b16 %v1083
        %v1119 = vunpack.c.l.b16 %v1084
        %v1120 = vunpack.c.l.b16 %v1085
        %v1121 = vunpack.c.h.b16 %v1085
        %v1122 = vunpack.c.l.b16 %v1086
        %v1123 = vunpack.c.l.b16 %v1087
        %v1124 = vunpack.c.h.b16 %v1087
        %v1125 = vunpack.c.l.b16 %v1088
        %v1126 = vpack.c.b16 %v1117, %v1114
        %v1127 = vpack.c.b16 %v1118, %v1115
        %v1128 = vpack.c.b16 %v1119, %v1116
        %v1129 = vpack.c.b16 %v1123, %v1120
        %v1130 = vpack.c.b16 %v1124, %v1121
        %v1131 = vpack.c.b16 %v1125, %v1122
        %v1139 = vsel %vm621, %v936, 0
        %1141 = vmatprep.subr.bf16.mxu0 0
        %1142 = vmatpush1.bf16.msra.mxu0 0
        %1143 = vmatprep.subr.bf16.mxu0 0
        %1144 = vmatpush1.bf16.msra.mxu0 0
        %1145 = vmatprep.subr.bf16.mxu0 0
        %1146 = vmatpush1.bf16.msra.mxu0 0
        %1147 = vmatprep.subr.bf16.mxu0 0
        %1148 = vmatpush1.bf16.msra.mxu0 0
        %1149 = vmatprep.subr.bf16.mxu0 0
        %1150 = vmatpush1.bf16.msra.mxu0 0
        %1151 = vmatprep.subr.bf16.mxu0 0
        %1152 = vmatpush1.bf16.msra.mxu0 0
        %1153 = vmatprep.subr.bf16.mxu0 %v1130
        %1154 = vmatpush1.bf16.msra.mxu0 %v1129
        %1155 = vmatprep.subr.bf16.mxu0 %v1127
        %1156 = vmatpush1.bf16.msra.mxu0 %v1126
        %1157 = vmatprep.subr.bf16.mxu0 0
        %1158 = vmatpush2.bf16.msra.mxu0 0
        %1159 = vmatprep.subr.bf16.mxu0 0
        %1160 = vmatpush2.bf16.msra.mxu0 0
        %1161 = vmatprep.subr.bf16.mxu0 0
        %1162 = vmatpush2.bf16.msra.mxu0 0
        %1163 = vmatprep.subr.bf16.mxu0 0
        %1164 = vmatpush2.bf16.msra.mxu0 0
        %1165 = vmatprep.subr.bf16.mxu0 0
        %1166 = vmatpush2.bf16.msra.mxu0 0
        %1167 = vmatprep.subr.bf16.mxu0 0
        %1168 = vmatpush2.bf16.msra.mxu0 0
        %1169 = vmatprep.subr.bf16.mxu0 0
        %1170 = vmatpush2.bf16.msra.mxu0 0
        %1171 = vmatprep.subr.bf16.mxu0 0
        %1172 = vmatpush2.bf16.msra.mxu0 0
        %1173 = vmatprep.mubr.bf16.mxu0 0
        %1174 = vmatmul.mubr.bf16.gmra.mxu0 %v1139
        %v1175 = vpop.f32.mrf.mxu0
        %v1176 = vadd.f32 %v1094, %v1175
        %v1177 = vpop.f32.mrf.mxu0
        %v1178 = vadd.f32 %v1098, %v1177
        %v1179 = vpop.f32.mrf.mxu0
        %v1180 = vpop.f32.mrf.mxu0
        %1181 = vdwg.mxu0
        %1182 = vmatprep.subr.bf16.mxu0 0
        %1183 = vmatpush1.bf16.msra.mxu0 0
        %1184 = vmatprep.subr.bf16.mxu0 0
        %1185 = vmatpush1.bf16.msra.mxu0 0
        %1186 = vmatprep.subr.bf16.mxu0 0
        %1187 = vmatpush1.bf16.msra.mxu0 0
        %1188 = vmatprep.subr.bf16.mxu0 0
        %1189 = vmatpush1.bf16.msra.mxu0 0
        %1190 = vmatprep.subr.bf16.mxu0 0
        %1191 = vmatpush1.bf16.msra.mxu0 0
        %1192 = vmatprep.subr.bf16.mxu0 0
        %1193 = vmatpush1.bf16.msra.mxu0 0
        %1194 = vmatprep.subr.bf16.mxu0 0
        %1195 = vmatpush1.bf16.msra.mxu0 %v1131
        %1196 = vmatprep.subr.bf16.mxu0 0
        %1197 = vmatpush1.bf16.msra.mxu0 %v1128
        %1198 = vmatprep.subr.bf16.mxu0 0
        %1199 = vmatpush2.bf16.msra.mxu0 0
        %1200 = vmatprep.subr.bf16.mxu0 0
        %1201 = vmatpush2.bf16.msra.mxu0 0
        %1202 = vmatprep.subr.bf16.mxu0 0
        %1203 = vmatpush2.bf16.msra.mxu0 0
        %1204 = vmatprep.subr.bf16.mxu0 0
        %1205 = vmatpush2.bf16.msra.mxu0 0
        %1206 = vmatprep.subr.bf16.mxu0 0
        %1207 = vmatpush2.bf16.msra.mxu0 0
        %1208 = vmatprep.subr.bf16.mxu0 0
        %1209 = vmatpush2.bf16.msra.mxu0 0
        %1210 = vmatprep.subr.bf16.mxu0 0
        %1211 = vmatpush2.bf16.msra.mxu0 0
        %1212 = vmatprep.subr.bf16.mxu0 0
        %1213 = vmatpush2.bf16.msra.mxu0 0
        %1214 = vmatprep.mubr.bf16.mxu0 0
        %1215 = vmatmul.mubr.bf16.gmra.mxu0 %v1139
        %v1216 = vpop.f32.mrf.mxu0
        %v1217 = vadd.f32 %v1102, %v1216
        %v1218 = vpop.f32.mrf.mxu0
        %v1219 = vpop.f32.mrf.mxu0
        %v1220 = vpop.f32.mrf.mxu0
        %1221 = vdwg.mxu0
        %v1222 = vld [vmem:[#allocation7 + $0x58] sm:$0xf]
        %v1223 = vld [vmem:[#allocation7 + $0xb8] sm:$0xf]
        %v1224 = vld [vmem:[#allocation7 + $0x118] sm:$0xf]
        %v1225 = vld [vmem:[#allocation7 + $0x178] sm:$0xf]
        %v1226 = vld [vmem:[#allocation7 + $0x5c] sm:$0x1]
        %v1227 = vld [vmem:[#allocation10 + $0x18] sm:$0x1]
        %v1228 = vld [vmem:[#allocation10 + $0x19] sm:$0x1]
        %v1229 = vpack.c.bf16 %v1036, %v1032
        %v1234 = vunpack.c.l.b16 %v1222
        %v1235 = vunpack.c.l.b16 %v1223
        %v1236 = vunpack.c.l.b16 %v1224
        %v1237 = vunpack.c.l.b16 %v1225
        %v1238 = vpack.c.b16 %v1235, %v1234
        %v1239 = vpack.c.b16 %v1237, %v1236
        %v1243 = vsel %vm621, %v1229, 0
        %1245 = vmatprep.subr.bf16.mxu0 0
        %1246 = vmatpush1.bf16.msra.mxu0 0
        %1247 = vmatprep.subr.bf16.mxu0 0
        %1248 = vmatpush1.bf16.msra.mxu0 0
        %1249 = vmatprep.subr.bf16.mxu0 0
        %1250 = vmatpush1.bf16.msra.mxu0 0
        %1251 = vmatprep.subr.bf16.mxu0 0
        %1252 = vmatpush1.bf16.msra.mxu0 0
        %1253 = vmatprep.subr.bf16.mxu0 0
        %1254 = vmatpush1.bf16.msra.mxu0 0
        %1255 = vmatprep.subr.bf16.mxu0 0
        %1256 = vmatpush1.bf16.msra.mxu0 0
        %1257 = vmatprep.subr.bf16.mxu0 0
        %1258 = vmatpush1.bf16.msra.mxu0 %v1239
        %1259 = vmatprep.subr.bf16.mxu0 0
        %1260 = vmatpush1.bf16.msra.mxu0 %v1238
        %1261 = vmatprep.subr.bf16.mxu0 0
        %1262 = vmatpush2.bf16.msra.mxu0 0
        %1263 = vmatprep.subr.bf16.mxu0 0
        %1264 = vmatpush2.bf16.msra.mxu0 0
        %1265 = vmatprep.subr.bf16.mxu0 0
        %1266 = vmatpush2.bf16.msra.mxu0 0
        %1267 = vmatprep.subr.bf16.mxu0 0
        %1268 = vmatpush2.bf16.msra.mxu0 0
        %1269 = vmatprep.subr.bf16.mxu0 0
        %1270 = vmatpush2.bf16.msra.mxu0 0
        %1271 = vmatprep.subr.bf16.mxu0 0
        %1272 = vmatpush2.bf16.msra.mxu0 0
        %1273 = vmatprep.subr.bf16.mxu0 0
        %1274 = vmatpush2.bf16.msra.mxu0 0
        %1275 = vmatprep.subr.bf16.mxu0 0
        %1276 = vmatpush2.bf16.msra.mxu0 0
        %1277 = vmatprep.mubr.bf16.mxu0 0
        %1278 = vmatmul.mubr.bf16.gmra.mxu0 %v1243
        %v1279 = vpop.f32.mrf.mxu0
        %v1280 = vadd.f32 0.0, %v1279
        %v1281 = vpop.f32.mrf.mxu0
        %v1282 = vpop.f32.mrf.mxu0
        %v1283 = vadd.f32 0.0, %v1282
        %v1284 = vpop.f32.mrf.mxu0
        %1285 = vdwg.mxu0
        %v1286 = vpack.c.bf16 %v1283, %v1280
        %vm1287 = vcmask 15360
        %v1289 = vsel %vm1287, %v1286, 0
        %vm1291 = vcmask 1040384
        %v1293 = vsel %vm1291, %v1226, 0
        %1295 = vmatprep.subr.bf16.mxu0 0
        %1296 = vmatpush1.bf16.msra.mxu0 0
        %1297 = vmatprep.subr.bf16.mxu0 0
        %1298 = vmatpush1.bf16.msra.mxu0 0
        %1299 = vmatprep.subr.bf16.mxu0 0
        %1300 = vmatpush1.bf16.msra.mxu0 0
        %1301 = vmatprep.subr.bf16.mxu0 0
        %1302 = vmatpush1.bf16.msra.mxu0 0
        %1303 = vmatprep.subr.bf16.mxu0 0
        %1304 = vmatpush1.bf16.msra.mxu0 0
        %1305 = vmatprep.subr.bf16.mxu0 0
        %1306 = vmatpush1.bf16.msra.mxu0 0
        %1307 = vmatprep.subr.bf16.mxu0 0
        %1308 = vmatpush1.bf16.msra.mxu0 0
        %1309 = vmatprep.subr.bf16.mxu0 0
        %1310 = vmatpush1.bf16.msra.mxu0 %v1293
        %1311 = vmatprep.subr.bf16.mxu0 0
        %1312 = vmatpush2.bf16.msra.mxu0 0
        %1313 = vmatprep.subr.bf16.mxu0 0
        %1314 = vmatpush2.bf16.msra.mxu0 0
        %1315 = vmatprep.subr.bf16.mxu0 0
        %1316 = vmatpush2.bf16.msra.mxu0 0
        %1317 = vmatprep.subr.bf16.mxu0 0
        %1318 = vmatpush2.bf16.msra.mxu0 0
        %1319 = vmatprep.subr.bf16.mxu0 0
        %1320 = vmatpush2.bf16.msra.mxu0 0
        %1321 = vmatprep.subr.bf16.mxu0 0
        %1322 = vmatpush2.bf16.msra.mxu0 0
        %1323 = vmatprep.subr.bf16.mxu0 0
        %1324 = vmatpush2.bf16.msra.mxu0 0
        %1325 = vmatprep.subr.bf16.mxu0 0
        %1326 = vmatpush2.bf16.msra.mxu0 0
        %1327 = vmatprep.mubr.bf16.mxu0 0
        %1328 = vmatmul.mubr.bf16.gmra.mxu0 %v1289
        %v1329 = vpop.f32.mrf.mxu0
        %v1330 = vadd.f32 0.0, %v1329
        %v1331 = vpop.f32.mrf.mxu0
        %v1332 = vpop.f32.mrf.mxu0
        %v1333 = vadd.f32 0.0, %v1332
        %v1334 = vpop.f32.mrf.mxu0
        %1335 = vdwg.mxu0
        %v1336 = vsub.f32 %v1032, %v1330
        %v1337 = vsub.f32 %v1036, %v1333
        %v1338 = vmul.f32 %v1336, %v1336
        %v1339 = vmul.f32 %v1337, %v1337
        %v1340 = vpack.c.bf16 %v1339, %v1338
        %v1342 = vsel %vm621, %v1340, 0
        %1344 = vmatprep.subr.bf16.mxu0 0
        %1345 = vmatpush1.bf16.msra.mxu0 0
        %1346 = vmatprep.subr.bf16.mxu0 0
        %1347 = vmatpush1.bf16.msra.mxu0 0
        %1348 = vmatprep.subr.bf16.mxu0 0
        %1349 = vmatpush1.bf16.msra.mxu0 0
        %1350 = vmatprep.subr.bf16.mxu0 0
        %1351 = vmatpush1.bf16.msra.mxu0 0
        %1352 = vmatprep.subr.bf16.mxu0 0
        %1353 = vmatpush1.bf16.msra.mxu0 0
        %1354 = vmatprep.subr.bf16.mxu0 0
        %1355 = vmatpush1.bf16.msra.mxu0 0
        %1356 = vmatprep.subr.bf16.mxu0 0
        %1357 = vmatpush1.bf16.msra.mxu0 %v1239
        %1358 = vmatprep.subr.bf16.mxu0 0
        %1359 = vmatpush1.bf16.msra.mxu0 %v1238
        %1360 = vmatprep.subr.bf16.mxu0 0
        %1361 = vmatpush2.bf16.msra.mxu0 0
        %1362 = vmatprep.subr.bf16.mxu0 0
        %1363 = vmatpush2.bf16.msra.mxu0 0
        %1364 = vmatprep.subr.bf16.mxu0 0
        %1365 = vmatpush2.bf16.msra.mxu0 0
        %1366 = vmatprep.subr.bf16.mxu0 0
        %1367 = vmatpush2.bf16.msra.mxu0 0
        %1368 = vmatprep.subr.bf16.mxu0 0
        %1369 = vmatpush2.bf16.msra.mxu0 0
        %1370 = vmatprep.subr.bf16.mxu0 0
        %1371 = vmatpush2.bf16.msra.mxu0 0
        %1372 = vmatprep.subr.bf16.mxu0 0
        %1373 = vmatpush2.bf16.msra.mxu0 0
        %1374 = vmatprep.subr.bf16.mxu0 0
        %1375 = vmatpush2.bf16.msra.mxu0 0
        %1376 = vmatprep.mubr.bf16.mxu0 0
        %1377 = vmatmul.mubr.bf16.gmra.mxu0 %v1342
        %v1378 = vpop.f32.mrf.mxu0
        %v1379 = vadd.f32 0.0, %v1378
        %v1380 = vpop.f32.mrf.mxu0
        %v1381 = vpop.f32.mrf.mxu0
        %v1382 = vadd.f32 0.0, %v1381
        %v1383 = vpop.f32.mrf.mxu0
        %1384 = vdwg.mxu0
        %v1385 = vpack.c.bf16 %v1382, %v1379
        %v1387 = vsel %vm1287, %v1385, 0
        %1389 = vmatprep.subr.bf16.mxu0 0
        %1390 = vmatpush1.bf16.msra.mxu0 0
        %1391 = vmatprep.subr.bf16.mxu0 0
        %1392 = vmatpush1.bf16.msra.mxu0 0
        %1393 = vmatprep.subr.bf16.mxu0 0
        %1394 = vmatpush1.bf16.msra.mxu0 0
        %1395 = vmatprep.subr.bf16.mxu0 0
        %1396 = vmatpush1.bf16.msra.mxu0 0
        %1397 = vmatprep.subr.bf16.mxu0 0
        %1398 = vmatpush1.bf16.msra.mxu0 0
        %1399 = vmatprep.subr.bf16.mxu0 0
        %1400 = vmatpush1.bf16.msra.mxu0 0
        %1401 = vmatprep.subr.bf16.mxu0 0
        %1402 = vmatpush1.bf16.msra.mxu0 0
        %1403 = vmatprep.subr.bf16.mxu0 0
        %1404 = vmatpush1.bf16.msra.mxu0 %v1293
        %1405 = vmatprep.subr.bf16.mxu0 0
        %1406 = vmatpush2.bf16.msra.mxu0 0
        %1407 = vmatprep.subr.bf16.mxu0 0
        %1408 = vmatpush2.bf16.msra.mxu0 0
        %1409 = vmatprep.subr.bf16.mxu0 0
        %1410 = vmatpush2.bf16.msra.mxu0 0
        %1411 = vmatprep.subr.bf16.mxu0 0
        %1412 = vmatpush2.bf16.msra.mxu0 0
        %1413 = vmatprep.subr.bf16.mxu0 0
        %1414 = vmatpush2.bf16.msra.mxu0 0
        %1415 = vmatprep.subr.bf16.mxu0 0
        %1416 = vmatpush2.bf16.msra.mxu0 0
        %1417 = vmatprep.subr.bf16.mxu0 0
        %1418 = vmatpush2.bf16.msra.mxu0 0
        %1419 = vmatprep.subr.bf16.mxu0 0
        %1420 = vmatpush2.bf16.msra.mxu0 0
        %1421 = vmatprep.mubr.bf16.mxu0 0
        %1422 = vmatmul.mubr.bf16.gmra.mxu0 %v1387
        %v1423 = vpop.f32.mrf.mxu0
        %v1424 = vadd.f32 1e-05, %v1423
        %v1425 = vpop.f32.mrf.mxu0
        %v1426 = vpop.f32.mrf.mxu0
        %v1427 = vadd.f32 1e-05, %v1426
        %v1428 = vpop.f32.mrf.mxu0
        %1429 = vdwg.mxu0
        %v1430 = vrsqrt.pop %v1424
        %v1431 = vrsqrt.pop %v1427
        %v1432 = vmul.f32 %v1336, %v1430
        %v1433 = vmul.f32 %v1337, %v1431
        %v1435 = vlaneseq
        %v1436 = vshrl.u32 %v1435, 7
        %v1437 = vsub.s32 0, %v1436
        %v1438 = vrot.slane %v1227, %v1437
        %v1440 = vmul.f32 %v1432, %v1438
        %v1441 = vmul.f32 %v1433, %v1438
        %v1443 = vlaneseq
        %v1444 = vshrl.u32 %v1443, 7
        %v1445 = vsub.s32 0, %v1444
        %v1446 = vrot.slane %v1228, %v1445
        %v1448 = vadd.f32 %v1440, %v1446
        %v1449 = vadd.f32 %v1441, %v1446
        %v1450 = vld [vmem:[#allocation10 + $0x1c] sm:$0x1]
        %v1451 = vld [vmem:[#allocation10 + $0x1d] sm:$0x1]
        %v1452 = vpack.c.bf16 %v1176, %v1176
        %v1454 = vsel %vm621, %v1452, 0
        %1456 = vmatprep.subr.bf16.mxu0 0
        %1457 = vmatpush1.bf16.msra.mxu0 0
        %1458 = vmatprep.subr.bf16.mxu0 0
        %1459 = vmatpush1.bf16.msra.mxu0 0
        %1460 = vmatprep.subr.bf16.mxu0 0
        %1461 = vmatpush1.bf16.msra.mxu0 0
        %1462 = vmatprep.subr.bf16.mxu0 0
        %1463 = vmatpush1.bf16.msra.mxu0 0
        %1464 = vmatprep.subr.bf16.mxu0 0
        %1465 = vmatpush1.bf16.msra.mxu0 0
        %1466 = vmatprep.subr.bf16.mxu0 0
        %1467 = vmatpush1.bf16.msra.mxu0 0
        %1468 = vmatprep.subr.bf16.mxu0 0
        %1469 = vmatpush1.bf16.msra.mxu0 %v1239
        %1470 = vmatprep.subr.bf16.mxu0 0
        %1471 = vmatpush1.bf16.msra.mxu0 %v1238
        %1472 = vmatprep.subr.bf16.mxu0 0
        %1473 = vmatpush2.bf16.msra.mxu0 0
        %1474 = vmatprep.subr.bf16.mxu0 0
        %1475 = vmatpush2.bf16.msra.mxu0 0
        %1476 = vmatprep.subr.bf16.mxu0 0
        %1477 = vmatpush2.bf16.msra.mxu0 0
        %1478 = vmatprep.subr.bf16.mxu0 0
        %1479 = vmatpush2.bf16.msra.mxu0 0
        %1480 = vmatprep.subr.bf16.mxu0 0
        %1481 = vmatpush2.bf16.msra.mxu0 0
        %1482 = vmatprep.subr.bf16.mxu0 0
        %1483 = vmatpush2.bf16.msra.mxu0 0
        %1484 = vmatprep.subr.bf16.mxu0 0
        %1485 = vmatpush2.bf16.msra.mxu0 0
        %1486 = vmatprep.subr.bf16.mxu0 0
        %1487 = vmatpush2.bf16.msra.mxu0 0
        %1488 = vmatprep.mubr.bf16.mxu0 0
        %1489 = vmatmul.mubr.bf16.gmra.mxu0 %v1454
        %v1490 = vpop.f32.mrf.mxu0
        %v1491 = vadd.f32 0.0, %v1490
        %v1492 = vpop.f32.mrf.mxu0
        %v1493 = vpop.f32.mrf.mxu0
        %v1494 = vpop.f32.mrf.mxu0
        %1495 = vdwg.mxu0
        %v1496 = vpack.c.bf16 %v1491, %v1491
        %v1498 = vsel %vm1287, %v1496, 0
        %1500 = vmatprep.subr.bf16.mxu0 0
        %1501 = vmatpush1.bf16.msra.mxu0 0
        %1502 = vmatprep.subr.bf16.mxu0 0
        %1503 = vmatpush1.bf16.msra.mxu0 0
        %1504 = vmatprep.subr.bf16.mxu0 0
        %1505 = vmatpush1.bf16.msra.mxu0 0
        %1506 = vmatprep.subr.bf16.mxu0 0
        %1507 = vmatpush1.bf16.msra.mxu0 0
        %1508 = vmatprep.subr.bf16.mxu0 0
        %1509 = vmatpush1.bf16.msra.mxu0 0
        %1510 = vmatprep.subr.bf16.mxu0 0
        %1511 = vmatpush1.bf16.msra.mxu0 0
        %1512 = vmatprep.subr.bf16.mxu0 0
        %1513 = vmatpush1.bf16.msra.mxu0 0
        %1514 = vmatprep.subr.bf16.mxu0 0
        %1515 = vmatpush1.bf16.msra.mxu0 %v1293
        %1516 = vmatprep.subr.bf16.mxu0 0
        %1517 = vmatpush2.bf16.msra.mxu0 0
        %1518 = vmatprep.subr.bf16.mxu0 0
        %1519 = vmatpush2.bf16.msra.mxu0 0
        %1520 = vmatprep.subr.bf16.mxu0 0
        %1521 = vmatpush2.bf16.msra.mxu0 0
        %1522 = vmatprep.subr.bf16.mxu0 0
        %1523 = vmatpush2.bf16.msra.mxu0 0
        %1524 = vmatprep.subr.bf16.mxu0 0
        %1525 = vmatpush2.bf16.msra.mxu0 0
        %1526 = vmatprep.subr.bf16.mxu0 0
        %1527 = vmatpush2.bf16.msra.mxu0 0
        %1528 = vmatprep.subr.bf16.mxu0 0
        %1529 = vmatpush2.bf16.msra.mxu0 0
        %1530 = vmatprep.subr.bf16.mxu0 0
        %1531 = vmatpush2.bf16.msra.mxu0 0
        %1532 = vmatprep.mubr.bf16.mxu0 0
        %1533 = vmatmul.mubr.bf16.gmra.mxu0 %v1498
        %v1534 = vpop.f32.mrf.mxu0
        %v1535 = vadd.f32 0.0, %v1534
        %v1536 = vpop.f32.mrf.mxu0
        %v1537 = vpop.f32.mrf.mxu0
        %v1538 = vpop.f32.mrf.mxu0
        %1539 = vdwg.mxu0
        %v1540 = vsub.f32 %v1176, %v1535
        %v1541 = vmul.f32 %v1540, %v1540
        %v1542 = vpack.c.bf16 %v1541, %v1541
        %v1544 = vsel %vm621, %v1542, 0
        %1546 = vmatprep.subr.bf16.mxu0 0
        %1547 = vmatpush1.bf16.msra.mxu0 0
        %1548 = vmatprep.subr.bf16.mxu0 0
        %1549 = vmatpush1.bf16.msra.mxu0 0
        %1550 = vmatprep.subr.bf16.mxu0 0
        %1551 = vmatpush1.bf16.msra.mxu0 0
        %1552 = vmatprep.subr.bf16.mxu0 0
        %1553 = vmatpush1.bf16.msra.mxu0 0
        %1554 = vmatprep.subr.bf16.mxu0 0
        %1555 = vmatpush1.bf16.msra.mxu0 0
        %1556 = vmatprep.subr.bf16.mxu0 0
        %1557 = vmatpush1.bf16.msra.mxu0 0
        %1558 = vmatprep.subr.bf16.mxu0 0
        %1559 = vmatpush1.bf16.msra.mxu0 %v1239
        %1560 = vmatprep.subr.bf16.mxu0 0
        %1561 = vmatpush1.bf16.msra.mxu0 %v1238
        %1562 = vmatprep.subr.bf16.mxu0 0
        %1563 = vmatpush2.bf16.msra.mxu0 0
        %1564 = vmatprep.subr.bf16.mxu0 0
        %1565 = vmatpush2.bf16.msra.mxu0 0
        %1566 = vmatprep.subr.bf16.mxu0 0
        %1567 = vmatpush2.bf16.msra.mxu0 0
        %1568 = vmatprep.subr.bf16.mxu0 0
        %1569 = vmatpush2.bf16.msra.mxu0 0
        %1570 = vmatprep.subr.bf16.mxu0 0
        %1571 = vmatpush2.bf16.msra.mxu0 0
        %1572 = vmatprep.subr.bf16.mxu0 0
        %1573 = vmatpush2.bf16.msra.mxu0 0
        %1574 = vmatprep.subr.bf16.mxu0 0
        %1575 = vmatpush2.bf16.msra.mxu0 0
        %1576 = vmatprep.subr.bf16.mxu0 0
        %1577 = vmatpush2.bf16.msra.mxu0 0
        %1578 = vmatprep.mubr.bf16.mxu0 0
        %1579 = vmatmul.mubr.bf16.gmra.mxu0 %v1544
        %v1580 = vpop.f32.mrf.mxu0
        %v1581 = vadd.f32 0.0, %v1580
        %v1582 = vpop.f32.mrf.mxu0
        %v1583 = vpop.f32.mrf.mxu0
        %v1584 = vpop.f32.mrf.mxu0
        %1585 = vdwg.mxu0
        %v1586 = vpack.c.bf16 %v1581, %v1581
        %v1588 = vsel %vm1287, %v1586, 0
        %1590 = vmatprep.subr.bf16.mxu0 0
        %1591 = vmatpush1.bf16.msra.mxu0 0
        %1592 = vmatprep.subr.bf16.mxu0 0
        %1593 = vmatpush1.bf16.msra.mxu0 0
        %1594 = vmatprep.subr.bf16.mxu0 0
        %1595 = vmatpush1.bf16.msra.mxu0 0
        %1596 = vmatprep.subr.bf16.mxu0 0
        %1597 = vmatpush1.bf16.msra.mxu0 0
        %1598 = vmatprep.subr.bf16.mxu0 0
        %1599 = vmatpush1.bf16.msra.mxu0 0
        %1600 = vmatprep.subr.bf16.mxu0 0
        %1601 = vmatpush1.bf16.msra.mxu0 0
        %1602 = vmatprep.subr.bf16.mxu0 0
        %1603 = vmatpush1.bf16.msra.mxu0 0
        %1604 = vmatprep.subr.bf16.mxu0 0
        %1605 = vmatpush1.bf16.msra.mxu0 %v1293
        %1606 = vmatprep.subr.bf16.mxu0 0
        %1607 = vmatpush2.bf16.msra.mxu0 0
        %1608 = vmatprep.subr.bf16.mxu0 0
        %1609 = vmatpush2.bf16.msra.mxu0 0
        %1610 = vmatprep.subr.bf16.mxu0 0
        %1611 = vmatpush2.bf16.msra.mxu0 0
        %1612 = vmatprep.subr.bf16.mxu0 0
        %1613 = vmatpush2.bf16.msra.mxu0 0
        %1614 = vmatprep.subr.bf16.mxu0 0
        %1615 = vmatpush2.bf16.msra.mxu0 0
        %1616 = vmatprep.subr.bf16.mxu0 0
        %1617 = vmatpush2.bf16.msra.mxu0 0
        %1618 = vmatprep.subr.bf16.mxu0 0
        %1619 = vmatpush2.bf16.msra.mxu0 0
        %1620 = vmatprep.subr.bf16.mxu0 0
        %1621 = vmatpush2.bf16.msra.mxu0 0
        %1622 = vmatprep.mubr.bf16.mxu0 0
        %1623 = vmatmul.mubr.bf16.gmra.mxu0 %v1588
        %v1624 = vpop.f32.mrf.mxu0
        %v1625 = vadd.f32 1e-05, %v1624
        %v1626 = vpop.f32.mrf.mxu0
        %v1627 = vpop.f32.mrf.mxu0
        %v1628 = vpop.f32.mrf.mxu0
        %1629 = vdwg.mxu0
        %v1630 = vrsqrt.pop %v1625
        %v1631 = vmul.f32 %v1540, %v1630
        %v1633 = vlaneseq
        %v1634 = vshrl.u32 %v1633, 7
        %v1635 = vsub.s32 0, %v1634
        %v1636 = vrot.slane %v1450, %v1635
        %v1638 = vmul.f32 %v1631, %v1636
        %v1640 = vlaneseq
        %v1641 = vshrl.u32 %v1640, 7
        %v1642 = vsub.s32 0, %v1641
        %v1643 = vrot.slane %v1451, %v1642
        %v1645 = vadd.f32 %v1638, %v1643
        %v1646 = vpack.c.bf16 %v1449, %v1448
        %v1647 = vpack.c.bf16 %v1645, %v1645
        %v1648 = vld [vmem:[#allocation10 + $0x1a] sm:$0x1]
        %v1649 = vld [vmem:[#allocation10 + $0x1b] sm:$0x1]
        %v1650 = vpack.c.bf16 %v1038, %v1034
        %v1652 = vsel %vm621, %v1650, 0
        %1654 = vmatprep.subr.bf16.mxu0 0
        %1655 = vmatpush1.bf16.msra.mxu0 0
        %1656 = vmatprep.subr.bf16.mxu0 0
        %1657 = vmatpush1.bf16.msra.mxu0 0
        %1658 = vmatprep.subr.bf16.mxu0 0
        %1659 = vmatpush1.bf16.msra.mxu0 0
        %1660 = vmatprep.subr.bf16.mxu0 0
        %1661 = vmatpush1.bf16.msra.mxu0 0
        %1662 = vmatprep.subr.bf16.mxu0 0
        %1663 = vmatpush1.bf16.msra.mxu0 0
        %1664 = vmatprep.subr.bf16.mxu0 0
        %1665 = vmatpush1.bf16.msra.mxu0 0
        %1666 = vmatprep.subr.bf16.mxu0 0
        %1667 = vmatpush1.bf16.msra.mxu0 %v1239
        %1668 = vmatprep.subr.bf16.mxu0 0
        %1669 = vmatpush1.bf16.msra.mxu0 %v1238
        %1670 = vmatprep.subr.bf16.mxu0 0
        %1671 = vmatpush2.bf16.msra.mxu0 0
        %1672 = vmatprep.subr.bf16.mxu0 0
        %1673 = vmatpush2.bf16.msra.mxu0 0
        %1674 = vmatprep.subr.bf16.mxu0 0
        %1675 = vmatpush2.bf16.msra.mxu0 0
        %1676 = vmatprep.subr.bf16.mxu0 0
        %1677 = vmatpush2.bf16.msra.mxu0 0
        %1678 = vmatprep.subr.bf16.mxu0 0
        %1679 = vmatpush2.bf16.msra.mxu0 0
        %1680 = vmatprep.subr.bf16.mxu0 0
        %1681 = vmatpush2.bf16.msra.mxu0 0
        %1682 = vmatprep.subr.bf16.mxu0 0
        %1683 = vmatpush2.bf16.msra.mxu0 0
        %1684 = vmatprep.subr.bf16.mxu0 0
        %1685 = vmatpush2.bf16.msra.mxu0 0
        %1686 = vmatprep.mubr.bf16.mxu0 0
        %1687 = vmatmul.mubr.bf16.gmra.mxu0 %v1652
        %v1688 = vpop.f32.mrf.mxu0
        %v1689 = vadd.f32 0.0, %v1688
        %v1690 = vpop.f32.mrf.mxu0
        %v1691 = vpop.f32.mrf.mxu0
        %v1692 = vadd.f32 0.0, %v1691
        %v1693 = vpop.f32.mrf.mxu0
        %1694 = vdwg.mxu0
        %v1695 = vpack.c.bf16 %v1692, %v1689
        %v1697 = vsel %vm1287, %v1695, 0
        %1699 = vmatprep.subr.bf16.mxu0 0
        %1700 = vmatpush1.bf16.msra.mxu0 0
        %1701 = vmatprep.subr.bf16.mxu0 0
        %1702 = vmatpush1.bf16.msra.mxu0 0
        %1703 = vmatprep.subr.bf16.mxu0 0
        %1704 = vmatpush1.bf16.msra.mxu0 0
        %1705 = vmatprep.subr.bf16.mxu0 0
        %1706 = vmatpush1.bf16.msra.mxu0 0
        %1707 = vmatprep.subr.bf16.mxu0 0
        %1708 = vmatpush1.bf16.msra.mxu0 0
        %1709 = vmatprep.subr.bf16.mxu0 0
        %1710 = vmatpush1.bf16.msra.mxu0 0
        %1711 = vmatprep.subr.bf16.mxu0 0
        %1712 = vmatpush1.bf16.msra.mxu0 0
        %1713 = vmatprep.subr.bf16.mxu0 0
        %1714 = vmatpush1.bf16.msra.mxu0 %v1293
        %1715 = vmatprep.subr.bf16.mxu0 0
        %1716 = vmatpush2.bf16.msra.mxu0 0
        %1717 = vmatprep.subr.bf16.mxu0 0
        %1718 = vmatpush2.bf16.msra.mxu0 0
        %1719 = vmatprep.subr.bf16.mxu0 0
        %1720 = vmatpush2.bf16.msra.mxu0 0
        %1721 = vmatprep.subr.bf16.mxu0 0
        %1722 = vmatpush2.bf16.msra.mxu0 0
        %1723 = vmatprep.subr.bf16.mxu0 0
        %1724 = vmatpush2.bf16.msra.mxu0 0
        %1725 = vmatprep.subr.bf16.mxu0 0
        %1726 = vmatpush2.bf16.msra.mxu0 0
        %1727 = vmatprep.subr.bf16.mxu0 0
        %1728 = vmatpush2.bf16.msra.mxu0 0
        %1729 = vmatprep.subr.bf16.mxu0 0
        %1730 = vmatpush2.bf16.msra.mxu0 0
        %1731 = vmatprep.mubr.bf16.mxu0 0
        %1732 = vmatmul.mubr.bf16.gmra.mxu0 %v1697
        %v1733 = vpop.f32.mrf.mxu0
        %v1734 = vadd.f32 0.0, %v1733
        %v1735 = vpop.f32.mrf.mxu0
        %v1736 = vpop.f32.mrf.mxu0
        %v1737 = vadd.f32 0.0, %v1736
        %v1738 = vpop.f32.mrf.mxu0
        %1739 = vdwg.mxu0
        %v1740 = vsub.f32 %v1034, %v1734
        %v1741 = vsub.f32 %v1038, %v1737
        %v1742 = vmul.f32 %v1740, %v1740
        %v1743 = vmul.f32 %v1741, %v1741
        %v1744 = vpack.c.bf16 %v1743, %v1742
        %v1746 = vsel %vm621, %v1744, 0
        %1748 = vmatprep.subr.bf16.mxu0 0
        %1749 = vmatpush1.bf16.msra.mxu0 0
        %1750 = vmatprep.subr.bf16.mxu0 0
        %1751 = vmatpush1.bf16.msra.mxu0 0
        %1752 = vmatprep.subr.bf16.mxu0 0
        %1753 = vmatpush1.bf16.msra.mxu0 0
        %1754 = vmatprep.subr.bf16.mxu0 0
        %1755 = vmatpush1.bf16.msra.mxu0 0
        %1756 = vmatprep.subr.bf16.mxu0 0
        %1757 = vmatpush1.bf16.msra.mxu0 0
        %1758 = vmatprep.subr.bf16.mxu0 0
        %1759 = vmatpush1.bf16.msra.mxu0 0
        %1760 = vmatprep.subr.bf16.mxu0 0
        %1761 = vmatpush1.bf16.msra.mxu0 %v1239
        %1762 = vmatprep.subr.bf16.mxu0 0
        %1763 = vmatpush1.bf16.msra.mxu0 %v1238
        %1764 = vmatprep.subr.bf16.mxu0 0
        %1765 = vmatpush2.bf16.msra.mxu0 0
        %1766 = vmatprep.subr.bf16.mxu0 0
        %1767 = vmatpush2.bf16.msra.mxu0 0
        %1768 = vmatprep.subr.bf16.mxu0 0
        %1769 = vmatpush2.bf16.msra.mxu0 0
        %1770 = vmatprep.subr.bf16.mxu0 0
        %1771 = vmatpush2.bf16.msra.mxu0 0
        %1772 = vmatprep.subr.bf16.mxu0 0
        %1773 = vmatpush2.bf16.msra.mxu0 0
        %1774 = vmatprep.subr.bf16.mxu0 0
        %1775 = vmatpush2.bf16.msra.mxu0 0
        %1776 = vmatprep.subr.bf16.mxu0 0
        %1777 = vmatpush2.bf16.msra.mxu0 0
        %1778 = vmatprep.subr.bf16.mxu0 0
        %1779 = vmatpush2.bf16.msra.mxu0 0
        %1780 = vmatprep.mubr.bf16.mxu0 0
        %1781 = vmatmul.mubr.bf16.gmra.mxu0 %v1746
        %v1782 = vpop.f32.mrf.mxu0
        %v1783 = vadd.f32 0.0, %v1782
        %v1784 = vpop.f32.mrf.mxu0
        %v1785 = vpop.f32.mrf.mxu0
        %v1786 = vadd.f32 0.0, %v1785
        %v1787 = vpop.f32.mrf.mxu0
        %1788 = vdwg.mxu0
        %v1789 = vpack.c.bf16 %v1786, %v1783
        %v1791 = vsel %vm1287, %v1789, 0
        %1793 = vmatprep.subr.bf16.mxu0 0
        %1794 = vmatpush1.bf16.msra.mxu0 0
        %1795 = vmatprep.subr.bf16.mxu0 0
        %1796 = vmatpush1.bf16.msra.mxu0 0
        %1797 = vmatprep.subr.bf16.mxu0 0
        %1798 = vmatpush1.bf16.msra.mxu0 0
        %1799 = vmatprep.subr.bf16.mxu0 0
        %1800 = vmatpush1.bf16.msra.mxu0 0
        %1801 = vmatprep.subr.bf16.mxu0 0
        %1802 = vmatpush1.bf16.msra.mxu0 0
        %1803 = vmatprep.subr.bf16.mxu0 0
        %1804 = vmatpush1.bf16.msra.mxu0 0
        %1805 = vmatprep.subr.bf16.mxu0 0
        %1806 = vmatpush1.bf16.msra.mxu0 0
        %1807 = vmatprep.subr.bf16.mxu0 0
        %1808 = vmatpush1.bf16.msra.mxu0 %v1293
        %1809 = vmatprep.subr.bf16.mxu0 0
        %1810 = vmatpush2.bf16.msra.mxu0 0
        %1811 = vmatprep.subr.bf16.mxu0 0
        %1812 = vmatpush2.bf16.msra.mxu0 0
        %1813 = vmatprep.subr.bf16.mxu0 0
        %1814 = vmatpush2.bf16.msra.mxu0 0
        %1815 = vmatprep.subr.bf16.mxu0 0
        %1816 = vmatpush2.bf16.msra.mxu0 0
        %1817 = vmatprep.subr.bf16.mxu0 0
        %1818 = vmatpush2.bf16.msra.mxu0 0
        %1819 = vmatprep.subr.bf16.mxu0 0
        %1820 = vmatpush2.bf16.msra.mxu0 0
        %1821 = vmatprep.subr.bf16.mxu0 0
        %1822 = vmatpush2.bf16.msra.mxu0 0
        %1823 = vmatprep.subr.bf16.mxu0 0
        %1824 = vmatpush2.bf16.msra.mxu0 0
        %1825 = vmatprep.mubr.bf16.mxu0 0
        %1826 = vmatmul.mubr.bf16.gmra.mxu0 %v1791
        %v1827 = vpop.f32.mrf.mxu0
        %v1828 = vadd.f32 1e-05, %v1827
        %v1829 = vpop.f32.mrf.mxu0
        %v1830 = vpop.f32.mrf.mxu0
        %v1831 = vadd.f32 1e-05, %v1830
        %v1832 = vpop.f32.mrf.mxu0
        %1833 = vdwg.mxu0
        %v1834 = vrsqrt.pop %v1828
        %v1835 = vrsqrt.pop %v1831
        %v1836 = vmul.f32 %v1740, %v1834
        %v1837 = vmul.f32 %v1741, %v1835
        %v1839 = vlaneseq
        %v1840 = vshrl.u32 %v1839, 7
        %v1841 = vsub.s32 0, %v1840
        %v1842 = vrot.slane %v1648, %v1841
        %v1844 = vmul.f32 %v1836, %v1842
        %v1845 = vmul.f32 %v1837, %v1842
        %v1847 = vlaneseq
        %v1848 = vshrl.u32 %v1847, 7
        %v1849 = vsub.s32 0, %v1848
        %v1850 = vrot.slane %v1649, %v1849
        %v1852 = vadd.f32 %v1844, %v1850
        %v1853 = vadd.f32 %v1845, %v1850
        %v1854 = vld [vmem:[#allocation10 + $0x1e] sm:$0x1]
        %v1855 = vld [vmem:[#allocation10 + $0x1f] sm:$0x1]
        %v1856 = vpack.c.bf16 %v1178, %v1178
        %v1858 = vsel %vm621, %v1856, 0
        %1860 = vmatprep.subr.bf16.mxu0 0
        %1861 = vmatpush1.bf16.msra.mxu0 0
        %1862 = vmatprep.subr.bf16.mxu0 0
        %1863 = vmatpush1.bf16.msra.mxu0 0
        %1864 = vmatprep.subr.bf16.mxu0 0
        %1865 = vmatpush1.bf16.msra.mxu0 0
        %1866 = vmatprep.subr.bf16.mxu0 0
        %1867 = vmatpush1.bf16.msra.mxu0 0
        %1868 = vmatprep.subr.bf16.mxu0 0
        %1869 = vmatpush1.bf16.msra.mxu0 0
        %1870 = vmatprep.subr.bf16.mxu0 0
        %1871 = vmatpush1.bf16.msra.mxu0 0
        %1872 = vmatprep.subr.bf16.mxu0 0
        %1873 = vmatpush1.bf16.msra.mxu0 %v1239
        %1874 = vmatprep.subr.bf16.mxu0 0
        %1875 = vmatpush1.bf16.msra.mxu0 %v1238
        %1876 = vmatprep.subr.bf16.mxu0 0
        %1877 = vmatpush2.bf16.msra.mxu0 0
        %1878 = vmatprep.subr.bf16.mxu0 0
        %1879 = vmatpush2.bf16.msra.mxu0 0
        %1880 = vmatprep.subr.bf16.mxu0 0
        %1881 = vmatpush2.bf16.msra.mxu0 0
        %1882 = vmatprep.subr.bf16.mxu0 0
        %1883 = vmatpush2.bf16.msra.mxu0 0
        %1884 = vmatprep.subr.bf16.mxu0 0
        %1885 = vmatpush2.bf16.msra.mxu0 0
        %1886 = vmatprep.subr.bf16.mxu0 0
        %1887 = vmatpush2.bf16.msra.mxu0 0
        %1888 = vmatprep.subr.bf16.mxu0 0
        %1889 = vmatpush2.bf16.msra.mxu0 0
        %1890 = vmatprep.subr.bf16.mxu0 0
        %1891 = vmatpush2.bf16.msra.mxu0 0
        %1892 = vmatprep.mubr.bf16.mxu0 0
        %1893 = vmatmul.mubr.bf16.gmra.mxu0 %v1858
        %v1894 = vpop.f32.mrf.mxu0
        %v1895 = vadd.f32 0.0, %v1894
        %v1896 = vpop.f32.mrf.mxu0
        %v1897 = vpop.f32.mrf.mxu0
        %v1898 = vpop.f32.mrf.mxu0
        %1899 = vdwg.mxu0
        %v1900 = vpack.c.bf16 %v1895, %v1895
        %v1902 = vsel %vm1287, %v1900, 0
        %1904 = vmatprep.subr.bf16.mxu0 0
        %1905 = vmatpush1.bf16.msra.mxu0 0
        %1906 = vmatprep.subr.bf16.mxu0 0
        %1907 = vmatpush1.bf16.msra.mxu0 0
        %1908 = vmatprep.subr.bf16.mxu0 0
        %1909 = vmatpush1.bf16.msra.mxu0 0
        %1910 = vmatprep.subr.bf16.mxu0 0
        %1911 = vmatpush1.bf16.msra.mxu0 0
        %1912 = vmatprep.subr.bf16.mxu0 0
        %1913 = vmatpush1.bf16.msra.mxu0 0
        %1914 = vmatprep.subr.bf16.mxu0 0
        %1915 = vmatpush1.bf16.msra.mxu0 0
        %1916 = vmatprep.subr.bf16.mxu0 0
        %1917 = vmatpush1.bf16.msra.mxu0 0
        %1918 = vmatprep.subr.bf16.mxu0 0
        %1919 = vmatpush1.bf16.msra.mxu0 %v1293
        %1920 = vmatprep.subr.bf16.mxu0 0
        %1921 = vmatpush2.bf16.msra.mxu0 0
        %1922 = vmatprep.subr.bf16.mxu0 0
        %1923 = vmatpush2.bf16.msra.mxu0 0
        %1924 = vmatprep.subr.bf16.mxu0 0
        %1925 = vmatpush2.bf16.msra.mxu0 0
        %1926 = vmatprep.subr.bf16.mxu0 0
        %1927 = vmatpush2.bf16.msra.mxu0 0
        %1928 = vmatprep.subr.bf16.mxu0 0
        %1929 = vmatpush2.bf16.msra.mxu0 0
        %1930 = vmatprep.subr.bf16.mxu0 0
        %1931 = vmatpush2.bf16.msra.mxu0 0
        %1932 = vmatprep.subr.bf16.mxu0 0
        %1933 = vmatpush2.bf16.msra.mxu0 0
        %1934 = vmatprep.subr.bf16.mxu0 0
        %1935 = vmatpush2.bf16.msra.mxu0 0
        %1936 = vmatprep.mubr.bf16.mxu0 0
        %1937 = vmatmul.mubr.bf16.gmra.mxu0 %v1902
        %v1938 = vpop.f32.mrf.mxu0
        %v1939 = vadd.f32 0.0, %v1938
        %v1940 = vpop.f32.mrf.mxu0
        %v1941 = vpop.f32.mrf.mxu0
        %v1942 = vpop.f32.mrf.mxu0
        %1943 = vdwg.mxu0
        %v1944 = vsub.f32 %v1178, %v1939
        %v1945 = vmul.f32 %v1944, %v1944
        %v1946 = vpack.c.bf16 %v1945, %v1945
        %v1948 = vsel %vm621, %v1946, 0
        %1950 = vmatprep.subr.bf16.mxu0 0
        %1951 = vmatpush1.bf16.msra.mxu0 0
        %1952 = vmatprep.subr.bf16.mxu0 0
        %1953 = vmatpush1.bf16.msra.mxu0 0
        %1954 = vmatprep.subr.bf16.mxu0 0
        %1955 = vmatpush1.bf16.msra.mxu0 0
        %1956 = vmatprep.subr.bf16.mxu0 0
        %1957 = vmatpush1.bf16.msra.mxu0 0
        %1958 = vmatprep.subr.bf16.mxu0 0
        %1959 = vmatpush1.bf16.msra.mxu0 0
        %1960 = vmatprep.subr.bf16.mxu0 0
        %1961 = vmatpush1.bf16.msra.mxu0 0
        %1962 = vmatprep.subr.bf16.mxu0 0
        %1963 = vmatpush1.bf16.msra.mxu0 %v1239
        %1964 = vmatprep.subr.bf16.mxu0 0
        %1965 = vmatpush1.bf16.msra.mxu0 %v1238
        %1966 = vmatprep.subr.bf16.mxu0 0
        %1967 = vmatpush2.bf16.msra.mxu0 0
        %1968 = vmatprep.subr.bf16.mxu0 0
        %1969 = vmatpush2.bf16.msra.mxu0 0
        %1970 = vmatprep.subr.bf16.mxu0 0
        %1971 = vmatpush2.bf16.msra.mxu0 0
        %1972 = vmatprep.subr.bf16.mxu0 0
        %1973 = vmatpush2.bf16.msra.mxu0 0
        %1974 = vmatprep.subr.bf16.mxu0 0
        %1975 = vmatpush2.bf16.msra.mxu0 0
        %1976 = vmatprep.subr.bf16.mxu0 0
        %1977 = vmatpush2.bf16.msra.mxu0 0
        %1978 = vmatprep.subr.bf16.mxu0 0
        %1979 = vmatpush2.bf16.msra.mxu0 0
        %1980 = vmatprep.subr.bf16.mxu0 0
        %1981 = vmatpush2.bf16.msra.mxu0 0
        %1982 = vmatprep.mubr.bf16.mxu0 0
        %1983 = vmatmul.mubr.bf16.gmra.mxu0 %v1948
        %v1984 = vpop.f32.mrf.mxu0
        %v1985 = vadd.f32 0.0, %v1984
        %v1986 = vpop.f32.mrf.mxu0
        %v1987 = vpop.f32.mrf.mxu0
        %v1988 = vpop.f32.mrf.mxu0
        %1989 = vdwg.mxu0
        %v1990 = vpack.c.bf16 %v1985, %v1985
        %v1992 = vsel %vm1287, %v1990, 0
        %1994 = vmatprep.subr.bf16.mxu0 0
        %1995 = vmatpush1.bf16.msra.mxu0 0
        %1996 = vmatprep.subr.bf16.mxu0 0
        %1997 = vmatpush1.bf16.msra.mxu0 0
        %1998 = vmatprep.subr.bf16.mxu0 0
        %1999 = vmatpush1.bf16.msra.mxu0 0
        %2000 = vmatprep.subr.bf16.mxu0 0
        %2001 = vmatpush1.bf16.msra.mxu0 0
        %2002 = vmatprep.subr.bf16.mxu0 0
        %2003 = vmatpush1.bf16.msra.mxu0 0
        %2004 = vmatprep.subr.bf16.mxu0 0
        %2005 = vmatpush1.bf16.msra.mxu0 0
        %2006 = vmatprep.subr.bf16.mxu0 0
        %2007 = vmatpush1.bf16.msra.mxu0 0
        %2008 = vmatprep.subr.bf16.mxu0 0
        %2009 = vmatpush1.bf16.msra.mxu0 %v1293
        %2010 = vmatprep.subr.bf16.mxu0 0
        %2011 = vmatpush2.bf16.msra.mxu0 0
        %2012 = vmatprep.subr.bf16.mxu0 0
        %2013 = vmatpush2.bf16.msra.mxu0 0
        %2014 = vmatprep.subr.bf16.mxu0 0
        %2015 = vmatpush2.bf16.msra.mxu0 0
        %2016 = vmatprep.subr.bf16.mxu0 0
        %2017 = vmatpush2.bf16.msra.mxu0 0
        %2018 = vmatprep.subr.bf16.mxu0 0
        %2019 = vmatpush2.bf16.msra.mxu0 0
        %2020 = vmatprep.subr.bf16.mxu0 0
        %2021 = vmatpush2.bf16.msra.mxu0 0
        %2022 = vmatprep.subr.bf16.mxu0 0
        %2023 = vmatpush2.bf16.msra.mxu0 0
        %2024 = vmatprep.subr.bf16.mxu0 0
        %2025 = vmatpush2.bf16.msra.mxu0 0
        %2026 = vmatprep.mubr.bf16.mxu0 0
        %2027 = vmatmul.mubr.bf16.gmra.mxu0 %v1992
        %v2028 = vpop.f32.mrf.mxu0
        %v2029 = vadd.f32 1e-05, %v2028
        %v2030 = vpop.f32.mrf.mxu0
        %v2031 = vpop.f32.mrf.mxu0
        %v2032 = vpop.f32.mrf.mxu0
        %2033 = vdwg.mxu0
        %v2034 = vrsqrt.pop %v2029
        %v2035 = vmul.f32 %v1944, %v2034
        %v2037 = vlaneseq
        %v2038 = vshrl.u32 %v2037, 7
        %v2039 = vsub.s32 0, %v2038
        %v2040 = vrot.slane %v1854, %v2039
        %v2042 = vmul.f32 %v2035, %v2040
        %v2044 = vlaneseq
        %v2045 = vshrl.u32 %v2044, 7
        %v2046 = vsub.s32 0, %v2045
        %v2047 = vrot.slane %v1855, %v2046
        %v2049 = vadd.f32 %v2042, %v2047
        %v2050 = vpack.c.bf16 %v1853, %v1852
        %v2051 = vpack.c.bf16 %v2049, %v2049
        %v2052 = vpack.c.bf16 %v1078, %v1075
        %v2053 = vpack.c.bf16 %v1217, %v1217
        %vm2054 = vcmask 130048
        %v2056 = vsel %vm2054, %v1646, 0
        %v2059 = vsel %vm2054, %v1647, 0
        %v2062 = vsel %vm2054, %v2050, 0
        %v2065 = vsel %vm2054, %v2051, 0
        %2067 = vmatprep.subr.bf16.mxu0 0
        %2068 = vmatpush1.bf16.xpose.msra.mxu0 0
        %2069 = vmatprep.subr.bf16.mxu0 0
        %2070 = vmatpush1.bf16.xpose.msra.mxu0 0
        %2071 = vmatprep.subr.bf16.mxu0 0
        %2072 = vmatpush1.bf16.xpose.msra.mxu0 0
        %2073 = vmatprep.subr.bf16.mxu0 0
        %2074 = vmatpush1.bf16.xpose.msra.mxu0 0
        %2075 = vmatprep.subr.bf16.mxu0 0
        %2076 = vmatpush1.bf16.xpose.msra.mxu0 0
        %2077 = vmatprep.subr.bf16.mxu0 0
        %2078 = vmatpush1.bf16.xpose.msra.mxu0 0
        %2079 = vmatprep.subr.bf16.mxu0 0
        %2080 = vmatpush1.bf16.xpose.msra.mxu0 %v2065
        %2081 = vmatprep.subr.bf16.mxu0 0
        %2082 = vmatpush1.bf16.xpose.msra.mxu0 %v2062
        %2083 = vmatprep.subr.bf16.mxu0 0
        %2084 = vmatpush2.bf16.xpose.msra.mxu0 0
        %2085 = vmatprep.subr.bf16.mxu0 0
        %2086 = vmatpush2.bf16.xpose.msra.mxu0 0
        %2087 = vmatprep.subr.bf16.mxu0 0
        %2088 = vmatpush2.bf16.xpose.msra.mxu0 0
        %2089 = vmatprep.subr.bf16.mxu0 0
        %2090 = vmatpush2.bf16.xpose.msra.mxu0 0
        %2091 = vmatprep.subr.bf16.mxu0 0
        %2092 = vmatpush2.bf16.xpose.msra.mxu0 0
        %2093 = vmatprep.subr.bf16.mxu0 0
        %2094 = vmatpush2.bf16.xpose.msra.mxu0 0
        %2095 = vmatprep.subr.bf16.mxu0 0
        %2096 = vmatpush2.bf16.xpose.msra.mxu0 0
        %2097 = vmatprep.subr.bf16.mxu0 0
        %2098 = vmatpush2.bf16.xpose.msra.mxu0 0
        %2099 = vmatprep.mubr.bf16.mxu0 0
        %2100 = vmatmul.mubr.bf16.gmra.mxu0 %v2056
        %v2101 = vpop.f32.mrf.mxu0
        %v2102 = vadd.f32 0.0, %v2101
        %v2103 = vpop.f32.mrf.mxu0
        %v2104 = vpop.f32.mrf.mxu0
        %v2105 = vadd.f32 0.0, %v2104
        %v2106 = vpop.f32.mrf.mxu0
        %2107 = vmatprep.mubr.bf16.mxu0 0
        %2108 = vmatmul.mubr.bf16.gmra.mxu0 %v2059
        %v2109 = vpop.f32.mrf.mxu0
        %v2110 = vadd.f32 0.0, %v2109
        %v2111 = vpop.f32.mrf.mxu0
        %v2112 = vpop.f32.mrf.mxu0
        %v2113 = vpop.f32.mrf.mxu0
        %2114 = vdwg.mxu0
        %v2115 = vmul.f32 %v2102, 0.25
        %v2116 = vmul.f32 %v2105, 0.25
        %v2117 = vmul.f32 %v2110, 0.25
        %vm2118 = vcmask 195584
        %v2119 = vsel %vm2118, %v2115, -inf
        %2120 = vmax.xlane.f32.xlu0 %v2119
        %v2121 = vpop.xlane.xlu0 %2120
        %v2122 = vsel %vm2118, %v2116, -inf
        %2123 = vmax.xlane.f32.xlu0 %v2122
        %v2124 = vpop.xlane.xlu0 %2123
        %v2125 = vsel %vm2118, %v2117, -inf
        %2126 = vmax.xlane.f32.xlu0 %v2125
        %v2127 = vpop.xlane.xlu0 %2126
        %v2128 = vsub.f32 %v2115, %v2121
        %v2129 = vsub.f32 %v2116, %v2124
        %v2130 = vsub.f32 %v2117, %v2127
        %v2131 = vmul.f32 %v2128, 1.442695
        %v2132 = vpow.pop %v2131
        %v2133 = vmul.f32 %v2129, 1.442695
        %v2134 = vpow.pop %v2133
        %v2135 = vmul.f32 %v2130, 1.442695
        %v2136 = vpow.pop %v2135
        %v2137 = vsel %vm2118, %v2132, 0.0
        %2138 = vadd.xlane.f32.xlu0 %v2137
        %v2139 = vpop.xlane.xlu0 %2138
        %v2140 = vsel %vm2118, %v2134, 0.0
        %2141 = vadd.xlane.f32.xlu0 %v2140
        %v2142 = vpop.xlane.xlu0 %2141
        %v2143 = vsel %vm2118, %v2136, 0.0
        %2144 = vadd.xlane.f32.xlu0 %v2143
        %v2145 = vpop.xlane.xlu0 %2144
        %v2146 = vrcp.pop %v2139
        %v2147 = vrcp.pop %v2142
        %v2148 = vrcp.pop %v2145
        %v2149 = vmul.f32 %v2132, %v2146
        %v2150 = vmul.f32 %v2134, %v2147
        %v2151 = vmul.f32 %v2136, %v2148
        %v2152 = vpack.c.bf16 %v2150, %v2149
        %v2153 = vpack.c.bf16 %v2151, %v2151
        %v2155 = vsel %vm2118, %v2152, 0
        %v2158 = vsel %vm2118, %v2153, 0
        %vm2160 = vcmask 1043456
        %v2162 = vsel %vm2160, %v2053, 0
        %2164 = vmatprep.subr.bf16.mxu0 0
        %2165 = vmatpush1.bf16.msra.mxu0 0
        %2166 = vmatprep.subr.bf16.mxu0 0
        %2167 = vmatpush1.bf16.msra.mxu0 0
        %2168 = vmatprep.subr.bf16.mxu0 0
        %2169 = vmatpush1.bf16.msra.mxu0 0
        %2170 = vmatprep.subr.bf16.mxu0 0
        %2171 = vmatpush1.bf16.msra.mxu0 0
        %2172 = vmatprep.subr.bf16.mxu0 0
        %2173 = vmatpush1.bf16.msra.mxu0 0
        %2174 = vmatprep.subr.bf16.mxu0 0
        %2175 = vmatpush1.bf16.msra.mxu0 0
        %2176 = vmatprep.subr.bf16.mxu0 0
        %2177 = vmatpush1.bf16.msra.mxu0 %v2162
        %2178 = vmatprep.subr.bf16.mxu0 0
        %2179 = vmatpush1.bf16.msra.mxu0 %v2052
        %2180 = vmatprep.subr.bf16.mxu0 0
        %2181 = vmatpush2.bf16.msra.mxu0 0
        %2182 = vmatprep.subr.bf16.mxu0 0
        %2183 = vmatpush2.bf16.msra.mxu0 0
        %2184 = vmatprep.subr.bf16.mxu0 0
        %2185 = vmatpush2.bf16.msra.mxu0 0
        %2186 = vmatprep.subr.bf16.mxu0 0
        %2187 = vmatpush2.bf16.msra.mxu0 0
        %2188 = vmatprep.subr.bf16.mxu0 0
        %2189 = vmatpush2.bf16.msra.mxu0 0
        %2190 = vmatprep.subr.bf16.mxu0 0
        %2191 = vmatpush2.bf16.msra.mxu0 0
        %2192 = vmatprep.subr.bf16.mxu0 0
        %2193 = vmatpush2.bf16.msra.mxu0 0
        %2194 = vmatprep.subr.bf16.mxu0 0
        %2195 = vmatpush2.bf16.msra.mxu0 0
        %2196 = vmatprep.mubr.bf16.mxu0 0
        %2197 = vmatmul.mubr.bf16.gmra.mxu0 %v2155
        %v2198 = vpop.f32.mrf.mxu0
        %v2199 = vadd.f32 0.0, %v2198
        %v2200 = vpop.f32.mrf.mxu0
        %v2201 = vpop.f32.mrf.mxu0
        %v2202 = vadd.f32 0.0, %v2201
        %v2203 = vpop.f32.mrf.mxu0
        %2204 = vmatprep.mubr.bf16.mxu0 0
        %2205 = vmatmul.mubr.bf16.gmra.mxu0 %v2158
        %v2206 = vpop.f32.mrf.mxu0
        %v2207 = vadd.f32 0.0, %v2206
        %v2208 = vpop.f32.mrf.mxu0
        %v2209 = vpop.f32.mrf.mxu0
        %v2210 = vpop.f32.mrf.mxu0
        %2211 = vdwg.mxu0
        %v2212 = vpack.c.bf16 %v2202, %v2199
        %v2213 = vpack.c.bf16 %v2207, %v2207
        %v2214 = vld [vmem:[#allocation7 + $0x48] sm:$0xf]
        %v2215 = vld [vmem:[#allocation7 + $0xa8] sm:$0xf]
        %v2216 = vld [vmem:[#allocation7 + $0x4c] sm:$0xf]
        %v2217 = vld [vmem:[#allocation7 + $0xac] sm:$0xf]
        %2220 = vrot.lane.b32.xlu0 %v1646, 112
        %v2221 = vpop.permute.xlu0 %2220
        %2222 = vrot.lane.b32.xlu0 %v1647, 112
        %v2223 = vpop.permute.xlu0 %2222
        %2226 = vrot.lane.b32.xlu0 %v2050, 112
        %v2227 = vpop.permute.xlu0 %2226
        %2228 = vrot.lane.b32.xlu0 %v2051, 112
        %v2229 = vpop.permute.xlu0 %2228
        %v2231 = vsel %vm2054, %v2221, 0
        %v2234 = vsel %vm2054, %v2223, 0
        %v2237 = vsel %vm2054, %v2227, 0
        %v2240 = vsel %vm2054, %v2229, 0
        %2242 = vmatprep.subr.bf16.mxu0 0
        %2243 = vmatpush1.bf16.xpose.msra.mxu0 0
        %2244 = vmatprep.subr.bf16.mxu0 0
        %2245 = vmatpush1.bf16.xpose.msra.mxu0 0
        %2246 = vmatprep.subr.bf16.mxu0 0
        %2247 = vmatpush1.bf16.xpose.msra.mxu0 0
        %2248 = vmatprep.subr.bf16.mxu0 0
        %2249 = vmatpush1.bf16.xpose.msra.mxu0 0
        %2250 = vmatprep.subr.bf16.mxu0 0
        %2251 = vmatpush1.bf16.xpose.msra.mxu0 0
        %2252 = vmatprep.subr.bf16.mxu0 0
        %2253 = vmatpush1.bf16.xpose.msra.mxu0 0
        %2254 = vmatprep.subr.bf16.mxu0 0
        %2255 = vmatpush1.bf16.xpose.msra.mxu0 %v2240
        %2256 = vmatprep.subr.bf16.mxu0 0
        %2257 = vmatpush1.bf16.xpose.msra.mxu0 %v2237
        %2258 = vmatprep.subr.bf16.mxu0 0
        %2259 = vmatpush2.bf16.xpose.msra.mxu0 0
        %2260 = vmatprep.subr.bf16.mxu0 0
        %2261 = vmatpush2.bf16.xpose.msra.mxu0 0
        %2262 = vmatprep.subr.bf16.mxu0 0
        %2263 = vmatpush2.bf16.xpose.msra.mxu0 0
        %2264 = vmatprep.subr.bf16.mxu0 0
        %2265 = vmatpush2.bf16.xpose.msra.mxu0 0
        %2266 = vmatprep.subr.bf16.mxu0 0
        %2267 = vmatpush2.bf16.xpose.msra.mxu0 0
        %2268 = vmatprep.subr.bf16.mxu0 0
        %2269 = vmatpush2.bf16.xpose.msra.mxu0 0
        %2270 = vmatprep.subr.bf16.mxu0 0
        %2271 = vmatpush2.bf16.xpose.msra.mxu0 0
        %2272 = vmatprep.subr.bf16.mxu0 0
        %2273 = vmatpush2.bf16.xpose.msra.mxu0 0
        %2274 = vmatprep.mubr.bf16.mxu0 0
        %2275 = vmatmul.mubr.bf16.gmra.mxu0 %v2231
        %v2276 = vpop.f32.mrf.mxu0
        %v2277 = vadd.f32 0.0, %v2276
        %v2278 = vpop.f32.mrf.mxu0
        %v2279 = vpop.f32.mrf.mxu0
        %v2280 = vadd.f32 0.0, %v2279
        %v2281 = vpop.f32.mrf.mxu0
        %2282 = vmatprep.mubr.bf16.mxu0 0
        %2283 = vmatmul.mubr.bf16.gmra.mxu0 %v2234
        %v2284 = vpop.f32.mrf.mxu0
        %v2285 = vadd.f32 0.0, %v2284
        %v2286 = vpop.f32.mrf.mxu0
        %v2287 = vpop.f32.mrf.mxu0
        %v2288 = vpop.f32.mrf.mxu0
        %2289 = vdwg.mxu0
        %v2290 = vmul.f32 %v2277, 0.25
        %v2291 = vmul.f32 %v2280, 0.25
        %v2292 = vmul.f32 %v2285, 0.25
        %v2293 = vsel %vm2118, %v2290, -inf
        %2294 = vmax.xlane.f32.xlu0 %v2293
        %v2295 = vpop.xlane.xlu0 %2294
        %v2296 = vsel %vm2118, %v2291, -inf
        %2297 = vmax.xlane.f32.xlu0 %v2296
        %v2298 = vpop.xlane.xlu0 %2297
        %v2299 = vsel %vm2118, %v2292, -inf
        %2300 = vmax.xlane.f32.xlu0 %v2299
        %v2301 = vpop.xlane.xlu0 %2300
        %v2302 = vsub.f32 %v2290, %v2295
        %v2303 = vsub.f32 %v2291, %v2298
        %v2304 = vsub.f32 %v2292, %v2301
        %v2305 = vmul.f32 %v2302, 1.442695
        %v2306 = vpow.pop %v2305
        %v2307 = vmul.f32 %v2303, 1.442695
        %v2308 = vpow.pop %v2307
        %v2309 = vmul.f32 %v2304, 1.442695
        %v2310 = vpow.pop %v2309
        %v2311 = vsel %vm2118, %v2306, 0.0
        %2312 = vadd.xlane.f32.xlu0 %v2311
        %v2313 = vpop.xlane.xlu0 %2312
        %v2314 = vsel %vm2118, %v2308, 0.0
        %2315 = vadd.xlane.f32.xlu0 %v2314
        %v2316 = vpop.xlane.xlu0 %2315
        %v2317 = vsel %vm2118, %v2310, 0.0
        %2318 = vadd.xlane.f32.xlu0 %v2317
        %v2319 = vpop.xlane.xlu0 %2318
        %v2320 = vrcp.pop %v2313
        %v2321 = vrcp.pop %v2316
        %v2322 = vrcp.pop %v2319
        %v2323 = vmul.f32 %v2306, %v2320
        %v2324 = vmul.f32 %v2308, %v2321
        %v2325 = vmul.f32 %v2310, %v2322
        %v2326 = vpack.c.bf16 %v2324, %v2323
        %v2327 = vpack.c.bf16 %v2325, %v2325
        %2330 = vrot.lane.b32.xlu0 %v2052, 112
        %v2331 = vpop.permute.xlu0 %2330
        %2332 = vrot.lane.b32.xlu0 %v2053, 112
        %v2333 = vpop.permute.xlu0 %2332
        %v2336 = vsel %vm2118, %v2326, 0
        %v2339 = vsel %vm2118, %v2327, 0
        %v2342 = vsel %vm2160, %v2333, 0
        %2344 = vmatprep.subr.bf16.mxu0 0
        %2345 = vmatpush1.bf16.msra.mxu0 0
        %2346 = vmatprep.subr.bf16.mxu0 0
        %2347 = vmatpush1.bf16.msra.mxu0 0
        %2348 = vmatprep.subr.bf16.mxu0 0
        %2349 = vmatpush1.bf16.msra.mxu0 0
        %2350 = vmatprep.subr.bf16.mxu0 0
        %2351 = vmatpush1.bf16.msra.mxu0 0
        %2352 = vmatprep.subr.bf16.mxu0 0
        %2353 = vmatpush1.bf16.msra.mxu0 0
        %2354 = vmatprep.subr.bf16.mxu0 0
        %2355 = vmatpush1.bf16.msra.mxu0 0
        %2356 = vmatprep.subr.bf16.mxu0 0
        %2357 = vmatpush1.bf16.msra.mxu0 %v2342
        %2358 = vmatprep.subr.bf16.mxu0 0
        %2359 = vmatpush1.bf16.msra.mxu0 %v2331
        %2360 = vmatprep.subr.bf16.mxu0 0
        %2361 = vmatpush2.bf16.msra.mxu0 0
        %2362 = vmatprep.subr.bf16.mxu0 0
        %2363 = vmatpush2.bf16.msra.mxu0 0
        %2364 = vmatprep.subr.bf16.mxu0 0
        %2365 = vmatpush2.bf16.msra.mxu0 0
        %2366 = vmatprep.subr.bf16.mxu0 0
        %2367 = vmatpush2.bf16.msra.mxu0 0
        %2368 = vmatprep.subr.bf16.mxu0 0
        %2369 = vmatpush2.bf16.msra.mxu0 0
        %2370 = vmatprep.subr.bf16.mxu0 0
        %2371 = vmatpush2.bf16.msra.mxu0 0
        %2372 = vmatprep.subr.bf16.mxu0 0
        %2373 = vmatpush2.bf16.msra.mxu0 0
        %2374 = vmatprep.subr.bf16.mxu0 0
        %2375 = vmatpush2.bf16.msra.mxu0 0
        %2376 = vmatprep.mubr.bf16.mxu0 0
        %2377 = vmatmul.mubr.bf16.gmra.mxu0 %v2336
        %v2378 = vpop.f32.mrf.mxu0
        %v2379 = vadd.f32 0.0, %v2378
        %v2380 = vpop.f32.mrf.mxu0
        %v2381 = vpop.f32.mrf.mxu0
        %v2382 = vadd.f32 0.0, %v2381
        %v2383 = vpop.f32.mrf.mxu0
        %2384 = vmatprep.mubr.bf16.mxu0 0
        %2385 = vmatmul.mubr.bf16.gmra.mxu0 %v2339
        %v2386 = vpop.f32.mrf.mxu0
        %v2387 = vadd.f32 0.0, %v2386
        %v2388 = vpop.f32.mrf.mxu0
        %v2389 = vpop.f32.mrf.mxu0
        %v2390 = vpop.f32.mrf.mxu0
        %2391 = vdwg.mxu0
        %v2392 = vpack.c.bf16 %v2382, %v2379
        %v2393 = vpack.c.bf16 %v2387, %v2387
        %v2394 = vld [vmem:[#allocation7 + $0x108] sm:$0xf]
        %v2395 = vld [vmem:[#allocation7 + $0x168] sm:$0xf]
        %v2398 = vunpack.c.l.b16 %v2394
        %v2399 = vunpack.c.l.b16 %v2395
        %v2400 = vpack.c.b16 %v2399, %v2398
        %v2403 = vsel %vm2054, %v2392, 0
        %2405 = vmatprep.subr.bf16.mxu0 0
        %2406 = vmatpush1.bf16.msra.mxu0 0
        %2407 = vmatprep.subr.bf16.mxu0 0
        %2408 = vmatpush1.bf16.msra.mxu0 0
        %2409 = vmatprep.subr.bf16.mxu0 0
        %2410 = vmatpush1.bf16.msra.mxu0 0
        %2411 = vmatprep.subr.bf16.mxu0 0
        %2412 = vmatpush1.bf16.msra.mxu0 0
        %2413 = vmatprep.subr.bf16.mxu0 0
        %2414 = vmatpush1.bf16.msra.mxu0 0
        %2415 = vmatprep.subr.bf16.mxu0 0
        %2416 = vmatpush1.bf16.msra.mxu0 0
        %2417 = vmatprep.subr.bf16.mxu0 0
        %2418 = vmatpush1.bf16.msra.mxu0 0
        %2419 = vmatprep.subr.bf16.mxu0 0
        %2420 = vmatpush1.bf16.msra.mxu0 %v2400
        %2421 = vmatprep.subr.bf16.mxu0 0
        %2422 = vmatpush2.bf16.msra.mxu0 0
        %2423 = vmatprep.subr.bf16.mxu0 0
        %2424 = vmatpush2.bf16.msra.mxu0 0
        %2425 = vmatprep.subr.bf16.mxu0 0
        %2426 = vmatpush2.bf16.msra.mxu0 0
        %2427 = vmatprep.subr.bf16.mxu0 0
        %2428 = vmatpush2.bf16.msra.mxu0 0
        %2429 = vmatprep.subr.bf16.mxu0 0
        %2430 = vmatpush2.bf16.msra.mxu0 0
        %2431 = vmatprep.subr.bf16.mxu0 0
        %2432 = vmatpush2.bf16.msra.mxu0 0
        %2433 = vmatprep.subr.bf16.mxu0 0
        %2434 = vmatpush2.bf16.msra.mxu0 0
        %2435 = vmatprep.subr.bf16.mxu0 0
        %2436 = vmatpush2.bf16.msra.mxu0 0
        %2437 = vmatprep.mubr.bf16.mxu0 0
        %2438 = vmatmul.mubr.bf16.gmra.mxu0 %v2403
        %v2439 = vpop.f32.mrf.mxu0
        %v2440 = vadd.f32 0.0, %v2439
        %v2441 = vpop.f32.mrf.mxu0
        %v2442 = vpop.f32.mrf.mxu0
        %v2443 = vadd.f32 0.0, %v2442
        %v2444 = vpop.f32.mrf.mxu0
        %2445 = vdwg.mxu0
        %v2448 = vunpack.c.l.b16 %v2214
        %v2449 = vunpack.c.l.b16 %v2215
        %v2450 = vpack.c.b16 %v2449, %v2448
        %v2453 = vsel %vm2054, %v2212, 0
        %2455 = vmatprep.subr.bf16.mxu0 0
        %2456 = vmatpush1.bf16.msra.mxu0 0
        %2457 = vmatprep.subr.bf16.mxu0 0
        %2458 = vmatpush1.bf16.msra.mxu0 0
        %2459 = vmatprep.subr.bf16.mxu0 0
        %2460 = vmatpush1.bf16.msra.mxu0 0
        %2461 = vmatprep.subr.bf16.mxu0 0
        %2462 = vmatpush1.bf16.msra.mxu0 0
        %2463 = vmatprep.subr.bf16.mxu0 0
        %2464 = vmatpush1.bf16.msra.mxu0 0
        %2465 = vmatprep.subr.bf16.mxu0 0
        %2466 = vmatpush1.bf16.msra.mxu0 0
        %2467 = vmatprep.subr.bf16.mxu0 0
        %2468 = vmatpush1.bf16.msra.mxu0 0
        %2469 = vmatprep.subr.bf16.mxu0 0
        %2470 = vmatpush1.bf16.msra.mxu0 %v2450
        %2471 = vmatprep.subr.bf16.mxu0 0
        %2472 = vmatpush2.bf16.msra.mxu0 0
        %2473 = vmatprep.subr.bf16.mxu0 0
        %2474 = vmatpush2.bf16.msra.mxu0 0
        %2475 = vmatprep.subr.bf16.mxu0 0
        %2476 = vmatpush2.bf16.msra.mxu0 0
        %2477 = vmatprep.subr.bf16.mxu0 0
        %2478 = vmatpush2.bf16.msra.mxu0 0
        %2479 = vmatprep.subr.bf16.mxu0 0
        %2480 = vmatpush2.bf16.msra.mxu0 0
        %2481 = vmatprep.subr.bf16.mxu0 0
        %2482 = vmatpush2.bf16.msra.mxu0 0
        %2483 = vmatprep.subr.bf16.mxu0 0
        %2484 = vmatpush2.bf16.msra.mxu0 0
        %2485 = vmatprep.subr.bf16.mxu0 0
        %2486 = vmatpush2.bf16.msra.mxu0 0
        %2487 = vmatprep.mubr.bf16.mxu0 0
        %2488 = vmatmul.mubr.bf16.gmra.mxu0 %v2453
        %v2489 = vpop.f32.mrf.mxu0
        %v2490 = vadd.f32 %v2440, %v2489
        %v2491 = vpop.f32.mrf.mxu0
        %v2492 = vpop.f32.mrf.mxu0
        %v2493 = vadd.f32 %v2443, %v2492
        %v2494 = vpop.f32.mrf.mxu0
        %2495 = vdwg.mxu0
        %v2496 = vld [vmem:[#allocation7 + $0x10c] sm:$0xf]
        %v2497 = vld [vmem:[#allocation7 + $0x16c] sm:$0xf]
        %v2500 = vunpack.c.l.b16 %v2496
        %v2501 = vunpack.c.l.b16 %v2497
        %v2502 = vpack.c.b16 %v2501, %v2500
        %v2505 = vsel %vm2054, %v2393, 0
        %2507 = vmatprep.subr.bf16.mxu0 0
        %2508 = vmatpush1.bf16.msra.mxu0 0
        %2509 = vmatprep.subr.bf16.mxu0 0
        %2510 = vmatpush1.bf16.msra.mxu0 0
        %2511 = vmatprep.subr.bf16.mxu0 0
        %2512 = vmatpush1.bf16.msra.mxu0 0
        %2513 = vmatprep.subr.bf16.mxu0 0
        %2514 = vmatpush1.bf16.msra.mxu0 0
        %2515 = vmatprep.subr.bf16.mxu0 0
        %2516 = vmatpush1.bf16.msra.mxu0 0
        %2517 = vmatprep.subr.bf16.mxu0 0
        %2518 = vmatpush1.bf16.msra.mxu0 0
        %2519 = vmatprep.subr.bf16.mxu0 0
        %2520 = vmatpush1.bf16.msra.mxu0 0
        %2521 = vmatprep.subr.bf16.mxu0 0
        %2522 = vmatpush1.bf16.msra.mxu0 %v2502
        %2523 = vmatprep.subr.bf16.mxu0 0
        %2524 = vmatpush2.bf16.msra.mxu0 0
        %2525 = vmatprep.subr.bf16.mxu0 0
        %2526 = vmatpush2.bf16.msra.mxu0 0
        %2527 = vmatprep.subr.bf16.mxu0 0
        %2528 = vmatpush2.bf16.msra.mxu0 0
        %2529 = vmatprep.subr.bf16.mxu0 0
        %2530 = vmatpush2.bf16.msra.mxu0 0
        %2531 = vmatprep.subr.bf16.mxu0 0
        %2532 = vmatpush2.bf16.msra.mxu0 0
        %2533 = vmatprep.subr.bf16.mxu0 0
        %2534 = vmatpush2.bf16.msra.mxu0 0
        %2535 = vmatprep.subr.bf16.mxu0 0
        %2536 = vmatpush2.bf16.msra.mxu0 0
        %2537 = vmatprep.subr.bf16.mxu0 0
        %2538 = vmatpush2.bf16.msra.mxu0 0
        %2539 = vmatprep.mubr.bf16.mxu0 0
        %2540 = vmatmul.mubr.bf16.gmra.mxu0 %v2505
        %v2541 = vpop.f32.mrf.mxu0
        %v2542 = vadd.f32 0.0, %v2541
        %v2543 = vpop.f32.mrf.mxu0
        %v2544 = vpop.f32.mrf.mxu0
        %v2545 = vpop.f32.mrf.mxu0
        %2546 = vdwg.mxu0
        %v2549 = vunpack.c.l.b16 %v2216
        %v2550 = vunpack.c.l.b16 %v2217
        %v2551 = vpack.c.b16 %v2550, %v2549
        %v2554 = vsel %vm2054, %v2213, 0
        %2556 = vmatprep.subr.bf16.mxu0 0
        %2557 = vmatpush1.bf16.msra.mxu0 0
        %2558 = vmatprep.subr.bf16.mxu0 0
        %2559 = vmatpush1.bf16.msra.mxu0 0
        %2560 = vmatprep.subr.bf16.mxu0 0
        %2561 = vmatpush1.bf16.msra.mxu0 0
        %2562 = vmatprep.subr.bf16.mxu0 0
        %2563 = vmatpush1.bf16.msra.mxu0 0
        %2564 = vmatprep.subr.bf16.mxu0 0
        %2565 = vmatpush1.bf16.msra.mxu0 0
        %2566 = vmatprep.subr.bf16.mxu0 0
        %2567 = vmatpush1.bf16.msra.mxu0 0
        %2568 = vmatprep.subr.bf16.mxu0 0
        %2569 = vmatpush1.bf16.msra.mxu0 0
        %2570 = vmatprep.subr.bf16.mxu0 0
        %2571 = vmatpush1.bf16.msra.mxu0 %v2551
        %2572 = vmatprep.subr.bf16.mxu0 0
        %2573 = vmatpush2.bf16.msra.mxu0 0
        %2574 = vmatprep.subr.bf16.mxu0 0
        %2575 = vmatpush2.bf16.msra.mxu0 0
        %2576 = vmatprep.subr.bf16.mxu0 0
        %2577 = vmatpush2.bf16.msra.mxu0 0
        %2578 = vmatprep.subr.bf16.mxu0 0
        %2579 = vmatpush2.bf16.msra.mxu0 0
        %2580 = vmatprep.subr.bf16.mxu0 0
        %2581 = vmatpush2.bf16.msra.mxu0 0
        %2582 = vmatprep.subr.bf16.mxu0 0
        %2583 = vmatpush2.bf16.msra.mxu0 0
        %2584 = vmatprep.subr.bf16.mxu0 0
        %2585 = vmatpush2.bf16.msra.mxu0 0
        %2586 = vmatprep.subr.bf16.mxu0 0
        %2587 = vmatpush2.bf16.msra.mxu0 0
        %2588 = vmatprep.mubr.bf16.mxu0 0
        %2589 = vmatmul.mubr.bf16.gmra.mxu0 %v2554
        %v2590 = vpop.f32.mrf.mxu0
        %v2591 = vadd.f32 %v2542, %v2590
        %v2592 = vpop.f32.mrf.mxu0
        %v2593 = vpop.f32.mrf.mxu0
        %v2594 = vpop.f32.mrf.mxu0
        %2595 = vdwg.mxu0
        %v2596 = vld [vmem:[#allocation10 + $0x12] sm:$0x1]
        %v2598 = vlaneseq
        %v2599 = vshrl.u32 %v2598, 7
        %v2600 = vsub.s32 0, %v2599
        %v2601 = vrot.slane %v2596, %v2600
        %v2603 = vadd.f32 %v2490, %v2601
        %v2604 = vadd.f32 %v2493, %v2601
        %v2605 = vld [vmem:[#allocation10 + $0x13] sm:$0x1]
        %v2607 = vlaneseq
        %v2608 = vshrl.u32 %v2607, 7
        %v2609 = vsub.s32 0, %v2608
        %v2610 = vrot.slane %v2605, %v2609
        %v2612 = vadd.f32 %v2591, %v2610
        %v2613 = vlaneseq
        %v2614 = vshrl.u32 %v2613, 7
        %v2615 = vsub.s32 0, %v2614
        %v2616 = vrot.slane %v701, %v2615
        %v2617 = vmul.f32 %v2616, %v2603
        %v2618 = vmul.f32 %v2616, %v2604
        %v2619 = vadd.f32 %v401, %v2617
        %v2620 = vadd.f32 %v402, %v2618
        %v2621 = vsel %vm621, %v2619, 0.0
        %2622 = vadd.xlane.f32.xlu0 %v2621
        %v2623 = vpop.xlane.xlu0 %2622
        %v2624 = vsel %vm621, %v2620, 0.0
        %2625 = vadd.xlane.f32.xlu0 %v2624
        %v2626 = vpop.xlane.xlu0 %2625
        %v2627 = vmul.f32 %v2623, %v877
        %v2628 = vmul.f32 %v2626, %v877
        %v2629 = vsub.f32 %v2619, %v2627
        %v2630 = vsub.f32 %v2620, %v2628
        %v2631 = vmul.f32 %v2629, %v2629
        %v2632 = vmul.f32 %v2630, %v2630
        %v2633 = vsel %vm621, %v2631, 0.0
        %2634 = vadd.xlane.f32.xlu0 %v2633
        %v2635 = vpop.xlane.xlu0 %2634
        %v2636 = vsel %vm621, %v2632, 0.0
        %2637 = vadd.xlane.f32.xlu0 %v2636
        %v2638 = vpop.xlane.xlu0 %2637
        %v2639 = vmul.f32 %v2635, %v877
        %v2640 = vmul.f32 %v2638, %v877
        %v2641 = vadd.f32 %v2639, 1e-06
        %v2642 = vadd.f32 %v2640, 1e-06
        %v2643 = vrsqrt.pop %v2641
        %v2644 = vrsqrt.pop %v2642
        %v2645 = vmul.f32 %v2629, %v2643
        %v2646 = vmul.f32 %v2630, %v2644
        %v2647 = vadd.f32 %v742, 1.0
        %v2648 = vlaneseq
        %v2649 = vshrl.u32 %v2648, 7
        %v2650 = vsub.s32 0, %v2649
        %v2651 = vrot.slane %v2647, %v2650
        %v2652 = vmul.f32 %v2645, %v2651
        %v2653 = vmul.f32 %v2646, %v2651
        %v2654 = vlaneseq
        %v2655 = vshrl.u32 %v2654, 7
        %v2656 = vsub.s32 0, %v2655
        %v2657 = vrot.slane %v703, %v2656
        %v2658 = vadd.f32 %v2652, %v2657
        %v2659 = vadd.f32 %v2653, %v2657
        %v2660 = vpack.c.bf16 %v2659, %v2658
        %v2661 = vld [vmem:[#allocation7 + $0x50] sm:$0xf]
        %v2662 = vld [vmem:[#allocation7 + $0xb0] sm:$0xf]
        %v2663 = vld [vmem:[#allocation7 + $0x110] sm:$0xf]
        %v2664 = vld [vmem:[#allocation7 + $0x170] sm:$0xf]
        %v2665 = vld [vmem:[#allocation10 + $0x14] sm:$0x1]
        %v2667 = vlaneseq
        %v2668 = vshrl.u32 %v2667, 7
        %v2669 = vsub.s32 0, %v2668
        %v2670 = vrot.slane %v2665, %v2669
        %v2676 = vunpack.c.l.b16 %v2661
        %v2677 = vunpack.c.l.b16 %v2662
        %v2678 = vunpack.c.l.b16 %v2663
        %v2679 = vunpack.c.l.b16 %v2664
        %v2680 = vpack.c.b16 %v2677, %v2676
        %v2681 = vpack.c.b16 %v2679, %v2678
        %v2685 = vsel %vm621, %v2660, 0
        %2687 = vmatprep.subr.bf16.mxu0 0
        %2688 = vmatpush1.bf16.msra.mxu0 0
        %2689 = vmatprep.subr.bf16.mxu0 0
        %2690 = vmatpush1.bf16.msra.mxu0 0
        %2691 = vmatprep.subr.bf16.mxu0 0
        %2692 = vmatpush1.bf16.msra.mxu0 0
        %2693 = vmatprep.subr.bf16.mxu0 0
        %2694 = vmatpush1.bf16.msra.mxu0 0
        %2695 = vmatprep.subr.bf16.mxu0 0
        %2696 = vmatpush1.bf16.msra.mxu0 0
        %2697 = vmatprep.subr.bf16.mxu0 0
        %2698 = vmatpush1.bf16.msra.mxu0 0
        %2699 = vmatprep.subr.bf16.mxu0 0
        %2700 = vmatpush1.bf16.msra.mxu0 %v2681
        %2701 = vmatprep.subr.bf16.mxu0 0
        %2702 = vmatpush1.bf16.msra.mxu0 %v2680
        %2703 = vmatprep.subr.bf16.mxu0 0
        %2704 = vmatpush2.bf16.msra.mxu0 0
        %2705 = vmatprep.subr.bf16.mxu0 0
        %2706 = vmatpush2.bf16.msra.mxu0 0
        %2707 = vmatprep.subr.bf16.mxu0 0
        %2708 = vmatpush2.bf16.msra.mxu0 0
        %2709 = vmatprep.subr.bf16.mxu0 0
        %2710 = vmatpush2.bf16.msra.mxu0 0
        %2711 = vmatprep.subr.bf16.mxu0 0
        %2712 = vmatpush2.bf16.msra.mxu0 0
        %2713 = vmatprep.subr.bf16.mxu0 0
        %2714 = vmatpush2.bf16.msra.mxu0 0
        %2715 = vmatprep.subr.bf16.mxu0 0
        %2716 = vmatpush2.bf16.msra.mxu0 0
        %2717 = vmatprep.subr.bf16.mxu0 0
        %2718 = vmatpush2.bf16.msra.mxu0 0
        %2719 = vmatprep.mubr.bf16.mxu0 0
        %2720 = vmatmul.mubr.bf16.gmra.mxu0 %v2685
        %v2721 = vpop.f32.mrf.mxu0
        %v2722 = vadd.f32 %v2670, %v2721
        %v2723 = vpop.f32.mrf.mxu0
        %v2724 = vpop.f32.mrf.mxu0
        %v2725 = vadd.f32 %v2670, %v2724
        %v2726 = vpop.f32.mrf.mxu0
        %2727 = vdwg.mxu0
        %v2728 = vmul.f32 %v2722, 0.5
        %v2729 = vmul.f32 %v2725, 0.5
        %v2730 = vmul.f32 %v2722, 0.044715
        %v2731 = vmul.f32 %v2725, 0.044715
        %v2732 = vmul.f32 %v2730, %v2722
        %v2733 = vmul.f32 %v2731, %v2725
        %v2734 = vmul.f32 %v2732, %v2722
        %v2735 = vmul.f32 %v2733, %v2725
        %v2736 = vadd.f32 %v2722, %v2734
        %v2737 = vadd.f32 %v2725, %v2735
        %v2738 = vmul.f32 %v2736, 0.7978846
        %v2739 = vmul.f32 %v2737, 0.7978846
        %v2740 = vtanh.pop %v2738
        %v2741 = vtanh.pop %v2739
        %v2742 = vadd.f32 %v2740, 1.0
        %v2743 = vadd.f32 %v2741, 1.0
        %v2744 = vmul.f32 %v2728, %v2742
        %v2745 = vmul.f32 %v2729, %v2743
        %v2746 = vpack.c.bf16 %v2745, %v2744
        %v2747 = vld [vmem:[#allocation8] sm:$0xf]
        %v2748 = vld [vmem:[#allocation8 + $0x8] sm:$0xf]
        %v2749 = vld [vmem:[#allocation8 + $0x10] sm:$0xf]
        %v2750 = vld [vmem:[#allocation8 + $0x18] sm:$0xf]
        %v2751 = vld [vmem:[#allocation8 + $0x20] sm:$0xf]
        %v2752 = vld [vmem:[#allocation8 + $0x28] sm:$0xf]
        %v2753 = vld [vmem:[#allocation8 + $0x30] sm:$0xf]
        %v2754 = vld [vmem:[#allocation8 + $0x38] sm:$0xf]
        %v2755 = vld [vmem:[#allocation8 + $0x40] sm:$0xf]
        %v2756 = vld [vmem:[#allocation8 + $0x48] sm:$0xf]
        %v2757 = vld [vmem:[#allocation8 + $0x50] sm:$0xf]
        %v2758 = vld [vmem:[#allocation8 + $0x58] sm:$0xf]
        %v2759 = vld [vmem:[#allocation8 + $0x60] sm:$0xf]
        %v2760 = vld [vmem:[#allocation8 + $0x68] sm:$0xf]
        %v2761 = vld [vmem:[#allocation8 + $0x70] sm:$0xf]
        %v2762 = vld [vmem:[#allocation8 + $0x78] sm:$0xf]
        %v2763 = vld [vmem:[#allocation10 + $0x16] sm:$0x1]
        %v2765 = vlaneseq
        %v2766 = vshrl.u32 %v2765, 7
        %v2767 = vsub.s32 0, %v2766
        %v2768 = vrot.slane %v2763, %v2767
        %v2786 = vunpack.c.l.b16 %v2747
        %v2787 = vunpack.c.l.b16 %v2748
        %v2788 = vunpack.c.l.b16 %v2749
        %v2789 = vunpack.c.l.b16 %v2750
        %v2790 = vunpack.c.l.b16 %v2751
        %v2791 = vunpack.c.l.b16 %v2752
        %v2792 = vunpack.c.l.b16 %v2753
        %v2793 = vunpack.c.l.b16 %v2754
        %v2794 = vunpack.c.l.b16 %v2755
        %v2795 = vunpack.c.l.b16 %v2756
        %v2796 = vunpack.c.l.b16 %v2757
        %v2797 = vunpack.c.l.b16 %v2758
        %v2798 = vunpack.c.l.b16 %v2759
        %v2799 = vunpack.c.l.b16 %v2760
        %v2800 = vunpack.c.l.b16 %v2761
        %v2801 = vunpack.c.l.b16 %v2762
        %v2802 = vpack.c.b16 %v2787, %v2786
        %v2803 = vpack.c.b16 %v2789, %v2788
        %v2804 = vpack.c.b16 %v2791, %v2790
        %v2805 = vpack.c.b16 %v2793, %v2792
        %v2806 = vpack.c.b16 %v2795, %v2794
        %v2807 = vpack.c.b16 %v2797, %v2796
        %v2808 = vpack.c.b16 %v2799, %v2798
        %v2809 = vpack.c.b16 %v2801, %v2800
        %2818 = vmatprep.subr.bf16.mxu0 0
        %2819 = vmatpush1.bf16.msra.mxu0 %v2809
        %2820 = vmatprep.subr.bf16.mxu0 0
        %2821 = vmatpush1.bf16.msra.mxu0 %v2808
        %2822 = vmatprep.subr.bf16.mxu0 0
        %2823 = vmatpush1.bf16.msra.mxu0 %v2807
        %2824 = vmatprep.subr.bf16.mxu0 0
        %2825 = vmatpush1.bf16.msra.mxu0 %v2806
        %2826 = vmatprep.subr.bf16.mxu0 0
        %2827 = vmatpush1.bf16.msra.mxu0 %v2805
        %2828 = vmatprep.subr.bf16.mxu0 0
        %2829 = vmatpush1.bf16.msra.mxu0 %v2804
        %2830 = vmatprep.subr.bf16.mxu0 0
        %2831 = vmatpush1.bf16.msra.mxu0 %v2803
        %2832 = vmatprep.subr.bf16.mxu0 0
        %2833 = vmatpush1.bf16.msra.mxu0 %v2802
        %2834 = vmatprep.subr.bf16.mxu0 0
        %2835 = vmatpush2.bf16.msra.mxu0 0
        %2836 = vmatprep.subr.bf16.mxu0 0
        %2837 = vmatpush2.bf16.msra.mxu0 0
        %2838 = vmatprep.subr.bf16.mxu0 0
        %2839 = vmatpush2.bf16.msra.mxu0 0
        %2840 = vmatprep.subr.bf16.mxu0 0
        %2841 = vmatpush2.bf16.msra.mxu0 0
        %2842 = vmatprep.subr.bf16.mxu0 0
        %2843 = vmatpush2.bf16.msra.mxu0 0
        %2844 = vmatprep.subr.bf16.mxu0 0
        %2845 = vmatpush2.bf16.msra.mxu0 0
        %2846 = vmatprep.subr.bf16.mxu0 0
        %2847 = vmatpush2.bf16.msra.mxu0 0
        %2848 = vmatprep.subr.bf16.mxu0 0
        %2849 = vmatpush2.bf16.msra.mxu0 0
        %2850 = vmatprep.mubr.bf16.mxu0 0
        %2851 = vmatmul.mubr.bf16.gmra.mxu0 %v2746
        %v2852 = vpop.f32.mrf.mxu0
        %v2853 = vadd.f32 %v2768, %v2852
        %v2854 = vpop.f32.mrf.mxu0
        %v2855 = vpop.f32.mrf.mxu0
        %v2856 = vadd.f32 %v2768, %v2855
        %v2857 = vpop.f32.mrf.mxu0
        %2858 = vdwg.mxu0
        %v2859 = vlaneseq
        %v2860 = vshrl.u32 %v2859, 7
        %v2861 = vsub.s32 0, %v2860
        %v2862 = vrot.slane %v744, %v2861
        %v2863 = vmul.f32 %v2862, %v2853
        %v2864 = vmul.f32 %v2862, %v2856
        %v2865 = vadd.f32 %v2619, %v2863
        %v2866 = vadd.f32 %v2620, %v2864
        %2867 = vst.msk [vmem:[%s389] sm:$0xff] %vm621, %v2865
        %2868 = vst.msk [vmem:[%s389 + $0x8] sm:$0xff] %vm621, %v2866
        %v2869 = vlaneseq
        %v2870 = vshrl.u32 %v2869, 7
        %v2871 = vsub.s32 0, %v2870
        %v2872 = vrot.slane %v824, %v2871
        %v2873 = vmul.f32 %v2872, %v2612
        %v2874 = vadd.f32 %v403, %v2873
        %v2875 = vsel %vm621, %v2874, 0.0
        %2876 = vadd.xlane.f32.xlu0 %v2875
        %v2877 = vpop.xlane.xlu0 %2876
        %v2878 = vmul.f32 %v2877, %v877
        %v2879 = vsub.f32 %v2874, %v2878
        %v2880 = vmul.f32 %v2879, %v2879
        %v2881 = vsel %vm621, %v2880, 0.0
        %2882 = vadd.xlane.f32.xlu0 %v2881
        %v2883 = vpop.xlane.xlu0 %2882
        %v2884 = vmul.f32 %v2883, %v877
        %v2885 = vadd.f32 %v2884, 1e-06
        %v2886 = vrsqrt.pop %v2885
        %v2887 = vmul.f32 %v2879, %v2886
        %v2888 = vadd.f32 %v865, 1.0
        %v2889 = vlaneseq
        %v2890 = vshrl.u32 %v2889, 7
        %v2891 = vsub.s32 0, %v2890
        %v2892 = vrot.slane %v2888, %v2891
        %v2893 = vmul.f32 %v2887, %v2892
        %v2894 = vlaneseq
        %v2895 = vshrl.u32 %v2894, 7
        %v2896 = vsub.s32 0, %v2895
        %v2897 = vrot.slane %v826, %v2896
        %v2898 = vadd.f32 %v2893, %v2897
        %v2899 = vpack.c.bf16 %v2898, %v2898
        %v2900 = vld [vmem:[#allocation7 + $0x54] sm:$0xf]
        %v2901 = vld [vmem:[#allocation7 + $0xb4] sm:$0xf]
        %v2902 = vld [vmem:[#allocation7 + $0x114] sm:$0xf]
        %v2903 = vld [vmem:[#allocation7 + $0x174] sm:$0xf]
        %v2904 = vld [vmem:[#allocation10 + $0x15] sm:$0x1]
        %v2906 = vlaneseq
        %v2907 = vshrl.u32 %v2906, 7
        %v2908 = vsub.s32 0, %v2907
        %v2909 = vrot.slane %v2904, %v2908
        %v2915 = vunpack.c.l.b16 %v2900
        %v2916 = vunpack.c.l.b16 %v2901
        %v2917 = vunpack.c.l.b16 %v2902
        %v2918 = vunpack.c.l.b16 %v2903
        %v2919 = vpack.c.b16 %v2916, %v2915
        %v2920 = vpack.c.b16 %v2918, %v2917
        %v2924 = vsel %vm621, %v2899, 0
        %2926 = vmatprep.subr.bf16.mxu0 0
        %2927 = vmatpush1.bf16.msra.mxu0 0
        %2928 = vmatprep.subr.bf16.mxu0 0
        %2929 = vmatpush1.bf16.msra.mxu0 0
        %2930 = vmatprep.subr.bf16.mxu0 0
        %2931 = vmatpush1.bf16.msra.mxu0 0
        %2932 = vmatprep.subr.bf16.mxu0 0
        %2933 = vmatpush1.bf16.msra.mxu0 0
        %2934 = vmatprep.subr.bf16.mxu0 0
        %2935 = vmatpush1.bf16.msra.mxu0 0
        %2936 = vmatprep.subr.bf16.mxu0 0
        %2937 = vmatpush1.bf16.msra.mxu0 0
        %2938 = vmatprep.subr.bf16.mxu0 0
        %2939 = vmatpush1.bf16.msra.mxu0 %v2920
        %2940 = vmatprep.subr.bf16.mxu0 0
        %2941 = vmatpush1.bf16.msra.mxu0 %v2919
        %2942 = vmatprep.subr.bf16.mxu0 0
        %2943 = vmatpush2.bf16.msra.mxu0 0
        %2944 = vmatprep.subr.bf16.mxu0 0
        %2945 = vmatpush2.bf16.msra.mxu0 0
        %2946 = vmatprep.subr.bf16.mxu0 0
        %2947 = vmatpush2.bf16.msra.mxu0 0
        %2948 = vmatprep.subr.bf16.mxu0 0
        %2949 = vmatpush2.bf16.msra.mxu0 0
        %2950 = vmatprep.subr.bf16.mxu0 0
        %2951 = vmatpush2.bf16.msra.mxu0 0
        %2952 = vmatprep.subr.bf16.mxu0 0
        %2953 = vmatpush2.bf16.msra.mxu0 0
        %2954 = vmatprep.subr.bf16.mxu0 0
        %2955 = vmatpush2.bf16.msra.mxu0 0
        %2956 = vmatprep.subr.bf16.mxu0 0
        %2957 = vmatpush2.bf16.msra.mxu0 0
        %2958 = vmatprep.mubr.bf16.mxu0 0
        %2959 = vmatmul.mubr.bf16.gmra.mxu0 %v2924
        %v2960 = vpop.f32.mrf.mxu0
        %v2961 = vadd.f32 %v2909, %v2960
        %v2962 = vpop.f32.mrf.mxu0
        %v2963 = vpop.f32.mrf.mxu0
        %v2964 = vpop.f32.mrf.mxu0
        %2965 = vdwg.mxu0
        %v2966 = vmul.f32 %v2961, 0.5
        %v2967 = vmul.f32 %v2961, 0.044715
        %v2968 = vmul.f32 %v2967, %v2961
        %v2969 = vmul.f32 %v2968, %v2961
        %v2970 = vadd.f32 %v2961, %v2969
        %v2971 = vmul.f32 %v2970, 0.7978846
        %v2972 = vtanh.pop %v2971
        %v2973 = vadd.f32 %v2972, 1.0
        %v2974 = vmul.f32 %v2966, %v2973
        %v2975 = vpack.c.bf16 %v2974, %v2974
        %v2976 = vld [vmem:[#allocation8 + $0x4] sm:$0xf]
        %v2977 = vld [vmem:[#allocation8 + $0xc] sm:$0xf]
        %v2978 = vld [vmem:[#allocation8 + $0x14] sm:$0xf]
        %v2979 = vld [vmem:[#allocation8 + $0x1c] sm:$0xf]
        %v2980 = vld [vmem:[#allocation8 + $0x24] sm:$0xf]
        %v2981 = vld [vmem:[#allocation8 + $0x2c] sm:$0xf]
        %v2982 = vld [vmem:[#allocation8 + $0x34] sm:$0xf]
        %v2983 = vld [vmem:[#allocation8 + $0x3c] sm:$0xf]
        %v2984 = vld [vmem:[#allocation8 + $0x44] sm:$0xf]
        %v2985 = vld [vmem:[#allocation8 + $0x4c] sm:$0xf]
        %v2986 = vld [vmem:[#allocation8 + $0x54] sm:$0xf]
        %v2987 = vld [vmem:[#allocation8 + $0x5c] sm:$0xf]
        %v2988 = vld [vmem:[#allocation8 + $0x64] sm:$0xf]
        %v2989 = vld [vmem:[#allocation8 + $0x6c] sm:$0xf]
        %v2990 = vld [vmem:[#allocation8 + $0x74] sm:$0xf]
        %v2991 = vld [vmem:[#allocation8 + $0x7c] sm:$0xf]
        %v2992 = vld [vmem:[#allocation10 + $0x17] sm:$0x1]
        %v2994 = vlaneseq
        %v2995 = vshrl.u32 %v2994, 7
        %v2996 = vsub.s32 0, %v2995
        %v2997 = vrot.slane %v2992, %v2996
        %v3015 = vunpack.c.l.b16 %v2976
        %v3016 = vunpack.c.l.b16 %v2977
        %v3017 = vunpack.c.l.b16 %v2978
        %v3018 = vunpack.c.l.b16 %v2979
        %v3019 = vunpack.c.l.b16 %v2980
        %v3020 = vunpack.c.l.b16 %v2981
        %v3021 = vunpack.c.l.b16 %v2982
        %v3022 = vunpack.c.l.b16 %v2983
        %v3023 = vunpack.c.l.b16 %v2984
        %v3024 = vunpack.c.l.b16 %v2985
        %v3025 = vunpack.c.l.b16 %v2986
        %v3026 = vunpack.c.l.b16 %v2987
        %v3027 = vunpack.c.l.b16 %v2988
        %v3028 = vunpack.c.l.b16 %v2989
        %v3029 = vunpack.c.l.b16 %v2990
        %v3030 = vunpack.c.l.b16 %v2991
        %v3031 = vpack.c.b16 %v3016, %v3015
        %v3032 = vpack.c.b16 %v3018, %v3017
        %v3033 = vpack.c.b16 %v3020, %v3019
        %v3034 = vpack.c.b16 %v3022, %v3021
        %v3035 = vpack.c.b16 %v3024, %v3023
        %v3036 = vpack.c.b16 %v3026, %v3025
        %v3037 = vpack.c.b16 %v3028, %v3027
        %v3038 = vpack.c.b16 %v3030, %v3029
        %3047 = vmatprep.subr.bf16.mxu0 0
        %3048 = vmatpush1.bf16.msra.mxu0 %v3038
        %3049 = vmatprep.subr.bf16.mxu0 0
        %3050 = vmatpush1.bf16.msra.mxu0 %v3037
        %3051 = vmatprep.subr.bf16.mxu0 0
        %3052 = vmatpush1.bf16.msra.mxu0 %v3036
        %3053 = vmatprep.subr.bf16.mxu0 0
        %3054 = vmatpush1.bf16.msra.mxu0 %v3035
        %3055 = vmatprep.subr.bf16.mxu0 0
        %3056 = vmatpush1.bf16.msra.mxu0 %v3034
        %3057 = vmatprep.subr.bf16.mxu0 0
        %3058 = vmatpush1.bf16.msra.mxu0 %v3033
        %3059 = vmatprep.subr.bf16.mxu0 0
        %3060 = vmatpush1.bf16.msra.mxu0 %v3032
        %3061 = vmatprep.subr.bf16.mxu0 0
        %3062 = vmatpush1.bf16.msra.mxu0 %v3031
        %3063 = vmatprep.subr.bf16.mxu0 0
        %3064 = vmatpush2.bf16.msra.mxu0 0
        %3065 = vmatprep.subr.bf16.mxu0 0
        %3066 = vmatpush2.bf16.msra.mxu0 0
        %3067 = vmatprep.subr.bf16.mxu0 0
        %3068 = vmatpush2.bf16.msra.mxu0 0
        %3069 = vmatprep.subr.bf16.mxu0 0
        %3070 = vmatpush2.bf16.msra.mxu0 0
        %3071 = vmatprep.subr.bf16.mxu0 0
        %3072 = vmatpush2.bf16.msra.mxu0 0
        %3073 = vmatprep.subr.bf16.mxu0 0
        %3074 = vmatpush2.bf16.msra.mxu0 0
        %3075 = vmatprep.subr.bf16.mxu0 0
        %3076 = vmatpush2.bf16.msra.mxu0 0
        %3077 = vmatprep.subr.bf16.mxu0 0
        %3078 = vmatpush2.bf16.msra.mxu0 0
        %3079 = vmatprep.mubr.bf16.mxu0 0
        %3080 = vmatmul.mubr.bf16.gmra.mxu0 %v2975
        %v3081 = vpop.f32.mrf.mxu0
        %v3082 = vadd.f32 %v2997, %v3081
        %v3083 = vpop.f32.mrf.mxu0
        %v3084 = vpop.f32.mrf.mxu0
        %v3085 = vpop.f32.mrf.mxu0
        %3086 = vdwg.mxu0
        %v3087 = vlaneseq
        %v3088 = vshrl.u32 %v3087, 7
        %v3089 = vsub.s32 0, %v3088
        %v3090 = vrot.slane %v867, %v3089
        %v3091 = vmul.f32 %v3090, %v3082
        %v3092 = vadd.f32 %v2874, %v3091
        %3093 = vst.msk [vmem:[%s396] sm:$0xff] %vm621, %v3092
        %s3094 = sand.u32 %s181, 1
        %s3095 = scalar_lea.sflag [#allocation4], %s3094
        %s3096 = sand.u32 %s181, 1
        %s3097 = smul.addr %s3096, 16
        %s3098 = scalar_lea.vmem [#allocation11], %s3097
        %s3099 = sand.u32 %s207, 1
        %s3100 = scalar_lea.sflag [#allocation13], %s3099
        %s3101 = sand.u32 %s207, 1
        %s3102 = smul.addr %s3101, 8
        %s3103 = scalar_lea.vmem [#allocation12], %s3102
        // Predicated region
        $region65: #{tpu_custom_call.1} parent=43 // pred_check
          %p3104 = pneg %p191
        $region66: #{tpu_custom_call.1} parent=43 // pred_check_branch
          %3106 = sbr.rel (%p3104) target = $region68
        $region67: #{tpu_custom_call.1} parent=43 // pred_region
          %s3108 = ssub.s32 256, 256
          %3109 = vsyncadd %s3095, %s3108
          %s3110 = smul.addr %s32, 2
          %s3111 = smul.addr %s3110, 128
          %s3112 = scalar_lea.hbm %s6, %s3111
          %s3113 = sshll.u32 %s3098, 4
          %s3114 = int_to_ptr.vmem [resolvable:$true] %s3113
          %3119 = dma.vmem_to_hbm [thread:$0]  %s3114, 256, %s3112, %s3095, 128, 128, 8
        $region68: #{tpu_custom_call.1} parent=43 // pred_fallthru
          _
        // Predicated region
        $region69: #{tpu_custom_call.1} parent=43 // pred_check
          %p3120 = pneg %p217
        $region70: #{tpu_custom_call.1} parent=43 // pred_check_branch
          %3122 = sbr.rel (%p3120) target = $region72
        $region71: #{tpu_custom_call.1} parent=43 // pred_region
          %s3124 = ssub.s32 128, 128
          %3125 = vsyncadd %s3100, %s3124
          %s3126 = smul.addr %s32, 128
          %s3127 = scalar_lea.hbm %s7, %s3126
          %s3129 = sshll.u32 %s3103, 4
          %s3130 = int_to_ptr.vmem [resolvable:$true] %s3129
          %3132 = dma.vmem_to_hbm [thread:$0]  %s3130, 128, %s3127, %s3100
        $region72: #{tpu_custom_call.1} parent=43 // pred_fallthru
          _
      $region44: #{tpu_custom_call.1} parent=5 // pred_fallthru
        _
      %p3133 = scmp.le.s32.totalorder 2, %s27
      // Predicated region
      $region73: #{tpu_custom_call.1} parent=5 // pred_check
        %p3134 = pneg %p3133
      $region74: #{tpu_custom_call.1} parent=5 // pred_check_branch
        %3136 = sbr.rel (%p3134) target = $region76
      $region75: #{tpu_custom_call.1} parent=5 // pred_region
        %s3137 = ssub.s32 %s27, 2
        // Predicated region
        $region77: #{tpu_custom_call.1} parent=75 // pred_check
          %p3138 = pneg %p197
        $region78: #{tpu_custom_call.1} parent=75 // pred_check_branch
          %3140 = sbr.rel (%p3138) target = $region80
        $region79: #{tpu_custom_call.1} parent=75 // pred_region
          %s3141 = sand.u32 %s182, 1
          %s3142 = scalar_lea.sflag [#allocation4], %s3141
          %s3143 = sand.u32 %s182, 1
          %s3144 = smul.addr %s3143, 16
          %s3145 = scalar_lea.vmem [#allocation11], %s3144
          %3146 = dma.done %s3142, 256
        $region80: #{tpu_custom_call.1} parent=75 // pred_fallthru
          _
        // Predicated region
        $region81: #{tpu_custom_call.1} parent=75 // pred_check
          %p3147 = pneg %p223
        $region82: #{tpu_custom_call.1} parent=75 // pred_check_branch
          %3149 = sbr.rel (%p3147) target = $region84
        $region83: #{tpu_custom_call.1} parent=75 // pred_region
          %s3150 = sand.u32 %s208, 1
          %s3151 = scalar_lea.sflag [#allocation13], %s3150
          %s3152 = sand.u32 %s208, 1
          %s3153 = smul.addr %s3152, 8
          %s3154 = scalar_lea.vmem [#allocation12], %s3153
          %3155 = dma.done %s3151, 128
        $region84: #{tpu_custom_call.1} parent=75 // pred_fallthru
          _
      $region76: #{tpu_custom_call.1} parent=5 // pred_fallthru
        _
    $region6: #{tpu_custom_call.1} parent=1 // loop_footer
      %s31 = sadd.s32 1, %s27
    $region7: #{tpu_custom_call.1} parent=1 // loop_footer_branch
      %26 = sbr.rel target = $region3
    $region8: #{tpu_custom_call.1} parent=1 // loop_exit
      _
    %3156 = vsyncpa [#allocation3], 1
    %s3157 = scalar_lea.sflag [#allocation3], 1
    %3158 = vsyncpa %s3157, 1
    %3159 = vsyncpa [#allocation6], 1
    %s3160 = scalar_lea.sflag [#allocation6], 1
    %3161 = vsyncpa %s3160, 1
    %3162 = vsyncpa [#allocation9], 1
    %3163 = vsyncpa [#allocation4], 1
    %s3164 = scalar_lea.sflag [#allocation4], 1
    %3165 = vsyncpa %s3164, 1
    %3166 = vsyncpa [#allocation13], 1
    %s3167 = scalar_lea.sflag [#allocation13], 1
    %3168 = vsyncpa %s3167, 1

</llo_original>
